<compile_context>
chip_gen: v7x
topology: tpu7x:2x2x1
jax: 0.10.0
libtpu: 0.0.40
codegen_flags: <defaults>
</compile_context>

<pallas_src>
import jax
import jax.numpy as jnp
from jax.experimental import pallas as pl
from jax.experimental.pallas import tpu as pltpu

D = 8
W = 256
INPUT_CH = 3
INPUT_CH_VIEWS = 3
OUTPUT_CH = 4
SKIPS = (4,)

HIGHEST = jax.lax.Precision.HIGHEST


def nerf_kernel(x_ref,
                w06, b0, w1, b1, w2, b2, w3, b3, w4, b4,
                w5h, b5, w6, b6, w7, b7,
                wout, bout,
                out_ref):
    # x tile: (TN, 6); cols 0:3 = input_pts, 3:6 = input_views (unused -> sliced off)
    x = x_ref[...]
    pts = x[:, :INPUT_CH].astype(jnp.float32)                 # (TN, 3)

    # Fused K=3 matmul (f32, negligible cost):
    #   cols 0:W   -> layer-0 pre-activation (pts @ W0)
    #   cols W:2W  -> layer-5 skip addend    (pts @ W5[:3])
    xw = jnp.dot(pts, w06[...], preferred_element_type=jnp.float32)   # (TN, 2W)
    skip = xw[:, W:]

    def lin(h, w_ref, b_ref):
        # bf16 MXU inputs, f32 accumulation, f32 epilogue.
        return jnp.dot(h.astype(w_ref.dtype), w_ref[...],
                       preferred_element_type=jnp.float32) + b_ref[...]

    h = jnp.maximum(xw[:, :W] + b0[...], 0.0)                 # layer 0
    h = jnp.maximum(lin(h, w1, b1), 0.0)                      # layer 1
    h = jnp.maximum(lin(h, w2, b2), 0.0)                      # layer 2
    h = jnp.maximum(lin(h, w3, b3), 0.0)                      # layer 3
    h = jnp.maximum(lin(h, w4, b4), 0.0)                      # layer 4 (skip after)
    h = jnp.maximum(lin(h, w5h, b5) + skip, 0.0)              # layer 5 (cat folded)
    h = jnp.maximum(lin(h, w6, b6), 0.0)                      # layer 6
    h = jnp.maximum(lin(h, w7, b7), 0.0)                      # layer 7
    out_ref[...] = lin(h, wout, bout).astype(out_ref.dtype)   # output_linear


def nerf_pallas(x, kernel_params, tile_n=512):
    N, C = x.shape
    assert N % tile_n == 0

    def weight_spec(a):
        return pl.BlockSpec(a.shape, lambda i: (0,) * a.ndim)

    in_specs = [pl.BlockSpec((tile_n, C), lambda i: (i, 0))]
    in_specs += [weight_spec(a) for a in kernel_params]

    flops = 2 * N * (INPUT_CH * 2 * W + 7 * W * W + W * OUTPUT_CH)
    bytes_accessed = int(
        x.size * x.dtype.itemsize
        + N * OUTPUT_CH * 4
        + sum(int(a.size) * a.dtype.itemsize for a in kernel_params))
    cost = pl.CostEstimate(flops=flops, transcendentals=0,
                           bytes_accessed=bytes_accessed)

    return pl.pallas_call(
        nerf_kernel,
        out_shape=jax.ShapeDtypeStruct((N, OUTPUT_CH), jnp.float32),
        grid=(N // tile_n,),
        in_specs=in_specs,
        out_specs=pl.BlockSpec((tile_n, OUTPUT_CH), lambda i: (i, 0)),
        compiler_params=pltpu.CompilerParams(dimension_semantics=("parallel",)),
        cost_estimate=cost,
    )(x, *kernel_params)


def init_raw_params(key):
    """Deterministic synthetic weights with the exact nn.Module shapes (f32)."""
    in_feats = [INPUT_CH, W, W, W, W, W + INPUT_CH, W, W]
    keys = jax.random.split(key, 2 * D + 2)
    pts = []
    for i in range(D):
        kw, kb = jax.random.split(keys[i])
        w = jax.random.normal(kw, (in_feats[i], W), jnp.float32) * 0.05
        b = jax.random.normal(kb, (W,), jnp.float32) * 0.05
        pts.append((w, b))
    kw, kb = jax.random.split(keys[D])
    w_out = jax.random.normal(kw, (W, OUTPUT_CH), jnp.float32) * 0.05
    b_out = jax.random.normal(kb, (OUTPUT_CH,), jnp.float32) * 0.05
    return pts, (w_out, b_out)


def to_kernel_params(pts_params, out_params):
    """Reshape the raw params into the flat list the kernel expects.

    - Layer-0 weight and the pts-rows of layer-5 weight are fused into one
      (3, 2W) f32 weight (tiny, kept f32 for precision).
    - All (W, W) hidden weights and the output weight are cast to bf16.
    - Biases stay f32, reshaped to (1, W) / (1, OUTPUT_CH).
    """
    params = []
    w0, b0 = pts_params[0]
    w5, _ = pts_params[5]
    w06 = jnp.concatenate([w0, w5[:INPUT_CH]], axis=1)        # (3, 2W) f32
    params += [w06, b0.reshape(1, W)]
    for i in range(1, D):
        w, b = pts_params[i]
        if i == 5:
            w = w[INPUT_CH:]                                   # (W, W) h-part
        params += [w.astype(jnp.bfloat16), b.reshape(1, W)]
    w_out, b_out = out_params
    params += [w_out.astype(jnp.bfloat16), b_out.reshape(1, OUTPUT_CH)]
    return params


def nerf_ref(x, pts_params, out_params):
    """Pure-JAX f32 reference mirroring the PyTorch forward exactly."""
    input_pts = x[:, :INPUT_CH]
    h = input_pts
    for i in range(D):
        w, b = pts_params[i]
        h = jax.nn.relu(jnp.dot(h, w, precision=HIGHEST) + b)
        if i in SKIPS:
            h = jnp.concatenate([input_pts, h], axis=-1)
    w_out, b_out = out_params
    return jnp.dot(h, w_out, precision=HIGHEST) + b_out


def nerf_ref_quant(x, pts_params, out_params):
    """Reference mirroring the kernel's bf16 weight/activation quantization."""
    def bf(a):
        return a.astype(jnp.bfloat16).astype(jnp.float32)

    input_pts = x[:, :INPUT_CH].astype(jnp.float32)
    w0, b0 = pts_params[0]
    h = jax.nn.relu(jnp.dot(input_pts, w0, precision=HIGHEST) + b0)
    for i in range(1, D):
        w, b = pts_params[i]
        if i == 5:
            pre = (jnp.dot(bf(h), bf(w[INPUT_CH:]), precision=HIGHEST)
                   + jnp.dot(input_pts, w[:INPUT_CH], precision=HIGHEST) + b)
        else:
            pre = jnp.dot(bf(h), bf(w), precision=HIGHEST) + b
        h = jax.nn.relu(pre)
    w_out, b_out = out_params
    return jnp.dot(bf(h), bf(w_out), precision=HIGHEST) + b_out


if __name__ == "__main__":
    key = jax.random.PRNGKey(0)
    k_param, k_x = jax.random.split(key)

    pts_params, out_params = init_raw_params(k_param)
    kernel_params = to_kernel_params(pts_params, out_params)

    N = 2048          # sampled points (rows); tile_n=512 -> grid of 4 (even, megacore-friendly)
    x = jax.random.normal(k_x, (N, INPUT_CH + INPUT_CH_VIEWS), jnp.float32)

    out = nerf_pallas(x, kernel_params, tile_n=512)
    out = jax.block_until_ready(out)
    assert out.shape == (N, OUTPUT_CH)

    # Strict check vs. a reference that mirrors the kernel's bf16 quantization.
    ref_q = nerf_ref_quant(x, pts_params, out_params)
    assert jnp.allclose(out, ref_q, atol=1e-2, rtol=1e-2), (
        "mismatch vs bf16-mirrored reference; max abs diff "
        f"{float(jnp.max(jnp.abs(out - ref_q)))}")

    # Loose check vs. the exact f32 PyTorch-equivalent forward.
    ref = nerf_ref(x, pts_params, out_params)
    assert jnp.allclose(out, ref, atol=5e-2, rtol=5e-2), (
        "mismatch vs f32 module reference; max abs diff "
        f"{float(jnp.max(jnp.abs(out - ref)))}")

    print("KERNEL_OK")
</pallas_src>

<mosaic_0001>
module attributes {stable_mosaic.version = 11 : i64} {
  func.func @nerf_kernel(%arg0: i32, %arg1: memref<512x6xf32, #tpu.memory_space<vmem>>, %arg2: memref<3x512xf32, #tpu.memory_space<vmem>>, %arg3: memref<1x256xf32, #tpu.memory_space<vmem>>, %arg4: memref<256x256xbf16, #tpu.memory_space<vmem>>, %arg5: memref<1x256xf32, #tpu.memory_space<vmem>>, %arg6: memref<256x256xbf16, #tpu.memory_space<vmem>>, %arg7: memref<1x256xf32, #tpu.memory_space<vmem>>, %arg8: memref<256x256xbf16, #tpu.memory_space<vmem>>, %arg9: memref<1x256xf32, #tpu.memory_space<vmem>>, %arg10: memref<256x256xbf16, #tpu.memory_space<vmem>>, %arg11: memref<1x256xf32, #tpu.memory_space<vmem>>, %arg12: memref<256x256xbf16, #tpu.memory_space<vmem>>, %arg13: memref<1x256xf32, #tpu.memory_space<vmem>>, %arg14: memref<256x256xbf16, #tpu.memory_space<vmem>>, %arg15: memref<1x256xf32, #tpu.memory_space<vmem>>, %arg16: memref<256x256xbf16, #tpu.memory_space<vmem>>, %arg17: memref<1x256xf32, #tpu.memory_space<vmem>>, %arg18: memref<256x4xbf16, #tpu.memory_space<vmem>>, %arg19: memref<1x4xf32, #tpu.memory_space<vmem>>, %arg20: memref<512x4xf32, #tpu.memory_space<vmem>>) attributes {dimension_semantics = [#tpu.dimension_semantics<parallel>], iteration_bounds = array<i64: 4>, scalar_prefetch = 0 : i64, scratch_operands = 0 : i64, tpu.core_type = #tpu.core_type<tc>, window_params = [{transform_indices = @transform_0, window_bounds = array<i64: 512, 6>}, {pipeline_mode = #tpu.pipeline_mode<synchronous>, transform_indices = @transform_1, window_bounds = array<i64: 3, 512>}, {pipeline_mode = #tpu.pipeline_mode<synchronous>, transform_indices = @transform_2, window_bounds = array<i64: 1, 256>}, {pipeline_mode = #tpu.pipeline_mode<synchronous>, transform_indices = @transform_3, window_bounds = array<i64: 256, 256>}, {pipeline_mode = #tpu.pipeline_mode<synchronous>, transform_indices = @transform_4, window_bounds = array<i64: 1, 256>}, {pipeline_mode = #tpu.pipeline_mode<synchronous>, transform_indices = @transform_5, window_bounds = array<i64: 256, 256>}, {pipeline_mode = #tpu.pipeline_mode<synchronous>, transform_indices = @transform_6, window_bounds = array<i64: 1, 256>}, {pipeline_mode = #tpu.pipeline_mode<synchronous>, transform_indices = @transform_7, window_bounds = array<i64: 256, 256>}, {pipeline_mode = #tpu.pipeline_mode<synchronous>, transform_indices = @transform_8, window_bounds = array<i64: 1, 256>}, {pipeline_mode = #tpu.pipeline_mode<synchronous>, transform_indices = @transform_9, window_bounds = array<i64: 256, 256>}, {pipeline_mode = #tpu.pipeline_mode<synchronous>, transform_indices = @transform_10, window_bounds = array<i64: 1, 256>}, {pipeline_mode = #tpu.pipeline_mode<synchronous>, transform_indices = @transform_11, window_bounds = array<i64: 256, 256>}, {pipeline_mode = #tpu.pipeline_mode<synchronous>, transform_indices = @transform_12, window_bounds = array<i64: 1, 256>}, {pipeline_mode = #tpu.pipeline_mode<synchronous>, transform_indices = @transform_13, window_bounds = array<i64: 256, 256>}, {pipeline_mode = #tpu.pipeline_mode<synchronous>, transform_indices = @transform_14, window_bounds = array<i64: 1, 256>}, {pipeline_mode = #tpu.pipeline_mode<synchronous>, transform_indices = @transform_15, window_bounds = array<i64: 256, 256>}, {pipeline_mode = #tpu.pipeline_mode<synchronous>, transform_indices = @transform_16, window_bounds = array<i64: 1, 256>}, {pipeline_mode = #tpu.pipeline_mode<synchronous>, transform_indices = @transform_17, window_bounds = array<i64: 256, 4>}, {pipeline_mode = #tpu.pipeline_mode<synchronous>, transform_indices = @transform_18, window_bounds = array<i64: 1, 4>}, {transform_indices = @transform_19, window_bounds = array<i64: 512, 4>}]} {
    %c0 = arith.constant 0 : index
    %c0_0 = arith.constant 0 : index
    %0 = vector.load %arg1[%c0, %c0_0] : memref<512x6xf32, #tpu.memory_space<vmem>>, vector<512x6xf32>
    %1 = vector.extract_strided_slice %0 {offsets = [0, 0], sizes = [512, 3], strides = [1, 1]} : vector<512x6xf32> to vector<512x3xf32>
    %c0_1 = arith.constant 0 : index
    %c0_2 = arith.constant 0 : index
    %2 = vector.load %arg2[%c0_1, %c0_2] : memref<3x512xf32, #tpu.memory_space<vmem>>, vector<3x512xf32>
    %cst = arith.constant dense<0.000000e+00> : vector<512x512xf32>
    %3 = tpu.matmul %1, %2, %cst {dimension_numbers = #tpu.dot_dimension_numbers<[1], [0], [0], [1], [0, 0, 1, 1], [], []>} : vector<512x3xf32>, vector<3x512xf32>, vector<512x512xf32> -> vector<512x512xf32>
    %4 = vector.extract_strided_slice %3 {offsets = [0, 256], sizes = [512, 256], strides = [1, 1]} : vector<512x512xf32> to vector<512x256xf32>
    %5 = vector.extract_strided_slice %3 {offsets = [0, 0], sizes = [512, 256], strides = [1, 1]} : vector<512x512xf32> to vector<512x256xf32>
    %c0_3 = arith.constant 0 : index
    %c0_4 = arith.constant 0 : index
    %6 = vector.load %arg3[%c0_3, %c0_4] : memref<1x256xf32, #tpu.memory_space<vmem>>, vector<1x256xf32>
    %7 = vector.broadcast %6 : vector<1x256xf32> to vector<512x256xf32>
    %8 = arith.addf %5, %7 : vector<512x256xf32>
    %cst_5 = arith.constant 0.000000e+00 : f32
    %9 = vector.broadcast %cst_5 : f32 to vector<512x256xf32>
    %10 = arith.maximumf %8, %9 : vector<512x256xf32>
    %11 = arith.truncf %10 : vector<512x256xf32> to vector<512x256xbf16>
    %c0_6 = arith.constant 0 : index
    %c0_7 = arith.constant 0 : index
    %12 = vector.load %arg4[%c0_6, %c0_7] : memref<256x256xbf16, #tpu.memory_space<vmem>>, vector<256x256xbf16>
    %cst_8 = arith.constant dense<0.000000e+00> : vector<512x256xf32>
    %13 = tpu.matmul %11, %12, %cst_8 {dimension_numbers = #tpu.dot_dimension_numbers<[1], [0], [0], [1], [0, 0, 1, 1], [], []>} : vector<512x256xbf16>, vector<256x256xbf16>, vector<512x256xf32> -> vector<512x256xf32>
    %c0_9 = arith.constant 0 : index
    %c0_10 = arith.constant 0 : index
    %14 = vector.load %arg5[%c0_9, %c0_10] : memref<1x256xf32, #tpu.memory_space<vmem>>, vector<1x256xf32>
    %15 = vector.broadcast %14 : vector<1x256xf32> to vector<512x256xf32>
    %16 = arith.addf %13, %15 : vector<512x256xf32>
    %cst_11 = arith.constant 0.000000e+00 : f32
    %17 = vector.broadcast %cst_11 : f32 to vector<512x256xf32>
    %18 = arith.maximumf %16, %17 : vector<512x256xf32>
    %19 = arith.truncf %18 : vector<512x256xf32> to vector<512x256xbf16>
    %c0_12 = arith.constant 0 : index
    %c0_13 = arith.constant 0 : index
    %20 = vector.load %arg6[%c0_12, %c0_13] : memref<256x256xbf16, #tpu.memory_space<vmem>>, vector<256x256xbf16>
    %cst_14 = arith.constant dense<0.000000e+00> : vector<512x256xf32>
    %21 = tpu.matmul %19, %20, %cst_14 {dimension_numbers = #tpu.dot_dimension_numbers<[1], [0], [0], [1], [0, 0, 1, 1], [], []>} : vector<512x256xbf16>, vector<256x256xbf16>, vector<512x256xf32> -> vector<512x256xf32>
    %c0_15 = arith.constant 0 : index
    %c0_16 = arith.constant 0 : index
    %22 = vector.load %arg7[%c0_15, %c0_16] : memref<1x256xf32, #tpu.memory_space<vmem>>, vector<1x256xf32>
    %23 = vector.broadcast %22 : vector<1x256xf32> to vector<512x256xf32>
    %24 = arith.addf %21, %23 : vector<512x256xf32>
    %cst_17 = arith.constant 0.000000e+00 : f32
    %25 = vector.broadcast %cst_17 : f32 to vector<512x256xf32>
    %26 = arith.maximumf %24, %25 : vector<512x256xf32>
    %27 = arith.truncf %26 : vector<512x256xf32> to vector<512x256xbf16>
    %c0_18 = arith.constant 0 : index
    %c0_19 = arith.constant 0 : index
    %28 = vector.load %arg8[%c0_18, %c0_19] : memref<256x256xbf16, #tpu.memory_space<vmem>>, vector<256x256xbf16>
    %cst_20 = arith.constant dense<0.000000e+00> : vector<512x256xf32>
    %29 = tpu.matmul %27, %28, %cst_20 {dimension_numbers = #tpu.dot_dimension_numbers<[1], [0], [0], [1], [0, 0, 1, 1], [], []>} : vector<512x256xbf16>, vector<256x256xbf16>, vector<512x256xf32> -> vector<512x256xf32>
    %c0_21 = arith.constant 0 : index
    %c0_22 = arith.constant 0 : index
    %30 = vector.load %arg9[%c0_21, %c0_22] : memref<1x256xf32, #tpu.memory_space<vmem>>, vector<1x256xf32>
    %31 = vector.broadcast %30 : vector<1x256xf32> to vector<512x256xf32>
    %32 = arith.addf %29, %31 : vector<512x256xf32>
    %cst_23 = arith.constant 0.000000e+00 : f32
    %33 = vector.broadcast %cst_23 : f32 to vector<512x256xf32>
    %34 = arith.maximumf %32, %33 : vector<512x256xf32>
    %35 = arith.truncf %34 : vector<512x256xf32> to vector<512x256xbf16>
    %c0_24 = arith.constant 0 : index
    %c0_25 = arith.constant 0 : index
    %36 = vector.load %arg10[%c0_24, %c0_25] : memref<256x256xbf16, #tpu.memory_space<vmem>>, vector<256x256xbf16>
    %cst_26 = arith.constant dense<0.000000e+00> : vector<512x256xf32>
    %37 = tpu.matmul %35, %36, %cst_26 {dimension_numbers = #tpu.dot_dimension_numbers<[1], [0], [0], [1], [0, 0, 1, 1], [], []>} : vector<512x256xbf16>, vector<256x256xbf16>, vector<512x256xf32> -> vector<512x256xf32>
    %c0_27 = arith.constant 0 : index
    %c0_28 = arith.constant 0 : index
    %38 = vector.load %arg11[%c0_27, %c0_28] : memref<1x256xf32, #tpu.memory_space<vmem>>, vector<1x256xf32>
    %39 = vector.broadcast %38 : vector<1x256xf32> to vector<512x256xf32>
    %40 = arith.addf %37, %39 : vector<512x256xf32>
    %cst_29 = arith.constant 0.000000e+00 : f32
    %41 = vector.broadcast %cst_29 : f32 to vector<512x256xf32>
    %42 = arith.maximumf %40, %41 : vector<512x256xf32>
    %43 = arith.truncf %42 : vector<512x256xf32> to vector<512x256xbf16>
    %c0_30 = arith.constant 0 : index
    %c0_31 = arith.constant 0 : index
    %44 = vector.load %arg12[%c0_30, %c0_31] : memref<256x256xbf16, #tpu.memory_space<vmem>>, vector<256x256xbf16>
    %cst_32 = arith.constant dense<0.000000e+00> : vector<512x256xf32>
    %45 = tpu.matmul %43, %44, %cst_32 {dimension_numbers = #tpu.dot_dimension_numbers<[1], [0], [0], [1], [0, 0, 1, 1], [], []>} : vector<512x256xbf16>, vector<256x256xbf16>, vector<512x256xf32> -> vector<512x256xf32>
    %c0_33 = arith.constant 0 : index
    %c0_34 = arith.constant 0 : index
    %46 = vector.load %arg13[%c0_33, %c0_34] : memref<1x256xf32, #tpu.memory_space<vmem>>, vector<1x256xf32>
    %47 = vector.broadcast %46 : vector<1x256xf32> to vector<512x256xf32>
    %48 = arith.addf %45, %47 : vector<512x256xf32>
    %49 = arith.addf %48, %4 : vector<512x256xf32>
    %cst_35 = arith.constant 0.000000e+00 : f32
    %50 = vector.broadcast %cst_35 : f32 to vector<512x256xf32>
    %51 = arith.maximumf %49, %50 : vector<512x256xf32>
    %52 = arith.truncf %51 : vector<512x256xf32> to vector<512x256xbf16>
    %c0_36 = arith.constant 0 : index
    %c0_37 = arith.constant 0 : index
    %53 = vector.load %arg14[%c0_36, %c0_37] : memref<256x256xbf16, #tpu.memory_space<vmem>>, vector<256x256xbf16>
    %cst_38 = arith.constant dense<0.000000e+00> : vector<512x256xf32>
    %54 = tpu.matmul %52, %53, %cst_38 {dimension_numbers = #tpu.dot_dimension_numbers<[1], [0], [0], [1], [0, 0, 1, 1], [], []>} : vector<512x256xbf16>, vector<256x256xbf16>, vector<512x256xf32> -> vector<512x256xf32>
    %c0_39 = arith.constant 0 : index
    %c0_40 = arith.constant 0 : index
    %55 = vector.load %arg15[%c0_39, %c0_40] : memref<1x256xf32, #tpu.memory_space<vmem>>, vector<1x256xf32>
    %56 = vector.broadcast %55 : vector<1x256xf32> to vector<512x256xf32>
    %57 = arith.addf %54, %56 : vector<512x256xf32>
    %cst_41 = arith.constant 0.000000e+00 : f32
    %58 = vector.broadcast %cst_41 : f32 to vector<512x256xf32>
    %59 = arith.maximumf %57, %58 : vector<512x256xf32>
    %60 = arith.truncf %59 : vector<512x256xf32> to vector<512x256xbf16>
    %c0_42 = arith.constant 0 : index
    %c0_43 = arith.constant 0 : index
    %61 = vector.load %arg16[%c0_42, %c0_43] : memref<256x256xbf16, #tpu.memory_space<vmem>>, vector<256x256xbf16>
    %cst_44 = arith.constant dense<0.000000e+00> : vector<512x256xf32>
    %62 = tpu.matmul %60, %61, %cst_44 {dimension_numbers = #tpu.dot_dimension_numbers<[1], [0], [0], [1], [0, 0, 1, 1], [], []>} : vector<512x256xbf16>, vector<256x256xbf16>, vector<512x256xf32> -> vector<512x256xf32>
    %c0_45 = arith.constant 0 : index
    %c0_46 = arith.constant 0 : index
    %63 = vector.load %arg17[%c0_45, %c0_46] : memref<1x256xf32, #tpu.memory_space<vmem>>, vector<1x256xf32>
    %64 = vector.broadcast %63 : vector<1x256xf32> to vector<512x256xf32>
    %65 = arith.addf %62, %64 : vector<512x256xf32>
    %cst_47 = arith.constant 0.000000e+00 : f32
    %66 = vector.broadcast %cst_47 : f32 to vector<512x256xf32>
    %67 = arith.maximumf %65, %66 : vector<512x256xf32>
    %68 = arith.truncf %67 : vector<512x256xf32> to vector<512x256xbf16>
    %c0_48 = arith.constant 0 : index
    %c0_49 = arith.constant 0 : index
    %69 = vector.load %arg18[%c0_48, %c0_49] : memref<256x4xbf16, #tpu.memory_space<vmem>>, vector<256x4xbf16>
    %cst_50 = arith.constant dense<0.000000e+00> : vector<512x4xf32>
    %70 = tpu.matmul %68, %69, %cst_50 {dimension_numbers = #tpu.dot_dimension_numbers<[1], [0], [0], [1], [0, 0, 1, 1], [], []>} : vector<512x256xbf16>, vector<256x4xbf16>, vector<512x4xf32> -> vector<512x4xf32>
    %c0_51 = arith.constant 0 : index
    %c0_52 = arith.constant 0 : index
    %71 = vector.load %arg19[%c0_51, %c0_52] : memref<1x4xf32, #tpu.memory_space<vmem>>, vector<1x4xf32>
    %72 = vector.broadcast %71 : vector<1x4xf32> to vector<512x4xf32>
    %73 = arith.addf %70, %72 : vector<512x4xf32>
    %c0_53 = arith.constant 0 : index
    %c0_54 = arith.constant 0 : index
    %74 = vector.load %arg20[%c0_53, %c0_54] : memref<512x4xf32, #tpu.memory_space<vmem>>, vector<512x4xf32>
    tpu.vector_store %arg20[%c0_53, %c0_54], %73 {strides = array<i32>} : memref<512x4xf32, #tpu.memory_space<vmem>>, vector<512x4xf32>,
    return
  }
  func.func @transform_0(%arg0: i32) -> (i32, i32) {
    %c0_i32 = arith.constant 0 : i32
    %c0_i32_0 = arith.constant 0 : i32
    return %arg0, %c0_i32 : i32, i32
  }
  func.func @transform_1(%arg0: i32) -> (i32, i32) {
    %c0_i32 = arith.constant 0 : i32
    %c0_i32_0 = arith.constant 0 : i32
    %c0_i32_1 = arith.constant 0 : i32
    return %c0_i32, %c0_i32_0 : i32, i32
  }
  func.func @transform_2(%arg0: i32) -> (i32, i32) {
    %c0_i32 = arith.constant 0 : i32
    %c0_i32_0 = arith.constant 0 : i32
    %c0_i32_1 = arith.constant 0 : i32
    return %c0_i32, %c0_i32_0 : i32, i32
  }
  func.func @transform_3(%arg0: i32) -> (i32, i32) {
    %c0_i32 = arith.constant 0 : i32
    %c0_i32_0 = arith.constant 0 : i32
    %c0_i32_1 = arith.constant 0 : i32
    return %c0_i32, %c0_i32_0 : i32, i32
  }
  func.func @transform_4(%arg0: i32) -> (i32, i32) {
    %c0_i32 = arith.constant 0 : i32
    %c0_i32_0 = arith.constant 0 : i32
    %c0_i32_1 = arith.constant 0 : i32
    return %c0_i32, %c0_i32_0 : i32, i32
  }
  func.func @transform_5(%arg0: i32) -> (i32, i32) {
    %c0_i32 = arith.constant 0 : i32
    %c0_i32_0 = arith.constant 0 : i32
    %c0_i32_1 = arith.constant 0 : i32
    return %c0_i32, %c0_i32_0 : i32, i32
  }
  func.func @transform_6(%arg0: i32) -> (i32, i32) {
    %c0_i32 = arith.constant 0 : i32
    %c0_i32_0 = arith.constant 0 : i32
    %c0_i32_1 = arith.constant 0 : i32
    return %c0_i32, %c0_i32_0 : i32, i32
  }
  func.func @transform_7(%arg0: i32) -> (i32, i32) {
    %c0_i32 = arith.constant 0 : i32
    %c0_i32_0 = arith.constant 0 : i32
    %c0_i32_1 = arith.constant 0 : i32
    return %c0_i32, %c0_i32_0 : i32, i32
  }
  func.func @transform_8(%arg0: i32) -> (i32, i32) {
    %c0_i32 = arith.constant 0 : i32
    %c0_i32_0 = arith.constant 0 : i32
    %c0_i32_1 = arith.constant 0 : i32
    return %c0_i32, %c0_i32_0 : i32, i32
  }
  func.func @transform_9(%arg0: i32) -> (i32, i32) {
    %c0_i32 = arith.constant 0 : i32
    %c0_i32_0 = arith.constant 0 : i32
    %c0_i32_1 = arith.constant 0 : i32
    return %c0_i32, %c0_i32_0 : i32, i32
  }
  func.func @transform_10(%arg0: i32) -> (i32, i32) {
    %c0_i32 = arith.constant 0 : i32
    %c0_i32_0 = arith.constant 0 : i32
    %c0_i32_1 = arith.constant 0 : i32
    return %c0_i32, %c0_i32_0 : i32, i32
  }
  func.func @transform_11(%arg0: i32) -> (i32, i32) {
    %c0_i32 = arith.constant 0 : i32
    %c0_i32_0 = arith.constant 0 : i32
    %c0_i32_1 = arith.constant 0 : i32
    return %c0_i32, %c0_i32_0 : i32, i32
  }
  func.func @transform_12(%arg0: i32) -> (i32, i32) {
    %c0_i32 = arith.constant 0 : i32
    %c0_i32_0 = arith.constant 0 : i32
    %c0_i32_1 = arith.constant 0 : i32
    return %c0_i32, %c0_i32_0 : i32, i32
  }
  func.func @transform_13(%arg0: i32) -> (i32, i32) {
    %c0_i32 = arith.constant 0 : i32
    %c0_i32_0 = arith.constant 0 : i32
    %c0_i32_1 = arith.constant 0 : i32
    return %c0_i32, %c0_i32_0 : i32, i32
  }
  func.func @transform_14(%arg0: i32) -> (i32, i32) {
    %c0_i32 = arith.constant 0 : i32
    %c0_i32_0 = arith.constant 0 : i32
    %c0_i32_1 = arith.constant 0 : i32
    return %c0_i32, %c0_i32_0 : i32, i32
  }
  func.func @transform_15(%arg0: i32) -> (i32, i32) {
    %c0_i32 = arith.constant 0 : i32
    %c0_i32_0 = arith.constant 0 : i32
    %c0_i32_1 = arith.constant 0 : i32
    return %c0_i32, %c0_i32_0 : i32, i32
  }
  func.func @transform_16(%arg0: i32) -> (i32, i32) {
    %c0_i32 = arith.constant 0 : i32
    %c0_i32_0 = arith.constant 0 : i32
    %c0_i32_1 = arith.constant 0 : i32
    return %c0_i32, %c0_i32_0 : i32, i32
  }
  func.func @transform_17(%arg0: i32) -> (i32, i32) {
    %c0_i32 = arith.constant 0 : i32
    %c0_i32_0 = arith.constant 0 : i32
    %c0_i32_1 = arith.constant 0 : i32
    return %c0_i32, %c0_i32_0 : i32, i32
  }
  func.func @transform_18(%arg0: i32) -> (i32, i32) {
    %c0_i32 = arith.constant 0 : i32
    %c0_i32_0 = arith.constant 0 : i32
    %c0_i32_1 = arith.constant 0 : i32
    return %c0_i32, %c0_i32_0 : i32, i32
  }
  func.func @transform_19(%arg0: i32) -> (i32, i32) {
    %c0_i32 = arith.constant 0 : i32
    %c0_i32_0 = arith.constant 0 : i32
    return %arg0, %c0_i32 : i32, i32
  }
}

</mosaic_0001>

<llo_original>
// kernel: tpu_custom_call.1
$region0: #{tpu_custom_call.1}
  #allocation0 [shape = 'u32[]', space=smem, size = 0x4, offset = 0x4, fixed_abs, tag = 'smem constant byte address 0x4 - core index']
  #allocation1 [shape = 'u32[144,128]{1,0:T(1,128)}', space=vmem, size = 0x12000, scoped, tag = 'internal scratch']
  %s0 = inlined_call_operand.vmem [shape: f32[2048,6], index: 0, kind: input, shape index: {}]
  %s1 = inlined_call_operand.vmem [shape: f32[3,512], index: 1, kind: input, shape index: {}]
  %s2 = inlined_call_operand.vmem [shape: f32[1,256], index: 2, kind: input, shape index: {}]
  %s3 = inlined_call_operand.vmem [shape: bf16[256,256], index: 3, kind: input, shape index: {}]
  %s4 = inlined_call_operand.vmem [shape: f32[1,256], index: 4, kind: input, shape index: {}]
  %s5 = inlined_call_operand.vmem [shape: bf16[256,256], index: 5, kind: input, shape index: {}]
  %s6 = inlined_call_operand.vmem [shape: f32[1,256], index: 6, kind: input, shape index: {}]
  %s7 = inlined_call_operand.vmem [shape: bf16[256,256], index: 7, kind: input, shape index: {}]
  %s8 = inlined_call_operand.vmem [shape: f32[1,256], index: 8, kind: input, shape index: {}]
  %s9 = inlined_call_operand.vmem [shape: bf16[256,256], index: 9, kind: input, shape index: {}]
  %s10 = inlined_call_operand.vmem [shape: f32[1,256], index: 10, kind: input, shape index: {}]
  %s11 = inlined_call_operand.vmem [shape: bf16[256,256], index: 11, kind: input, shape index: {}]
  %s12 = inlined_call_operand.vmem [shape: f32[1,256], index: 12, kind: input, shape index: {}]
  %s13 = inlined_call_operand.vmem [shape: bf16[256,256], index: 13, kind: input, shape index: {}]
  %s14 = inlined_call_operand.vmem [shape: f32[1,256], index: 14, kind: input, shape index: {}]
  %s15 = inlined_call_operand.vmem [shape: bf16[256,256], index: 15, kind: input, shape index: {}]
  %s16 = inlined_call_operand.vmem [shape: f32[1,256], index: 16, kind: input, shape index: {}]
  %s17 = inlined_call_operand.vmem [shape: bf16[256,4], index: 17, kind: input, shape index: {}]
  %s18 = inlined_call_operand.vmem [shape: f32[1,4], index: 18, kind: input, shape index: {}]
  %s19 = inlined_call_operand.vmem [shape: f32[2048,4], index: 19, kind: output, shape index: {}]
  %s20 = sld [smem:[#allocation0]]
  $region109: #{tpu_custom_call.1} parent=0
    _
  %s22 = ssub.s32 1, %s20
  %s23 = scalar_select 0, %s22, %s20
  loop: start=0, step=1, limit=6
  $region2: #{tpu_custom_call.1} parent=0 // loop_pre_header
    _
  $region3: #{tpu_custom_call.1} parent=0 // loop_header
    %s25 = sphi 0, %s29
    %p26 = scmp.ge.s32.totalorder %s25, 6
    %s35 = sphi 0, %s37
    %s38 = sphi 0, %s35
    %s39 = sphi 0, %s38
    %s55 = sphi 0, %s39
    %s59 = sphi 0, %s59
    %s61 = sphi 0, %s59
    %s62 = sphi 0, %s61
    %s76 = sphi 0, %s62
    %s80 = sphi 0, %s80
    %s82 = sphi 0, %s80
    %s83 = sphi 0, %s82
    %s97 = sphi 0, %s83
    %s101 = sphi 0, %s101
    %s103 = sphi 0, %s101
    %s104 = sphi 0, %s103
    %s118 = sphi 0, %s104
    %s122 = sphi 0, %s122
    %s124 = sphi 0, %s122
    %s125 = sphi 0, %s124
    %s139 = sphi 0, %s125
    %s143 = sphi 0, %s143
    %s145 = sphi 0, %s143
    %s146 = sphi 0, %s145
    %s160 = sphi 0, %s146
    %s164 = sphi 0, %s164
    %s166 = sphi 0, %s164
    %s167 = sphi 0, %s166
    %s181 = sphi 0, %s167
    %s185 = sphi 0, %s185
    %s187 = sphi 0, %s185
    %s188 = sphi 0, %s187
    %s202 = sphi 0, %s188
    %s206 = sphi 0, %s206
    %s208 = sphi 0, %s206
    %s209 = sphi 0, %s208
    %s223 = sphi 0, %s209
    %s227 = sphi 0, %s227
    %s229 = sphi 0, %s227
    %s230 = sphi 0, %s229
    %s244 = sphi 0, %s230
    %s248 = sphi 0, %s248
    %s250 = sphi 0, %s248
    %s251 = sphi 0, %s250
    %s265 = sphi 0, %s251
    %s269 = sphi 0, %s269
    %s271 = sphi 0, %s269
    %s272 = sphi 0, %s271
    %s286 = sphi 0, %s272
    %s290 = sphi 0, %s290
    %s292 = sphi 0, %s290
    %s293 = sphi 0, %s292
    %s307 = sphi 0, %s293
    %s311 = sphi 0, %s311
    %s313 = sphi 0, %s311
    %s314 = sphi 0, %s313
    %s328 = sphi 0, %s314
    %s332 = sphi 0, %s332
    %s334 = sphi 0, %s332
    %s335 = sphi 0, %s334
    %s349 = sphi 0, %s335
    %s353 = sphi 0, %s353
    %s355 = sphi 0, %s353
    %s356 = sphi 0, %s355
    %s370 = sphi 0, %s356
    %s374 = sphi 0, %s374
    %s376 = sphi 0, %s374
    %s377 = sphi 0, %s376
    %s391 = sphi 0, %s377
    %s395 = sphi 0, %s395
    %s397 = sphi 0, %s395
    %s398 = sphi 0, %s397
    %s412 = sphi 0, %s398
    %s416 = sphi 0, %s416
    %s418 = sphi 0, %s416
    %s419 = sphi 0, %s418
    %s433 = sphi 0, %s419
    %s439 = sphi 0, %s441
    %s442 = sphi 0, %s439
    %s443 = sphi 0, %s442
    %s459 = sphi 0, %s443
  $region4: #{tpu_custom_call.1} parent=0 // loop_header_branch
    %28 = sbr.rel (%p26) target = $region8
  $region5: #{tpu_custom_call.1} parent=0 // loop_body
    %s30 = ssub.s32 %s25, 1
    %s31 = ssub.s32 %s25, 2
    %s32 = sadd.s32 %s25, 1
    %s33 = ssub.s32 %s25, %s32
    %p34 = scmp.eq.s32.totalorder %s33, 0
    %s36 = sadd.s32 %s35, 1
    %s37 = scalar_select %p34, %s35, %s36
    %p40 = pneg %p34
    %p41 = scmp.eq.s32.totalorder %s25, 3
    %p42 = por %p40, %p41
    %p43 = scmp.ne.s32.totalorder %s35, %s38
    %p44 = scmp.eq.s32.totalorder %s25, 0
    %p45 = por %p43, %p44
    %p46 = scmp.ne.s32.totalorder %s35, %s38
    %p47 = scmp.eq.s32.totalorder %s30, 3
    %p48 = por %p46, %p47
    %p49 = scmp.ne.s32.totalorder %s38, %s39
    %p50 = scmp.eq.s32.totalorder %s30, 0
    %p51 = por %p49, %p50
    %p52 = scmp.ne.s32.totalorder %s38, %s39
    %p53 = scmp.eq.s32.totalorder %s31, 3
    %p54 = por %p52, %p53
    %p56 = scmp.ne.s32.totalorder %s39, %s55
    %p57 = scmp.eq.s32.totalorder %s31, 0
    %p58 = por %p56, %p57
    %s60 = sadd.s32 %s59, 1
    %p63 = scmp.eq.s32.totalorder %s25, 3
    %p64 = scmp.ne.s32.totalorder %s59, %s61
    %p65 = scmp.eq.s32.totalorder %s25, 0
    %p66 = por %p64, %p65
    %p67 = scmp.ne.s32.totalorder %s59, %s61
    %p68 = scmp.eq.s32.totalorder %s30, 3
    %p69 = por %p67, %p68
    %p70 = scmp.ne.s32.totalorder %s61, %s62
    %p71 = scmp.eq.s32.totalorder %s30, 0
    %p72 = por %p70, %p71
    %p73 = scmp.ne.s32.totalorder %s61, %s62
    %p74 = scmp.eq.s32.totalorder %s31, 3
    %p75 = por %p73, %p74
    %p77 = scmp.ne.s32.totalorder %s62, %s76
    %p78 = scmp.eq.s32.totalorder %s31, 0
    %p79 = por %p77, %p78
    %s81 = sadd.s32 %s80, 1
    %p84 = scmp.eq.s32.totalorder %s25, 3
    %p85 = scmp.ne.s32.totalorder %s80, %s82
    %p86 = scmp.eq.s32.totalorder %s25, 0
    %p87 = por %p85, %p86
    %p88 = scmp.ne.s32.totalorder %s80, %s82
    %p89 = scmp.eq.s32.totalorder %s30, 3
    %p90 = por %p88, %p89
    %p91 = scmp.ne.s32.totalorder %s82, %s83
    %p92 = scmp.eq.s32.totalorder %s30, 0
    %p93 = por %p91, %p92
    %p94 = scmp.ne.s32.totalorder %s82, %s83
    %p95 = scmp.eq.s32.totalorder %s31, 3
    %p96 = por %p94, %p95
    %p98 = scmp.ne.s32.totalorder %s83, %s97
    %p99 = scmp.eq.s32.totalorder %s31, 0
    %p100 = por %p98, %p99
    %s102 = sadd.s32 %s101, 1
    %p105 = scmp.eq.s32.totalorder %s25, 3
    %p106 = scmp.ne.s32.totalorder %s101, %s103
    %p107 = scmp.eq.s32.totalorder %s25, 0
    %p108 = por %p106, %p107
    %p109 = scmp.ne.s32.totalorder %s101, %s103
    %p110 = scmp.eq.s32.totalorder %s30, 3
    %p111 = por %p109, %p110
    %p112 = scmp.ne.s32.totalorder %s103, %s104
    %p113 = scmp.eq.s32.totalorder %s30, 0
    %p114 = por %p112, %p113
    %p115 = scmp.ne.s32.totalorder %s103, %s104
    %p116 = scmp.eq.s32.totalorder %s31, 3
    %p117 = por %p115, %p116
    %p119 = scmp.ne.s32.totalorder %s104, %s118
    %p120 = scmp.eq.s32.totalorder %s31, 0
    %p121 = por %p119, %p120
    %s123 = sadd.s32 %s122, 1
    %p126 = scmp.eq.s32.totalorder %s25, 3
    %p127 = scmp.ne.s32.totalorder %s122, %s124
    %p128 = scmp.eq.s32.totalorder %s25, 0
    %p129 = por %p127, %p128
    %p130 = scmp.ne.s32.totalorder %s122, %s124
    %p131 = scmp.eq.s32.totalorder %s30, 3
    %p132 = por %p130, %p131
    %p133 = scmp.ne.s32.totalorder %s124, %s125
    %p134 = scmp.eq.s32.totalorder %s30, 0
    %p135 = por %p133, %p134
    %p136 = scmp.ne.s32.totalorder %s124, %s125
    %p137 = scmp.eq.s32.totalorder %s31, 3
    %p138 = por %p136, %p137
    %p140 = scmp.ne.s32.totalorder %s125, %s139
    %p141 = scmp.eq.s32.totalorder %s31, 0
    %p142 = por %p140, %p141
    %s144 = sadd.s32 %s143, 1
    %p147 = scmp.eq.s32.totalorder %s25, 3
    %p148 = scmp.ne.s32.totalorder %s143, %s145
    %p149 = scmp.eq.s32.totalorder %s25, 0
    %p150 = por %p148, %p149
    %p151 = scmp.ne.s32.totalorder %s143, %s145
    %p152 = scmp.eq.s32.totalorder %s30, 3
    %p153 = por %p151, %p152
    %p154 = scmp.ne.s32.totalorder %s145, %s146
    %p155 = scmp.eq.s32.totalorder %s30, 0
    %p156 = por %p154, %p155
    %p157 = scmp.ne.s32.totalorder %s145, %s146
    %p158 = scmp.eq.s32.totalorder %s31, 3
    %p159 = por %p157, %p158
    %p161 = scmp.ne.s32.totalorder %s146, %s160
    %p162 = scmp.eq.s32.totalorder %s31, 0
    %p163 = por %p161, %p162
    %s165 = sadd.s32 %s164, 1
    %p168 = scmp.eq.s32.totalorder %s25, 3
    %p169 = scmp.ne.s32.totalorder %s164, %s166
    %p170 = scmp.eq.s32.totalorder %s25, 0
    %p171 = por %p169, %p170
    %p172 = scmp.ne.s32.totalorder %s164, %s166
    %p173 = scmp.eq.s32.totalorder %s30, 3
    %p174 = por %p172, %p173
    %p175 = scmp.ne.s32.totalorder %s166, %s167
    %p176 = scmp.eq.s32.totalorder %s30, 0
    %p177 = por %p175, %p176
    %p178 = scmp.ne.s32.totalorder %s166, %s167
    %p179 = scmp.eq.s32.totalorder %s31, 3
    %p180 = por %p178, %p179
    %p182 = scmp.ne.s32.totalorder %s167, %s181
    %p183 = scmp.eq.s32.totalorder %s31, 0
    %p184 = por %p182, %p183
    %s186 = sadd.s32 %s185, 1
    %p189 = scmp.eq.s32.totalorder %s25, 3
    %p190 = scmp.ne.s32.totalorder %s185, %s187
    %p191 = scmp.eq.s32.totalorder %s25, 0
    %p192 = por %p190, %p191
    %p193 = scmp.ne.s32.totalorder %s185, %s187
    %p194 = scmp.eq.s32.totalorder %s30, 3
    %p195 = por %p193, %p194
    %p196 = scmp.ne.s32.totalorder %s187, %s188
    %p197 = scmp.eq.s32.totalorder %s30, 0
    %p198 = por %p196, %p197
    %p199 = scmp.ne.s32.totalorder %s187, %s188
    %p200 = scmp.eq.s32.totalorder %s31, 3
    %p201 = por %p199, %p200
    %p203 = scmp.ne.s32.totalorder %s188, %s202
    %p204 = scmp.eq.s32.totalorder %s31, 0
    %p205 = por %p203, %p204
    %s207 = sadd.s32 %s206, 1
    %p210 = scmp.eq.s32.totalorder %s25, 3
    %p211 = scmp.ne.s32.totalorder %s206, %s208
    %p212 = scmp.eq.s32.totalorder %s25, 0
    %p213 = por %p211, %p212
    %p214 = scmp.ne.s32.totalorder %s206, %s208
    %p215 = scmp.eq.s32.totalorder %s30, 3
    %p216 = por %p214, %p215
    %p217 = scmp.ne.s32.totalorder %s208, %s209
    %p218 = scmp.eq.s32.totalorder %s30, 0
    %p219 = por %p217, %p218
    %p220 = scmp.ne.s32.totalorder %s208, %s209
    %p221 = scmp.eq.s32.totalorder %s31, 3
    %p222 = por %p220, %p221
    %p224 = scmp.ne.s32.totalorder %s209, %s223
    %p225 = scmp.eq.s32.totalorder %s31, 0
    %p226 = por %p224, %p225
    %s228 = sadd.s32 %s227, 1
    %p231 = scmp.eq.s32.totalorder %s25, 3
    %p232 = scmp.ne.s32.totalorder %s227, %s229
    %p233 = scmp.eq.s32.totalorder %s25, 0
    %p234 = por %p232, %p233
    %p235 = scmp.ne.s32.totalorder %s227, %s229
    %p236 = scmp.eq.s32.totalorder %s30, 3
    %p237 = por %p235, %p236
    %p238 = scmp.ne.s32.totalorder %s229, %s230
    %p239 = scmp.eq.s32.totalorder %s30, 0
    %p240 = por %p238, %p239
    %p241 = scmp.ne.s32.totalorder %s229, %s230
    %p242 = scmp.eq.s32.totalorder %s31, 3
    %p243 = por %p241, %p242
    %p245 = scmp.ne.s32.totalorder %s230, %s244
    %p246 = scmp.eq.s32.totalorder %s31, 0
    %p247 = por %p245, %p246
    %s249 = sadd.s32 %s248, 1
    %p252 = scmp.eq.s32.totalorder %s25, 3
    %p253 = scmp.ne.s32.totalorder %s248, %s250
    %p254 = scmp.eq.s32.totalorder %s25, 0
    %p255 = por %p253, %p254
    %p256 = scmp.ne.s32.totalorder %s248, %s250
    %p257 = scmp.eq.s32.totalorder %s30, 3
    %p258 = por %p256, %p257
    %p259 = scmp.ne.s32.totalorder %s250, %s251
    %p260 = scmp.eq.s32.totalorder %s30, 0
    %p261 = por %p259, %p260
    %p262 = scmp.ne.s32.totalorder %s250, %s251
    %p263 = scmp.eq.s32.totalorder %s31, 3
    %p264 = por %p262, %p263
    %p266 = scmp.ne.s32.totalorder %s251, %s265
    %p267 = scmp.eq.s32.totalorder %s31, 0
    %p268 = por %p266, %p267
    %s270 = sadd.s32 %s269, 1
    %p273 = scmp.eq.s32.totalorder %s25, 3
    %p274 = scmp.ne.s32.totalorder %s269, %s271
    %p275 = scmp.eq.s32.totalorder %s25, 0
    %p276 = por %p274, %p275
    %p277 = scmp.ne.s32.totalorder %s269, %s271
    %p278 = scmp.eq.s32.totalorder %s30, 3
    %p279 = por %p277, %p278
    %p280 = scmp.ne.s32.totalorder %s271, %s272
    %p281 = scmp.eq.s32.totalorder %s30, 0
    %p282 = por %p280, %p281
    %p283 = scmp.ne.s32.totalorder %s271, %s272
    %p284 = scmp.eq.s32.totalorder %s31, 3
    %p285 = por %p283, %p284
    %p287 = scmp.ne.s32.totalorder %s272, %s286
    %p288 = scmp.eq.s32.totalorder %s31, 0
    %p289 = por %p287, %p288
    %s291 = sadd.s32 %s290, 1
    %p294 = scmp.eq.s32.totalorder %s25, 3
    %p295 = scmp.ne.s32.totalorder %s290, %s292
    %p296 = scmp.eq.s32.totalorder %s25, 0
    %p297 = por %p295, %p296
    %p298 = scmp.ne.s32.totalorder %s290, %s292
    %p299 = scmp.eq.s32.totalorder %s30, 3
    %p300 = por %p298, %p299
    %p301 = scmp.ne.s32.totalorder %s292, %s293
    %p302 = scmp.eq.s32.totalorder %s30, 0
    %p303 = por %p301, %p302
    %p304 = scmp.ne.s32.totalorder %s292, %s293
    %p305 = scmp.eq.s32.totalorder %s31, 3
    %p306 = por %p304, %p305
    %p308 = scmp.ne.s32.totalorder %s293, %s307
    %p309 = scmp.eq.s32.totalorder %s31, 0
    %p310 = por %p308, %p309
    %s312 = sadd.s32 %s311, 1
    %p315 = scmp.eq.s32.totalorder %s25, 3
    %p316 = scmp.ne.s32.totalorder %s311, %s313
    %p317 = scmp.eq.s32.totalorder %s25, 0
    %p318 = por %p316, %p317
    %p319 = scmp.ne.s32.totalorder %s311, %s313
    %p320 = scmp.eq.s32.totalorder %s30, 3
    %p321 = por %p319, %p320
    %p322 = scmp.ne.s32.totalorder %s313, %s314
    %p323 = scmp.eq.s32.totalorder %s30, 0
    %p324 = por %p322, %p323
    %p325 = scmp.ne.s32.totalorder %s313, %s314
    %p326 = scmp.eq.s32.totalorder %s31, 3
    %p327 = por %p325, %p326
    %p329 = scmp.ne.s32.totalorder %s314, %s328
    %p330 = scmp.eq.s32.totalorder %s31, 0
    %p331 = por %p329, %p330
    %s333 = sadd.s32 %s332, 1
    %p336 = scmp.eq.s32.totalorder %s25, 3
    %p337 = scmp.ne.s32.totalorder %s332, %s334
    %p338 = scmp.eq.s32.totalorder %s25, 0
    %p339 = por %p337, %p338
    %p340 = scmp.ne.s32.totalorder %s332, %s334
    %p341 = scmp.eq.s32.totalorder %s30, 3
    %p342 = por %p340, %p341
    %p343 = scmp.ne.s32.totalorder %s334, %s335
    %p344 = scmp.eq.s32.totalorder %s30, 0
    %p345 = por %p343, %p344
    %p346 = scmp.ne.s32.totalorder %s334, %s335
    %p347 = scmp.eq.s32.totalorder %s31, 3
    %p348 = por %p346, %p347
    %p350 = scmp.ne.s32.totalorder %s335, %s349
    %p351 = scmp.eq.s32.totalorder %s31, 0
    %p352 = por %p350, %p351
    %s354 = sadd.s32 %s353, 1
    %p357 = scmp.eq.s32.totalorder %s25, 3
    %p358 = scmp.ne.s32.totalorder %s353, %s355
    %p359 = scmp.eq.s32.totalorder %s25, 0
    %p360 = por %p358, %p359
    %p361 = scmp.ne.s32.totalorder %s353, %s355
    %p362 = scmp.eq.s32.totalorder %s30, 3
    %p363 = por %p361, %p362
    %p364 = scmp.ne.s32.totalorder %s355, %s356
    %p365 = scmp.eq.s32.totalorder %s30, 0
    %p366 = por %p364, %p365
    %p367 = scmp.ne.s32.totalorder %s355, %s356
    %p368 = scmp.eq.s32.totalorder %s31, 3
    %p369 = por %p367, %p368
    %p371 = scmp.ne.s32.totalorder %s356, %s370
    %p372 = scmp.eq.s32.totalorder %s31, 0
    %p373 = por %p371, %p372
    %s375 = sadd.s32 %s374, 1
    %p378 = scmp.eq.s32.totalorder %s25, 3
    %p379 = scmp.ne.s32.totalorder %s374, %s376
    %p380 = scmp.eq.s32.totalorder %s25, 0
    %p381 = por %p379, %p380
    %p382 = scmp.ne.s32.totalorder %s374, %s376
    %p383 = scmp.eq.s32.totalorder %s30, 3
    %p384 = por %p382, %p383
    %p385 = scmp.ne.s32.totalorder %s376, %s377
    %p386 = scmp.eq.s32.totalorder %s30, 0
    %p387 = por %p385, %p386
    %p388 = scmp.ne.s32.totalorder %s376, %s377
    %p389 = scmp.eq.s32.totalorder %s31, 3
    %p390 = por %p388, %p389
    %p392 = scmp.ne.s32.totalorder %s377, %s391
    %p393 = scmp.eq.s32.totalorder %s31, 0
    %p394 = por %p392, %p393
    %s396 = sadd.s32 %s395, 1
    %p399 = scmp.eq.s32.totalorder %s25, 3
    %p400 = scmp.ne.s32.totalorder %s395, %s397
    %p401 = scmp.eq.s32.totalorder %s25, 0
    %p402 = por %p400, %p401
    %p403 = scmp.ne.s32.totalorder %s395, %s397
    %p404 = scmp.eq.s32.totalorder %s30, 3
    %p405 = por %p403, %p404
    %p406 = scmp.ne.s32.totalorder %s397, %s398
    %p407 = scmp.eq.s32.totalorder %s30, 0
    %p408 = por %p406, %p407
    %p409 = scmp.ne.s32.totalorder %s397, %s398
    %p410 = scmp.eq.s32.totalorder %s31, 3
    %p411 = por %p409, %p410
    %p413 = scmp.ne.s32.totalorder %s398, %s412
    %p414 = scmp.eq.s32.totalorder %s31, 0
    %p415 = por %p413, %p414
    %s417 = sadd.s32 %s416, 1
    %p420 = scmp.eq.s32.totalorder %s25, 3
    %p421 = scmp.ne.s32.totalorder %s416, %s418
    %p422 = scmp.eq.s32.totalorder %s25, 0
    %p423 = por %p421, %p422
    %p424 = scmp.ne.s32.totalorder %s416, %s418
    %p425 = scmp.eq.s32.totalorder %s30, 3
    %p426 = por %p424, %p425
    %p427 = scmp.ne.s32.totalorder %s418, %s419
    %p428 = scmp.eq.s32.totalorder %s30, 0
    %p429 = por %p427, %p428
    %p430 = scmp.ne.s32.totalorder %s418, %s419
    %p431 = scmp.eq.s32.totalorder %s31, 3
    %p432 = por %p430, %p431
    %p434 = scmp.ne.s32.totalorder %s419, %s433
    %p435 = scmp.eq.s32.totalorder %s31, 0
    %p436 = por %p434, %p435
    %s437 = ssub.s32 %s25, %s32
    %p438 = scmp.eq.s32.totalorder %s437, 0
    %s440 = sadd.s32 %s439, 1
    %s441 = scalar_select %p438, %s439, %s440
    %p444 = pneg %p438
    %p445 = scmp.eq.s32.totalorder %s25, 3
    %p446 = por %p444, %p445
    %p447 = scmp.ne.s32.totalorder %s439, %s442
    %p448 = scmp.eq.s32.totalorder %s25, 0
    %p449 = por %p447, %p448
    %p450 = scmp.ne.s32.totalorder %s439, %s442
    %p451 = scmp.eq.s32.totalorder %s30, 3
    %p452 = por %p450, %p451
    %p453 = scmp.ne.s32.totalorder %s442, %s443
    %p454 = scmp.eq.s32.totalorder %s30, 0
    %p455 = por %p453, %p454
    %p456 = scmp.ne.s32.totalorder %s442, %s443
    %p457 = scmp.eq.s32.totalorder %s31, 3
    %p458 = por %p456, %p457
    %p460 = scmp.ne.s32.totalorder %s443, %s459
    %p461 = scmp.eq.s32.totalorder %s31, 0
    %p462 = por %p460, %p461
    %p463 = scmp.le.s32.totalorder 1, %s25
    %p464 = scmp.lt.s32.totalorder %s25, 5
    %p465 = pnand %p463, %p464
    %p466 = pneg %p465
    // Predicated region
    $region9: #{tpu_custom_call.1} parent=5 // pred_check
      _
    $region10: #{tpu_custom_call.1} parent=5 // pred_check_branch
      %468 = sbr.rel (%p465) target = $region12
    $region11: #{tpu_custom_call.1} parent=5 // pred_region
      %s469 = ssub.s32 %s25, 1
      // Predicated region
      $region13: #{tpu_custom_call.1} parent=11 // pred_check
        %p470 = pneg %p72
      $region14: #{tpu_custom_call.1} parent=11 // pred_check_branch
        %472 = sbr.rel (%p470) target = $region16
      $region15: #{tpu_custom_call.1} parent=11 // pred_region
        _
      $region16: #{tpu_custom_call.1} parent=11 // pred_fallthru
        _
      // Predicated region
      $region17: #{tpu_custom_call.1} parent=11 // pred_check
        %p473 = pneg %p93
      $region18: #{tpu_custom_call.1} parent=11 // pred_check_branch
        %475 = sbr.rel (%p473) target = $region20
      $region19: #{tpu_custom_call.1} parent=11 // pred_region
        _
      $region20: #{tpu_custom_call.1} parent=11 // pred_fallthru
        _
      // Predicated region
      $region21: #{tpu_custom_call.1} parent=11 // pred_check
        %p476 = pneg %p114
      $region22: #{tpu_custom_call.1} parent=11 // pred_check_branch
        %478 = sbr.rel (%p476) target = $region24
      $region23: #{tpu_custom_call.1} parent=11 // pred_region
        _
      $region24: #{tpu_custom_call.1} parent=11 // pred_fallthru
        _
      // Predicated region
      $region25: #{tpu_custom_call.1} parent=11 // pred_check
        %p479 = pneg %p135
      $region26: #{tpu_custom_call.1} parent=11 // pred_check_branch
        %481 = sbr.rel (%p479) target = $region28
      $region27: #{tpu_custom_call.1} parent=11 // pred_region
        _
      $region28: #{tpu_custom_call.1} parent=11 // pred_fallthru
        _
      // Predicated region
      $region29: #{tpu_custom_call.1} parent=11 // pred_check
        %p482 = pneg %p156
      $region30: #{tpu_custom_call.1} parent=11 // pred_check_branch
        %484 = sbr.rel (%p482) target = $region32
      $region31: #{tpu_custom_call.1} parent=11 // pred_region
        _
      $region32: #{tpu_custom_call.1} parent=11 // pred_fallthru
        _
      // Predicated region
      $region33: #{tpu_custom_call.1} parent=11 // pred_check
        %p485 = pneg %p177
      $region34: #{tpu_custom_call.1} parent=11 // pred_check_branch
        %487 = sbr.rel (%p485) target = $region36
      $region35: #{tpu_custom_call.1} parent=11 // pred_region
        _
      $region36: #{tpu_custom_call.1} parent=11 // pred_fallthru
        _
      // Predicated region
      $region37: #{tpu_custom_call.1} parent=11 // pred_check
        %p488 = pneg %p198
      $region38: #{tpu_custom_call.1} parent=11 // pred_check_branch
        %490 = sbr.rel (%p488) target = $region40
      $region39: #{tpu_custom_call.1} parent=11 // pred_region
        _
      $region40: #{tpu_custom_call.1} parent=11 // pred_fallthru
        _
      // Predicated region
      $region41: #{tpu_custom_call.1} parent=11 // pred_check
        %p491 = pneg %p219
      $region42: #{tpu_custom_call.1} parent=11 // pred_check_branch
        %493 = sbr.rel (%p491) target = $region44
      $region43: #{tpu_custom_call.1} parent=11 // pred_region
        _
      $region44: #{tpu_custom_call.1} parent=11 // pred_fallthru
        _
      // Predicated region
      $region45: #{tpu_custom_call.1} parent=11 // pred_check
        %p494 = pneg %p240
      $region46: #{tpu_custom_call.1} parent=11 // pred_check_branch
        %496 = sbr.rel (%p494) target = $region48
      $region47: #{tpu_custom_call.1} parent=11 // pred_region
        _
      $region48: #{tpu_custom_call.1} parent=11 // pred_fallthru
        _
      // Predicated region
      $region49: #{tpu_custom_call.1} parent=11 // pred_check
        %p497 = pneg %p261
      $region50: #{tpu_custom_call.1} parent=11 // pred_check_branch
        %499 = sbr.rel (%p497) target = $region52
      $region51: #{tpu_custom_call.1} parent=11 // pred_region
        _
      $region52: #{tpu_custom_call.1} parent=11 // pred_fallthru
        _
      // Predicated region
      $region53: #{tpu_custom_call.1} parent=11 // pred_check
        %p500 = pneg %p282
      $region54: #{tpu_custom_call.1} parent=11 // pred_check_branch
        %502 = sbr.rel (%p500) target = $region56
      $region55: #{tpu_custom_call.1} parent=11 // pred_region
        _
      $region56: #{tpu_custom_call.1} parent=11 // pred_fallthru
        _
      // Predicated region
      $region57: #{tpu_custom_call.1} parent=11 // pred_check
        %p503 = pneg %p303
      $region58: #{tpu_custom_call.1} parent=11 // pred_check_branch
        %505 = sbr.rel (%p503) target = $region60
      $region59: #{tpu_custom_call.1} parent=11 // pred_region
        _
      $region60: #{tpu_custom_call.1} parent=11 // pred_fallthru
        _
      // Predicated region
      $region61: #{tpu_custom_call.1} parent=11 // pred_check
        %p506 = pneg %p324
      $region62: #{tpu_custom_call.1} parent=11 // pred_check_branch
        %508 = sbr.rel (%p506) target = $region64
      $region63: #{tpu_custom_call.1} parent=11 // pred_region
        _
      $region64: #{tpu_custom_call.1} parent=11 // pred_fallthru
        _
      // Predicated region
      $region65: #{tpu_custom_call.1} parent=11 // pred_check
        %p509 = pneg %p345
      $region66: #{tpu_custom_call.1} parent=11 // pred_check_branch
        %511 = sbr.rel (%p509) target = $region68
      $region67: #{tpu_custom_call.1} parent=11 // pred_region
        _
      $region68: #{tpu_custom_call.1} parent=11 // pred_fallthru
        _
      // Predicated region
      $region69: #{tpu_custom_call.1} parent=11 // pred_check
        %p512 = pneg %p366
      $region70: #{tpu_custom_call.1} parent=11 // pred_check_branch
        %514 = sbr.rel (%p512) target = $region72
      $region71: #{tpu_custom_call.1} parent=11 // pred_region
        _
      $region72: #{tpu_custom_call.1} parent=11 // pred_fallthru
        _
      // Predicated region
      $region73: #{tpu_custom_call.1} parent=11 // pred_check
        %p515 = pneg %p387
      $region74: #{tpu_custom_call.1} parent=11 // pred_check_branch
        %517 = sbr.rel (%p515) target = $region76
      $region75: #{tpu_custom_call.1} parent=11 // pred_region
        _
      $region76: #{tpu_custom_call.1} parent=11 // pred_fallthru
        _
      // Predicated region
      $region77: #{tpu_custom_call.1} parent=11 // pred_check
        %p518 = pneg %p408
      $region78: #{tpu_custom_call.1} parent=11 // pred_check_branch
        %520 = sbr.rel (%p518) target = $region80
      $region79: #{tpu_custom_call.1} parent=11 // pred_region
        _
      $region80: #{tpu_custom_call.1} parent=11 // pred_fallthru
        _
      // Predicated region
      $region81: #{tpu_custom_call.1} parent=11 // pred_check
        %p521 = pneg %p429
      $region82: #{tpu_custom_call.1} parent=11 // pred_check_branch
        %523 = sbr.rel (%p521) target = $region84
      $region83: #{tpu_custom_call.1} parent=11 // pred_region
        _
      $region84: #{tpu_custom_call.1} parent=11 // pred_fallthru
        _
    $region12: #{tpu_custom_call.1} parent=5 // pred_fallthru
      _
    %p524 = scmp.lt.s32.totalorder %s25, 4
    // Predicated region
    $region85: #{tpu_custom_call.1} parent=5 // pred_check
      %p525 = pneg %p524
    $region86: #{tpu_custom_call.1} parent=5 // pred_check_branch
      %527 = sbr.rel (%p525) target = $region88
    $region87: #{tpu_custom_call.1} parent=5 // pred_region
      // Predicated region
      $region89: #{tpu_custom_call.1} parent=87 // pred_check
        %p528 = pneg %p45
      $region90: #{tpu_custom_call.1} parent=87 // pred_check_branch
        %530 = sbr.rel (%p528) target = $region92
      $region91: #{tpu_custom_call.1} parent=87 // pred_region
        %s531 = smul.u32 64, %s25
        %p532 = scmp.lt.s32.totalorder %s531, 255
        %s533 = scalar_select %p532, %s531, 255
        %s534 = smul.addr %s533, 8
        %s535 = scalar_lea.vmem %s0, %s534
        %s536 = smul.u32 64, %s25
      $region92: #{tpu_custom_call.1} parent=87 // pred_fallthru
        _
    $region88: #{tpu_custom_call.1} parent=5 // pred_fallthru
      _
    %p537 = scmp.le.s32.totalorder 1, %s25
    %p538 = scmp.lt.s32.totalorder %s25, 5
    %p539 = pnand %p537, %p538
    %p540 = pneg %p539
    // Predicated region
    $region93: #{tpu_custom_call.1} parent=5 // pred_check
      _
    $region94: #{tpu_custom_call.1} parent=5 // pred_check_branch
      %542 = sbr.rel (%p539) target = $region96
    $region95: #{tpu_custom_call.1} parent=5 // pred_region
      %s543 = ssub.s32 %s25, 1
      %s544 = smul.u32 64, %s30
      %p545 = scmp.lt.s32.totalorder %s544, 255
      %s546 = scalar_select %p545, %s544, 255
      %s547 = smul.addr %s546, 8
      %s548 = scalar_lea.vmem %s0, %s547
      %p549 = pneg %p51
      %p550 = pneg %p48
      %p551 = pneg %p72
      %p552 = pneg %p69
      %p553 = pneg %p93
      %p554 = pneg %p90
      %p555 = pneg %p114
      %p556 = pneg %p111
      %p557 = pneg %p135
      %p558 = pneg %p132
      %p559 = pneg %p156
      %p560 = pneg %p153
      %p561 = pneg %p177
      %p562 = pneg %p174
      %p563 = pneg %p198
      %p564 = pneg %p195
      %p565 = pneg %p219
      %p566 = pneg %p216
      %p567 = pneg %p240
      %p568 = pneg %p237
      %p569 = pneg %p261
      %p570 = pneg %p258
      %p571 = pneg %p282
      %p572 = pneg %p279
      %p573 = pneg %p303
      %p574 = pneg %p300
      %p575 = pneg %p324
      %p576 = pneg %p321
      %p577 = pneg %p345
      %p578 = pneg %p342
      %p579 = pneg %p366
      %p580 = pneg %p363
      %p581 = pneg %p387
      %p582 = pneg %p384
      %p583 = pneg %p408
      %p584 = pneg %p405
      %p585 = pneg %p429
      %p586 = pneg %p426
      %p587 = pneg %p455
      %p588 = pneg %p452
      %s589 = smul.u32 64, %s30
      %p590 = scmp.lt.s32.totalorder %s589, 255
      %s591 = scalar_select %p590, %s589, 255
      %s592 = smul.addr %s591, 8
      %s593 = scalar_lea.vmem %s19, %s592
      %s594 = smul.u32 64, %s30
      %p595 = scmp.lt.s32.totalorder %s594, 255
      %s596 = scalar_select %p595, %s594, 255
      %s597 = smul.addr %s596, 8
      %s598 = scalar_lea.vmem %s0, %s597
      %s599 = smul.u32 64, %s30
      %s600 = smul.u32 64, %s30
      %p601 = scmp.lt.s32.totalorder %s600, 255
      %s602 = scalar_select %p601, %s600, 255
      %s603 = smul.addr %s602, 8
      %s604 = scalar_lea.vmem %s19, %s603
      %s605 = smul.u32 64, %s30
      %v607 = vld [vmem:[%s598] sm:$0xff]
      %v608 = vld [vmem:[%s598 + $0x8] sm:$0xff]
      %v609 = vld [vmem:[%s598 + $0x10] sm:$0xff]
      %v610 = vld [vmem:[%s598 + $0x18] sm:$0xff]
      %v611 = vld [vmem:[%s598 + $0x20] sm:$0xff]
      %v612 = vld [vmem:[%s598 + $0x28] sm:$0xff]
      %v613 = vld [vmem:[%s598 + $0x30] sm:$0xff]
      %v614 = vld [vmem:[%s598 + $0x38] sm:$0xff]
      %v615 = vld [vmem:[%s598 + $0x40] sm:$0xff]
      %v616 = vld [vmem:[%s598 + $0x48] sm:$0xff]
      %v617 = vld [vmem:[%s598 + $0x50] sm:$0xff]
      %v618 = vld [vmem:[%s598 + $0x58] sm:$0xff]
      %v619 = vld [vmem:[%s598 + $0x60] sm:$0xff]
      %v620 = vld [vmem:[%s598 + $0x68] sm:$0xff]
      %v621 = vld [vmem:[%s598 + $0x70] sm:$0xff]
      %v622 = vld [vmem:[%s598 + $0x78] sm:$0xff]
      %v623 = vld [vmem:[%s598 + $0x80] sm:$0xff]
      %v624 = vld [vmem:[%s598 + $0x88] sm:$0xff]
      %v625 = vld [vmem:[%s598 + $0x90] sm:$0xff]
      %v626 = vld [vmem:[%s598 + $0x98] sm:$0xff]
      %v627 = vld [vmem:[%s598 + $0xa0] sm:$0xff]
      %v628 = vld [vmem:[%s598 + $0xa8] sm:$0xff]
      %v629 = vld [vmem:[%s598 + $0xb0] sm:$0xff]
      %v630 = vld [vmem:[%s598 + $0xb8] sm:$0xff]
      %v631 = vld [vmem:[%s598 + $0xc0] sm:$0xff]
      %v632 = vld [vmem:[%s598 + $0xc8] sm:$0xff]
      %v633 = vld [vmem:[%s598 + $0xd0] sm:$0xff]
      %v634 = vld [vmem:[%s598 + $0xd8] sm:$0xff]
      %v635 = vld [vmem:[%s598 + $0xe0] sm:$0xff]
      %v636 = vld [vmem:[%s598 + $0xe8] sm:$0xff]
      %v637 = vld [vmem:[%s598 + $0xf0] sm:$0xff]
      %v638 = vld [vmem:[%s598 + $0xf8] sm:$0xff]
      %v639 = vld [vmem:[%s598 + $0x100] sm:$0xff]
      %v640 = vld [vmem:[%s598 + $0x108] sm:$0xff]
      %v641 = vld [vmem:[%s598 + $0x110] sm:$0xff]
      %v642 = vld [vmem:[%s598 + $0x118] sm:$0xff]
      %v643 = vld [vmem:[%s598 + $0x120] sm:$0xff]
      %v644 = vld [vmem:[%s598 + $0x128] sm:$0xff]
      %v645 = vld [vmem:[%s598 + $0x130] sm:$0xff]
      %v646 = vld [vmem:[%s598 + $0x138] sm:$0xff]
      %v647 = vld [vmem:[%s598 + $0x140] sm:$0xff]
      %v648 = vld [vmem:[%s598 + $0x148] sm:$0xff]
      %v649 = vld [vmem:[%s598 + $0x150] sm:$0xff]
      %v650 = vld [vmem:[%s598 + $0x158] sm:$0xff]
      %v651 = vld [vmem:[%s598 + $0x160] sm:$0xff]
      %v652 = vld [vmem:[%s598 + $0x168] sm:$0xff]
      %v653 = vld [vmem:[%s598 + $0x170] sm:$0xff]
      %v654 = vld [vmem:[%s598 + $0x178] sm:$0xff]
      %v655 = vld [vmem:[%s598 + $0x180] sm:$0xff]
      %v656 = vld [vmem:[%s598 + $0x188] sm:$0xff]
      %v657 = vld [vmem:[%s598 + $0x190] sm:$0xff]
      %v658 = vld [vmem:[%s598 + $0x198] sm:$0xff]
      %v659 = vld [vmem:[%s598 + $0x1a0] sm:$0xff]
      %v660 = vld [vmem:[%s598 + $0x1a8] sm:$0xff]
      %v661 = vld [vmem:[%s598 + $0x1b0] sm:$0xff]
      %v662 = vld [vmem:[%s598 + $0x1b8] sm:$0xff]
      %v663 = vld [vmem:[%s598 + $0x1c0] sm:$0xff]
      %v664 = vld [vmem:[%s598 + $0x1c8] sm:$0xff]
      %v665 = vld [vmem:[%s598 + $0x1d0] sm:$0xff]
      %v666 = vld [vmem:[%s598 + $0x1d8] sm:$0xff]
      %v667 = vld [vmem:[%s598 + $0x1e0] sm:$0xff]
      %v668 = vld [vmem:[%s598 + $0x1e8] sm:$0xff]
      %v669 = vld [vmem:[%s598 + $0x1f0] sm:$0xff]
      %v670 = vld [vmem:[%s598 + $0x1f8] sm:$0xff]
      %v671 = vld [vmem:[%s1] sm:$0x77]
      %v672 = vld [vmem:[%s1 + $0x8] sm:$0x77]
      %v675 = vcombine.high %v671, %v671
      %v676 = vcombine.high %v672, %v672
      %vm677 = vcmask 23552
      %v679 = vsel %vm677, %v607, 0
      %v682 = vsel %vm677, %v608, 0
      %v685 = vsel %vm677, %v609, 0
      %v688 = vsel %vm677, %v610, 0
      %v691 = vsel %vm677, %v611, 0
      %v694 = vsel %vm677, %v612, 0
      %v697 = vsel %vm677, %v613, 0
      %v700 = vsel %vm677, %v614, 0
      %v703 = vsel %vm677, %v615, 0
      %v706 = vsel %vm677, %v616, 0
      %v709 = vsel %vm677, %v617, 0
      %v712 = vsel %vm677, %v618, 0
      %v715 = vsel %vm677, %v619, 0
      %v718 = vsel %vm677, %v620, 0
      %v721 = vsel %vm677, %v621, 0
      %v724 = vsel %vm677, %v622, 0
      %v727 = vsel %vm677, %v623, 0
      %v730 = vsel %vm677, %v624, 0
      %v733 = vsel %vm677, %v625, 0
      %v736 = vsel %vm677, %v626, 0
      %v739 = vsel %vm677, %v627, 0
      %v742 = vsel %vm677, %v628, 0
      %v745 = vsel %vm677, %v629, 0
      %v748 = vsel %vm677, %v630, 0
      %v751 = vsel %vm677, %v631, 0
      %v754 = vsel %vm677, %v632, 0
      %v757 = vsel %vm677, %v633, 0
      %v760 = vsel %vm677, %v634, 0
      %v763 = vsel %vm677, %v635, 0
      %v766 = vsel %vm677, %v636, 0
      %v769 = vsel %vm677, %v637, 0
      %v772 = vsel %vm677, %v638, 0
      %v775 = vsel %vm677, %v639, 0
      %v778 = vsel %vm677, %v640, 0
      %v781 = vsel %vm677, %v641, 0
      %v784 = vsel %vm677, %v642, 0
      %v787 = vsel %vm677, %v643, 0
      %v790 = vsel %vm677, %v644, 0
      %v793 = vsel %vm677, %v645, 0
      %v796 = vsel %vm677, %v646, 0
      %v799 = vsel %vm677, %v647, 0
      %v802 = vsel %vm677, %v648, 0
      %v805 = vsel %vm677, %v649, 0
      %v808 = vsel %vm677, %v650, 0
      %v811 = vsel %vm677, %v651, 0
      %v814 = vsel %vm677, %v652, 0
      %v817 = vsel %vm677, %v653, 0
      %v820 = vsel %vm677, %v654, 0
      %v823 = vsel %vm677, %v655, 0
      %v826 = vsel %vm677, %v656, 0
      %v829 = vsel %vm677, %v657, 0
      %v832 = vsel %vm677, %v658, 0
      %v835 = vsel %vm677, %v659, 0
      %v838 = vsel %vm677, %v660, 0
      %v841 = vsel %vm677, %v661, 0
      %v844 = vsel %vm677, %v662, 0
      %v847 = vsel %vm677, %v663, 0
      %v850 = vsel %vm677, %v664, 0
      %v853 = vsel %vm677, %v665, 0
      %v856 = vsel %vm677, %v666, 0
      %v859 = vsel %vm677, %v667, 0
      %v862 = vsel %vm677, %v668, 0
      %v865 = vsel %vm677, %v669, 0
      %v868 = vsel %vm677, %v670, 0
      %vm870 = vcmask 1042432
      %v871 = vsel %vm870, %v671, 0
      %v873 = vsel %vm870, %v675, 0
      %v875 = vsel %vm870, %v672, 0
      %v877 = vsel %vm870, %v676, 0
      %879 = vmatprep.subr.mxu0 %v873
      %880 = vmatpush1.msra.mxu0 %v871
      %881 = vmatprep.subr.mxu0 0.0
      %882 = vmatpush1.msra.mxu0 0.0
      %883 = vmatprep.subr.mxu0 0.0
      %884 = vmatpush1.msra.mxu0 0.0
      %885 = vmatprep.subr.mxu0 0.0
      %886 = vmatpush1.msra.mxu0 0.0
      %887 = vmatprep.subr.mxu0 0.0
      %888 = vmatpush1.msra.mxu0 0.0
      %889 = vmatprep.subr.mxu0 0.0
      %890 = vmatpush1.msra.mxu0 0.0
      %891 = vmatprep.subr.mxu0 0.0
      %892 = vmatpush1.msra.mxu0 0.0
      %893 = vmatprep.subr.mxu0 0.0
      %894 = vmatpush1.msra.mxu0 0.0
      %895 = vmatprep.subr.mxu0 0.0
      %896 = vmatpush1.msra.mxu0 0.0
      %897 = vmatprep.subr.mxu0 0.0
      %898 = vmatpush1.msra.mxu0 0.0
      %899 = vmatprep.subr.mxu0 0.0
      %900 = vmatpush1.msra.mxu0 0.0
      %901 = vmatprep.subr.mxu0 0.0
      %902 = vmatpush1.msra.mxu0 0.0
      %903 = vmatprep.subr.mxu0 0.0
      %904 = vmatpush1.msra.mxu0 0.0
      %905 = vmatprep.subr.mxu0 0.0
      %906 = vmatpush1.msra.mxu0 0.0
      %907 = vmatprep.subr.mxu0 0.0
      %908 = vmatpush1.msra.mxu0 0.0
      %909 = vmatprep.subr.mxu0 0.0
      %910 = vmatpush1.msra.mxu0 0.0
      %911 = vmatprep.subr.mxu0 0.0
      %912 = vmatpush1.msra.mxu0 0.0
      %913 = vmatprep.subr.mxu0 0.0
      %914 = vmatpush1.msra.mxu0 0.0
      %915 = vmatprep.subr.mxu0 0.0
      %916 = vmatpush1.msra.mxu0 0.0
      %917 = vmatprep.subr.mxu0 0.0
      %918 = vmatpush1.msra.mxu0 0.0
      %919 = vmatprep.subr.mxu0 0.0
      %920 = vmatpush1.msra.mxu0 0.0
      %921 = vmatprep.subr.mxu0 0.0
      %922 = vmatpush1.msra.mxu0 0.0
      %923 = vmatprep.subr.mxu0 0.0
      %924 = vmatpush1.msra.mxu0 0.0
      %925 = vmatprep.subr.mxu0 0.0
      %926 = vmatpush1.msra.mxu0 0.0
      %927 = vmatprep.subr.mxu0 0.0
      %928 = vmatpush1.msra.mxu0 0.0
      %929 = vmatprep.subr.mxu0 0.0
      %930 = vmatpush1.msra.mxu0 0.0
      %931 = vmatprep.subr.mxu0 0.0
      %932 = vmatpush1.msra.mxu0 0.0
      %933 = vmatprep.subr.mxu0 0.0
      %934 = vmatpush1.msra.mxu0 0.0
      %935 = vmatprep.subr.mxu0 0.0
      %936 = vmatpush1.msra.mxu0 0.0
      %937 = vmatprep.subr.mxu0 0.0
      %938 = vmatpush1.msra.mxu0 0.0
      %939 = vmatprep.subr.mxu0 0.0
      %940 = vmatpush1.msra.mxu0 0.0
      %941 = vmatprep.subr.mxu0 0.0
      %942 = vmatpush1.msra.mxu0 0.0
      %943 = vmatprep.mubr.f32.mxu0 0.0
      %944 = vmatmul.mubr.f32.gmra.mrb[0].mxu0 %v679
      %v945 = vpop.f32.mrb[0].mxu0
      %v946 = vadd.f32 0.0, %v945
      %v947 = vpop.f32.mrb[0].mxu0
      %v948 = vadd.f32 0.0, %v947
      %949 = vmatprep.mubr.f32.mxu0 0.0
      %950 = vmatmul.mubr.f32.gmra.mrb[0].mxu0 %v682
      %v951 = vpop.f32.mrb[0].mxu0
      %v952 = vadd.f32 0.0, %v951
      %v953 = vpop.f32.mrb[0].mxu0
      %v954 = vadd.f32 0.0, %v953
      %955 = vmatprep.mubr.f32.mxu0 0.0
      %956 = vmatmul.mubr.f32.gmra.mrb[0].mxu0 %v685
      %v957 = vpop.f32.mrb[0].mxu0
      %v958 = vadd.f32 0.0, %v957
      %v959 = vpop.f32.mrb[0].mxu0
      %v960 = vadd.f32 0.0, %v959
      %961 = vmatprep.mubr.f32.mxu0 0.0
      %962 = vmatmul.mubr.f32.gmra.mrb[0].mxu0 %v688
      %v963 = vpop.f32.mrb[0].mxu0
      %v964 = vadd.f32 0.0, %v963
      %v965 = vpop.f32.mrb[0].mxu0
      %v966 = vadd.f32 0.0, %v965
      %967 = vmatprep.mubr.f32.mxu0 0.0
      %968 = vmatmul.mubr.f32.gmra.mrb[0].mxu0 %v691
      %v969 = vpop.f32.mrb[0].mxu0
      %v970 = vadd.f32 0.0, %v969
      %v971 = vpop.f32.mrb[0].mxu0
      %v972 = vadd.f32 0.0, %v971
      %973 = vmatprep.mubr.f32.mxu0 0.0
      %974 = vmatmul.mubr.f32.gmra.mrb[0].mxu0 %v694
      %v975 = vpop.f32.mrb[0].mxu0
      %v976 = vadd.f32 0.0, %v975
      %v977 = vpop.f32.mrb[0].mxu0
      %v978 = vadd.f32 0.0, %v977
      %979 = vmatprep.mubr.f32.mxu0 0.0
      %980 = vmatmul.mubr.f32.gmra.mrb[0].mxu0 %v697
      %v981 = vpop.f32.mrb[0].mxu0
      %v982 = vadd.f32 0.0, %v981
      %v983 = vpop.f32.mrb[0].mxu0
      %v984 = vadd.f32 0.0, %v983
      %985 = vmatprep.mubr.f32.mxu0 0.0
      %986 = vmatmul.mubr.f32.gmra.mrb[0].mxu0 %v700
      %v987 = vpop.f32.mrb[0].mxu0
      %v988 = vadd.f32 0.0, %v987
      %v989 = vpop.f32.mrb[0].mxu0
      %v990 = vadd.f32 0.0, %v989
      %991 = vmatprep.mubr.f32.mxu0 0.0
      %992 = vmatmul.mubr.f32.gmra.mrb[0].mxu0 %v703
      %v993 = vpop.f32.mrb[0].mxu0
      %v994 = vadd.f32 0.0, %v993
      %v995 = vpop.f32.mrb[0].mxu0
      %v996 = vadd.f32 0.0, %v995
      %997 = vmatprep.mubr.f32.mxu0 0.0
      %998 = vmatmul.mubr.f32.gmra.mrb[0].mxu0 %v706
      %v999 = vpop.f32.mrb[0].mxu0
      %v1000 = vadd.f32 0.0, %v999
      %v1001 = vpop.f32.mrb[0].mxu0
      %v1002 = vadd.f32 0.0, %v1001
      %1003 = vmatprep.mubr.f32.mxu0 0.0
      %1004 = vmatmul.mubr.f32.gmra.mrb[0].mxu0 %v709
      %v1005 = vpop.f32.mrb[0].mxu0
      %v1006 = vadd.f32 0.0, %v1005
      %v1007 = vpop.f32.mrb[0].mxu0
      %v1008 = vadd.f32 0.0, %v1007
      %1009 = vmatprep.mubr.f32.mxu0 0.0
      %1010 = vmatmul.mubr.f32.gmra.mrb[0].mxu0 %v712
      %v1011 = vpop.f32.mrb[0].mxu0
      %v1012 = vadd.f32 0.0, %v1011
      %v1013 = vpop.f32.mrb[0].mxu0
      %v1014 = vadd.f32 0.0, %v1013
      %1015 = vmatprep.mubr.f32.mxu0 0.0
      %1016 = vmatmul.mubr.f32.gmra.mrb[0].mxu0 %v715
      %v1017 = vpop.f32.mrb[0].mxu0
      %v1018 = vadd.f32 0.0, %v1017
      %v1019 = vpop.f32.mrb[0].mxu0
      %v1020 = vadd.f32 0.0, %v1019
      %1021 = vmatprep.mubr.f32.mxu0 0.0
      %1022 = vmatmul.mubr.f32.gmra.mrb[0].mxu0 %v718
      %v1023 = vpop.f32.mrb[0].mxu0
      %v1024 = vadd.f32 0.0, %v1023
      %v1025 = vpop.f32.mrb[0].mxu0
      %v1026 = vadd.f32 0.0, %v1025
      %1027 = vmatprep.mubr.f32.mxu0 0.0
      %1028 = vmatmul.mubr.f32.gmra.mrb[0].mxu0 %v721
      %v1029 = vpop.f32.mrb[0].mxu0
      %v1030 = vadd.f32 0.0, %v1029
      %v1031 = vpop.f32.mrb[0].mxu0
      %v1032 = vadd.f32 0.0, %v1031
      %1033 = vmatprep.mubr.f32.mxu0 0.0
      %1034 = vmatmul.mubr.f32.gmra.mrb[0].mxu0 %v724
      %v1035 = vpop.f32.mrb[0].mxu0
      %v1036 = vadd.f32 0.0, %v1035
      %v1037 = vpop.f32.mrb[0].mxu0
      %v1038 = vadd.f32 0.0, %v1037
      %1039 = vmatprep.mubr.f32.mxu0 0.0
      %1040 = vmatmul.mubr.f32.gmra.mrb[0].mxu0 %v727
      %v1041 = vpop.f32.mrb[0].mxu0
      %v1042 = vadd.f32 0.0, %v1041
      %v1043 = vpop.f32.mrb[0].mxu0
      %v1044 = vadd.f32 0.0, %v1043
      %1045 = vmatprep.mubr.f32.mxu0 0.0
      %1046 = vmatmul.mubr.f32.gmra.mrb[0].mxu0 %v730
      %v1047 = vpop.f32.mrb[0].mxu0
      %v1048 = vadd.f32 0.0, %v1047
      %v1049 = vpop.f32.mrb[0].mxu0
      %v1050 = vadd.f32 0.0, %v1049
      %1051 = vmatprep.mubr.f32.mxu0 0.0
      %1052 = vmatmul.mubr.f32.gmra.mrb[0].mxu0 %v733
      %v1053 = vpop.f32.mrb[0].mxu0
      %v1054 = vadd.f32 0.0, %v1053
      %v1055 = vpop.f32.mrb[0].mxu0
      %v1056 = vadd.f32 0.0, %v1055
      %1057 = vmatprep.mubr.f32.mxu0 0.0
      %1058 = vmatmul.mubr.f32.gmra.mrb[0].mxu0 %v736
      %v1059 = vpop.f32.mrb[0].mxu0
      %v1060 = vadd.f32 0.0, %v1059
      %v1061 = vpop.f32.mrb[0].mxu0
      %v1062 = vadd.f32 0.0, %v1061
      %1063 = vmatprep.mubr.f32.mxu0 0.0
      %1064 = vmatmul.mubr.f32.gmra.mrb[0].mxu0 %v739
      %v1065 = vpop.f32.mrb[0].mxu0
      %v1066 = vadd.f32 0.0, %v1065
      %v1067 = vpop.f32.mrb[0].mxu0
      %v1068 = vadd.f32 0.0, %v1067
      %1069 = vmatprep.mubr.f32.mxu0 0.0
      %1070 = vmatmul.mubr.f32.gmra.mrb[0].mxu0 %v742
      %v1071 = vpop.f32.mrb[0].mxu0
      %v1072 = vadd.f32 0.0, %v1071
      %v1073 = vpop.f32.mrb[0].mxu0
      %v1074 = vadd.f32 0.0, %v1073
      %1075 = vmatprep.mubr.f32.mxu0 0.0
      %1076 = vmatmul.mubr.f32.gmra.mrb[0].mxu0 %v745
      %v1077 = vpop.f32.mrb[0].mxu0
      %v1078 = vadd.f32 0.0, %v1077
      %v1079 = vpop.f32.mrb[0].mxu0
      %v1080 = vadd.f32 0.0, %v1079
      %1081 = vmatprep.mubr.f32.mxu0 0.0
      %1082 = vmatmul.mubr.f32.gmra.mrb[0].mxu0 %v748
      %v1083 = vpop.f32.mrb[0].mxu0
      %v1084 = vadd.f32 0.0, %v1083
      %v1085 = vpop.f32.mrb[0].mxu0
      %v1086 = vadd.f32 0.0, %v1085
      %1087 = vmatprep.mubr.f32.mxu0 0.0
      %1088 = vmatmul.mubr.f32.gmra.mrb[0].mxu0 %v751
      %v1089 = vpop.f32.mrb[0].mxu0
      %v1090 = vadd.f32 0.0, %v1089
      %v1091 = vpop.f32.mrb[0].mxu0
      %v1092 = vadd.f32 0.0, %v1091
      %1093 = vmatprep.mubr.f32.mxu0 0.0
      %1094 = vmatmul.mubr.f32.gmra.mrb[0].mxu0 %v754
      %v1095 = vpop.f32.mrb[0].mxu0
      %v1096 = vadd.f32 0.0, %v1095
      %v1097 = vpop.f32.mrb[0].mxu0
      %v1098 = vadd.f32 0.0, %v1097
      %1099 = vmatprep.mubr.f32.mxu0 0.0
      %1100 = vmatmul.mubr.f32.gmra.mrb[0].mxu0 %v757
      %v1101 = vpop.f32.mrb[0].mxu0
      %v1102 = vadd.f32 0.0, %v1101
      %v1103 = vpop.f32.mrb[0].mxu0
      %v1104 = vadd.f32 0.0, %v1103
      %1105 = vmatprep.mubr.f32.mxu0 0.0
      %1106 = vmatmul.mubr.f32.gmra.mrb[0].mxu0 %v760
      %v1107 = vpop.f32.mrb[0].mxu0
      %v1108 = vadd.f32 0.0, %v1107
      %v1109 = vpop.f32.mrb[0].mxu0
      %v1110 = vadd.f32 0.0, %v1109
      %1111 = vmatprep.mubr.f32.mxu0 0.0
      %1112 = vmatmul.mubr.f32.gmra.mrb[0].mxu0 %v763
      %v1113 = vpop.f32.mrb[0].mxu0
      %v1114 = vadd.f32 0.0, %v1113
      %v1115 = vpop.f32.mrb[0].mxu0
      %v1116 = vadd.f32 0.0, %v1115
      %1117 = vmatprep.mubr.f32.mxu0 0.0
      %1118 = vmatmul.mubr.f32.gmra.mrb[0].mxu0 %v766
      %v1119 = vpop.f32.mrb[0].mxu0
      %v1120 = vadd.f32 0.0, %v1119
      %v1121 = vpop.f32.mrb[0].mxu0
      %v1122 = vadd.f32 0.0, %v1121
      %1123 = vmatprep.mubr.f32.mxu0 0.0
      %1124 = vmatmul.mubr.f32.gmra.mrb[0].mxu0 %v769
      %v1125 = vpop.f32.mrb[0].mxu0
      %v1126 = vadd.f32 0.0, %v1125
      %v1127 = vpop.f32.mrb[0].mxu0
      %v1128 = vadd.f32 0.0, %v1127
      %1129 = vmatprep.mubr.f32.mxu0 0.0
      %1130 = vmatmul.mubr.f32.gmra.mrb[0].mxu0 %v772
      %v1131 = vpop.f32.mrb[0].mxu0
      %v1132 = vadd.f32 0.0, %v1131
      %v1133 = vpop.f32.mrb[0].mxu0
      %v1134 = vadd.f32 0.0, %v1133
      %1135 = vmatprep.mubr.f32.mxu0 0.0
      %1136 = vmatmul.mubr.f32.gmra.mrb[0].mxu0 %v775
      %v1137 = vpop.f32.mrb[0].mxu0
      %v1138 = vadd.f32 0.0, %v1137
      %v1139 = vpop.f32.mrb[0].mxu0
      %v1140 = vadd.f32 0.0, %v1139
      %1141 = vmatprep.mubr.f32.mxu0 0.0
      %1142 = vmatmul.mubr.f32.gmra.mrb[0].mxu0 %v778
      %v1143 = vpop.f32.mrb[0].mxu0
      %v1144 = vadd.f32 0.0, %v1143
      %v1145 = vpop.f32.mrb[0].mxu0
      %v1146 = vadd.f32 0.0, %v1145
      %1147 = vmatprep.mubr.f32.mxu0 0.0
      %1148 = vmatmul.mubr.f32.gmra.mrb[0].mxu0 %v781
      %v1149 = vpop.f32.mrb[0].mxu0
      %v1150 = vadd.f32 0.0, %v1149
      %v1151 = vpop.f32.mrb[0].mxu0
      %v1152 = vadd.f32 0.0, %v1151
      %1153 = vmatprep.mubr.f32.mxu0 0.0
      %1154 = vmatmul.mubr.f32.gmra.mrb[0].mxu0 %v784
      %v1155 = vpop.f32.mrb[0].mxu0
      %v1156 = vadd.f32 0.0, %v1155
      %v1157 = vpop.f32.mrb[0].mxu0
      %v1158 = vadd.f32 0.0, %v1157
      %1159 = vmatprep.mubr.f32.mxu0 0.0
      %1160 = vmatmul.mubr.f32.gmra.mrb[0].mxu0 %v787
      %v1161 = vpop.f32.mrb[0].mxu0
      %v1162 = vadd.f32 0.0, %v1161
      %v1163 = vpop.f32.mrb[0].mxu0
      %v1164 = vadd.f32 0.0, %v1163
      %1165 = vmatprep.mubr.f32.mxu0 0.0
      %1166 = vmatmul.mubr.f32.gmra.mrb[0].mxu0 %v790
      %v1167 = vpop.f32.mrb[0].mxu0
      %v1168 = vadd.f32 0.0, %v1167
      %v1169 = vpop.f32.mrb[0].mxu0
      %v1170 = vadd.f32 0.0, %v1169
      %1171 = vmatprep.mubr.f32.mxu0 0.0
      %1172 = vmatmul.mubr.f32.gmra.mrb[0].mxu0 %v793
      %v1173 = vpop.f32.mrb[0].mxu0
      %v1174 = vadd.f32 0.0, %v1173
      %v1175 = vpop.f32.mrb[0].mxu0
      %v1176 = vadd.f32 0.0, %v1175
      %1177 = vmatprep.mubr.f32.mxu0 0.0
      %1178 = vmatmul.mubr.f32.gmra.mrb[0].mxu0 %v796
      %v1179 = vpop.f32.mrb[0].mxu0
      %v1180 = vadd.f32 0.0, %v1179
      %v1181 = vpop.f32.mrb[0].mxu0
      %v1182 = vadd.f32 0.0, %v1181
      %1183 = vmatprep.mubr.f32.mxu0 0.0
      %1184 = vmatmul.mubr.f32.gmra.mrb[0].mxu0 %v799
      %v1185 = vpop.f32.mrb[0].mxu0
      %v1186 = vadd.f32 0.0, %v1185
      %v1187 = vpop.f32.mrb[0].mxu0
      %v1188 = vadd.f32 0.0, %v1187
      %1189 = vmatprep.mubr.f32.mxu0 0.0
      %1190 = vmatmul.mubr.f32.gmra.mrb[0].mxu0 %v802
      %v1191 = vpop.f32.mrb[0].mxu0
      %v1192 = vadd.f32 0.0, %v1191
      %v1193 = vpop.f32.mrb[0].mxu0
      %v1194 = vadd.f32 0.0, %v1193
      %1195 = vmatprep.mubr.f32.mxu0 0.0
      %1196 = vmatmul.mubr.f32.gmra.mrb[0].mxu0 %v805
      %v1197 = vpop.f32.mrb[0].mxu0
      %v1198 = vadd.f32 0.0, %v1197
      %v1199 = vpop.f32.mrb[0].mxu0
      %v1200 = vadd.f32 0.0, %v1199
      %1201 = vmatprep.mubr.f32.mxu0 0.0
      %1202 = vmatmul.mubr.f32.gmra.mrb[0].mxu0 %v808
      %v1203 = vpop.f32.mrb[0].mxu0
      %v1204 = vadd.f32 0.0, %v1203
      %v1205 = vpop.f32.mrb[0].mxu0
      %v1206 = vadd.f32 0.0, %v1205
      %1207 = vmatprep.mubr.f32.mxu0 0.0
      %1208 = vmatmul.mubr.f32.gmra.mrb[0].mxu0 %v811
      %v1209 = vpop.f32.mrb[0].mxu0
      %v1210 = vadd.f32 0.0, %v1209
      %v1211 = vpop.f32.mrb[0].mxu0
      %v1212 = vadd.f32 0.0, %v1211
      %1213 = vmatprep.mubr.f32.mxu0 0.0
      %1214 = vmatmul.mubr.f32.gmra.mrb[0].mxu0 %v814
      %v1215 = vpop.f32.mrb[0].mxu0
      %v1216 = vadd.f32 0.0, %v1215
      %v1217 = vpop.f32.mrb[0].mxu0
      %v1218 = vadd.f32 0.0, %v1217
      %1219 = vmatprep.mubr.f32.mxu0 0.0
      %1220 = vmatmul.mubr.f32.gmra.mrb[0].mxu0 %v817
      %v1221 = vpop.f32.mrb[0].mxu0
      %v1222 = vadd.f32 0.0, %v1221
      %v1223 = vpop.f32.mrb[0].mxu0
      %v1224 = vadd.f32 0.0, %v1223
      %1225 = vmatprep.mubr.f32.mxu0 0.0
      %1226 = vmatmul.mubr.f32.gmra.mrb[0].mxu0 %v820
      %v1227 = vpop.f32.mrb[0].mxu0
      %v1228 = vadd.f32 0.0, %v1227
      %v1229 = vpop.f32.mrb[0].mxu0
      %v1230 = vadd.f32 0.0, %v1229
      %1231 = vmatprep.mubr.f32.mxu0 0.0
      %1232 = vmatmul.mubr.f32.gmra.mrb[0].mxu0 %v823
      %v1233 = vpop.f32.mrb[0].mxu0
      %v1234 = vadd.f32 0.0, %v1233
      %v1235 = vpop.f32.mrb[0].mxu0
      %v1236 = vadd.f32 0.0, %v1235
      %1237 = vmatprep.mubr.f32.mxu0 0.0
      %1238 = vmatmul.mubr.f32.gmra.mrb[0].mxu0 %v826
      %v1239 = vpop.f32.mrb[0].mxu0
      %v1240 = vadd.f32 0.0, %v1239
      %v1241 = vpop.f32.mrb[0].mxu0
      %v1242 = vadd.f32 0.0, %v1241
      %1243 = vmatprep.mubr.f32.mxu0 0.0
      %1244 = vmatmul.mubr.f32.gmra.mrb[0].mxu0 %v829
      %v1245 = vpop.f32.mrb[0].mxu0
      %v1246 = vadd.f32 0.0, %v1245
      %v1247 = vpop.f32.mrb[0].mxu0
      %v1248 = vadd.f32 0.0, %v1247
      %1249 = vmatprep.mubr.f32.mxu0 0.0
      %1250 = vmatmul.mubr.f32.gmra.mrb[0].mxu0 %v832
      %v1251 = vpop.f32.mrb[0].mxu0
      %v1252 = vadd.f32 0.0, %v1251
      %v1253 = vpop.f32.mrb[0].mxu0
      %v1254 = vadd.f32 0.0, %v1253
      %1255 = vmatprep.mubr.f32.mxu0 0.0
      %1256 = vmatmul.mubr.f32.gmra.mrb[0].mxu0 %v835
      %v1257 = vpop.f32.mrb[0].mxu0
      %v1258 = vadd.f32 0.0, %v1257
      %v1259 = vpop.f32.mrb[0].mxu0
      %v1260 = vadd.f32 0.0, %v1259
      %1261 = vmatprep.mubr.f32.mxu0 0.0
      %1262 = vmatmul.mubr.f32.gmra.mrb[0].mxu0 %v838
      %v1263 = vpop.f32.mrb[0].mxu0
      %v1264 = vadd.f32 0.0, %v1263
      %v1265 = vpop.f32.mrb[0].mxu0
      %v1266 = vadd.f32 0.0, %v1265
      %1267 = vmatprep.mubr.f32.mxu0 0.0
      %1268 = vmatmul.mubr.f32.gmra.mrb[0].mxu0 %v841
      %v1269 = vpop.f32.mrb[0].mxu0
      %v1270 = vadd.f32 0.0, %v1269
      %v1271 = vpop.f32.mrb[0].mxu0
      %v1272 = vadd.f32 0.0, %v1271
      %1273 = vmatprep.mubr.f32.mxu0 0.0
      %1274 = vmatmul.mubr.f32.gmra.mrb[0].mxu0 %v844
      %v1275 = vpop.f32.mrb[0].mxu0
      %v1276 = vadd.f32 0.0, %v1275
      %v1277 = vpop.f32.mrb[0].mxu0
      %v1278 = vadd.f32 0.0, %v1277
      %1279 = vmatprep.mubr.f32.mxu0 0.0
      %1280 = vmatmul.mubr.f32.gmra.mrb[0].mxu0 %v847
      %v1281 = vpop.f32.mrb[0].mxu0
      %v1282 = vadd.f32 0.0, %v1281
      %v1283 = vpop.f32.mrb[0].mxu0
      %v1284 = vadd.f32 0.0, %v1283
      %1285 = vmatprep.mubr.f32.mxu0 0.0
      %1286 = vmatmul.mubr.f32.gmra.mrb[0].mxu0 %v850
      %v1287 = vpop.f32.mrb[0].mxu0
      %v1288 = vadd.f32 0.0, %v1287
      %v1289 = vpop.f32.mrb[0].mxu0
      %v1290 = vadd.f32 0.0, %v1289
      %1291 = vmatprep.mubr.f32.mxu0 0.0
      %1292 = vmatmul.mubr.f32.gmra.mrb[0].mxu0 %v853
      %v1293 = vpop.f32.mrb[0].mxu0
      %v1294 = vadd.f32 0.0, %v1293
      %v1295 = vpop.f32.mrb[0].mxu0
      %v1296 = vadd.f32 0.0, %v1295
      %1297 = vmatprep.mubr.f32.mxu0 0.0
      %1298 = vmatmul.mubr.f32.gmra.mrb[0].mxu0 %v856
      %v1299 = vpop.f32.mrb[0].mxu0
      %v1300 = vadd.f32 0.0, %v1299
      %v1301 = vpop.f32.mrb[0].mxu0
      %v1302 = vadd.f32 0.0, %v1301
      %1303 = vmatprep.mubr.f32.mxu0 0.0
      %1304 = vmatmul.mubr.f32.gmra.mrb[0].mxu0 %v859
      %v1305 = vpop.f32.mrb[0].mxu0
      %v1306 = vadd.f32 0.0, %v1305
      %v1307 = vpop.f32.mrb[0].mxu0
      %v1308 = vadd.f32 0.0, %v1307
      %1309 = vmatprep.mubr.f32.mxu0 0.0
      %1310 = vmatmul.mubr.f32.gmra.mrb[0].mxu0 %v862
      %v1311 = vpop.f32.mrb[0].mxu0
      %v1312 = vadd.f32 0.0, %v1311
      %v1313 = vpop.f32.mrb[0].mxu0
      %v1314 = vadd.f32 0.0, %v1313
      %1315 = vmatprep.mubr.f32.mxu0 0.0
      %1316 = vmatmul.mubr.f32.gmra.mrb[0].mxu0 %v865
      %v1317 = vpop.f32.mrb[0].mxu0
      %v1318 = vadd.f32 0.0, %v1317
      %v1319 = vpop.f32.mrb[0].mxu0
      %v1320 = vadd.f32 0.0, %v1319
      %1321 = vmatprep.mubr.f32.mxu0 0.0
      %1322 = vmatmul.mubr.f32.gmra.mrb[0].mxu0 %v868
      %v1323 = vpop.f32.mrb[0].mxu0
      %v1324 = vadd.f32 0.0, %v1323
      %v1325 = vpop.f32.mrb[0].mxu0
      %v1326 = vadd.f32 0.0, %v1325
      %1327 = vdwg.mxu0
      %1328 = vmatprep.subr.mxu0 %v877
      %1329 = vmatpush1.msra.mxu0 %v875
      %1330 = vmatprep.subr.mxu0 0.0
      %1331 = vmatpush1.msra.mxu0 0.0
      %1332 = vmatprep.subr.mxu0 0.0
      %1333 = vmatpush1.msra.mxu0 0.0
      %1334 = vmatprep.subr.mxu0 0.0
      %1335 = vmatpush1.msra.mxu0 0.0
      %1336 = vmatprep.subr.mxu0 0.0
      %1337 = vmatpush1.msra.mxu0 0.0
      %1338 = vmatprep.subr.mxu0 0.0
      %1339 = vmatpush1.msra.mxu0 0.0
      %1340 = vmatprep.subr.mxu0 0.0
      %1341 = vmatpush1.msra.mxu0 0.0
      %1342 = vmatprep.subr.mxu0 0.0
      %1343 = vmatpush1.msra.mxu0 0.0
      %1344 = vmatprep.subr.mxu0 0.0
      %1345 = vmatpush1.msra.mxu0 0.0
      %1346 = vmatprep.subr.mxu0 0.0
      %1347 = vmatpush1.msra.mxu0 0.0
      %1348 = vmatprep.subr.mxu0 0.0
      %1349 = vmatpush1.msra.mxu0 0.0
      %1350 = vmatprep.subr.mxu0 0.0
      %1351 = vmatpush1.msra.mxu0 0.0
      %1352 = vmatprep.subr.mxu0 0.0
      %1353 = vmatpush1.msra.mxu0 0.0
      %1354 = vmatprep.subr.mxu0 0.0
      %1355 = vmatpush1.msra.mxu0 0.0
      %1356 = vmatprep.subr.mxu0 0.0
      %1357 = vmatpush1.msra.mxu0 0.0
      %1358 = vmatprep.subr.mxu0 0.0
      %1359 = vmatpush1.msra.mxu0 0.0
      %1360 = vmatprep.subr.mxu0 0.0
      %1361 = vmatpush1.msra.mxu0 0.0
      %1362 = vmatprep.subr.mxu0 0.0
      %1363 = vmatpush1.msra.mxu0 0.0
      %1364 = vmatprep.subr.mxu0 0.0
      %1365 = vmatpush1.msra.mxu0 0.0
      %1366 = vmatprep.subr.mxu0 0.0
      %1367 = vmatpush1.msra.mxu0 0.0
      %1368 = vmatprep.subr.mxu0 0.0
      %1369 = vmatpush1.msra.mxu0 0.0
      %1370 = vmatprep.subr.mxu0 0.0
      %1371 = vmatpush1.msra.mxu0 0.0
      %1372 = vmatprep.subr.mxu0 0.0
      %1373 = vmatpush1.msra.mxu0 0.0
      %1374 = vmatprep.subr.mxu0 0.0
      %1375 = vmatpush1.msra.mxu0 0.0
      %1376 = vmatprep.subr.mxu0 0.0
      %1377 = vmatpush1.msra.mxu0 0.0
      %1378 = vmatprep.subr.mxu0 0.0
      %1379 = vmatpush1.msra.mxu0 0.0
      %1380 = vmatprep.subr.mxu0 0.0
      %1381 = vmatpush1.msra.mxu0 0.0
      %1382 = vmatprep.subr.mxu0 0.0
      %1383 = vmatpush1.msra.mxu0 0.0
      %1384 = vmatprep.subr.mxu0 0.0
      %1385 = vmatpush1.msra.mxu0 0.0
      %1386 = vmatprep.subr.mxu0 0.0
      %1387 = vmatpush1.msra.mxu0 0.0
      %1388 = vmatprep.subr.mxu0 0.0
      %1389 = vmatpush1.msra.mxu0 0.0
      %1390 = vmatprep.subr.mxu0 0.0
      %1391 = vmatpush1.msra.mxu0 0.0
      %1392 = vmatprep.mubr.f32.mxu0 0.0
      %1393 = vmatmul.mubr.f32.gmra.mrb[0].mxu0 %v679
      %v1394 = vpop.f32.mrb[0].mxu0
      %v1395 = vadd.f32 0.0, %v1394
      %v1396 = vpop.f32.mrb[0].mxu0
      %v1397 = vadd.f32 0.0, %v1396
      %1398 = vmatprep.mubr.f32.mxu0 0.0
      %1399 = vmatmul.mubr.f32.gmra.mrb[0].mxu0 %v682
      %v1400 = vpop.f32.mrb[0].mxu0
      %v1401 = vadd.f32 0.0, %v1400
      %v1402 = vpop.f32.mrb[0].mxu0
      %v1403 = vadd.f32 0.0, %v1402
      %1404 = vmatprep.mubr.f32.mxu0 0.0
      %1405 = vmatmul.mubr.f32.gmra.mrb[0].mxu0 %v685
      %v1406 = vpop.f32.mrb[0].mxu0
      %v1407 = vadd.f32 0.0, %v1406
      %v1408 = vpop.f32.mrb[0].mxu0
      %v1409 = vadd.f32 0.0, %v1408
      %1410 = vmatprep.mubr.f32.mxu0 0.0
      %1411 = vmatmul.mubr.f32.gmra.mrb[0].mxu0 %v688
      %v1412 = vpop.f32.mrb[0].mxu0
      %v1413 = vadd.f32 0.0, %v1412
      %v1414 = vpop.f32.mrb[0].mxu0
      %v1415 = vadd.f32 0.0, %v1414
      %1416 = vmatprep.mubr.f32.mxu0 0.0
      %1417 = vmatmul.mubr.f32.gmra.mrb[0].mxu0 %v691
      %v1418 = vpop.f32.mrb[0].mxu0
      %v1419 = vadd.f32 0.0, %v1418
      %v1420 = vpop.f32.mrb[0].mxu0
      %v1421 = vadd.f32 0.0, %v1420
      %1422 = vmatprep.mubr.f32.mxu0 0.0
      %1423 = vmatmul.mubr.f32.gmra.mrb[0].mxu0 %v694
      %v1424 = vpop.f32.mrb[0].mxu0
      %v1425 = vadd.f32 0.0, %v1424
      %v1426 = vpop.f32.mrb[0].mxu0
      %v1427 = vadd.f32 0.0, %v1426
      %1428 = vmatprep.mubr.f32.mxu0 0.0
      %1429 = vmatmul.mubr.f32.gmra.mrb[0].mxu0 %v697
      %v1430 = vpop.f32.mrb[0].mxu0
      %v1431 = vadd.f32 0.0, %v1430
      %v1432 = vpop.f32.mrb[0].mxu0
      %v1433 = vadd.f32 0.0, %v1432
      %1434 = vmatprep.mubr.f32.mxu0 0.0
      %1435 = vmatmul.mubr.f32.gmra.mrb[0].mxu0 %v700
      %v1436 = vpop.f32.mrb[0].mxu0
      %v1437 = vadd.f32 0.0, %v1436
      %v1438 = vpop.f32.mrb[0].mxu0
      %v1439 = vadd.f32 0.0, %v1438
      %1440 = vmatprep.mubr.f32.mxu0 0.0
      %1441 = vmatmul.mubr.f32.gmra.mrb[0].mxu0 %v703
      %v1442 = vpop.f32.mrb[0].mxu0
      %v1443 = vadd.f32 0.0, %v1442
      %v1444 = vpop.f32.mrb[0].mxu0
      %v1445 = vadd.f32 0.0, %v1444
      %1446 = vmatprep.mubr.f32.mxu0 0.0
      %1447 = vmatmul.mubr.f32.gmra.mrb[0].mxu0 %v706
      %v1448 = vpop.f32.mrb[0].mxu0
      %v1449 = vadd.f32 0.0, %v1448
      %v1450 = vpop.f32.mrb[0].mxu0
      %v1451 = vadd.f32 0.0, %v1450
      %1452 = vmatprep.mubr.f32.mxu0 0.0
      %1453 = vmatmul.mubr.f32.gmra.mrb[0].mxu0 %v709
      %v1454 = vpop.f32.mrb[0].mxu0
      %v1455 = vadd.f32 0.0, %v1454
      %v1456 = vpop.f32.mrb[0].mxu0
      %v1457 = vadd.f32 0.0, %v1456
      %1458 = vmatprep.mubr.f32.mxu0 0.0
      %1459 = vmatmul.mubr.f32.gmra.mrb[0].mxu0 %v712
      %v1460 = vpop.f32.mrb[0].mxu0
      %v1461 = vadd.f32 0.0, %v1460
      %v1462 = vpop.f32.mrb[0].mxu0
      %v1463 = vadd.f32 0.0, %v1462
      %1464 = vmatprep.mubr.f32.mxu0 0.0
      %1465 = vmatmul.mubr.f32.gmra.mrb[0].mxu0 %v715
      %v1466 = vpop.f32.mrb[0].mxu0
      %v1467 = vadd.f32 0.0, %v1466
      %v1468 = vpop.f32.mrb[0].mxu0
      %v1469 = vadd.f32 0.0, %v1468
      %1470 = vmatprep.mubr.f32.mxu0 0.0
      %1471 = vmatmul.mubr.f32.gmra.mrb[0].mxu0 %v718
      %v1472 = vpop.f32.mrb[0].mxu0
      %v1473 = vadd.f32 0.0, %v1472
      %v1474 = vpop.f32.mrb[0].mxu0
      %v1475 = vadd.f32 0.0, %v1474
      %1476 = vmatprep.mubr.f32.mxu0 0.0
      %1477 = vmatmul.mubr.f32.gmra.mrb[0].mxu0 %v721
      %v1478 = vpop.f32.mrb[0].mxu0
      %v1479 = vadd.f32 0.0, %v1478
      %v1480 = vpop.f32.mrb[0].mxu0
      %v1481 = vadd.f32 0.0, %v1480
      %1482 = vmatprep.mubr.f32.mxu0 0.0
      %1483 = vmatmul.mubr.f32.gmra.mrb[0].mxu0 %v724
      %v1484 = vpop.f32.mrb[0].mxu0
      %v1485 = vadd.f32 0.0, %v1484
      %v1486 = vpop.f32.mrb[0].mxu0
      %v1487 = vadd.f32 0.0, %v1486
      %1488 = vmatprep.mubr.f32.mxu0 0.0
      %1489 = vmatmul.mubr.f32.gmra.mrb[0].mxu0 %v727
      %v1490 = vpop.f32.mrb[0].mxu0
      %v1491 = vadd.f32 0.0, %v1490
      %v1492 = vpop.f32.mrb[0].mxu0
      %v1493 = vadd.f32 0.0, %v1492
      %1494 = vmatprep.mubr.f32.mxu0 0.0
      %1495 = vmatmul.mubr.f32.gmra.mrb[0].mxu0 %v730
      %v1496 = vpop.f32.mrb[0].mxu0
      %v1497 = vadd.f32 0.0, %v1496
      %v1498 = vpop.f32.mrb[0].mxu0
      %v1499 = vadd.f32 0.0, %v1498
      %1500 = vmatprep.mubr.f32.mxu0 0.0
      %1501 = vmatmul.mubr.f32.gmra.mrb[0].mxu0 %v733
      %v1502 = vpop.f32.mrb[0].mxu0
      %v1503 = vadd.f32 0.0, %v1502
      %v1504 = vpop.f32.mrb[0].mxu0
      %v1505 = vadd.f32 0.0, %v1504
      %1506 = vmatprep.mubr.f32.mxu0 0.0
      %1507 = vmatmul.mubr.f32.gmra.mrb[0].mxu0 %v736
      %v1508 = vpop.f32.mrb[0].mxu0
      %v1509 = vadd.f32 0.0, %v1508
      %v1510 = vpop.f32.mrb[0].mxu0
      %v1511 = vadd.f32 0.0, %v1510
      %1512 = vmatprep.mubr.f32.mxu0 0.0
      %1513 = vmatmul.mubr.f32.gmra.mrb[0].mxu0 %v739
      %v1514 = vpop.f32.mrb[0].mxu0
      %v1515 = vadd.f32 0.0, %v1514
      %v1516 = vpop.f32.mrb[0].mxu0
      %v1517 = vadd.f32 0.0, %v1516
      %1518 = vmatprep.mubr.f32.mxu0 0.0
      %1519 = vmatmul.mubr.f32.gmra.mrb[0].mxu0 %v742
      %v1520 = vpop.f32.mrb[0].mxu0
      %v1521 = vadd.f32 0.0, %v1520
      %v1522 = vpop.f32.mrb[0].mxu0
      %v1523 = vadd.f32 0.0, %v1522
      %1524 = vmatprep.mubr.f32.mxu0 0.0
      %1525 = vmatmul.mubr.f32.gmra.mrb[0].mxu0 %v745
      %v1526 = vpop.f32.mrb[0].mxu0
      %v1527 = vadd.f32 0.0, %v1526
      %v1528 = vpop.f32.mrb[0].mxu0
      %v1529 = vadd.f32 0.0, %v1528
      %1530 = vmatprep.mubr.f32.mxu0 0.0
      %1531 = vmatmul.mubr.f32.gmra.mrb[0].mxu0 %v748
      %v1532 = vpop.f32.mrb[0].mxu0
      %v1533 = vadd.f32 0.0, %v1532
      %v1534 = vpop.f32.mrb[0].mxu0
      %v1535 = vadd.f32 0.0, %v1534
      %1536 = vmatprep.mubr.f32.mxu0 0.0
      %1537 = vmatmul.mubr.f32.gmra.mrb[0].mxu0 %v751
      %v1538 = vpop.f32.mrb[0].mxu0
      %v1539 = vadd.f32 0.0, %v1538
      %v1540 = vpop.f32.mrb[0].mxu0
      %v1541 = vadd.f32 0.0, %v1540
      %1542 = vmatprep.mubr.f32.mxu0 0.0
      %1543 = vmatmul.mubr.f32.gmra.mrb[0].mxu0 %v754
      %v1544 = vpop.f32.mrb[0].mxu0
      %v1545 = vadd.f32 0.0, %v1544
      %v1546 = vpop.f32.mrb[0].mxu0
      %v1547 = vadd.f32 0.0, %v1546
      %1548 = vmatprep.mubr.f32.mxu0 0.0
      %1549 = vmatmul.mubr.f32.gmra.mrb[0].mxu0 %v757
      %v1550 = vpop.f32.mrb[0].mxu0
      %v1551 = vadd.f32 0.0, %v1550
      %v1552 = vpop.f32.mrb[0].mxu0
      %v1553 = vadd.f32 0.0, %v1552
      %1554 = vmatprep.mubr.f32.mxu0 0.0
      %1555 = vmatmul.mubr.f32.gmra.mrb[0].mxu0 %v760
      %v1556 = vpop.f32.mrb[0].mxu0
      %v1557 = vadd.f32 0.0, %v1556
      %v1558 = vpop.f32.mrb[0].mxu0
      %v1559 = vadd.f32 0.0, %v1558
      %1560 = vmatprep.mubr.f32.mxu0 0.0
      %1561 = vmatmul.mubr.f32.gmra.mrb[0].mxu0 %v763
      %v1562 = vpop.f32.mrb[0].mxu0
      %v1563 = vadd.f32 0.0, %v1562
      %v1564 = vpop.f32.mrb[0].mxu0
      %v1565 = vadd.f32 0.0, %v1564
      %1566 = vmatprep.mubr.f32.mxu0 0.0
      %1567 = vmatmul.mubr.f32.gmra.mrb[0].mxu0 %v766
      %v1568 = vpop.f32.mrb[0].mxu0
      %v1569 = vadd.f32 0.0, %v1568
      %v1570 = vpop.f32.mrb[0].mxu0
      %v1571 = vadd.f32 0.0, %v1570
      %1572 = vmatprep.mubr.f32.mxu0 0.0
      %1573 = vmatmul.mubr.f32.gmra.mrb[0].mxu0 %v769
      %v1574 = vpop.f32.mrb[0].mxu0
      %v1575 = vadd.f32 0.0, %v1574
      %v1576 = vpop.f32.mrb[0].mxu0
      %v1577 = vadd.f32 0.0, %v1576
      %1578 = vmatprep.mubr.f32.mxu0 0.0
      %1579 = vmatmul.mubr.f32.gmra.mrb[0].mxu0 %v772
      %v1580 = vpop.f32.mrb[0].mxu0
      %v1581 = vadd.f32 0.0, %v1580
      %v1582 = vpop.f32.mrb[0].mxu0
      %v1583 = vadd.f32 0.0, %v1582
      %1584 = vmatprep.mubr.f32.mxu0 0.0
      %1585 = vmatmul.mubr.f32.gmra.mrb[0].mxu0 %v775
      %v1586 = vpop.f32.mrb[0].mxu0
      %v1587 = vadd.f32 0.0, %v1586
      %v1588 = vpop.f32.mrb[0].mxu0
      %v1589 = vadd.f32 0.0, %v1588
      %1590 = vmatprep.mubr.f32.mxu0 0.0
      %1591 = vmatmul.mubr.f32.gmra.mrb[0].mxu0 %v778
      %v1592 = vpop.f32.mrb[0].mxu0
      %v1593 = vadd.f32 0.0, %v1592
      %v1594 = vpop.f32.mrb[0].mxu0
      %v1595 = vadd.f32 0.0, %v1594
      %1596 = vmatprep.mubr.f32.mxu0 0.0
      %1597 = vmatmul.mubr.f32.gmra.mrb[0].mxu0 %v781
      %v1598 = vpop.f32.mrb[0].mxu0
      %v1599 = vadd.f32 0.0, %v1598
      %v1600 = vpop.f32.mrb[0].mxu0
      %v1601 = vadd.f32 0.0, %v1600
      %1602 = vmatprep.mubr.f32.mxu0 0.0
      %1603 = vmatmul.mubr.f32.gmra.mrb[0].mxu0 %v784
      %v1604 = vpop.f32.mrb[0].mxu0
      %v1605 = vadd.f32 0.0, %v1604
      %v1606 = vpop.f32.mrb[0].mxu0
      %v1607 = vadd.f32 0.0, %v1606
      %1608 = vmatprep.mubr.f32.mxu0 0.0
      %1609 = vmatmul.mubr.f32.gmra.mrb[0].mxu0 %v787
      %v1610 = vpop.f32.mrb[0].mxu0
      %v1611 = vadd.f32 0.0, %v1610
      %v1612 = vpop.f32.mrb[0].mxu0
      %v1613 = vadd.f32 0.0, %v1612
      %1614 = vmatprep.mubr.f32.mxu0 0.0
      %1615 = vmatmul.mubr.f32.gmra.mrb[0].mxu0 %v790
      %v1616 = vpop.f32.mrb[0].mxu0
      %v1617 = vadd.f32 0.0, %v1616
      %v1618 = vpop.f32.mrb[0].mxu0
      %v1619 = vadd.f32 0.0, %v1618
      %1620 = vmatprep.mubr.f32.mxu0 0.0
      %1621 = vmatmul.mubr.f32.gmra.mrb[0].mxu0 %v793
      %v1622 = vpop.f32.mrb[0].mxu0
      %v1623 = vadd.f32 0.0, %v1622
      %v1624 = vpop.f32.mrb[0].mxu0
      %v1625 = vadd.f32 0.0, %v1624
      %1626 = vmatprep.mubr.f32.mxu0 0.0
      %1627 = vmatmul.mubr.f32.gmra.mrb[0].mxu0 %v796
      %v1628 = vpop.f32.mrb[0].mxu0
      %v1629 = vadd.f32 0.0, %v1628
      %v1630 = vpop.f32.mrb[0].mxu0
      %v1631 = vadd.f32 0.0, %v1630
      %1632 = vmatprep.mubr.f32.mxu0 0.0
      %1633 = vmatmul.mubr.f32.gmra.mrb[0].mxu0 %v799
      %v1634 = vpop.f32.mrb[0].mxu0
      %v1635 = vadd.f32 0.0, %v1634
      %v1636 = vpop.f32.mrb[0].mxu0
      %v1637 = vadd.f32 0.0, %v1636
      %1638 = vmatprep.mubr.f32.mxu0 0.0
      %1639 = vmatmul.mubr.f32.gmra.mrb[0].mxu0 %v802
      %v1640 = vpop.f32.mrb[0].mxu0
      %v1641 = vadd.f32 0.0, %v1640
      %v1642 = vpop.f32.mrb[0].mxu0
      %v1643 = vadd.f32 0.0, %v1642
      %1644 = vmatprep.mubr.f32.mxu0 0.0
      %1645 = vmatmul.mubr.f32.gmra.mrb[0].mxu0 %v805
      %v1646 = vpop.f32.mrb[0].mxu0
      %v1647 = vadd.f32 0.0, %v1646
      %v1648 = vpop.f32.mrb[0].mxu0
      %v1649 = vadd.f32 0.0, %v1648
      %1650 = vmatprep.mubr.f32.mxu0 0.0
      %1651 = vmatmul.mubr.f32.gmra.mrb[0].mxu0 %v808
      %v1652 = vpop.f32.mrb[0].mxu0
      %v1653 = vadd.f32 0.0, %v1652
      %v1654 = vpop.f32.mrb[0].mxu0
      %v1655 = vadd.f32 0.0, %v1654
      %1656 = vmatprep.mubr.f32.mxu0 0.0
      %1657 = vmatmul.mubr.f32.gmra.mrb[0].mxu0 %v811
      %v1658 = vpop.f32.mrb[0].mxu0
      %v1659 = vadd.f32 0.0, %v1658
      %v1660 = vpop.f32.mrb[0].mxu0
      %v1661 = vadd.f32 0.0, %v1660
      %1662 = vmatprep.mubr.f32.mxu0 0.0
      %1663 = vmatmul.mubr.f32.gmra.mrb[0].mxu0 %v814
      %v1664 = vpop.f32.mrb[0].mxu0
      %v1665 = vadd.f32 0.0, %v1664
      %v1666 = vpop.f32.mrb[0].mxu0
      %v1667 = vadd.f32 0.0, %v1666
      %1668 = vmatprep.mubr.f32.mxu0 0.0
      %1669 = vmatmul.mubr.f32.gmra.mrb[0].mxu0 %v817
      %v1670 = vpop.f32.mrb[0].mxu0
      %v1671 = vadd.f32 0.0, %v1670
      %v1672 = vpop.f32.mrb[0].mxu0
      %v1673 = vadd.f32 0.0, %v1672
      %1674 = vmatprep.mubr.f32.mxu0 0.0
      %1675 = vmatmul.mubr.f32.gmra.mrb[0].mxu0 %v820
      %v1676 = vpop.f32.mrb[0].mxu0
      %v1677 = vadd.f32 0.0, %v1676
      %v1678 = vpop.f32.mrb[0].mxu0
      %v1679 = vadd.f32 0.0, %v1678
      %1680 = vmatprep.mubr.f32.mxu0 0.0
      %1681 = vmatmul.mubr.f32.gmra.mrb[0].mxu0 %v823
      %v1682 = vpop.f32.mrb[0].mxu0
      %v1683 = vadd.f32 0.0, %v1682
      %v1684 = vpop.f32.mrb[0].mxu0
      %v1685 = vadd.f32 0.0, %v1684
      %1686 = vmatprep.mubr.f32.mxu0 0.0
      %1687 = vmatmul.mubr.f32.gmra.mrb[0].mxu0 %v826
      %v1688 = vpop.f32.mrb[0].mxu0
      %v1689 = vadd.f32 0.0, %v1688
      %v1690 = vpop.f32.mrb[0].mxu0
      %v1691 = vadd.f32 0.0, %v1690
      %1692 = vmatprep.mubr.f32.mxu0 0.0
      %1693 = vmatmul.mubr.f32.gmra.mrb[0].mxu0 %v829
      %v1694 = vpop.f32.mrb[0].mxu0
      %v1695 = vadd.f32 0.0, %v1694
      %v1696 = vpop.f32.mrb[0].mxu0
      %v1697 = vadd.f32 0.0, %v1696
      %1698 = vmatprep.mubr.f32.mxu0 0.0
      %1699 = vmatmul.mubr.f32.gmra.mrb[0].mxu0 %v832
      %v1700 = vpop.f32.mrb[0].mxu0
      %v1701 = vadd.f32 0.0, %v1700
      %v1702 = vpop.f32.mrb[0].mxu0
      %v1703 = vadd.f32 0.0, %v1702
      %1704 = vmatprep.mubr.f32.mxu0 0.0
      %1705 = vmatmul.mubr.f32.gmra.mrb[0].mxu0 %v835
      %v1706 = vpop.f32.mrb[0].mxu0
      %v1707 = vadd.f32 0.0, %v1706
      %v1708 = vpop.f32.mrb[0].mxu0
      %v1709 = vadd.f32 0.0, %v1708
      %1710 = vmatprep.mubr.f32.mxu0 0.0
      %1711 = vmatmul.mubr.f32.gmra.mrb[0].mxu0 %v838
      %v1712 = vpop.f32.mrb[0].mxu0
      %v1713 = vadd.f32 0.0, %v1712
      %v1714 = vpop.f32.mrb[0].mxu0
      %v1715 = vadd.f32 0.0, %v1714
      %1716 = vmatprep.mubr.f32.mxu0 0.0
      %1717 = vmatmul.mubr.f32.gmra.mrb[0].mxu0 %v841
      %v1718 = vpop.f32.mrb[0].mxu0
      %v1719 = vadd.f32 0.0, %v1718
      %v1720 = vpop.f32.mrb[0].mxu0
      %v1721 = vadd.f32 0.0, %v1720
      %1722 = vmatprep.mubr.f32.mxu0 0.0
      %1723 = vmatmul.mubr.f32.gmra.mrb[0].mxu0 %v844
      %v1724 = vpop.f32.mrb[0].mxu0
      %v1725 = vadd.f32 0.0, %v1724
      %v1726 = vpop.f32.mrb[0].mxu0
      %v1727 = vadd.f32 0.0, %v1726
      %1728 = vmatprep.mubr.f32.mxu0 0.0
      %1729 = vmatmul.mubr.f32.gmra.mrb[0].mxu0 %v847
      %v1730 = vpop.f32.mrb[0].mxu0
      %v1731 = vadd.f32 0.0, %v1730
      %v1732 = vpop.f32.mrb[0].mxu0
      %v1733 = vadd.f32 0.0, %v1732
      %1734 = vmatprep.mubr.f32.mxu0 0.0
      %1735 = vmatmul.mubr.f32.gmra.mrb[0].mxu0 %v850
      %v1736 = vpop.f32.mrb[0].mxu0
      %v1737 = vadd.f32 0.0, %v1736
      %v1738 = vpop.f32.mrb[0].mxu0
      %v1739 = vadd.f32 0.0, %v1738
      %1740 = vmatprep.mubr.f32.mxu0 0.0
      %1741 = vmatmul.mubr.f32.gmra.mrb[0].mxu0 %v853
      %v1742 = vpop.f32.mrb[0].mxu0
      %v1743 = vadd.f32 0.0, %v1742
      %v1744 = vpop.f32.mrb[0].mxu0
      %v1745 = vadd.f32 0.0, %v1744
      %1746 = vmatprep.mubr.f32.mxu0 0.0
      %1747 = vmatmul.mubr.f32.gmra.mrb[0].mxu0 %v856
      %v1748 = vpop.f32.mrb[0].mxu0
      %v1749 = vadd.f32 0.0, %v1748
      %v1750 = vpop.f32.mrb[0].mxu0
      %v1751 = vadd.f32 0.0, %v1750
      %1752 = vmatprep.mubr.f32.mxu0 0.0
      %1753 = vmatmul.mubr.f32.gmra.mrb[0].mxu0 %v859
      %v1754 = vpop.f32.mrb[0].mxu0
      %v1755 = vadd.f32 0.0, %v1754
      %v1756 = vpop.f32.mrb[0].mxu0
      %v1757 = vadd.f32 0.0, %v1756
      %1758 = vmatprep.mubr.f32.mxu0 0.0
      %1759 = vmatmul.mubr.f32.gmra.mrb[0].mxu0 %v862
      %v1760 = vpop.f32.mrb[0].mxu0
      %v1761 = vadd.f32 0.0, %v1760
      %v1762 = vpop.f32.mrb[0].mxu0
      %v1763 = vadd.f32 0.0, %v1762
      %1764 = vmatprep.mubr.f32.mxu0 0.0
      %1765 = vmatmul.mubr.f32.gmra.mrb[0].mxu0 %v865
      %v1766 = vpop.f32.mrb[0].mxu0
      %v1767 = vadd.f32 0.0, %v1766
      %v1768 = vpop.f32.mrb[0].mxu0
      %v1769 = vadd.f32 0.0, %v1768
      %1770 = vmatprep.mubr.f32.mxu0 0.0
      %1771 = vmatmul.mubr.f32.gmra.mrb[0].mxu0 %v868
      %v1772 = vpop.f32.mrb[0].mxu0
      %v1773 = vadd.f32 0.0, %v1772
      %v1774 = vpop.f32.mrb[0].mxu0
      %v1775 = vadd.f32 0.0, %v1774
      %1776 = vdwg.mxu0
      %v1777 = vld [vmem:[%s2] sm:$0x3]
      %v1779 = vlaneseq
      %v1780 = vshrl.u32 %v1779, 7
      %v1781 = vsub.s32 0, %v1780
      %v1782 = vrot.slane %v1777, %v1781
      %v1783 = vlaneseq
      %v1784 = vshrl.u32 %v1783, 7
      %v1785 = vsub.s32 1, %v1784
      %v1786 = vrot.slane %v1777, %v1785
      %v1789 = vadd.f32 %v946, %v1782
      %v1790 = vadd.f32 %v948, %v1786
      %v1791 = vadd.f32 %v952, %v1782
      %v1792 = vadd.f32 %v954, %v1786
      %v1793 = vadd.f32 %v958, %v1782
      %v1794 = vadd.f32 %v960, %v1786
      %v1795 = vadd.f32 %v964, %v1782
      %v1796 = vadd.f32 %v966, %v1786
      %v1797 = vadd.f32 %v970, %v1782
      %v1798 = vadd.f32 %v972, %v1786
      %v1799 = vadd.f32 %v976, %v1782
      %v1800 = vadd.f32 %v978, %v1786
      %v1801 = vadd.f32 %v982, %v1782
      %v1802 = vadd.f32 %v984, %v1786
      %v1803 = vadd.f32 %v988, %v1782
      %v1804 = vadd.f32 %v990, %v1786
      %v1805 = vadd.f32 %v994, %v1782
      %v1806 = vadd.f32 %v996, %v1786
      %v1807 = vadd.f32 %v1000, %v1782
      %v1808 = vadd.f32 %v1002, %v1786
      %v1809 = vadd.f32 %v1006, %v1782
      %v1810 = vadd.f32 %v1008, %v1786
      %v1811 = vadd.f32 %v1012, %v1782
      %v1812 = vadd.f32 %v1014, %v1786
      %v1813 = vadd.f32 %v1018, %v1782
      %v1814 = vadd.f32 %v1020, %v1786
      %v1815 = vadd.f32 %v1024, %v1782
      %v1816 = vadd.f32 %v1026, %v1786
      %v1817 = vadd.f32 %v1030, %v1782
      %v1818 = vadd.f32 %v1032, %v1786
      %v1819 = vadd.f32 %v1036, %v1782
      %v1820 = vadd.f32 %v1038, %v1786
      %v1821 = vadd.f32 %v1042, %v1782
      %v1822 = vadd.f32 %v1044, %v1786
      %v1823 = vadd.f32 %v1048, %v1782
      %v1824 = vadd.f32 %v1050, %v1786
      %v1825 = vadd.f32 %v1054, %v1782
      %v1826 = vadd.f32 %v1056, %v1786
      %v1827 = vadd.f32 %v1060, %v1782
      %v1828 = vadd.f32 %v1062, %v1786
      %v1829 = vadd.f32 %v1066, %v1782
      %v1830 = vadd.f32 %v1068, %v1786
      %v1831 = vadd.f32 %v1072, %v1782
      %v1832 = vadd.f32 %v1074, %v1786
      %v1833 = vadd.f32 %v1078, %v1782
      %v1834 = vadd.f32 %v1080, %v1786
      %v1835 = vadd.f32 %v1084, %v1782
      %v1836 = vadd.f32 %v1086, %v1786
      %v1837 = vadd.f32 %v1090, %v1782
      %v1838 = vadd.f32 %v1092, %v1786
      %v1839 = vadd.f32 %v1096, %v1782
      %v1840 = vadd.f32 %v1098, %v1786
      %v1841 = vadd.f32 %v1102, %v1782
      %v1842 = vadd.f32 %v1104, %v1786
      %v1843 = vadd.f32 %v1108, %v1782
      %v1844 = vadd.f32 %v1110, %v1786
      %v1845 = vadd.f32 %v1114, %v1782
      %v1846 = vadd.f32 %v1116, %v1786
      %v1847 = vadd.f32 %v1120, %v1782
      %v1848 = vadd.f32 %v1122, %v1786
      %v1849 = vadd.f32 %v1126, %v1782
      %v1850 = vadd.f32 %v1128, %v1786
      %v1851 = vadd.f32 %v1132, %v1782
      %v1852 = vadd.f32 %v1134, %v1786
      %v1853 = vadd.f32 %v1138, %v1782
      %v1854 = vadd.f32 %v1140, %v1786
      %v1855 = vadd.f32 %v1144, %v1782
      %v1856 = vadd.f32 %v1146, %v1786
      %v1857 = vadd.f32 %v1150, %v1782
      %v1858 = vadd.f32 %v1152, %v1786
      %v1859 = vadd.f32 %v1156, %v1782
      %v1860 = vadd.f32 %v1158, %v1786
      %v1861 = vadd.f32 %v1162, %v1782
      %v1862 = vadd.f32 %v1164, %v1786
      %v1863 = vadd.f32 %v1168, %v1782
      %v1864 = vadd.f32 %v1170, %v1786
      %v1865 = vadd.f32 %v1174, %v1782
      %v1866 = vadd.f32 %v1176, %v1786
      %v1867 = vadd.f32 %v1180, %v1782
      %v1868 = vadd.f32 %v1182, %v1786
      %v1869 = vadd.f32 %v1186, %v1782
      %v1870 = vadd.f32 %v1188, %v1786
      %v1871 = vadd.f32 %v1192, %v1782
      %v1872 = vadd.f32 %v1194, %v1786
      %v1873 = vadd.f32 %v1198, %v1782
      %v1874 = vadd.f32 %v1200, %v1786
      %v1875 = vadd.f32 %v1204, %v1782
      %v1876 = vadd.f32 %v1206, %v1786
      %v1877 = vadd.f32 %v1210, %v1782
      %v1878 = vadd.f32 %v1212, %v1786
      %v1879 = vadd.f32 %v1216, %v1782
      %v1880 = vadd.f32 %v1218, %v1786
      %v1881 = vadd.f32 %v1222, %v1782
      %v1882 = vadd.f32 %v1224, %v1786
      %v1883 = vadd.f32 %v1228, %v1782
      %v1884 = vadd.f32 %v1230, %v1786
      %v1885 = vadd.f32 %v1234, %v1782
      %v1886 = vadd.f32 %v1236, %v1786
      %v1887 = vadd.f32 %v1240, %v1782
      %v1888 = vadd.f32 %v1242, %v1786
      %v1889 = vadd.f32 %v1246, %v1782
      %v1890 = vadd.f32 %v1248, %v1786
      %v1891 = vadd.f32 %v1252, %v1782
      %v1892 = vadd.f32 %v1254, %v1786
      %v1893 = vadd.f32 %v1258, %v1782
      %v1894 = vadd.f32 %v1260, %v1786
      %v1895 = vadd.f32 %v1264, %v1782
      %v1896 = vadd.f32 %v1266, %v1786
      %v1897 = vadd.f32 %v1270, %v1782
      %v1898 = vadd.f32 %v1272, %v1786
      %v1899 = vadd.f32 %v1276, %v1782
      %v1900 = vadd.f32 %v1278, %v1786
      %v1901 = vadd.f32 %v1282, %v1782
      %v1902 = vadd.f32 %v1284, %v1786
      %v1903 = vadd.f32 %v1288, %v1782
      %v1904 = vadd.f32 %v1290, %v1786
      %v1905 = vadd.f32 %v1294, %v1782
      %v1906 = vadd.f32 %v1296, %v1786
      %v1907 = vadd.f32 %v1300, %v1782
      %v1908 = vadd.f32 %v1302, %v1786
      %v1909 = vadd.f32 %v1306, %v1782
      %v1910 = vadd.f32 %v1308, %v1786
      %v1911 = vadd.f32 %v1312, %v1782
      %v1912 = vadd.f32 %v1314, %v1786
      %v1913 = vadd.f32 %v1318, %v1782
      %v1914 = vadd.f32 %v1320, %v1786
      %v1915 = vadd.f32 %v1324, %v1782
      %v1916 = vadd.f32 %v1326, %v1786
      %v1917 = vmax.f32 %v1789, 0.0
      %v1918 = vmax.f32 %v1790, 0.0
      %v1919 = vmax.f32 %v1791, 0.0
      %v1920 = vmax.f32 %v1792, 0.0
      %v1921 = vmax.f32 %v1793, 0.0
      %v1922 = vmax.f32 %v1794, 0.0
      %v1923 = vmax.f32 %v1795, 0.0
      %v1924 = vmax.f32 %v1796, 0.0
      %v1925 = vmax.f32 %v1797, 0.0
      %v1926 = vmax.f32 %v1798, 0.0
      %v1927 = vmax.f32 %v1799, 0.0
      %v1928 = vmax.f32 %v1800, 0.0
      %v1929 = vmax.f32 %v1801, 0.0
      %v1930 = vmax.f32 %v1802, 0.0
      %v1931 = vmax.f32 %v1803, 0.0
      %v1932 = vmax.f32 %v1804, 0.0
      %v1933 = vmax.f32 %v1805, 0.0
      %v1934 = vmax.f32 %v1806, 0.0
      %v1935 = vmax.f32 %v1807, 0.0
      %v1936 = vmax.f32 %v1808, 0.0
      %v1937 = vmax.f32 %v1809, 0.0
      %v1938 = vmax.f32 %v1810, 0.0
      %v1939 = vmax.f32 %v1811, 0.0
      %v1940 = vmax.f32 %v1812, 0.0
      %v1941 = vmax.f32 %v1813, 0.0
      %v1942 = vmax.f32 %v1814, 0.0
      %v1943 = vmax.f32 %v1815, 0.0
      %v1944 = vmax.f32 %v1816, 0.0
      %v1945 = vmax.f32 %v1817, 0.0
      %v1946 = vmax.f32 %v1818, 0.0
      %v1947 = vmax.f32 %v1819, 0.0
      %v1948 = vmax.f32 %v1820, 0.0
      %v1949 = vmax.f32 %v1821, 0.0
      %v1950 = vmax.f32 %v1822, 0.0
      %v1951 = vmax.f32 %v1823, 0.0
      %v1952 = vmax.f32 %v1824, 0.0
      %v1953 = vmax.f32 %v1825, 0.0
      %v1954 = vmax.f32 %v1826, 0.0
      %v1955 = vmax.f32 %v1827, 0.0
      %v1956 = vmax.f32 %v1828, 0.0
      %v1957 = vmax.f32 %v1829, 0.0
      %v1958 = vmax.f32 %v1830, 0.0
      %v1959 = vmax.f32 %v1831, 0.0
      %v1960 = vmax.f32 %v1832, 0.0
      %v1961 = vmax.f32 %v1833, 0.0
      %v1962 = vmax.f32 %v1834, 0.0
      %v1963 = vmax.f32 %v1835, 0.0
      %v1964 = vmax.f32 %v1836, 0.0
      %v1965 = vmax.f32 %v1837, 0.0
      %v1966 = vmax.f32 %v1838, 0.0
      %v1967 = vmax.f32 %v1839, 0.0
      %v1968 = vmax.f32 %v1840, 0.0
      %v1969 = vmax.f32 %v1841, 0.0
      %v1970 = vmax.f32 %v1842, 0.0
      %v1971 = vmax.f32 %v1843, 0.0
      %v1972 = vmax.f32 %v1844, 0.0
      %v1973 = vmax.f32 %v1845, 0.0
      %v1974 = vmax.f32 %v1846, 0.0
      %v1975 = vmax.f32 %v1847, 0.0
      %v1976 = vmax.f32 %v1848, 0.0
      %v1977 = vmax.f32 %v1849, 0.0
      %v1978 = vmax.f32 %v1850, 0.0
      %v1979 = vmax.f32 %v1851, 0.0
      %v1980 = vmax.f32 %v1852, 0.0
      %v1981 = vmax.f32 %v1853, 0.0
      %v1982 = vmax.f32 %v1854, 0.0
      %v1983 = vmax.f32 %v1855, 0.0
      %v1984 = vmax.f32 %v1856, 0.0
      %v1985 = vmax.f32 %v1857, 0.0
      %v1986 = vmax.f32 %v1858, 0.0
      %v1987 = vmax.f32 %v1859, 0.0
      %v1988 = vmax.f32 %v1860, 0.0
      %v1989 = vmax.f32 %v1861, 0.0
      %v1990 = vmax.f32 %v1862, 0.0
      %v1991 = vmax.f32 %v1863, 0.0
      %v1992 = vmax.f32 %v1864, 0.0
      %v1993 = vmax.f32 %v1865, 0.0
      %v1994 = vmax.f32 %v1866, 0.0
      %v1995 = vmax.f32 %v1867, 0.0
      %v1996 = vmax.f32 %v1868, 0.0
      %v1997 = vmax.f32 %v1869, 0.0
      %v1998 = vmax.f32 %v1870, 0.0
      %v1999 = vmax.f32 %v1871, 0.0
      %v2000 = vmax.f32 %v1872, 0.0
      %v2001 = vmax.f32 %v1873, 0.0
      %v2002 = vmax.f32 %v1874, 0.0
      %v2003 = vmax.f32 %v1875, 0.0
      %v2004 = vmax.f32 %v1876, 0.0
      %v2005 = vmax.f32 %v1877, 0.0
      %v2006 = vmax.f32 %v1878, 0.0
      %v2007 = vmax.f32 %v1879, 0.0
      %v2008 = vmax.f32 %v1880, 0.0
      %v2009 = vmax.f32 %v1881, 0.0
      %v2010 = vmax.f32 %v1882, 0.0
      %v2011 = vmax.f32 %v1883, 0.0
      %v2012 = vmax.f32 %v1884, 0.0
      %v2013 = vmax.f32 %v1885, 0.0
      %v2014 = vmax.f32 %v1886, 0.0
      %v2015 = vmax.f32 %v1887, 0.0
      %v2016 = vmax.f32 %v1888, 0.0
      %v2017 = vmax.f32 %v1889, 0.0
      %v2018 = vmax.f32 %v1890, 0.0
      %v2019 = vmax.f32 %v1891, 0.0
      %v2020 = vmax.f32 %v1892, 0.0
      %v2021 = vmax.f32 %v1893, 0.0
      %v2022 = vmax.f32 %v1894, 0.0
      %v2023 = vmax.f32 %v1895, 0.0
      %v2024 = vmax.f32 %v1896, 0.0
      %v2025 = vmax.f32 %v1897, 0.0
      %v2026 = vmax.f32 %v1898, 0.0
      %v2027 = vmax.f32 %v1899, 0.0
      %v2028 = vmax.f32 %v1900, 0.0
      %v2029 = vmax.f32 %v1901, 0.0
      %v2030 = vmax.f32 %v1902, 0.0
      %v2031 = vmax.f32 %v1903, 0.0
      %v2032 = vmax.f32 %v1904, 0.0
      %v2033 = vmax.f32 %v1905, 0.0
      %v2034 = vmax.f32 %v1906, 0.0
      %v2035 = vmax.f32 %v1907, 0.0
      %v2036 = vmax.f32 %v1908, 0.0
      %v2037 = vmax.f32 %v1909, 0.0
      %v2038 = vmax.f32 %v1910, 0.0
      %v2039 = vmax.f32 %v1911, 0.0
      %v2040 = vmax.f32 %v1912, 0.0
      %v2041 = vmax.f32 %v1913, 0.0
      %v2042 = vmax.f32 %v1914, 0.0
      %v2043 = vmax.f32 %v1915, 0.0
      %v2044 = vmax.f32 %v1916, 0.0
      %v2045 = vpack.c.bf16 %v1919, %v1917
      %v2046 = vpack.c.bf16 %v1920, %v1918
      %v2047 = vpack.c.bf16 %v1923, %v1921
      %v2048 = vpack.c.bf16 %v1924, %v1922
      %v2049 = vpack.c.bf16 %v1927, %v1925
      %v2050 = vpack.c.bf16 %v1928, %v1926
      %v2051 = vpack.c.bf16 %v1931, %v1929
      %v2052 = vpack.c.bf16 %v1932, %v1930
      %v2053 = vpack.c.bf16 %v1935, %v1933
      %v2054 = vpack.c.bf16 %v1936, %v1934
      %v2055 = vpack.c.bf16 %v1939, %v1937
      %v2056 = vpack.c.bf16 %v1940, %v1938
      %v2057 = vpack.c.bf16 %v1943, %v1941
      %v2058 = vpack.c.bf16 %v1944, %v1942
      %v2059 = vpack.c.bf16 %v1947, %v1945
      %v2060 = vpack.c.bf16 %v1948, %v1946
      %v2061 = vpack.c.bf16 %v1951, %v1949
      %v2062 = vpack.c.bf16 %v1952, %v1950
      %v2063 = vpack.c.bf16 %v1955, %v1953
      %v2064 = vpack.c.bf16 %v1956, %v1954
      %v2065 = vpack.c.bf16 %v1959, %v1957
      %v2066 = vpack.c.bf16 %v1960, %v1958
      %v2067 = vpack.c.bf16 %v1963, %v1961
      %v2068 = vpack.c.bf16 %v1964, %v1962
      %v2069 = vpack.c.bf16 %v1967, %v1965
      %v2070 = vpack.c.bf16 %v1968, %v1966
      %v2071 = vpack.c.bf16 %v1971, %v1969
      %v2072 = vpack.c.bf16 %v1972, %v1970
      %v2073 = vpack.c.bf16 %v1975, %v1973
      %v2074 = vpack.c.bf16 %v1976, %v1974
      %v2075 = vpack.c.bf16 %v1979, %v1977
      %v2076 = vpack.c.bf16 %v1980, %v1978
      %v2077 = vpack.c.bf16 %v1983, %v1981
      %v2078 = vpack.c.bf16 %v1984, %v1982
      %v2079 = vpack.c.bf16 %v1987, %v1985
      %v2080 = vpack.c.bf16 %v1988, %v1986
      %v2081 = vpack.c.bf16 %v1991, %v1989
      %v2082 = vpack.c.bf16 %v1992, %v1990
      %v2083 = vpack.c.bf16 %v1995, %v1993
      %v2084 = vpack.c.bf16 %v1996, %v1994
      %v2085 = vpack.c.bf16 %v1999, %v1997
      %v2086 = vpack.c.bf16 %v2000, %v1998
      %v2087 = vpack.c.bf16 %v2003, %v2001
      %v2088 = vpack.c.bf16 %v2004, %v2002
      %v2089 = vpack.c.bf16 %v2007, %v2005
      %v2090 = vpack.c.bf16 %v2008, %v2006
      %v2091 = vpack.c.bf16 %v2011, %v2009
      %v2092 = vpack.c.bf16 %v2012, %v2010
      %v2093 = vpack.c.bf16 %v2015, %v2013
      %v2094 = vpack.c.bf16 %v2016, %v2014
      %v2095 = vpack.c.bf16 %v2019, %v2017
      %v2096 = vpack.c.bf16 %v2020, %v2018
      %v2097 = vpack.c.bf16 %v2023, %v2021
      %v2098 = vpack.c.bf16 %v2024, %v2022
      %v2099 = vpack.c.bf16 %v2027, %v2025
      %v2100 = vpack.c.bf16 %v2028, %v2026
      %v2101 = vpack.c.bf16 %v2031, %v2029
      %v2102 = vpack.c.bf16 %v2032, %v2030
      %v2103 = vpack.c.bf16 %v2035, %v2033
      %v2104 = vpack.c.bf16 %v2036, %v2034
      %v2105 = vpack.c.bf16 %v2039, %v2037
      %v2106 = vpack.c.bf16 %v2040, %v2038
      %v2107 = vpack.c.bf16 %v2043, %v2041
      %v2108 = vpack.c.bf16 %v2044, %v2042
      %v2109 = vld [vmem:[%s3] sm:$0xff]
      %v2110 = vld [vmem:[%s3 + $0x8] sm:$0xff]
      %v2111 = vld [vmem:[%s3 + $0x10] sm:$0xff]
      %v2112 = vld [vmem:[%s3 + $0x18] sm:$0xff]
      %v2113 = vld [vmem:[%s3 + $0x20] sm:$0xff]
      %v2114 = vld [vmem:[%s3 + $0x28] sm:$0xff]
      %v2115 = vld [vmem:[%s3 + $0x30] sm:$0xff]
      %v2116 = vld [vmem:[%s3 + $0x38] sm:$0xff]
      %v2117 = vld [vmem:[%s3 + $0x40] sm:$0xff]
      %v2118 = vld [vmem:[%s3 + $0x48] sm:$0xff]
      %v2119 = vld [vmem:[%s3 + $0x50] sm:$0xff]
      %v2120 = vld [vmem:[%s3 + $0x58] sm:$0xff]
      %v2121 = vld [vmem:[%s3 + $0x60] sm:$0xff]
      %v2122 = vld [vmem:[%s3 + $0x68] sm:$0xff]
      %v2123 = vld [vmem:[%s3 + $0x70] sm:$0xff]
      %v2124 = vld [vmem:[%s3 + $0x78] sm:$0xff]
      %v2125 = vld [vmem:[%s3 + $0x80] sm:$0xff]
      %v2126 = vld [vmem:[%s3 + $0x88] sm:$0xff]
      %v2127 = vld [vmem:[%s3 + $0x90] sm:$0xff]
      %v2128 = vld [vmem:[%s3 + $0x98] sm:$0xff]
      %v2129 = vld [vmem:[%s3 + $0xa0] sm:$0xff]
      %v2130 = vld [vmem:[%s3 + $0xa8] sm:$0xff]
      %v2131 = vld [vmem:[%s3 + $0xb0] sm:$0xff]
      %v2132 = vld [vmem:[%s3 + $0xb8] sm:$0xff]
      %v2133 = vld [vmem:[%s3 + $0xc0] sm:$0xff]
      %v2134 = vld [vmem:[%s3 + $0xc8] sm:$0xff]
      %v2135 = vld [vmem:[%s3 + $0xd0] sm:$0xff]
      %v2136 = vld [vmem:[%s3 + $0xd8] sm:$0xff]
      %v2137 = vld [vmem:[%s3 + $0xe0] sm:$0xff]
      %v2138 = vld [vmem:[%s3 + $0xe8] sm:$0xff]
      %v2139 = vld [vmem:[%s3 + $0xf0] sm:$0xff]
      %v2140 = vld [vmem:[%s3 + $0xf8] sm:$0xff]
      %v2141 = vld [vmem:[%s4] sm:$0x3]
      %v2143 = vlaneseq
      %v2144 = vshrl.u32 %v2143, 7
      %v2145 = vsub.s32 0, %v2144
      %v2146 = vrot.slane %v2141, %v2145
      %v2147 = vlaneseq
      %v2148 = vshrl.u32 %v2147, 7
      %v2149 = vsub.s32 1, %v2148
      %v2150 = vrot.slane %v2141, %v2149
      %v2185 = vunpack.c.l.b16 %v2109
      %v2186 = vunpack.c.h.b16 %v2109
      %v2187 = vunpack.c.l.b16 %v2110
      %v2188 = vunpack.c.h.b16 %v2110
      %v2189 = vunpack.c.l.b16 %v2111
      %v2190 = vunpack.c.h.b16 %v2111
      %v2191 = vunpack.c.l.b16 %v2112
      %v2192 = vunpack.c.h.b16 %v2112
      %v2193 = vunpack.c.l.b16 %v2113
      %v2194 = vunpack.c.h.b16 %v2113
      %v2195 = vunpack.c.l.b16 %v2114
      %v2196 = vunpack.c.h.b16 %v2114
      %v2197 = vunpack.c.l.b16 %v2115
      %v2198 = vunpack.c.h.b16 %v2115
      %v2199 = vunpack.c.l.b16 %v2116
      %v2200 = vunpack.c.h.b16 %v2116
      %v2201 = vunpack.c.l.b16 %v2117
      %v2202 = vunpack.c.h.b16 %v2117
      %v2203 = vunpack.c.l.b16 %v2118
      %v2204 = vunpack.c.h.b16 %v2118
      %v2205 = vunpack.c.l.b16 %v2119
      %v2206 = vunpack.c.h.b16 %v2119
      %v2207 = vunpack.c.l.b16 %v2120
      %v2208 = vunpack.c.h.b16 %v2120
      %v2209 = vunpack.c.l.b16 %v2121
      %v2210 = vunpack.c.h.b16 %v2121
      %v2211 = vunpack.c.l.b16 %v2122
      %v2212 = vunpack.c.h.b16 %v2122
      %v2213 = vunpack.c.l.b16 %v2123
      %v2214 = vunpack.c.h.b16 %v2123
      %v2215 = vunpack.c.l.b16 %v2124
      %v2216 = vunpack.c.h.b16 %v2124
      %v2217 = vunpack.c.l.b16 %v2125
      %v2218 = vunpack.c.h.b16 %v2125
      %v2219 = vunpack.c.l.b16 %v2126
      %v2220 = vunpack.c.h.b16 %v2126
      %v2221 = vunpack.c.l.b16 %v2127
      %v2222 = vunpack.c.h.b16 %v2127
      %v2223 = vunpack.c.l.b16 %v2128
      %v2224 = vunpack.c.h.b16 %v2128
      %v2225 = vunpack.c.l.b16 %v2129
      %v2226 = vunpack.c.h.b16 %v2129
      %v2227 = vunpack.c.l.b16 %v2130
      %v2228 = vunpack.c.h.b16 %v2130
      %v2229 = vunpack.c.l.b16 %v2131
      %v2230 = vunpack.c.h.b16 %v2131
      %v2231 = vunpack.c.l.b16 %v2132
      %v2232 = vunpack.c.h.b16 %v2132
      %v2233 = vunpack.c.l.b16 %v2133
      %v2234 = vunpack.c.h.b16 %v2133
      %v2235 = vunpack.c.l.b16 %v2134
      %v2236 = vunpack.c.h.b16 %v2134
      %v2237 = vunpack.c.l.b16 %v2135
      %v2238 = vunpack.c.h.b16 %v2135
      %v2239 = vunpack.c.l.b16 %v2136
      %v2240 = vunpack.c.h.b16 %v2136
      %v2241 = vunpack.c.l.b16 %v2137
      %v2242 = vunpack.c.h.b16 %v2137
      %v2243 = vunpack.c.l.b16 %v2138
      %v2244 = vunpack.c.h.b16 %v2138
      %v2245 = vunpack.c.l.b16 %v2139
      %v2246 = vunpack.c.h.b16 %v2139
      %v2247 = vunpack.c.l.b16 %v2140
      %v2248 = vunpack.c.h.b16 %v2140
      %v2249 = vpack.c.b16 %v2187, %v2185
      %v2250 = vpack.c.b16 %v2188, %v2186
      %v2251 = vpack.c.b16 %v2191, %v2189
      %v2252 = vpack.c.b16 %v2192, %v2190
      %v2253 = vpack.c.b16 %v2195, %v2193
      %v2254 = vpack.c.b16 %v2196, %v2194
      %v2255 = vpack.c.b16 %v2199, %v2197
      %v2256 = vpack.c.b16 %v2200, %v2198
      %v2257 = vpack.c.b16 %v2203, %v2201
      %v2258 = vpack.c.b16 %v2204, %v2202
      %v2259 = vpack.c.b16 %v2207, %v2205
      %v2260 = vpack.c.b16 %v2208, %v2206
      %v2261 = vpack.c.b16 %v2211, %v2209
      %v2262 = vpack.c.b16 %v2212, %v2210
      %v2263 = vpack.c.b16 %v2215, %v2213
      %v2264 = vpack.c.b16 %v2216, %v2214
      %v2265 = vpack.c.b16 %v2219, %v2217
      %v2266 = vpack.c.b16 %v2220, %v2218
      %v2267 = vpack.c.b16 %v2223, %v2221
      %v2268 = vpack.c.b16 %v2224, %v2222
      %v2269 = vpack.c.b16 %v2227, %v2225
      %v2270 = vpack.c.b16 %v2228, %v2226
      %v2271 = vpack.c.b16 %v2231, %v2229
      %v2272 = vpack.c.b16 %v2232, %v2230
      %v2273 = vpack.c.b16 %v2235, %v2233
      %v2274 = vpack.c.b16 %v2236, %v2234
      %v2275 = vpack.c.b16 %v2239, %v2237
      %v2276 = vpack.c.b16 %v2240, %v2238
      %v2277 = vpack.c.b16 %v2243, %v2241
      %v2278 = vpack.c.b16 %v2244, %v2242
      %v2279 = vpack.c.b16 %v2247, %v2245
      %v2280 = vpack.c.b16 %v2248, %v2246
      %2313 = vmatprep.subr.bf16.mxu0 %v2250
      %2314 = vmatpush1.bf16.msra.mxu0 %v2249
      %2315 = vmatprep.subr.bf16.mxu0 %v2252
      %2316 = vmatpush1.bf16.msra.mxu0 %v2251
      %2317 = vmatprep.subr.bf16.mxu0 %v2254
      %2318 = vmatpush1.bf16.msra.mxu0 %v2253
      %2319 = vmatprep.subr.bf16.mxu0 %v2256
      %2320 = vmatpush1.bf16.msra.mxu0 %v2255
      %2321 = vmatprep.subr.bf16.mxu0 %v2258
      %2322 = vmatpush1.bf16.msra.mxu0 %v2257
      %2323 = vmatprep.subr.bf16.mxu0 %v2260
      %2324 = vmatpush1.bf16.msra.mxu0 %v2259
      %2325 = vmatprep.subr.bf16.mxu0 %v2262
      %2326 = vmatpush1.bf16.msra.mxu0 %v2261
      %2327 = vmatprep.subr.bf16.mxu0 %v2264
      %2328 = vmatpush1.bf16.msra.mxu0 %v2263
      %2329 = vmatprep.subr.bf16.mxu0 %v2266
      %2330 = vmatpush1.bf16.msra.mxu0 %v2265
      %2331 = vmatprep.subr.bf16.mxu0 %v2268
      %2332 = vmatpush1.bf16.msra.mxu0 %v2267
      %2333 = vmatprep.subr.bf16.mxu0 %v2270
      %2334 = vmatpush1.bf16.msra.mxu0 %v2269
      %2335 = vmatprep.subr.bf16.mxu0 %v2272
      %2336 = vmatpush1.bf16.msra.mxu0 %v2271
      %2337 = vmatprep.subr.bf16.mxu0 %v2274
      %2338 = vmatpush1.bf16.msra.mxu0 %v2273
      %2339 = vmatprep.subr.bf16.mxu0 %v2276
      %2340 = vmatpush1.bf16.msra.mxu0 %v2275
      %2341 = vmatprep.subr.bf16.mxu0 %v2278
      %2342 = vmatpush1.bf16.msra.mxu0 %v2277
      %2343 = vmatprep.subr.bf16.mxu0 %v2280
      %2344 = vmatpush1.bf16.msra.mxu0 %v2279
      %2345 = vmatprep.mubr.bf16.mxu0 %v2046
      %2346 = vmatmul.mubr.bf16.gmra.mrb[0].mxu0 %v2045
      %v2347 = vpop.f32.mrb[0].mxu0
      %v2348 = vadd.f32 %v2146, %v2347
      %v2349 = vpop.f32.mrb[0].mxu0
      %v2350 = vadd.f32 %v2150, %v2349
      %v2351 = vpop.f32.mrb[0].mxu0
      %v2352 = vadd.f32 %v2146, %v2351
      %v2353 = vpop.f32.mrb[0].mxu0
      %v2354 = vadd.f32 %v2150, %v2353
      %2355 = vmatprep.mubr.bf16.mxu0 %v2048
      %2356 = vmatmul.mubr.bf16.gmra.mrb[0].mxu0 %v2047
      %v2357 = vpop.f32.mrb[0].mxu0
      %v2358 = vadd.f32 %v2146, %v2357
      %v2359 = vpop.f32.mrb[0].mxu0
      %v2360 = vadd.f32 %v2150, %v2359
      %v2361 = vpop.f32.mrb[0].mxu0
      %v2362 = vadd.f32 %v2146, %v2361
      %v2363 = vpop.f32.mrb[0].mxu0
      %v2364 = vadd.f32 %v2150, %v2363
      %2365 = vmatprep.mubr.bf16.mxu0 %v2050
      %2366 = vmatmul.mubr.bf16.gmra.mrb[0].mxu0 %v2049
      %v2367 = vpop.f32.mrb[0].mxu0
      %v2368 = vadd.f32 %v2146, %v2367
      %v2369 = vpop.f32.mrb[0].mxu0
      %v2370 = vadd.f32 %v2150, %v2369
      %v2371 = vpop.f32.mrb[0].mxu0
      %v2372 = vadd.f32 %v2146, %v2371
      %v2373 = vpop.f32.mrb[0].mxu0
      %v2374 = vadd.f32 %v2150, %v2373
      %2375 = vmatprep.mubr.bf16.mxu0 %v2052
      %2376 = vmatmul.mubr.bf16.gmra.mrb[0].mxu0 %v2051
      %v2377 = vpop.f32.mrb[0].mxu0
      %v2378 = vadd.f32 %v2146, %v2377
      %v2379 = vpop.f32.mrb[0].mxu0
      %v2380 = vadd.f32 %v2150, %v2379
      %v2381 = vpop.f32.mrb[0].mxu0
      %v2382 = vadd.f32 %v2146, %v2381
      %v2383 = vpop.f32.mrb[0].mxu0
      %v2384 = vadd.f32 %v2150, %v2383
      %2385 = vmatprep.mubr.bf16.mxu0 %v2054
      %2386 = vmatmul.mubr.bf16.gmra.mrb[0].mxu0 %v2053
      %v2387 = vpop.f32.mrb[0].mxu0
      %v2388 = vadd.f32 %v2146, %v2387
      %v2389 = vpop.f32.mrb[0].mxu0
      %v2390 = vadd.f32 %v2150, %v2389
      %v2391 = vpop.f32.mrb[0].mxu0
      %v2392 = vadd.f32 %v2146, %v2391
      %v2393 = vpop.f32.mrb[0].mxu0
      %v2394 = vadd.f32 %v2150, %v2393
      %2395 = vmatprep.mubr.bf16.mxu0 %v2056
      %2396 = vmatmul.mubr.bf16.gmra.mrb[0].mxu0 %v2055
      %v2397 = vpop.f32.mrb[0].mxu0
      %v2398 = vadd.f32 %v2146, %v2397
      %v2399 = vpop.f32.mrb[0].mxu0
      %v2400 = vadd.f32 %v2150, %v2399
      %v2401 = vpop.f32.mrb[0].mxu0
      %v2402 = vadd.f32 %v2146, %v2401
      %v2403 = vpop.f32.mrb[0].mxu0
      %v2404 = vadd.f32 %v2150, %v2403
      %2405 = vmatprep.mubr.bf16.mxu0 %v2058
      %2406 = vmatmul.mubr.bf16.gmra.mrb[0].mxu0 %v2057
      %v2407 = vpop.f32.mrb[0].mxu0
      %v2408 = vadd.f32 %v2146, %v2407
      %v2409 = vpop.f32.mrb[0].mxu0
      %v2410 = vadd.f32 %v2150, %v2409
      %v2411 = vpop.f32.mrb[0].mxu0
      %v2412 = vadd.f32 %v2146, %v2411
      %v2413 = vpop.f32.mrb[0].mxu0
      %v2414 = vadd.f32 %v2150, %v2413
      %2415 = vmatprep.mubr.bf16.mxu0 %v2060
      %2416 = vmatmul.mubr.bf16.gmra.mrb[0].mxu0 %v2059
      %v2417 = vpop.f32.mrb[0].mxu0
      %v2418 = vadd.f32 %v2146, %v2417
      %v2419 = vpop.f32.mrb[0].mxu0
      %v2420 = vadd.f32 %v2150, %v2419
      %v2421 = vpop.f32.mrb[0].mxu0
      %v2422 = vadd.f32 %v2146, %v2421
      %v2423 = vpop.f32.mrb[0].mxu0
      %v2424 = vadd.f32 %v2150, %v2423
      %2425 = vmatprep.mubr.bf16.mxu0 %v2062
      %2426 = vmatmul.mubr.bf16.gmra.mrb[0].mxu0 %v2061
      %v2427 = vpop.f32.mrb[0].mxu0
      %v2428 = vadd.f32 %v2146, %v2427
      %v2429 = vpop.f32.mrb[0].mxu0
      %v2430 = vadd.f32 %v2150, %v2429
      %v2431 = vpop.f32.mrb[0].mxu0
      %v2432 = vadd.f32 %v2146, %v2431
      %v2433 = vpop.f32.mrb[0].mxu0
      %v2434 = vadd.f32 %v2150, %v2433
      %2435 = vmatprep.mubr.bf16.mxu0 %v2064
      %2436 = vmatmul.mubr.bf16.gmra.mrb[0].mxu0 %v2063
      %v2437 = vpop.f32.mrb[0].mxu0
      %v2438 = vadd.f32 %v2146, %v2437
      %v2439 = vpop.f32.mrb[0].mxu0
      %v2440 = vadd.f32 %v2150, %v2439
      %v2441 = vpop.f32.mrb[0].mxu0
      %v2442 = vadd.f32 %v2146, %v2441
      %v2443 = vpop.f32.mrb[0].mxu0
      %v2444 = vadd.f32 %v2150, %v2443
      %2445 = vmatprep.mubr.bf16.mxu0 %v2066
      %2446 = vmatmul.mubr.bf16.gmra.mrb[0].mxu0 %v2065
      %v2447 = vpop.f32.mrb[0].mxu0
      %v2448 = vadd.f32 %v2146, %v2447
      %v2449 = vpop.f32.mrb[0].mxu0
      %v2450 = vadd.f32 %v2150, %v2449
      %v2451 = vpop.f32.mrb[0].mxu0
      %v2452 = vadd.f32 %v2146, %v2451
      %v2453 = vpop.f32.mrb[0].mxu0
      %v2454 = vadd.f32 %v2150, %v2453
      %2455 = vmatprep.mubr.bf16.mxu0 %v2068
      %2456 = vmatmul.mubr.bf16.gmra.mrb[0].mxu0 %v2067
      %v2457 = vpop.f32.mrb[0].mxu0
      %v2458 = vadd.f32 %v2146, %v2457
      %v2459 = vpop.f32.mrb[0].mxu0
      %v2460 = vadd.f32 %v2150, %v2459
      %v2461 = vpop.f32.mrb[0].mxu0
      %v2462 = vadd.f32 %v2146, %v2461
      %v2463 = vpop.f32.mrb[0].mxu0
      %v2464 = vadd.f32 %v2150, %v2463
      %2465 = vmatprep.mubr.bf16.mxu0 %v2070
      %2466 = vmatmul.mubr.bf16.gmra.mrb[0].mxu0 %v2069
      %v2467 = vpop.f32.mrb[0].mxu0
      %v2468 = vadd.f32 %v2146, %v2467
      %v2469 = vpop.f32.mrb[0].mxu0
      %v2470 = vadd.f32 %v2150, %v2469
      %v2471 = vpop.f32.mrb[0].mxu0
      %v2472 = vadd.f32 %v2146, %v2471
      %v2473 = vpop.f32.mrb[0].mxu0
      %v2474 = vadd.f32 %v2150, %v2473
      %2475 = vmatprep.mubr.bf16.mxu0 %v2072
      %2476 = vmatmul.mubr.bf16.gmra.mrb[0].mxu0 %v2071
      %v2477 = vpop.f32.mrb[0].mxu0
      %v2478 = vadd.f32 %v2146, %v2477
      %v2479 = vpop.f32.mrb[0].mxu0
      %v2480 = vadd.f32 %v2150, %v2479
      %v2481 = vpop.f32.mrb[0].mxu0
      %v2482 = vadd.f32 %v2146, %v2481
      %v2483 = vpop.f32.mrb[0].mxu0
      %v2484 = vadd.f32 %v2150, %v2483
      %2485 = vmatprep.mubr.bf16.mxu0 %v2074
      %2486 = vmatmul.mubr.bf16.gmra.mrb[0].mxu0 %v2073
      %v2487 = vpop.f32.mrb[0].mxu0
      %v2488 = vadd.f32 %v2146, %v2487
      %v2489 = vpop.f32.mrb[0].mxu0
      %v2490 = vadd.f32 %v2150, %v2489
      %v2491 = vpop.f32.mrb[0].mxu0
      %v2492 = vadd.f32 %v2146, %v2491
      %v2493 = vpop.f32.mrb[0].mxu0
      %v2494 = vadd.f32 %v2150, %v2493
      %2495 = vmatprep.mubr.bf16.mxu0 %v2076
      %2496 = vmatmul.mubr.bf16.gmra.mrb[0].mxu0 %v2075
      %v2497 = vpop.f32.mrb[0].mxu0
      %v2498 = vadd.f32 %v2146, %v2497
      %v2499 = vpop.f32.mrb[0].mxu0
      %v2500 = vadd.f32 %v2150, %v2499
      %v2501 = vpop.f32.mrb[0].mxu0
      %v2502 = vadd.f32 %v2146, %v2501
      %v2503 = vpop.f32.mrb[0].mxu0
      %v2504 = vadd.f32 %v2150, %v2503
      %2505 = vmatprep.mubr.bf16.mxu0 %v2078
      %2506 = vmatmul.mubr.bf16.gmra.mrb[0].mxu0 %v2077
      %v2507 = vpop.f32.mrb[0].mxu0
      %v2508 = vadd.f32 %v2146, %v2507
      %v2509 = vpop.f32.mrb[0].mxu0
      %v2510 = vadd.f32 %v2150, %v2509
      %v2511 = vpop.f32.mrb[0].mxu0
      %v2512 = vadd.f32 %v2146, %v2511
      %v2513 = vpop.f32.mrb[0].mxu0
      %v2514 = vadd.f32 %v2150, %v2513
      %2515 = vmatprep.mubr.bf16.mxu0 %v2080
      %2516 = vmatmul.mubr.bf16.gmra.mrb[0].mxu0 %v2079
      %v2517 = vpop.f32.mrb[0].mxu0
      %v2518 = vadd.f32 %v2146, %v2517
      %v2519 = vpop.f32.mrb[0].mxu0
      %v2520 = vadd.f32 %v2150, %v2519
      %v2521 = vpop.f32.mrb[0].mxu0
      %v2522 = vadd.f32 %v2146, %v2521
      %v2523 = vpop.f32.mrb[0].mxu0
      %v2524 = vadd.f32 %v2150, %v2523
      %2525 = vmatprep.mubr.bf16.mxu0 %v2082
      %2526 = vmatmul.mubr.bf16.gmra.mrb[0].mxu0 %v2081
      %v2527 = vpop.f32.mrb[0].mxu0
      %v2528 = vadd.f32 %v2146, %v2527
      %v2529 = vpop.f32.mrb[0].mxu0
      %v2530 = vadd.f32 %v2150, %v2529
      %v2531 = vpop.f32.mrb[0].mxu0
      %v2532 = vadd.f32 %v2146, %v2531
      %v2533 = vpop.f32.mrb[0].mxu0
      %v2534 = vadd.f32 %v2150, %v2533
      %2535 = vmatprep.mubr.bf16.mxu0 %v2084
      %2536 = vmatmul.mubr.bf16.gmra.mrb[0].mxu0 %v2083
      %v2537 = vpop.f32.mrb[0].mxu0
      %v2538 = vadd.f32 %v2146, %v2537
      %v2539 = vpop.f32.mrb[0].mxu0
      %v2540 = vadd.f32 %v2150, %v2539
      %v2541 = vpop.f32.mrb[0].mxu0
      %v2542 = vadd.f32 %v2146, %v2541
      %v2543 = vpop.f32.mrb[0].mxu0
      %v2544 = vadd.f32 %v2150, %v2543
      %2545 = vmatprep.mubr.bf16.mxu0 %v2086
      %2546 = vmatmul.mubr.bf16.gmra.mrb[0].mxu0 %v2085
      %v2547 = vpop.f32.mrb[0].mxu0
      %v2548 = vadd.f32 %v2146, %v2547
      %v2549 = vpop.f32.mrb[0].mxu0
      %v2550 = vadd.f32 %v2150, %v2549
      %v2551 = vpop.f32.mrb[0].mxu0
      %v2552 = vadd.f32 %v2146, %v2551
      %v2553 = vpop.f32.mrb[0].mxu0
      %v2554 = vadd.f32 %v2150, %v2553
      %2555 = vmatprep.mubr.bf16.mxu0 %v2088
      %2556 = vmatmul.mubr.bf16.gmra.mrb[0].mxu0 %v2087
      %v2557 = vpop.f32.mrb[0].mxu0
      %v2558 = vadd.f32 %v2146, %v2557
      %v2559 = vpop.f32.mrb[0].mxu0
      %v2560 = vadd.f32 %v2150, %v2559
      %v2561 = vpop.f32.mrb[0].mxu0
      %v2562 = vadd.f32 %v2146, %v2561
      %v2563 = vpop.f32.mrb[0].mxu0
      %v2564 = vadd.f32 %v2150, %v2563
      %2565 = vmatprep.mubr.bf16.mxu0 %v2090
      %2566 = vmatmul.mubr.bf16.gmra.mrb[0].mxu0 %v2089
      %v2567 = vpop.f32.mrb[0].mxu0
      %v2568 = vadd.f32 %v2146, %v2567
      %v2569 = vpop.f32.mrb[0].mxu0
      %v2570 = vadd.f32 %v2150, %v2569
      %v2571 = vpop.f32.mrb[0].mxu0
      %v2572 = vadd.f32 %v2146, %v2571
      %v2573 = vpop.f32.mrb[0].mxu0
      %v2574 = vadd.f32 %v2150, %v2573
      %2575 = vmatprep.mubr.bf16.mxu0 %v2092
      %2576 = vmatmul.mubr.bf16.gmra.mrb[0].mxu0 %v2091
      %v2577 = vpop.f32.mrb[0].mxu0
      %v2578 = vadd.f32 %v2146, %v2577
      %v2579 = vpop.f32.mrb[0].mxu0
      %v2580 = vadd.f32 %v2150, %v2579
      %v2581 = vpop.f32.mrb[0].mxu0
      %v2582 = vadd.f32 %v2146, %v2581
      %v2583 = vpop.f32.mrb[0].mxu0
      %v2584 = vadd.f32 %v2150, %v2583
      %2585 = vmatprep.mubr.bf16.mxu0 %v2094
      %2586 = vmatmul.mubr.bf16.gmra.mrb[0].mxu0 %v2093
      %v2587 = vpop.f32.mrb[0].mxu0
      %v2588 = vadd.f32 %v2146, %v2587
      %v2589 = vpop.f32.mrb[0].mxu0
      %v2590 = vadd.f32 %v2150, %v2589
      %v2591 = vpop.f32.mrb[0].mxu0
      %v2592 = vadd.f32 %v2146, %v2591
      %v2593 = vpop.f32.mrb[0].mxu0
      %v2594 = vadd.f32 %v2150, %v2593
      %2595 = vmatprep.mubr.bf16.mxu0 %v2096
      %2596 = vmatmul.mubr.bf16.gmra.mrb[0].mxu0 %v2095
      %v2597 = vpop.f32.mrb[0].mxu0
      %v2598 = vadd.f32 %v2146, %v2597
      %v2599 = vpop.f32.mrb[0].mxu0
      %v2600 = vadd.f32 %v2150, %v2599
      %v2601 = vpop.f32.mrb[0].mxu0
      %v2602 = vadd.f32 %v2146, %v2601
      %v2603 = vpop.f32.mrb[0].mxu0
      %v2604 = vadd.f32 %v2150, %v2603
      %2605 = vmatprep.mubr.bf16.mxu0 %v2098
      %2606 = vmatmul.mubr.bf16.gmra.mrb[0].mxu0 %v2097
      %v2607 = vpop.f32.mrb[0].mxu0
      %v2608 = vadd.f32 %v2146, %v2607
      %v2609 = vpop.f32.mrb[0].mxu0
      %v2610 = vadd.f32 %v2150, %v2609
      %v2611 = vpop.f32.mrb[0].mxu0
      %v2612 = vadd.f32 %v2146, %v2611
      %v2613 = vpop.f32.mrb[0].mxu0
      %v2614 = vadd.f32 %v2150, %v2613
      %2615 = vmatprep.mubr.bf16.mxu0 %v2100
      %2616 = vmatmul.mubr.bf16.gmra.mrb[0].mxu0 %v2099
      %v2617 = vpop.f32.mrb[0].mxu0
      %v2618 = vadd.f32 %v2146, %v2617
      %v2619 = vpop.f32.mrb[0].mxu0
      %v2620 = vadd.f32 %v2150, %v2619
      %v2621 = vpop.f32.mrb[0].mxu0
      %v2622 = vadd.f32 %v2146, %v2621
      %v2623 = vpop.f32.mrb[0].mxu0
      %v2624 = vadd.f32 %v2150, %v2623
      %2625 = vmatprep.mubr.bf16.mxu0 %v2102
      %2626 = vmatmul.mubr.bf16.gmra.mrb[0].mxu0 %v2101
      %v2627 = vpop.f32.mrb[0].mxu0
      %v2628 = vadd.f32 %v2146, %v2627
      %v2629 = vpop.f32.mrb[0].mxu0
      %v2630 = vadd.f32 %v2150, %v2629
      %v2631 = vpop.f32.mrb[0].mxu0
      %v2632 = vadd.f32 %v2146, %v2631
      %v2633 = vpop.f32.mrb[0].mxu0
      %v2634 = vadd.f32 %v2150, %v2633
      %2635 = vmatprep.mubr.bf16.mxu0 %v2104
      %2636 = vmatmul.mubr.bf16.gmra.mrb[0].mxu0 %v2103
      %v2637 = vpop.f32.mrb[0].mxu0
      %v2638 = vadd.f32 %v2146, %v2637
      %v2639 = vpop.f32.mrb[0].mxu0
      %v2640 = vadd.f32 %v2150, %v2639
      %v2641 = vpop.f32.mrb[0].mxu0
      %v2642 = vadd.f32 %v2146, %v2641
      %v2643 = vpop.f32.mrb[0].mxu0
      %v2644 = vadd.f32 %v2150, %v2643
      %2645 = vmatprep.mubr.bf16.mxu0 %v2106
      %2646 = vmatmul.mubr.bf16.gmra.mrb[0].mxu0 %v2105
      %v2647 = vpop.f32.mrb[0].mxu0
      %v2648 = vadd.f32 %v2146, %v2647
      %v2649 = vpop.f32.mrb[0].mxu0
      %v2650 = vadd.f32 %v2150, %v2649
      %v2651 = vpop.f32.mrb[0].mxu0
      %v2652 = vadd.f32 %v2146, %v2651
      %v2653 = vpop.f32.mrb[0].mxu0
      %v2654 = vadd.f32 %v2150, %v2653
      %2655 = vmatprep.mubr.bf16.mxu0 %v2108
      %2656 = vmatmul.mubr.bf16.gmra.mrb[0].mxu0 %v2107
      %v2657 = vpop.f32.mrb[0].mxu0
      %v2658 = vadd.f32 %v2146, %v2657
      %v2659 = vpop.f32.mrb[0].mxu0
      %v2660 = vadd.f32 %v2150, %v2659
      %v2661 = vpop.f32.mrb[0].mxu0
      %v2662 = vadd.f32 %v2146, %v2661
      %v2663 = vpop.f32.mrb[0].mxu0
      %v2664 = vadd.f32 %v2150, %v2663
      %2665 = vdwg.mxu0
      %v2666 = vmax.f32 %v2348, 0.0
      %v2667 = vmax.f32 %v2350, 0.0
      %v2668 = vmax.f32 %v2352, 0.0
      %v2669 = vmax.f32 %v2354, 0.0
      %v2670 = vmax.f32 %v2358, 0.0
      %v2671 = vmax.f32 %v2360, 0.0
      %v2672 = vmax.f32 %v2362, 0.0
      %v2673 = vmax.f32 %v2364, 0.0
      %v2674 = vmax.f32 %v2368, 0.0
      %v2675 = vmax.f32 %v2370, 0.0
      %v2676 = vmax.f32 %v2372, 0.0
      %v2677 = vmax.f32 %v2374, 0.0
      %v2678 = vmax.f32 %v2378, 0.0
      %v2679 = vmax.f32 %v2380, 0.0
      %v2680 = vmax.f32 %v2382, 0.0
      %v2681 = vmax.f32 %v2384, 0.0
      %v2682 = vmax.f32 %v2388, 0.0
      %v2683 = vmax.f32 %v2390, 0.0
      %v2684 = vmax.f32 %v2392, 0.0
      %v2685 = vmax.f32 %v2394, 0.0
      %v2686 = vmax.f32 %v2398, 0.0
      %v2687 = vmax.f32 %v2400, 0.0
      %v2688 = vmax.f32 %v2402, 0.0
      %v2689 = vmax.f32 %v2404, 0.0
      %v2690 = vmax.f32 %v2408, 0.0
      %v2691 = vmax.f32 %v2410, 0.0
      %v2692 = vmax.f32 %v2412, 0.0
      %v2693 = vmax.f32 %v2414, 0.0
      %v2694 = vmax.f32 %v2418, 0.0
      %v2695 = vmax.f32 %v2420, 0.0
      %v2696 = vmax.f32 %v2422, 0.0
      %v2697 = vmax.f32 %v2424, 0.0
      %v2698 = vmax.f32 %v2428, 0.0
      %v2699 = vmax.f32 %v2430, 0.0
      %v2700 = vmax.f32 %v2432, 0.0
      %v2701 = vmax.f32 %v2434, 0.0
      %v2702 = vmax.f32 %v2438, 0.0
      %v2703 = vmax.f32 %v2440, 0.0
      %v2704 = vmax.f32 %v2442, 0.0
      %v2705 = vmax.f32 %v2444, 0.0
      %v2706 = vmax.f32 %v2448, 0.0
      %v2707 = vmax.f32 %v2450, 0.0
      %v2708 = vmax.f32 %v2452, 0.0
      %v2709 = vmax.f32 %v2454, 0.0
      %v2710 = vmax.f32 %v2458, 0.0
      %v2711 = vmax.f32 %v2460, 0.0
      %v2712 = vmax.f32 %v2462, 0.0
      %v2713 = vmax.f32 %v2464, 0.0
      %v2714 = vmax.f32 %v2468, 0.0
      %v2715 = vmax.f32 %v2470, 0.0
      %v2716 = vmax.f32 %v2472, 0.0
      %v2717 = vmax.f32 %v2474, 0.0
      %v2718 = vmax.f32 %v2478, 0.0
      %v2719 = vmax.f32 %v2480, 0.0
      %v2720 = vmax.f32 %v2482, 0.0
      %v2721 = vmax.f32 %v2484, 0.0
      %v2722 = vmax.f32 %v2488, 0.0
      %v2723 = vmax.f32 %v2490, 0.0
      %v2724 = vmax.f32 %v2492, 0.0
      %v2725 = vmax.f32 %v2494, 0.0
      %v2726 = vmax.f32 %v2498, 0.0
      %v2727 = vmax.f32 %v2500, 0.0
      %v2728 = vmax.f32 %v2502, 0.0
      %v2729 = vmax.f32 %v2504, 0.0
      %v2730 = vmax.f32 %v2508, 0.0
      %v2731 = vmax.f32 %v2510, 0.0
      %v2732 = vmax.f32 %v2512, 0.0
      %v2733 = vmax.f32 %v2514, 0.0
      %v2734 = vmax.f32 %v2518, 0.0
      %v2735 = vmax.f32 %v2520, 0.0
      %v2736 = vmax.f32 %v2522, 0.0
      %v2737 = vmax.f32 %v2524, 0.0
      %v2738 = vmax.f32 %v2528, 0.0
      %v2739 = vmax.f32 %v2530, 0.0
      %v2740 = vmax.f32 %v2532, 0.0
      %v2741 = vmax.f32 %v2534, 0.0
      %v2742 = vmax.f32 %v2538, 0.0
      %v2743 = vmax.f32 %v2540, 0.0
      %v2744 = vmax.f32 %v2542, 0.0
      %v2745 = vmax.f32 %v2544, 0.0
      %v2746 = vmax.f32 %v2548, 0.0
      %v2747 = vmax.f32 %v2550, 0.0
      %v2748 = vmax.f32 %v2552, 0.0
      %v2749 = vmax.f32 %v2554, 0.0
      %v2750 = vmax.f32 %v2558, 0.0
      %v2751 = vmax.f32 %v2560, 0.0
      %v2752 = vmax.f32 %v2562, 0.0
      %v2753 = vmax.f32 %v2564, 0.0
      %v2754 = vmax.f32 %v2568, 0.0
      %v2755 = vmax.f32 %v2570, 0.0
      %v2756 = vmax.f32 %v2572, 0.0
      %v2757 = vmax.f32 %v2574, 0.0
      %v2758 = vmax.f32 %v2578, 0.0
      %v2759 = vmax.f32 %v2580, 0.0
      %v2760 = vmax.f32 %v2582, 0.0
      %v2761 = vmax.f32 %v2584, 0.0
      %v2762 = vmax.f32 %v2588, 0.0
      %v2763 = vmax.f32 %v2590, 0.0
      %v2764 = vmax.f32 %v2592, 0.0
      %v2765 = vmax.f32 %v2594, 0.0
      %v2766 = vmax.f32 %v2598, 0.0
      %v2767 = vmax.f32 %v2600, 0.0
      %v2768 = vmax.f32 %v2602, 0.0
      %v2769 = vmax.f32 %v2604, 0.0
      %v2770 = vmax.f32 %v2608, 0.0
      %v2771 = vmax.f32 %v2610, 0.0
      %v2772 = vmax.f32 %v2612, 0.0
      %v2773 = vmax.f32 %v2614, 0.0
      %v2774 = vmax.f32 %v2618, 0.0
      %v2775 = vmax.f32 %v2620, 0.0
      %v2776 = vmax.f32 %v2622, 0.0
      %v2777 = vmax.f32 %v2624, 0.0
      %v2778 = vmax.f32 %v2628, 0.0
      %v2779 = vmax.f32 %v2630, 0.0
      %v2780 = vmax.f32 %v2632, 0.0
      %v2781 = vmax.f32 %v2634, 0.0
      %v2782 = vmax.f32 %v2638, 0.0
      %v2783 = vmax.f32 %v2640, 0.0
      %v2784 = vmax.f32 %v2642, 0.0
      %v2785 = vmax.f32 %v2644, 0.0
      %v2786 = vmax.f32 %v2648, 0.0
      %v2787 = vmax.f32 %v2650, 0.0
      %v2788 = vmax.f32 %v2652, 0.0
      %v2789 = vmax.f32 %v2654, 0.0
      %v2790 = vmax.f32 %v2658, 0.0
      %v2791 = vmax.f32 %v2660, 0.0
      %v2792 = vmax.f32 %v2662, 0.0
      %v2793 = vmax.f32 %v2664, 0.0
      %v2794 = vpack.c.bf16 %v2668, %v2666
      %v2795 = vpack.c.bf16 %v2669, %v2667
      %v2796 = vpack.c.bf16 %v2672, %v2670
      %v2797 = vpack.c.bf16 %v2673, %v2671
      %v2798 = vpack.c.bf16 %v2676, %v2674
      %v2799 = vpack.c.bf16 %v2677, %v2675
      %v2800 = vpack.c.bf16 %v2680, %v2678
      %v2801 = vpack.c.bf16 %v2681, %v2679
      %v2802 = vpack.c.bf16 %v2684, %v2682
      %v2803 = vpack.c.bf16 %v2685, %v2683
      %v2804 = vpack.c.bf16 %v2688, %v2686
      %v2805 = vpack.c.bf16 %v2689, %v2687
      %v2806 = vpack.c.bf16 %v2692, %v2690
      %v2807 = vpack.c.bf16 %v2693, %v2691
      %v2808 = vpack.c.bf16 %v2696, %v2694
      %v2809 = vpack.c.bf16 %v2697, %v2695
      %v2810 = vpack.c.bf16 %v2700, %v2698
      %v2811 = vpack.c.bf16 %v2701, %v2699
      %v2812 = vpack.c.bf16 %v2704, %v2702
      %v2813 = vpack.c.bf16 %v2705, %v2703
      %v2814 = vpack.c.bf16 %v2708, %v2706
      %v2815 = vpack.c.bf16 %v2709, %v2707
      %v2816 = vpack.c.bf16 %v2712, %v2710
      %v2817 = vpack.c.bf16 %v2713, %v2711
      %v2818 = vpack.c.bf16 %v2716, %v2714
      %v2819 = vpack.c.bf16 %v2717, %v2715
      %v2820 = vpack.c.bf16 %v2720, %v2718
      %v2821 = vpack.c.bf16 %v2721, %v2719
      %v2822 = vpack.c.bf16 %v2724, %v2722
      %v2823 = vpack.c.bf16 %v2725, %v2723
      %v2824 = vpack.c.bf16 %v2728, %v2726
      %v2825 = vpack.c.bf16 %v2729, %v2727
      %v2826 = vpack.c.bf16 %v2732, %v2730
      %v2827 = vpack.c.bf16 %v2733, %v2731
      %v2828 = vpack.c.bf16 %v2736, %v2734
      %v2829 = vpack.c.bf16 %v2737, %v2735
      %v2830 = vpack.c.bf16 %v2740, %v2738
      %v2831 = vpack.c.bf16 %v2741, %v2739
      %v2832 = vpack.c.bf16 %v2744, %v2742
      %v2833 = vpack.c.bf16 %v2745, %v2743
      %v2834 = vpack.c.bf16 %v2748, %v2746
      %v2835 = vpack.c.bf16 %v2749, %v2747
      %v2836 = vpack.c.bf16 %v2752, %v2750
      %v2837 = vpack.c.bf16 %v2753, %v2751
      %v2838 = vpack.c.bf16 %v2756, %v2754
      %v2839 = vpack.c.bf16 %v2757, %v2755
      %v2840 = vpack.c.bf16 %v2760, %v2758
      %v2841 = vpack.c.bf16 %v2761, %v2759
      %v2842 = vpack.c.bf16 %v2764, %v2762
      %v2843 = vpack.c.bf16 %v2765, %v2763
      %v2844 = vpack.c.bf16 %v2768, %v2766
      %v2845 = vpack.c.bf16 %v2769, %v2767
      %v2846 = vpack.c.bf16 %v2772, %v2770
      %v2847 = vpack.c.bf16 %v2773, %v2771
      %v2848 = vpack.c.bf16 %v2776, %v2774
      %v2849 = vpack.c.bf16 %v2777, %v2775
      %v2850 = vpack.c.bf16 %v2780, %v2778
      %v2851 = vpack.c.bf16 %v2781, %v2779
      %v2852 = vpack.c.bf16 %v2784, %v2782
      %v2853 = vpack.c.bf16 %v2785, %v2783
      %v2854 = vpack.c.bf16 %v2788, %v2786
      %v2855 = vpack.c.bf16 %v2789, %v2787
      %v2856 = vpack.c.bf16 %v2792, %v2790
      %v2857 = vpack.c.bf16 %v2793, %v2791
      %v2858 = vld [vmem:[%s5] sm:$0xff]
      %v2859 = vld [vmem:[%s5 + $0x8] sm:$0xff]
      %v2860 = vld [vmem:[%s5 + $0x10] sm:$0xff]
      %v2861 = vld [vmem:[%s5 + $0x18] sm:$0xff]
      %v2862 = vld [vmem:[%s5 + $0x20] sm:$0xff]
      %v2863 = vld [vmem:[%s5 + $0x28] sm:$0xff]
      %v2864 = vld [vmem:[%s5 + $0x30] sm:$0xff]
      %v2865 = vld [vmem:[%s5 + $0x38] sm:$0xff]
      %v2866 = vld [vmem:[%s5 + $0x40] sm:$0xff]
      %v2867 = vld [vmem:[%s5 + $0x48] sm:$0xff]
      %v2868 = vld [vmem:[%s5 + $0x50] sm:$0xff]
      %v2869 = vld [vmem:[%s5 + $0x58] sm:$0xff]
      %v2870 = vld [vmem:[%s5 + $0x60] sm:$0xff]
      %v2871 = vld [vmem:[%s5 + $0x68] sm:$0xff]
      %v2872 = vld [vmem:[%s5 + $0x70] sm:$0xff]
      %v2873 = vld [vmem:[%s5 + $0x78] sm:$0xff]
      %v2874 = vld [vmem:[%s5 + $0x80] sm:$0xff]
      %v2875 = vld [vmem:[%s5 + $0x88] sm:$0xff]
      %v2876 = vld [vmem:[%s5 + $0x90] sm:$0xff]
      %v2877 = vld [vmem:[%s5 + $0x98] sm:$0xff]
      %v2878 = vld [vmem:[%s5 + $0xa0] sm:$0xff]
      %v2879 = vld [vmem:[%s5 + $0xa8] sm:$0xff]
      %v2880 = vld [vmem:[%s5 + $0xb0] sm:$0xff]
      %v2881 = vld [vmem:[%s5 + $0xb8] sm:$0xff]
      %v2882 = vld [vmem:[%s5 + $0xc0] sm:$0xff]
      %v2883 = vld [vmem:[%s5 + $0xc8] sm:$0xff]
      %v2884 = vld [vmem:[%s5 + $0xd0] sm:$0xff]
      %v2885 = vld [vmem:[%s5 + $0xd8] sm:$0xff]
      %v2886 = vld [vmem:[%s5 + $0xe0] sm:$0xff]
      %v2887 = vld [vmem:[%s5 + $0xe8] sm:$0xff]
      %v2888 = vld [vmem:[%s5 + $0xf0] sm:$0xff]
      %v2889 = vld [vmem:[%s5 + $0xf8] sm:$0xff]
      %v2890 = vld [vmem:[%s6] sm:$0x3]
      %v2892 = vlaneseq
      %v2893 = vshrl.u32 %v2892, 7
      %v2894 = vsub.s32 0, %v2893
      %v2895 = vrot.slane %v2890, %v2894
      %v2896 = vlaneseq
      %v2897 = vshrl.u32 %v2896, 7
      %v2898 = vsub.s32 1, %v2897
      %v2899 = vrot.slane %v2890, %v2898
      %v2934 = vunpack.c.l.b16 %v2858
      %v2935 = vunpack.c.h.b16 %v2858
      %v2936 = vunpack.c.l.b16 %v2859
      %v2937 = vunpack.c.h.b16 %v2859
      %v2938 = vunpack.c.l.b16 %v2860
      %v2939 = vunpack.c.h.b16 %v2860
      %v2940 = vunpack.c.l.b16 %v2861
      %v2941 = vunpack.c.h.b16 %v2861
      %v2942 = vunpack.c.l.b16 %v2862
      %v2943 = vunpack.c.h.b16 %v2862
      %v2944 = vunpack.c.l.b16 %v2863
      %v2945 = vunpack.c.h.b16 %v2863
      %v2946 = vunpack.c.l.b16 %v2864
      %v2947 = vunpack.c.h.b16 %v2864
      %v2948 = vunpack.c.l.b16 %v2865
      %v2949 = vunpack.c.h.b16 %v2865
      %v2950 = vunpack.c.l.b16 %v2866
      %v2951 = vunpack.c.h.b16 %v2866
      %v2952 = vunpack.c.l.b16 %v2867
      %v2953 = vunpack.c.h.b16 %v2867
      %v2954 = vunpack.c.l.b16 %v2868
      %v2955 = vunpack.c.h.b16 %v2868
      %v2956 = vunpack.c.l.b16 %v2869
      %v2957 = vunpack.c.h.b16 %v2869
      %v2958 = vunpack.c.l.b16 %v2870
      %v2959 = vunpack.c.h.b16 %v2870
      %v2960 = vunpack.c.l.b16 %v2871
      %v2961 = vunpack.c.h.b16 %v2871
      %v2962 = vunpack.c.l.b16 %v2872
      %v2963 = vunpack.c.h.b16 %v2872
      %v2964 = vunpack.c.l.b16 %v2873
      %v2965 = vunpack.c.h.b16 %v2873
      %v2966 = vunpack.c.l.b16 %v2874
      %v2967 = vunpack.c.h.b16 %v2874
      %v2968 = vunpack.c.l.b16 %v2875
      %v2969 = vunpack.c.h.b16 %v2875
      %v2970 = vunpack.c.l.b16 %v2876
      %v2971 = vunpack.c.h.b16 %v2876
      %v2972 = vunpack.c.l.b16 %v2877
      %v2973 = vunpack.c.h.b16 %v2877
      %v2974 = vunpack.c.l.b16 %v2878
      %v2975 = vunpack.c.h.b16 %v2878
      %v2976 = vunpack.c.l.b16 %v2879
      %v2977 = vunpack.c.h.b16 %v2879
      %v2978 = vunpack.c.l.b16 %v2880
      %v2979 = vunpack.c.h.b16 %v2880
      %v2980 = vunpack.c.l.b16 %v2881
      %v2981 = vunpack.c.h.b16 %v2881
      %v2982 = vunpack.c.l.b16 %v2882
      %v2983 = vunpack.c.h.b16 %v2882
      %v2984 = vunpack.c.l.b16 %v2883
      %v2985 = vunpack.c.h.b16 %v2883
      %v2986 = vunpack.c.l.b16 %v2884
      %v2987 = vunpack.c.h.b16 %v2884
      %v2988 = vunpack.c.l.b16 %v2885
      %v2989 = vunpack.c.h.b16 %v2885
      %v2990 = vunpack.c.l.b16 %v2886
      %v2991 = vunpack.c.h.b16 %v2886
      %v2992 = vunpack.c.l.b16 %v2887
      %v2993 = vunpack.c.h.b16 %v2887
      %v2994 = vunpack.c.l.b16 %v2888
      %v2995 = vunpack.c.h.b16 %v2888
      %v2996 = vunpack.c.l.b16 %v2889
      %v2997 = vunpack.c.h.b16 %v2889
      %v2998 = vpack.c.b16 %v2936, %v2934
      %v2999 = vpack.c.b16 %v2937, %v2935
      %v3000 = vpack.c.b16 %v2940, %v2938
      %v3001 = vpack.c.b16 %v2941, %v2939
      %v3002 = vpack.c.b16 %v2944, %v2942
      %v3003 = vpack.c.b16 %v2945, %v2943
      %v3004 = vpack.c.b16 %v2948, %v2946
      %v3005 = vpack.c.b16 %v2949, %v2947
      %v3006 = vpack.c.b16 %v2952, %v2950
      %v3007 = vpack.c.b16 %v2953, %v2951
      %v3008 = vpack.c.b16 %v2956, %v2954
      %v3009 = vpack.c.b16 %v2957, %v2955
      %v3010 = vpack.c.b16 %v2960, %v2958
      %v3011 = vpack.c.b16 %v2961, %v2959
      %v3012 = vpack.c.b16 %v2964, %v2962
      %v3013 = vpack.c.b16 %v2965, %v2963
      %v3014 = vpack.c.b16 %v2968, %v2966
      %v3015 = vpack.c.b16 %v2969, %v2967
      %v3016 = vpack.c.b16 %v2972, %v2970
      %v3017 = vpack.c.b16 %v2973, %v2971
      %v3018 = vpack.c.b16 %v2976, %v2974
      %v3019 = vpack.c.b16 %v2977, %v2975
      %v3020 = vpack.c.b16 %v2980, %v2978
      %v3021 = vpack.c.b16 %v2981, %v2979
      %v3022 = vpack.c.b16 %v2984, %v2982
      %v3023 = vpack.c.b16 %v2985, %v2983
      %v3024 = vpack.c.b16 %v2988, %v2986
      %v3025 = vpack.c.b16 %v2989, %v2987
      %v3026 = vpack.c.b16 %v2992, %v2990
      %v3027 = vpack.c.b16 %v2993, %v2991
      %v3028 = vpack.c.b16 %v2996, %v2994
      %v3029 = vpack.c.b16 %v2997, %v2995
      %3062 = vmatprep.subr.bf16.mxu0 %v2999
      %3063 = vmatpush1.bf16.msra.mxu0 %v2998
      %3064 = vmatprep.subr.bf16.mxu0 %v3001
      %3065 = vmatpush1.bf16.msra.mxu0 %v3000
      %3066 = vmatprep.subr.bf16.mxu0 %v3003
      %3067 = vmatpush1.bf16.msra.mxu0 %v3002
      %3068 = vmatprep.subr.bf16.mxu0 %v3005
      %3069 = vmatpush1.bf16.msra.mxu0 %v3004
      %3070 = vmatprep.subr.bf16.mxu0 %v3007
      %3071 = vmatpush1.bf16.msra.mxu0 %v3006
      %3072 = vmatprep.subr.bf16.mxu0 %v3009
      %3073 = vmatpush1.bf16.msra.mxu0 %v3008
      %3074 = vmatprep.subr.bf16.mxu0 %v3011
      %3075 = vmatpush1.bf16.msra.mxu0 %v3010
      %3076 = vmatprep.subr.bf16.mxu0 %v3013
      %3077 = vmatpush1.bf16.msra.mxu0 %v3012
      %3078 = vmatprep.subr.bf16.mxu0 %v3015
      %3079 = vmatpush1.bf16.msra.mxu0 %v3014
      %3080 = vmatprep.subr.bf16.mxu0 %v3017
      %3081 = vmatpush1.bf16.msra.mxu0 %v3016
      %3082 = vmatprep.subr.bf16.mxu0 %v3019
      %3083 = vmatpush1.bf16.msra.mxu0 %v3018
      %3084 = vmatprep.subr.bf16.mxu0 %v3021
      %3085 = vmatpush1.bf16.msra.mxu0 %v3020
      %3086 = vmatprep.subr.bf16.mxu0 %v3023
      %3087 = vmatpush1.bf16.msra.mxu0 %v3022
      %3088 = vmatprep.subr.bf16.mxu0 %v3025
      %3089 = vmatpush1.bf16.msra.mxu0 %v3024
      %3090 = vmatprep.subr.bf16.mxu0 %v3027
      %3091 = vmatpush1.bf16.msra.mxu0 %v3026
      %3092 = vmatprep.subr.bf16.mxu0 %v3029
      %3093 = vmatpush1.bf16.msra.mxu0 %v3028
      %3094 = vmatprep.mubr.bf16.mxu0 %v2795
      %3095 = vmatmul.mubr.bf16.gmra.mrb[0].mxu0 %v2794
      %v3096 = vpop.f32.mrb[0].mxu0
      %v3097 = vadd.f32 %v2895, %v3096
      %v3098 = vpop.f32.mrb[0].mxu0
      %v3099 = vadd.f32 %v2899, %v3098
      %v3100 = vpop.f32.mrb[0].mxu0
      %v3101 = vadd.f32 %v2895, %v3100
      %v3102 = vpop.f32.mrb[0].mxu0
      %v3103 = vadd.f32 %v2899, %v3102
      %3104 = vmatprep.mubr.bf16.mxu0 %v2797
      %3105 = vmatmul.mubr.bf16.gmra.mrb[0].mxu0 %v2796
      %v3106 = vpop.f32.mrb[0].mxu0
      %v3107 = vadd.f32 %v2895, %v3106
      %v3108 = vpop.f32.mrb[0].mxu0
      %v3109 = vadd.f32 %v2899, %v3108
      %v3110 = vpop.f32.mrb[0].mxu0
      %v3111 = vadd.f32 %v2895, %v3110
      %v3112 = vpop.f32.mrb[0].mxu0
      %v3113 = vadd.f32 %v2899, %v3112
      %3114 = vmatprep.mubr.bf16.mxu0 %v2799
      %3115 = vmatmul.mubr.bf16.gmra.mrb[0].mxu0 %v2798
      %v3116 = vpop.f32.mrb[0].mxu0
      %v3117 = vadd.f32 %v2895, %v3116
      %v3118 = vpop.f32.mrb[0].mxu0
      %v3119 = vadd.f32 %v2899, %v3118
      %v3120 = vpop.f32.mrb[0].mxu0
      %v3121 = vadd.f32 %v2895, %v3120
      %v3122 = vpop.f32.mrb[0].mxu0
      %v3123 = vadd.f32 %v2899, %v3122
      %3124 = vmatprep.mubr.bf16.mxu0 %v2801
      %3125 = vmatmul.mubr.bf16.gmra.mrb[0].mxu0 %v2800
      %v3126 = vpop.f32.mrb[0].mxu0
      %v3127 = vadd.f32 %v2895, %v3126
      %v3128 = vpop.f32.mrb[0].mxu0
      %v3129 = vadd.f32 %v2899, %v3128
      %v3130 = vpop.f32.mrb[0].mxu0
      %v3131 = vadd.f32 %v2895, %v3130
      %v3132 = vpop.f32.mrb[0].mxu0
      %v3133 = vadd.f32 %v2899, %v3132
      %3134 = vmatprep.mubr.bf16.mxu0 %v2803
      %3135 = vmatmul.mubr.bf16.gmra.mrb[0].mxu0 %v2802
      %v3136 = vpop.f32.mrb[0].mxu0
      %v3137 = vadd.f32 %v2895, %v3136
      %v3138 = vpop.f32.mrb[0].mxu0
      %v3139 = vadd.f32 %v2899, %v3138
      %v3140 = vpop.f32.mrb[0].mxu0
      %v3141 = vadd.f32 %v2895, %v3140
      %v3142 = vpop.f32.mrb[0].mxu0
      %v3143 = vadd.f32 %v2899, %v3142
      %3144 = vmatprep.mubr.bf16.mxu0 %v2805
      %3145 = vmatmul.mubr.bf16.gmra.mrb[0].mxu0 %v2804
      %v3146 = vpop.f32.mrb[0].mxu0
      %v3147 = vadd.f32 %v2895, %v3146
      %v3148 = vpop.f32.mrb[0].mxu0
      %v3149 = vadd.f32 %v2899, %v3148
      %v3150 = vpop.f32.mrb[0].mxu0
      %v3151 = vadd.f32 %v2895, %v3150
      %v3152 = vpop.f32.mrb[0].mxu0
      %v3153 = vadd.f32 %v2899, %v3152
      %3154 = vmatprep.mubr.bf16.mxu0 %v2807
      %3155 = vmatmul.mubr.bf16.gmra.mrb[0].mxu0 %v2806
      %v3156 = vpop.f32.mrb[0].mxu0
      %v3157 = vadd.f32 %v2895, %v3156
      %v3158 = vpop.f32.mrb[0].mxu0
      %v3159 = vadd.f32 %v2899, %v3158
      %v3160 = vpop.f32.mrb[0].mxu0
      %v3161 = vadd.f32 %v2895, %v3160
      %v3162 = vpop.f32.mrb[0].mxu0
      %v3163 = vadd.f32 %v2899, %v3162
      %3164 = vmatprep.mubr.bf16.mxu0 %v2809
      %3165 = vmatmul.mubr.bf16.gmra.mrb[0].mxu0 %v2808
      %v3166 = vpop.f32.mrb[0].mxu0
      %v3167 = vadd.f32 %v2895, %v3166
      %v3168 = vpop.f32.mrb[0].mxu0
      %v3169 = vadd.f32 %v2899, %v3168
      %v3170 = vpop.f32.mrb[0].mxu0
      %v3171 = vadd.f32 %v2895, %v3170
      %v3172 = vpop.f32.mrb[0].mxu0
      %v3173 = vadd.f32 %v2899, %v3172
      %3174 = vmatprep.mubr.bf16.mxu0 %v2811
      %3175 = vmatmul.mubr.bf16.gmra.mrb[0].mxu0 %v2810
      %v3176 = vpop.f32.mrb[0].mxu0
      %v3177 = vadd.f32 %v2895, %v3176
      %v3178 = vpop.f32.mrb[0].mxu0
      %v3179 = vadd.f32 %v2899, %v3178
      %v3180 = vpop.f32.mrb[0].mxu0
      %v3181 = vadd.f32 %v2895, %v3180
      %v3182 = vpop.f32.mrb[0].mxu0
      %v3183 = vadd.f32 %v2899, %v3182
      %3184 = vmatprep.mubr.bf16.mxu0 %v2813
      %3185 = vmatmul.mubr.bf16.gmra.mrb[0].mxu0 %v2812
      %v3186 = vpop.f32.mrb[0].mxu0
      %v3187 = vadd.f32 %v2895, %v3186
      %v3188 = vpop.f32.mrb[0].mxu0
      %v3189 = vadd.f32 %v2899, %v3188
      %v3190 = vpop.f32.mrb[0].mxu0
      %v3191 = vadd.f32 %v2895, %v3190
      %v3192 = vpop.f32.mrb[0].mxu0
      %v3193 = vadd.f32 %v2899, %v3192
      %3194 = vmatprep.mubr.bf16.mxu0 %v2815
      %3195 = vmatmul.mubr.bf16.gmra.mrb[0].mxu0 %v2814
      %v3196 = vpop.f32.mrb[0].mxu0
      %v3197 = vadd.f32 %v2895, %v3196
      %v3198 = vpop.f32.mrb[0].mxu0
      %v3199 = vadd.f32 %v2899, %v3198
      %v3200 = vpop.f32.mrb[0].mxu0
      %v3201 = vadd.f32 %v2895, %v3200
      %v3202 = vpop.f32.mrb[0].mxu0
      %v3203 = vadd.f32 %v2899, %v3202
      %3204 = vmatprep.mubr.bf16.mxu0 %v2817
      %3205 = vmatmul.mubr.bf16.gmra.mrb[0].mxu0 %v2816
      %v3206 = vpop.f32.mrb[0].mxu0
      %v3207 = vadd.f32 %v2895, %v3206
      %v3208 = vpop.f32.mrb[0].mxu0
      %v3209 = vadd.f32 %v2899, %v3208
      %v3210 = vpop.f32.mrb[0].mxu0
      %v3211 = vadd.f32 %v2895, %v3210
      %v3212 = vpop.f32.mrb[0].mxu0
      %v3213 = vadd.f32 %v2899, %v3212
      %3214 = vmatprep.mubr.bf16.mxu0 %v2819
      %3215 = vmatmul.mubr.bf16.gmra.mrb[0].mxu0 %v2818
      %v3216 = vpop.f32.mrb[0].mxu0
      %v3217 = vadd.f32 %v2895, %v3216
      %v3218 = vpop.f32.mrb[0].mxu0
      %v3219 = vadd.f32 %v2899, %v3218
      %v3220 = vpop.f32.mrb[0].mxu0
      %v3221 = vadd.f32 %v2895, %v3220
      %v3222 = vpop.f32.mrb[0].mxu0
      %v3223 = vadd.f32 %v2899, %v3222
      %3224 = vmatprep.mubr.bf16.mxu0 %v2821
      %3225 = vmatmul.mubr.bf16.gmra.mrb[0].mxu0 %v2820
      %v3226 = vpop.f32.mrb[0].mxu0
      %v3227 = vadd.f32 %v2895, %v3226
      %v3228 = vpop.f32.mrb[0].mxu0
      %v3229 = vadd.f32 %v2899, %v3228
      %v3230 = vpop.f32.mrb[0].mxu0
      %v3231 = vadd.f32 %v2895, %v3230
      %v3232 = vpop.f32.mrb[0].mxu0
      %v3233 = vadd.f32 %v2899, %v3232
      %3234 = vmatprep.mubr.bf16.mxu0 %v2823
      %3235 = vmatmul.mubr.bf16.gmra.mrb[0].mxu0 %v2822
      %v3236 = vpop.f32.mrb[0].mxu0
      %v3237 = vadd.f32 %v2895, %v3236
      %v3238 = vpop.f32.mrb[0].mxu0
      %v3239 = vadd.f32 %v2899, %v3238
      %v3240 = vpop.f32.mrb[0].mxu0
      %v3241 = vadd.f32 %v2895, %v3240
      %v3242 = vpop.f32.mrb[0].mxu0
      %v3243 = vadd.f32 %v2899, %v3242
      %3244 = vmatprep.mubr.bf16.mxu0 %v2825
      %3245 = vmatmul.mubr.bf16.gmra.mrb[0].mxu0 %v2824
      %v3246 = vpop.f32.mrb[0].mxu0
      %v3247 = vadd.f32 %v2895, %v3246
      %v3248 = vpop.f32.mrb[0].mxu0
      %v3249 = vadd.f32 %v2899, %v3248
      %v3250 = vpop.f32.mrb[0].mxu0
      %v3251 = vadd.f32 %v2895, %v3250
      %v3252 = vpop.f32.mrb[0].mxu0
      %v3253 = vadd.f32 %v2899, %v3252
      %3254 = vmatprep.mubr.bf16.mxu0 %v2827
      %3255 = vmatmul.mubr.bf16.gmra.mrb[0].mxu0 %v2826
      %v3256 = vpop.f32.mrb[0].mxu0
      %v3257 = vadd.f32 %v2895, %v3256
      %v3258 = vpop.f32.mrb[0].mxu0
      %v3259 = vadd.f32 %v2899, %v3258
      %v3260 = vpop.f32.mrb[0].mxu0
      %v3261 = vadd.f32 %v2895, %v3260
      %v3262 = vpop.f32.mrb[0].mxu0
      %v3263 = vadd.f32 %v2899, %v3262
      %3264 = vmatprep.mubr.bf16.mxu0 %v2829
      %3265 = vmatmul.mubr.bf16.gmra.mrb[0].mxu0 %v2828
      %v3266 = vpop.f32.mrb[0].mxu0
      %v3267 = vadd.f32 %v2895, %v3266
      %v3268 = vpop.f32.mrb[0].mxu0
      %v3269 = vadd.f32 %v2899, %v3268
      %v3270 = vpop.f32.mrb[0].mxu0
      %v3271 = vadd.f32 %v2895, %v3270
      %v3272 = vpop.f32.mrb[0].mxu0
      %v3273 = vadd.f32 %v2899, %v3272
      %3274 = vmatprep.mubr.bf16.mxu0 %v2831
      %3275 = vmatmul.mubr.bf16.gmra.mrb[0].mxu0 %v2830
      %v3276 = vpop.f32.mrb[0].mxu0
      %v3277 = vadd.f32 %v2895, %v3276
      %v3278 = vpop.f32.mrb[0].mxu0
      %v3279 = vadd.f32 %v2899, %v3278
      %v3280 = vpop.f32.mrb[0].mxu0
      %v3281 = vadd.f32 %v2895, %v3280
      %v3282 = vpop.f32.mrb[0].mxu0
      %v3283 = vadd.f32 %v2899, %v3282
      %3284 = vmatprep.mubr.bf16.mxu0 %v2833
      %3285 = vmatmul.mubr.bf16.gmra.mrb[0].mxu0 %v2832
      %v3286 = vpop.f32.mrb[0].mxu0
      %v3287 = vadd.f32 %v2895, %v3286
      %v3288 = vpop.f32.mrb[0].mxu0
      %v3289 = vadd.f32 %v2899, %v3288
      %v3290 = vpop.f32.mrb[0].mxu0
      %v3291 = vadd.f32 %v2895, %v3290
      %v3292 = vpop.f32.mrb[0].mxu0
      %v3293 = vadd.f32 %v2899, %v3292
      %3294 = vmatprep.mubr.bf16.mxu0 %v2835
      %3295 = vmatmul.mubr.bf16.gmra.mrb[0].mxu0 %v2834
      %v3296 = vpop.f32.mrb[0].mxu0
      %v3297 = vadd.f32 %v2895, %v3296
      %v3298 = vpop.f32.mrb[0].mxu0
      %v3299 = vadd.f32 %v2899, %v3298
      %v3300 = vpop.f32.mrb[0].mxu0
      %v3301 = vadd.f32 %v2895, %v3300
      %v3302 = vpop.f32.mrb[0].mxu0
      %v3303 = vadd.f32 %v2899, %v3302
      %3304 = vmatprep.mubr.bf16.mxu0 %v2837
      %3305 = vmatmul.mubr.bf16.gmra.mrb[0].mxu0 %v2836
      %v3306 = vpop.f32.mrb[0].mxu0
      %v3307 = vadd.f32 %v2895, %v3306
      %v3308 = vpop.f32.mrb[0].mxu0
      %v3309 = vadd.f32 %v2899, %v3308
      %v3310 = vpop.f32.mrb[0].mxu0
      %v3311 = vadd.f32 %v2895, %v3310
      %v3312 = vpop.f32.mrb[0].mxu0
      %v3313 = vadd.f32 %v2899, %v3312
      %3314 = vmatprep.mubr.bf16.mxu0 %v2839
      %3315 = vmatmul.mubr.bf16.gmra.mrb[0].mxu0 %v2838
      %v3316 = vpop.f32.mrb[0].mxu0
      %v3317 = vadd.f32 %v2895, %v3316
      %v3318 = vpop.f32.mrb[0].mxu0
      %v3319 = vadd.f32 %v2899, %v3318
      %v3320 = vpop.f32.mrb[0].mxu0
      %v3321 = vadd.f32 %v2895, %v3320
      %v3322 = vpop.f32.mrb[0].mxu0
      %v3323 = vadd.f32 %v2899, %v3322
      %3324 = vmatprep.mubr.bf16.mxu0 %v2841
      %3325 = vmatmul.mubr.bf16.gmra.mrb[0].mxu0 %v2840
      %v3326 = vpop.f32.mrb[0].mxu0
      %v3327 = vadd.f32 %v2895, %v3326
      %v3328 = vpop.f32.mrb[0].mxu0
      %v3329 = vadd.f32 %v2899, %v3328
      %v3330 = vpop.f32.mrb[0].mxu0
      %v3331 = vadd.f32 %v2895, %v3330
      %v3332 = vpop.f32.mrb[0].mxu0
      %v3333 = vadd.f32 %v2899, %v3332
      %3334 = vmatprep.mubr.bf16.mxu0 %v2843
      %3335 = vmatmul.mubr.bf16.gmra.mrb[0].mxu0 %v2842
      %v3336 = vpop.f32.mrb[0].mxu0
      %v3337 = vadd.f32 %v2895, %v3336
      %v3338 = vpop.f32.mrb[0].mxu0
      %v3339 = vadd.f32 %v2899, %v3338
      %v3340 = vpop.f32.mrb[0].mxu0
      %v3341 = vadd.f32 %v2895, %v3340
      %v3342 = vpop.f32.mrb[0].mxu0
      %v3343 = vadd.f32 %v2899, %v3342
      %3344 = vmatprep.mubr.bf16.mxu0 %v2845
      %3345 = vmatmul.mubr.bf16.gmra.mrb[0].mxu0 %v2844
      %v3346 = vpop.f32.mrb[0].mxu0
      %v3347 = vadd.f32 %v2895, %v3346
      %v3348 = vpop.f32.mrb[0].mxu0
      %v3349 = vadd.f32 %v2899, %v3348
      %v3350 = vpop.f32.mrb[0].mxu0
      %v3351 = vadd.f32 %v2895, %v3350
      %v3352 = vpop.f32.mrb[0].mxu0
      %v3353 = vadd.f32 %v2899, %v3352
      %3354 = vmatprep.mubr.bf16.mxu0 %v2847
      %3355 = vmatmul.mubr.bf16.gmra.mrb[0].mxu0 %v2846
      %v3356 = vpop.f32.mrb[0].mxu0
      %v3357 = vadd.f32 %v2895, %v3356
      %v3358 = vpop.f32.mrb[0].mxu0
      %v3359 = vadd.f32 %v2899, %v3358
      %v3360 = vpop.f32.mrb[0].mxu0
      %v3361 = vadd.f32 %v2895, %v3360
      %v3362 = vpop.f32.mrb[0].mxu0
      %v3363 = vadd.f32 %v2899, %v3362
      %3364 = vmatprep.mubr.bf16.mxu0 %v2849
      %3365 = vmatmul.mubr.bf16.gmra.mrb[0].mxu0 %v2848
      %v3366 = vpop.f32.mrb[0].mxu0
      %v3367 = vadd.f32 %v2895, %v3366
      %v3368 = vpop.f32.mrb[0].mxu0
      %v3369 = vadd.f32 %v2899, %v3368
      %v3370 = vpop.f32.mrb[0].mxu0
      %v3371 = vadd.f32 %v2895, %v3370
      %v3372 = vpop.f32.mrb[0].mxu0
      %v3373 = vadd.f32 %v2899, %v3372
      %3374 = vmatprep.mubr.bf16.mxu0 %v2851
      %3375 = vmatmul.mubr.bf16.gmra.mrb[0].mxu0 %v2850
      %v3376 = vpop.f32.mrb[0].mxu0
      %v3377 = vadd.f32 %v2895, %v3376
      %v3378 = vpop.f32.mrb[0].mxu0
      %v3379 = vadd.f32 %v2899, %v3378
      %v3380 = vpop.f32.mrb[0].mxu0
      %v3381 = vadd.f32 %v2895, %v3380
      %v3382 = vpop.f32.mrb[0].mxu0
      %v3383 = vadd.f32 %v2899, %v3382
      %3384 = vmatprep.mubr.bf16.mxu0 %v2853
      %3385 = vmatmul.mubr.bf16.gmra.mrb[0].mxu0 %v2852
      %v3386 = vpop.f32.mrb[0].mxu0
      %v3387 = vadd.f32 %v2895, %v3386
      %v3388 = vpop.f32.mrb[0].mxu0
      %v3389 = vadd.f32 %v2899, %v3388
      %v3390 = vpop.f32.mrb[0].mxu0
      %v3391 = vadd.f32 %v2895, %v3390
      %v3392 = vpop.f32.mrb[0].mxu0
      %v3393 = vadd.f32 %v2899, %v3392
      %3394 = vmatprep.mubr.bf16.mxu0 %v2855
      %3395 = vmatmul.mubr.bf16.gmra.mrb[0].mxu0 %v2854
      %v3396 = vpop.f32.mrb[0].mxu0
      %v3397 = vadd.f32 %v2895, %v3396
      %v3398 = vpop.f32.mrb[0].mxu0
      %v3399 = vadd.f32 %v2899, %v3398
      %v3400 = vpop.f32.mrb[0].mxu0
      %v3401 = vadd.f32 %v2895, %v3400
      %v3402 = vpop.f32.mrb[0].mxu0
      %v3403 = vadd.f32 %v2899, %v3402
      %3404 = vmatprep.mubr.bf16.mxu0 %v2857
      %3405 = vmatmul.mubr.bf16.gmra.mrb[0].mxu0 %v2856
      %v3406 = vpop.f32.mrb[0].mxu0
      %v3407 = vadd.f32 %v2895, %v3406
      %v3408 = vpop.f32.mrb[0].mxu0
      %v3409 = vadd.f32 %v2899, %v3408
      %v3410 = vpop.f32.mrb[0].mxu0
      %v3411 = vadd.f32 %v2895, %v3410
      %v3412 = vpop.f32.mrb[0].mxu0
      %v3413 = vadd.f32 %v2899, %v3412
      %3414 = vdwg.mxu0
      %v3415 = vmax.f32 %v3097, 0.0
      %v3416 = vmax.f32 %v3099, 0.0
      %v3417 = vmax.f32 %v3101, 0.0
      %v3418 = vmax.f32 %v3103, 0.0
      %v3419 = vmax.f32 %v3107, 0.0
      %v3420 = vmax.f32 %v3109, 0.0
      %v3421 = vmax.f32 %v3111, 0.0
      %v3422 = vmax.f32 %v3113, 0.0
      %v3423 = vmax.f32 %v3117, 0.0
      %v3424 = vmax.f32 %v3119, 0.0
      %v3425 = vmax.f32 %v3121, 0.0
      %v3426 = vmax.f32 %v3123, 0.0
      %v3427 = vmax.f32 %v3127, 0.0
      %v3428 = vmax.f32 %v3129, 0.0
      %v3429 = vmax.f32 %v3131, 0.0
      %v3430 = vmax.f32 %v3133, 0.0
      %v3431 = vmax.f32 %v3137, 0.0
      %v3432 = vmax.f32 %v3139, 0.0
      %v3433 = vmax.f32 %v3141, 0.0
      %v3434 = vmax.f32 %v3143, 0.0
      %v3435 = vmax.f32 %v3147, 0.0
      %v3436 = vmax.f32 %v3149, 0.0
      %v3437 = vmax.f32 %v3151, 0.0
      %v3438 = vmax.f32 %v3153, 0.0
      %v3439 = vmax.f32 %v3157, 0.0
      %v3440 = vmax.f32 %v3159, 0.0
      %v3441 = vmax.f32 %v3161, 0.0
      %v3442 = vmax.f32 %v3163, 0.0
      %v3443 = vmax.f32 %v3167, 0.0
      %v3444 = vmax.f32 %v3169, 0.0
      %v3445 = vmax.f32 %v3171, 0.0
      %v3446 = vmax.f32 %v3173, 0.0
      %v3447 = vmax.f32 %v3177, 0.0
      %v3448 = vmax.f32 %v3179, 0.0
      %v3449 = vmax.f32 %v3181, 0.0
      %v3450 = vmax.f32 %v3183, 0.0
      %v3451 = vmax.f32 %v3187, 0.0
      %v3452 = vmax.f32 %v3189, 0.0
      %v3453 = vmax.f32 %v3191, 0.0
      %v3454 = vmax.f32 %v3193, 0.0
      %v3455 = vmax.f32 %v3197, 0.0
      %v3456 = vmax.f32 %v3199, 0.0
      %v3457 = vmax.f32 %v3201, 0.0
      %v3458 = vmax.f32 %v3203, 0.0
      %v3459 = vmax.f32 %v3207, 0.0
      %v3460 = vmax.f32 %v3209, 0.0
      %v3461 = vmax.f32 %v3211, 0.0
      %v3462 = vmax.f32 %v3213, 0.0
      %v3463 = vmax.f32 %v3217, 0.0
      %v3464 = vmax.f32 %v3219, 0.0
      %v3465 = vmax.f32 %v3221, 0.0
      %v3466 = vmax.f32 %v3223, 0.0
      %v3467 = vmax.f32 %v3227, 0.0
      %v3468 = vmax.f32 %v3229, 0.0
      %v3469 = vmax.f32 %v3231, 0.0
      %v3470 = vmax.f32 %v3233, 0.0
      %v3471 = vmax.f32 %v3237, 0.0
      %v3472 = vmax.f32 %v3239, 0.0
      %v3473 = vmax.f32 %v3241, 0.0
      %v3474 = vmax.f32 %v3243, 0.0
      %v3475 = vmax.f32 %v3247, 0.0
      %v3476 = vmax.f32 %v3249, 0.0
      %v3477 = vmax.f32 %v3251, 0.0
      %v3478 = vmax.f32 %v3253, 0.0
      %v3479 = vmax.f32 %v3257, 0.0
      %v3480 = vmax.f32 %v3259, 0.0
      %v3481 = vmax.f32 %v3261, 0.0
      %v3482 = vmax.f32 %v3263, 0.0
      %v3483 = vmax.f32 %v3267, 0.0
      %v3484 = vmax.f32 %v3269, 0.0
      %v3485 = vmax.f32 %v3271, 0.0
      %v3486 = vmax.f32 %v3273, 0.0
      %v3487 = vmax.f32 %v3277, 0.0
      %v3488 = vmax.f32 %v3279, 0.0
      %v3489 = vmax.f32 %v3281, 0.0
      %v3490 = vmax.f32 %v3283, 0.0
      %v3491 = vmax.f32 %v3287, 0.0
      %v3492 = vmax.f32 %v3289, 0.0
      %v3493 = vmax.f32 %v3291, 0.0
      %v3494 = vmax.f32 %v3293, 0.0
      %v3495 = vmax.f32 %v3297, 0.0
      %v3496 = vmax.f32 %v3299, 0.0
      %v3497 = vmax.f32 %v3301, 0.0
      %v3498 = vmax.f32 %v3303, 0.0
      %v3499 = vmax.f32 %v3307, 0.0
      %v3500 = vmax.f32 %v3309, 0.0
      %v3501 = vmax.f32 %v3311, 0.0
      %v3502 = vmax.f32 %v3313, 0.0
      %v3503 = vmax.f32 %v3317, 0.0
      %v3504 = vmax.f32 %v3319, 0.0
      %v3505 = vmax.f32 %v3321, 0.0
      %v3506 = vmax.f32 %v3323, 0.0
      %v3507 = vmax.f32 %v3327, 0.0
      %v3508 = vmax.f32 %v3329, 0.0
      %v3509 = vmax.f32 %v3331, 0.0
      %v3510 = vmax.f32 %v3333, 0.0
      %v3511 = vmax.f32 %v3337, 0.0
      %v3512 = vmax.f32 %v3339, 0.0
      %v3513 = vmax.f32 %v3341, 0.0
      %v3514 = vmax.f32 %v3343, 0.0
      %v3515 = vmax.f32 %v3347, 0.0
      %v3516 = vmax.f32 %v3349, 0.0
      %v3517 = vmax.f32 %v3351, 0.0
      %v3518 = vmax.f32 %v3353, 0.0
      %v3519 = vmax.f32 %v3357, 0.0
      %v3520 = vmax.f32 %v3359, 0.0
      %v3521 = vmax.f32 %v3361, 0.0
      %v3522 = vmax.f32 %v3363, 0.0
      %v3523 = vmax.f32 %v3367, 0.0
      %v3524 = vmax.f32 %v3369, 0.0
      %v3525 = vmax.f32 %v3371, 0.0
      %v3526 = vmax.f32 %v3373, 0.0
      %v3527 = vmax.f32 %v3377, 0.0
      %v3528 = vmax.f32 %v3379, 0.0
      %v3529 = vmax.f32 %v3381, 0.0
      %v3530 = vmax.f32 %v3383, 0.0
      %v3531 = vmax.f32 %v3387, 0.0
      %v3532 = vmax.f32 %v3389, 0.0
      %v3533 = vmax.f32 %v3391, 0.0
      %v3534 = vmax.f32 %v3393, 0.0
      %v3535 = vmax.f32 %v3397, 0.0
      %v3536 = vmax.f32 %v3399, 0.0
      %v3537 = vmax.f32 %v3401, 0.0
      %v3538 = vmax.f32 %v3403, 0.0
      %v3539 = vmax.f32 %v3407, 0.0
      %v3540 = vmax.f32 %v3409, 0.0
      %v3541 = vmax.f32 %v3411, 0.0
      %v3542 = vmax.f32 %v3413, 0.0
      %v3543 = vpack.c.bf16 %v3417, %v3415
      %v3544 = vpack.c.bf16 %v3418, %v3416
      %v3545 = vpack.c.bf16 %v3421, %v3419
      %v3546 = vpack.c.bf16 %v3422, %v3420
      %v3547 = vpack.c.bf16 %v3425, %v3423
      %v3548 = vpack.c.bf16 %v3426, %v3424
      %v3549 = vpack.c.bf16 %v3429, %v3427
      %v3550 = vpack.c.bf16 %v3430, %v3428
      %v3551 = vpack.c.bf16 %v3433, %v3431
      %v3552 = vpack.c.bf16 %v3434, %v3432
      %v3553 = vpack.c.bf16 %v3437, %v3435
      %v3554 = vpack.c.bf16 %v3438, %v3436
      %v3555 = vpack.c.bf16 %v3441, %v3439
      %v3556 = vpack.c.bf16 %v3442, %v3440
      %v3557 = vpack.c.bf16 %v3445, %v3443
      %v3558 = vpack.c.bf16 %v3446, %v3444
      %v3559 = vpack.c.bf16 %v3449, %v3447
      %v3560 = vpack.c.bf16 %v3450, %v3448
      %v3561 = vpack.c.bf16 %v3453, %v3451
      %v3562 = vpack.c.bf16 %v3454, %v3452
      %v3563 = vpack.c.bf16 %v3457, %v3455
      %v3564 = vpack.c.bf16 %v3458, %v3456
      %v3565 = vpack.c.bf16 %v3461, %v3459
      %v3566 = vpack.c.bf16 %v3462, %v3460
      %v3567 = vpack.c.bf16 %v3465, %v3463
      %v3568 = vpack.c.bf16 %v3466, %v3464
      %v3569 = vpack.c.bf16 %v3469, %v3467
      %v3570 = vpack.c.bf16 %v3470, %v3468
      %v3571 = vpack.c.bf16 %v3473, %v3471
      %v3572 = vpack.c.bf16 %v3474, %v3472
      %v3573 = vpack.c.bf16 %v3477, %v3475
      %v3574 = vpack.c.bf16 %v3478, %v3476
      %v3575 = vpack.c.bf16 %v3481, %v3479
      %v3576 = vpack.c.bf16 %v3482, %v3480
      %v3577 = vpack.c.bf16 %v3485, %v3483
      %v3578 = vpack.c.bf16 %v3486, %v3484
      %v3579 = vpack.c.bf16 %v3489, %v3487
      %v3580 = vpack.c.bf16 %v3490, %v3488
      %v3581 = vpack.c.bf16 %v3493, %v3491
      %v3582 = vpack.c.bf16 %v3494, %v3492
      %v3583 = vpack.c.bf16 %v3497, %v3495
      %v3584 = vpack.c.bf16 %v3498, %v3496
      %v3585 = vpack.c.bf16 %v3501, %v3499
      %v3586 = vpack.c.bf16 %v3502, %v3500
      %v3587 = vpack.c.bf16 %v3505, %v3503
      %v3588 = vpack.c.bf16 %v3506, %v3504
      %v3589 = vpack.c.bf16 %v3509, %v3507
      %v3590 = vpack.c.bf16 %v3510, %v3508
      %v3591 = vpack.c.bf16 %v3513, %v3511
      %v3592 = vpack.c.bf16 %v3514, %v3512
      %v3593 = vpack.c.bf16 %v3517, %v3515
      %v3594 = vpack.c.bf16 %v3518, %v3516
      %v3595 = vpack.c.bf16 %v3521, %v3519
      %v3596 = vpack.c.bf16 %v3522, %v3520
      %v3597 = vpack.c.bf16 %v3525, %v3523
      %v3598 = vpack.c.bf16 %v3526, %v3524
      %v3599 = vpack.c.bf16 %v3529, %v3527
      %v3600 = vpack.c.bf16 %v3530, %v3528
      %v3601 = vpack.c.bf16 %v3533, %v3531
      %v3602 = vpack.c.bf16 %v3534, %v3532
      %v3603 = vpack.c.bf16 %v3537, %v3535
      %v3604 = vpack.c.bf16 %v3538, %v3536
      %v3605 = vpack.c.bf16 %v3541, %v3539
      %v3606 = vpack.c.bf16 %v3542, %v3540
      %v3607 = vld [vmem:[%s7] sm:$0xff]
      %v3608 = vld [vmem:[%s7 + $0x8] sm:$0xff]
      %v3609 = vld [vmem:[%s7 + $0x10] sm:$0xff]
      %v3610 = vld [vmem:[%s7 + $0x18] sm:$0xff]
      %v3611 = vld [vmem:[%s7 + $0x20] sm:$0xff]
      %v3612 = vld [vmem:[%s7 + $0x28] sm:$0xff]
      %v3613 = vld [vmem:[%s7 + $0x30] sm:$0xff]
      %v3614 = vld [vmem:[%s7 + $0x38] sm:$0xff]
      %v3615 = vld [vmem:[%s7 + $0x40] sm:$0xff]
      %v3616 = vld [vmem:[%s7 + $0x48] sm:$0xff]
      %v3617 = vld [vmem:[%s7 + $0x50] sm:$0xff]
      %v3618 = vld [vmem:[%s7 + $0x58] sm:$0xff]
      %v3619 = vld [vmem:[%s7 + $0x60] sm:$0xff]
      %v3620 = vld [vmem:[%s7 + $0x68] sm:$0xff]
      %v3621 = vld [vmem:[%s7 + $0x70] sm:$0xff]
      %v3622 = vld [vmem:[%s7 + $0x78] sm:$0xff]
      %v3623 = vld [vmem:[%s7 + $0x80] sm:$0xff]
      %v3624 = vld [vmem:[%s7 + $0x88] sm:$0xff]
      %v3625 = vld [vmem:[%s7 + $0x90] sm:$0xff]
      %v3626 = vld [vmem:[%s7 + $0x98] sm:$0xff]
      %v3627 = vld [vmem:[%s7 + $0xa0] sm:$0xff]
      %v3628 = vld [vmem:[%s7 + $0xa8] sm:$0xff]
      %v3629 = vld [vmem:[%s7 + $0xb0] sm:$0xff]
      %v3630 = vld [vmem:[%s7 + $0xb8] sm:$0xff]
      %v3631 = vld [vmem:[%s7 + $0xc0] sm:$0xff]
      %v3632 = vld [vmem:[%s7 + $0xc8] sm:$0xff]
      %v3633 = vld [vmem:[%s7 + $0xd0] sm:$0xff]
      %v3634 = vld [vmem:[%s7 + $0xd8] sm:$0xff]
      %v3635 = vld [vmem:[%s7 + $0xe0] sm:$0xff]
      %v3636 = vld [vmem:[%s7 + $0xe8] sm:$0xff]
      %v3637 = vld [vmem:[%s7 + $0xf0] sm:$0xff]
      %v3638 = vld [vmem:[%s7 + $0xf8] sm:$0xff]
      %v3639 = vld [vmem:[%s8] sm:$0x3]
      %v3641 = vlaneseq
      %v3642 = vshrl.u32 %v3641, 7
      %v3643 = vsub.s32 0, %v3642
      %v3644 = vrot.slane %v3639, %v3643
      %v3645 = vlaneseq
      %v3646 = vshrl.u32 %v3645, 7
      %v3647 = vsub.s32 1, %v3646
      %v3648 = vrot.slane %v3639, %v3647
      %v3683 = vunpack.c.l.b16 %v3607
      %v3684 = vunpack.c.h.b16 %v3607
      %v3685 = vunpack.c.l.b16 %v3608
      %v3686 = vunpack.c.h.b16 %v3608
      %v3687 = vunpack.c.l.b16 %v3609
      %v3688 = vunpack.c.h.b16 %v3609
      %v3689 = vunpack.c.l.b16 %v3610
      %v3690 = vunpack.c.h.b16 %v3610
      %v3691 = vunpack.c.l.b16 %v3611
      %v3692 = vunpack.c.h.b16 %v3611
      %v3693 = vunpack.c.l.b16 %v3612
      %v3694 = vunpack.c.h.b16 %v3612
      %v3695 = vunpack.c.l.b16 %v3613
      %v3696 = vunpack.c.h.b16 %v3613
      %v3697 = vunpack.c.l.b16 %v3614
      %v3698 = vunpack.c.h.b16 %v3614
      %v3699 = vunpack.c.l.b16 %v3615
      %v3700 = vunpack.c.h.b16 %v3615
      %v3701 = vunpack.c.l.b16 %v3616
      %v3702 = vunpack.c.h.b16 %v3616
      %v3703 = vunpack.c.l.b16 %v3617
      %v3704 = vunpack.c.h.b16 %v3617
      %v3705 = vunpack.c.l.b16 %v3618
      %v3706 = vunpack.c.h.b16 %v3618
      %v3707 = vunpack.c.l.b16 %v3619
      %v3708 = vunpack.c.h.b16 %v3619
      %v3709 = vunpack.c.l.b16 %v3620
      %v3710 = vunpack.c.h.b16 %v3620
      %v3711 = vunpack.c.l.b16 %v3621
      %v3712 = vunpack.c.h.b16 %v3621
      %v3713 = vunpack.c.l.b16 %v3622
      %v3714 = vunpack.c.h.b16 %v3622
      %v3715 = vunpack.c.l.b16 %v3623
      %v3716 = vunpack.c.h.b16 %v3623
      %v3717 = vunpack.c.l.b16 %v3624
      %v3718 = vunpack.c.h.b16 %v3624
      %v3719 = vunpack.c.l.b16 %v3625
      %v3720 = vunpack.c.h.b16 %v3625
      %v3721 = vunpack.c.l.b16 %v3626
      %v3722 = vunpack.c.h.b16 %v3626
      %v3723 = vunpack.c.l.b16 %v3627
      %v3724 = vunpack.c.h.b16 %v3627
      %v3725 = vunpack.c.l.b16 %v3628
      %v3726 = vunpack.c.h.b16 %v3628
      %v3727 = vunpack.c.l.b16 %v3629
      %v3728 = vunpack.c.h.b16 %v3629
      %v3729 = vunpack.c.l.b16 %v3630
      %v3730 = vunpack.c.h.b16 %v3630
      %v3731 = vunpack.c.l.b16 %v3631
      %v3732 = vunpack.c.h.b16 %v3631
      %v3733 = vunpack.c.l.b16 %v3632
      %v3734 = vunpack.c.h.b16 %v3632
      %v3735 = vunpack.c.l.b16 %v3633
      %v3736 = vunpack.c.h.b16 %v3633
      %v3737 = vunpack.c.l.b16 %v3634
      %v3738 = vunpack.c.h.b16 %v3634
      %v3739 = vunpack.c.l.b16 %v3635
      %v3740 = vunpack.c.h.b16 %v3635
      %v3741 = vunpack.c.l.b16 %v3636
      %v3742 = vunpack.c.h.b16 %v3636
      %v3743 = vunpack.c.l.b16 %v3637
      %v3744 = vunpack.c.h.b16 %v3637
      %v3745 = vunpack.c.l.b16 %v3638
      %v3746 = vunpack.c.h.b16 %v3638
      %v3747 = vpack.c.b16 %v3685, %v3683
      %v3748 = vpack.c.b16 %v3686, %v3684
      %v3749 = vpack.c.b16 %v3689, %v3687
      %v3750 = vpack.c.b16 %v3690, %v3688
      %v3751 = vpack.c.b16 %v3693, %v3691
      %v3752 = vpack.c.b16 %v3694, %v3692
      %v3753 = vpack.c.b16 %v3697, %v3695
      %v3754 = vpack.c.b16 %v3698, %v3696
      %v3755 = vpack.c.b16 %v3701, %v3699
      %v3756 = vpack.c.b16 %v3702, %v3700
      %v3757 = vpack.c.b16 %v3705, %v3703
      %v3758 = vpack.c.b16 %v3706, %v3704
      %v3759 = vpack.c.b16 %v3709, %v3707
      %v3760 = vpack.c.b16 %v3710, %v3708
      %v3761 = vpack.c.b16 %v3713, %v3711
      %v3762 = vpack.c.b16 %v3714, %v3712
      %v3763 = vpack.c.b16 %v3717, %v3715
      %v3764 = vpack.c.b16 %v3718, %v3716
      %v3765 = vpack.c.b16 %v3721, %v3719
      %v3766 = vpack.c.b16 %v3722, %v3720
      %v3767 = vpack.c.b16 %v3725, %v3723
      %v3768 = vpack.c.b16 %v3726, %v3724
      %v3769 = vpack.c.b16 %v3729, %v3727
      %v3770 = vpack.c.b16 %v3730, %v3728
      %v3771 = vpack.c.b16 %v3733, %v3731
      %v3772 = vpack.c.b16 %v3734, %v3732
      %v3773 = vpack.c.b16 %v3737, %v3735
      %v3774 = vpack.c.b16 %v3738, %v3736
      %v3775 = vpack.c.b16 %v3741, %v3739
      %v3776 = vpack.c.b16 %v3742, %v3740
      %v3777 = vpack.c.b16 %v3745, %v3743
      %v3778 = vpack.c.b16 %v3746, %v3744
      %3811 = vmatprep.subr.bf16.mxu0 %v3748
      %3812 = vmatpush1.bf16.msra.mxu0 %v3747
      %3813 = vmatprep.subr.bf16.mxu0 %v3750
      %3814 = vmatpush1.bf16.msra.mxu0 %v3749
      %3815 = vmatprep.subr.bf16.mxu0 %v3752
      %3816 = vmatpush1.bf16.msra.mxu0 %v3751
      %3817 = vmatprep.subr.bf16.mxu0 %v3754
      %3818 = vmatpush1.bf16.msra.mxu0 %v3753
      %3819 = vmatprep.subr.bf16.mxu0 %v3756
      %3820 = vmatpush1.bf16.msra.mxu0 %v3755
      %3821 = vmatprep.subr.bf16.mxu0 %v3758
      %3822 = vmatpush1.bf16.msra.mxu0 %v3757
      %3823 = vmatprep.subr.bf16.mxu0 %v3760
      %3824 = vmatpush1.bf16.msra.mxu0 %v3759
      %3825 = vmatprep.subr.bf16.mxu0 %v3762
      %3826 = vmatpush1.bf16.msra.mxu0 %v3761
      %3827 = vmatprep.subr.bf16.mxu0 %v3764
      %3828 = vmatpush1.bf16.msra.mxu0 %v3763
      %3829 = vmatprep.subr.bf16.mxu0 %v3766
      %3830 = vmatpush1.bf16.msra.mxu0 %v3765
      %3831 = vmatprep.subr.bf16.mxu0 %v3768
      %3832 = vmatpush1.bf16.msra.mxu0 %v3767
      %3833 = vmatprep.subr.bf16.mxu0 %v3770
      %3834 = vmatpush1.bf16.msra.mxu0 %v3769
      %3835 = vmatprep.subr.bf16.mxu0 %v3772
      %3836 = vmatpush1.bf16.msra.mxu0 %v3771
      %3837 = vmatprep.subr.bf16.mxu0 %v3774
      %3838 = vmatpush1.bf16.msra.mxu0 %v3773
      %3839 = vmatprep.subr.bf16.mxu0 %v3776
      %3840 = vmatpush1.bf16.msra.mxu0 %v3775
      %3841 = vmatprep.subr.bf16.mxu0 %v3778
      %3842 = vmatpush1.bf16.msra.mxu0 %v3777
      %3843 = vmatprep.mubr.bf16.mxu0 %v3544
      %3844 = vmatmul.mubr.bf16.gmra.mrb[0].mxu0 %v3543
      %v3845 = vpop.f32.mrb[0].mxu0
      %v3846 = vadd.f32 %v3644, %v3845
      %v3847 = vpop.f32.mrb[0].mxu0
      %v3848 = vadd.f32 %v3648, %v3847
      %v3849 = vpop.f32.mrb[0].mxu0
      %v3850 = vadd.f32 %v3644, %v3849
      %v3851 = vpop.f32.mrb[0].mxu0
      %v3852 = vadd.f32 %v3648, %v3851
      %3853 = vmatprep.mubr.bf16.mxu0 %v3546
      %3854 = vmatmul.mubr.bf16.gmra.mrb[0].mxu0 %v3545
      %v3855 = vpop.f32.mrb[0].mxu0
      %v3856 = vadd.f32 %v3644, %v3855
      %v3857 = vpop.f32.mrb[0].mxu0
      %v3858 = vadd.f32 %v3648, %v3857
      %v3859 = vpop.f32.mrb[0].mxu0
      %v3860 = vadd.f32 %v3644, %v3859
      %v3861 = vpop.f32.mrb[0].mxu0
      %v3862 = vadd.f32 %v3648, %v3861
      %3863 = vmatprep.mubr.bf16.mxu0 %v3548
      %3864 = vmatmul.mubr.bf16.gmra.mrb[0].mxu0 %v3547
      %v3865 = vpop.f32.mrb[0].mxu0
      %v3866 = vadd.f32 %v3644, %v3865
      %v3867 = vpop.f32.mrb[0].mxu0
      %v3868 = vadd.f32 %v3648, %v3867
      %v3869 = vpop.f32.mrb[0].mxu0
      %v3870 = vadd.f32 %v3644, %v3869
      %v3871 = vpop.f32.mrb[0].mxu0
      %v3872 = vadd.f32 %v3648, %v3871
      %3873 = vmatprep.mubr.bf16.mxu0 %v3550
      %3874 = vmatmul.mubr.bf16.gmra.mrb[0].mxu0 %v3549
      %v3875 = vpop.f32.mrb[0].mxu0
      %v3876 = vadd.f32 %v3644, %v3875
      %v3877 = vpop.f32.mrb[0].mxu0
      %v3878 = vadd.f32 %v3648, %v3877
      %v3879 = vpop.f32.mrb[0].mxu0
      %v3880 = vadd.f32 %v3644, %v3879
      %v3881 = vpop.f32.mrb[0].mxu0
      %v3882 = vadd.f32 %v3648, %v3881
      %3883 = vmatprep.mubr.bf16.mxu0 %v3552
      %3884 = vmatmul.mubr.bf16.gmra.mrb[0].mxu0 %v3551
      %v3885 = vpop.f32.mrb[0].mxu0
      %v3886 = vadd.f32 %v3644, %v3885
      %v3887 = vpop.f32.mrb[0].mxu0
      %v3888 = vadd.f32 %v3648, %v3887
      %v3889 = vpop.f32.mrb[0].mxu0
      %v3890 = vadd.f32 %v3644, %v3889
      %v3891 = vpop.f32.mrb[0].mxu0
      %v3892 = vadd.f32 %v3648, %v3891
      %3893 = vmatprep.mubr.bf16.mxu0 %v3554
      %3894 = vmatmul.mubr.bf16.gmra.mrb[0].mxu0 %v3553
      %v3895 = vpop.f32.mrb[0].mxu0
      %v3896 = vadd.f32 %v3644, %v3895
      %v3897 = vpop.f32.mrb[0].mxu0
      %v3898 = vadd.f32 %v3648, %v3897
      %v3899 = vpop.f32.mrb[0].mxu0
      %v3900 = vadd.f32 %v3644, %v3899
      %v3901 = vpop.f32.mrb[0].mxu0
      %v3902 = vadd.f32 %v3648, %v3901
      %3903 = vmatprep.mubr.bf16.mxu0 %v3556
      %3904 = vmatmul.mubr.bf16.gmra.mrb[0].mxu0 %v3555
      %v3905 = vpop.f32.mrb[0].mxu0
      %v3906 = vadd.f32 %v3644, %v3905
      %v3907 = vpop.f32.mrb[0].mxu0
      %v3908 = vadd.f32 %v3648, %v3907
      %v3909 = vpop.f32.mrb[0].mxu0
      %v3910 = vadd.f32 %v3644, %v3909
      %v3911 = vpop.f32.mrb[0].mxu0
      %v3912 = vadd.f32 %v3648, %v3911
      %3913 = vmatprep.mubr.bf16.mxu0 %v3558
      %3914 = vmatmul.mubr.bf16.gmra.mrb[0].mxu0 %v3557
      %v3915 = vpop.f32.mrb[0].mxu0
      %v3916 = vadd.f32 %v3644, %v3915
      %v3917 = vpop.f32.mrb[0].mxu0
      %v3918 = vadd.f32 %v3648, %v3917
      %v3919 = vpop.f32.mrb[0].mxu0
      %v3920 = vadd.f32 %v3644, %v3919
      %v3921 = vpop.f32.mrb[0].mxu0
      %v3922 = vadd.f32 %v3648, %v3921
      %3923 = vmatprep.mubr.bf16.mxu0 %v3560
      %3924 = vmatmul.mubr.bf16.gmra.mrb[0].mxu0 %v3559
      %v3925 = vpop.f32.mrb[0].mxu0
      %v3926 = vadd.f32 %v3644, %v3925
      %v3927 = vpop.f32.mrb[0].mxu0
      %v3928 = vadd.f32 %v3648, %v3927
      %v3929 = vpop.f32.mrb[0].mxu0
      %v3930 = vadd.f32 %v3644, %v3929
      %v3931 = vpop.f32.mrb[0].mxu0
      %v3932 = vadd.f32 %v3648, %v3931
      %3933 = vmatprep.mubr.bf16.mxu0 %v3562
      %3934 = vmatmul.mubr.bf16.gmra.mrb[0].mxu0 %v3561
      %v3935 = vpop.f32.mrb[0].mxu0
      %v3936 = vadd.f32 %v3644, %v3935
      %v3937 = vpop.f32.mrb[0].mxu0
      %v3938 = vadd.f32 %v3648, %v3937
      %v3939 = vpop.f32.mrb[0].mxu0
      %v3940 = vadd.f32 %v3644, %v3939
      %v3941 = vpop.f32.mrb[0].mxu0
      %v3942 = vadd.f32 %v3648, %v3941
      %3943 = vmatprep.mubr.bf16.mxu0 %v3564
      %3944 = vmatmul.mubr.bf16.gmra.mrb[0].mxu0 %v3563
      %v3945 = vpop.f32.mrb[0].mxu0
      %v3946 = vadd.f32 %v3644, %v3945
      %v3947 = vpop.f32.mrb[0].mxu0
      %v3948 = vadd.f32 %v3648, %v3947
      %v3949 = vpop.f32.mrb[0].mxu0
      %v3950 = vadd.f32 %v3644, %v3949
      %v3951 = vpop.f32.mrb[0].mxu0
      %v3952 = vadd.f32 %v3648, %v3951
      %3953 = vmatprep.mubr.bf16.mxu0 %v3566
      %3954 = vmatmul.mubr.bf16.gmra.mrb[0].mxu0 %v3565
      %v3955 = vpop.f32.mrb[0].mxu0
      %v3956 = vadd.f32 %v3644, %v3955
      %v3957 = vpop.f32.mrb[0].mxu0
      %v3958 = vadd.f32 %v3648, %v3957
      %v3959 = vpop.f32.mrb[0].mxu0
      %v3960 = vadd.f32 %v3644, %v3959
      %v3961 = vpop.f32.mrb[0].mxu0
      %v3962 = vadd.f32 %v3648, %v3961
      %3963 = vmatprep.mubr.bf16.mxu0 %v3568
      %3964 = vmatmul.mubr.bf16.gmra.mrb[0].mxu0 %v3567
      %v3965 = vpop.f32.mrb[0].mxu0
      %v3966 = vadd.f32 %v3644, %v3965
      %v3967 = vpop.f32.mrb[0].mxu0
      %v3968 = vadd.f32 %v3648, %v3967
      %v3969 = vpop.f32.mrb[0].mxu0
      %v3970 = vadd.f32 %v3644, %v3969
      %v3971 = vpop.f32.mrb[0].mxu0
      %v3972 = vadd.f32 %v3648, %v3971
      %3973 = vmatprep.mubr.bf16.mxu0 %v3570
      %3974 = vmatmul.mubr.bf16.gmra.mrb[0].mxu0 %v3569
      %v3975 = vpop.f32.mrb[0].mxu0
      %v3976 = vadd.f32 %v3644, %v3975
      %v3977 = vpop.f32.mrb[0].mxu0
      %v3978 = vadd.f32 %v3648, %v3977
      %v3979 = vpop.f32.mrb[0].mxu0
      %v3980 = vadd.f32 %v3644, %v3979
      %v3981 = vpop.f32.mrb[0].mxu0
      %v3982 = vadd.f32 %v3648, %v3981
      %3983 = vmatprep.mubr.bf16.mxu0 %v3572
      %3984 = vmatmul.mubr.bf16.gmra.mrb[0].mxu0 %v3571
      %v3985 = vpop.f32.mrb[0].mxu0
      %v3986 = vadd.f32 %v3644, %v3985
      %v3987 = vpop.f32.mrb[0].mxu0
      %v3988 = vadd.f32 %v3648, %v3987
      %v3989 = vpop.f32.mrb[0].mxu0
      %v3990 = vadd.f32 %v3644, %v3989
      %v3991 = vpop.f32.mrb[0].mxu0
      %v3992 = vadd.f32 %v3648, %v3991
      %3993 = vmatprep.mubr.bf16.mxu0 %v3574
      %3994 = vmatmul.mubr.bf16.gmra.mrb[0].mxu0 %v3573
      %v3995 = vpop.f32.mrb[0].mxu0
      %v3996 = vadd.f32 %v3644, %v3995
      %v3997 = vpop.f32.mrb[0].mxu0
      %v3998 = vadd.f32 %v3648, %v3997
      %v3999 = vpop.f32.mrb[0].mxu0
      %v4000 = vadd.f32 %v3644, %v3999
      %v4001 = vpop.f32.mrb[0].mxu0
      %v4002 = vadd.f32 %v3648, %v4001
      %4003 = vmatprep.mubr.bf16.mxu0 %v3576
      %4004 = vmatmul.mubr.bf16.gmra.mrb[0].mxu0 %v3575
      %v4005 = vpop.f32.mrb[0].mxu0
      %v4006 = vadd.f32 %v3644, %v4005
      %v4007 = vpop.f32.mrb[0].mxu0
      %v4008 = vadd.f32 %v3648, %v4007
      %v4009 = vpop.f32.mrb[0].mxu0
      %v4010 = vadd.f32 %v3644, %v4009
      %v4011 = vpop.f32.mrb[0].mxu0
      %v4012 = vadd.f32 %v3648, %v4011
      %4013 = vmatprep.mubr.bf16.mxu0 %v3578
      %4014 = vmatmul.mubr.bf16.gmra.mrb[0].mxu0 %v3577
      %v4015 = vpop.f32.mrb[0].mxu0
      %v4016 = vadd.f32 %v3644, %v4015
      %v4017 = vpop.f32.mrb[0].mxu0
      %v4018 = vadd.f32 %v3648, %v4017
      %v4019 = vpop.f32.mrb[0].mxu0
      %v4020 = vadd.f32 %v3644, %v4019
      %v4021 = vpop.f32.mrb[0].mxu0
      %v4022 = vadd.f32 %v3648, %v4021
      %4023 = vmatprep.mubr.bf16.mxu0 %v3580
      %4024 = vmatmul.mubr.bf16.gmra.mrb[0].mxu0 %v3579
      %v4025 = vpop.f32.mrb[0].mxu0
      %v4026 = vadd.f32 %v3644, %v4025
      %v4027 = vpop.f32.mrb[0].mxu0
      %v4028 = vadd.f32 %v3648, %v4027
      %v4029 = vpop.f32.mrb[0].mxu0
      %v4030 = vadd.f32 %v3644, %v4029
      %v4031 = vpop.f32.mrb[0].mxu0
      %v4032 = vadd.f32 %v3648, %v4031
      %4033 = vmatprep.mubr.bf16.mxu0 %v3582
      %4034 = vmatmul.mubr.bf16.gmra.mrb[0].mxu0 %v3581
      %v4035 = vpop.f32.mrb[0].mxu0
      %v4036 = vadd.f32 %v3644, %v4035
      %v4037 = vpop.f32.mrb[0].mxu0
      %v4038 = vadd.f32 %v3648, %v4037
      %v4039 = vpop.f32.mrb[0].mxu0
      %v4040 = vadd.f32 %v3644, %v4039
      %v4041 = vpop.f32.mrb[0].mxu0
      %v4042 = vadd.f32 %v3648, %v4041
      %4043 = vmatprep.mubr.bf16.mxu0 %v3584
      %4044 = vmatmul.mubr.bf16.gmra.mrb[0].mxu0 %v3583
      %v4045 = vpop.f32.mrb[0].mxu0
      %v4046 = vadd.f32 %v3644, %v4045
      %v4047 = vpop.f32.mrb[0].mxu0
      %v4048 = vadd.f32 %v3648, %v4047
      %v4049 = vpop.f32.mrb[0].mxu0
      %v4050 = vadd.f32 %v3644, %v4049
      %v4051 = vpop.f32.mrb[0].mxu0
      %v4052 = vadd.f32 %v3648, %v4051
      %4053 = vmatprep.mubr.bf16.mxu0 %v3586
      %4054 = vmatmul.mubr.bf16.gmra.mrb[0].mxu0 %v3585
      %v4055 = vpop.f32.mrb[0].mxu0
      %v4056 = vadd.f32 %v3644, %v4055
      %v4057 = vpop.f32.mrb[0].mxu0
      %v4058 = vadd.f32 %v3648, %v4057
      %v4059 = vpop.f32.mrb[0].mxu0
      %v4060 = vadd.f32 %v3644, %v4059
      %v4061 = vpop.f32.mrb[0].mxu0
      %v4062 = vadd.f32 %v3648, %v4061
      %4063 = vmatprep.mubr.bf16.mxu0 %v3588
      %4064 = vmatmul.mubr.bf16.gmra.mrb[0].mxu0 %v3587
      %v4065 = vpop.f32.mrb[0].mxu0
      %v4066 = vadd.f32 %v3644, %v4065
      %v4067 = vpop.f32.mrb[0].mxu0
      %v4068 = vadd.f32 %v3648, %v4067
      %v4069 = vpop.f32.mrb[0].mxu0
      %v4070 = vadd.f32 %v3644, %v4069
      %v4071 = vpop.f32.mrb[0].mxu0
      %v4072 = vadd.f32 %v3648, %v4071
      %4073 = vmatprep.mubr.bf16.mxu0 %v3590
      %4074 = vmatmul.mubr.bf16.gmra.mrb[0].mxu0 %v3589
      %v4075 = vpop.f32.mrb[0].mxu0
      %v4076 = vadd.f32 %v3644, %v4075
      %v4077 = vpop.f32.mrb[0].mxu0
      %v4078 = vadd.f32 %v3648, %v4077
      %v4079 = vpop.f32.mrb[0].mxu0
      %v4080 = vadd.f32 %v3644, %v4079
      %v4081 = vpop.f32.mrb[0].mxu0
      %v4082 = vadd.f32 %v3648, %v4081
      %4083 = vmatprep.mubr.bf16.mxu0 %v3592
      %4084 = vmatmul.mubr.bf16.gmra.mrb[0].mxu0 %v3591
      %v4085 = vpop.f32.mrb[0].mxu0
      %v4086 = vadd.f32 %v3644, %v4085
      %v4087 = vpop.f32.mrb[0].mxu0
      %v4088 = vadd.f32 %v3648, %v4087
      %v4089 = vpop.f32.mrb[0].mxu0
      %v4090 = vadd.f32 %v3644, %v4089
      %v4091 = vpop.f32.mrb[0].mxu0
      %v4092 = vadd.f32 %v3648, %v4091
      %4093 = vmatprep.mubr.bf16.mxu0 %v3594
      %4094 = vmatmul.mubr.bf16.gmra.mrb[0].mxu0 %v3593
      %v4095 = vpop.f32.mrb[0].mxu0
      %v4096 = vadd.f32 %v3644, %v4095
      %v4097 = vpop.f32.mrb[0].mxu0
      %v4098 = vadd.f32 %v3648, %v4097
      %v4099 = vpop.f32.mrb[0].mxu0
      %v4100 = vadd.f32 %v3644, %v4099
      %v4101 = vpop.f32.mrb[0].mxu0
      %v4102 = vadd.f32 %v3648, %v4101
      %4103 = vmatprep.mubr.bf16.mxu0 %v3596
      %4104 = vmatmul.mubr.bf16.gmra.mrb[0].mxu0 %v3595
      %v4105 = vpop.f32.mrb[0].mxu0
      %v4106 = vadd.f32 %v3644, %v4105
      %v4107 = vpop.f32.mrb[0].mxu0
      %v4108 = vadd.f32 %v3648, %v4107
      %v4109 = vpop.f32.mrb[0].mxu0
      %v4110 = vadd.f32 %v3644, %v4109
      %v4111 = vpop.f32.mrb[0].mxu0
      %v4112 = vadd.f32 %v3648, %v4111
      %4113 = vmatprep.mubr.bf16.mxu0 %v3598
      %4114 = vmatmul.mubr.bf16.gmra.mrb[0].mxu0 %v3597
      %v4115 = vpop.f32.mrb[0].mxu0
      %v4116 = vadd.f32 %v3644, %v4115
      %v4117 = vpop.f32.mrb[0].mxu0
      %v4118 = vadd.f32 %v3648, %v4117
      %v4119 = vpop.f32.mrb[0].mxu0
      %v4120 = vadd.f32 %v3644, %v4119
      %v4121 = vpop.f32.mrb[0].mxu0
      %v4122 = vadd.f32 %v3648, %v4121
      %4123 = vmatprep.mubr.bf16.mxu0 %v3600
      %4124 = vmatmul.mubr.bf16.gmra.mrb[0].mxu0 %v3599
      %v4125 = vpop.f32.mrb[0].mxu0
      %v4126 = vadd.f32 %v3644, %v4125
      %v4127 = vpop.f32.mrb[0].mxu0
      %v4128 = vadd.f32 %v3648, %v4127
      %v4129 = vpop.f32.mrb[0].mxu0
      %v4130 = vadd.f32 %v3644, %v4129
      %v4131 = vpop.f32.mrb[0].mxu0
      %v4132 = vadd.f32 %v3648, %v4131
      %4133 = vmatprep.mubr.bf16.mxu0 %v3602
      %4134 = vmatmul.mubr.bf16.gmra.mrb[0].mxu0 %v3601
      %v4135 = vpop.f32.mrb[0].mxu0
      %v4136 = vadd.f32 %v3644, %v4135
      %v4137 = vpop.f32.mrb[0].mxu0
      %v4138 = vadd.f32 %v3648, %v4137
      %v4139 = vpop.f32.mrb[0].mxu0
      %v4140 = vadd.f32 %v3644, %v4139
      %v4141 = vpop.f32.mrb[0].mxu0
      %v4142 = vadd.f32 %v3648, %v4141
      %4143 = vmatprep.mubr.bf16.mxu0 %v3604
      %4144 = vmatmul.mubr.bf16.gmra.mrb[0].mxu0 %v3603
      %v4145 = vpop.f32.mrb[0].mxu0
      %v4146 = vadd.f32 %v3644, %v4145
      %v4147 = vpop.f32.mrb[0].mxu0
      %v4148 = vadd.f32 %v3648, %v4147
      %v4149 = vpop.f32.mrb[0].mxu0
      %v4150 = vadd.f32 %v3644, %v4149
      %v4151 = vpop.f32.mrb[0].mxu0
      %v4152 = vadd.f32 %v3648, %v4151
      %4153 = vmatprep.mubr.bf16.mxu0 %v3606
      %4154 = vmatmul.mubr.bf16.gmra.mrb[0].mxu0 %v3605
      %v4155 = vpop.f32.mrb[0].mxu0
      %v4156 = vadd.f32 %v3644, %v4155
      %v4157 = vpop.f32.mrb[0].mxu0
      %v4158 = vadd.f32 %v3648, %v4157
      %v4159 = vpop.f32.mrb[0].mxu0
      %v4160 = vadd.f32 %v3644, %v4159
      %v4161 = vpop.f32.mrb[0].mxu0
      %v4162 = vadd.f32 %v3648, %v4161
      %4163 = vdwg.mxu0
      %v4164 = vmax.f32 %v3846, 0.0
      %v4165 = vmax.f32 %v3848, 0.0
      %v4166 = vmax.f32 %v3850, 0.0
      %v4167 = vmax.f32 %v3852, 0.0
      %v4168 = vmax.f32 %v3856, 0.0
      %v4169 = vmax.f32 %v3858, 0.0
      %v4170 = vmax.f32 %v3860, 0.0
      %v4171 = vmax.f32 %v3862, 0.0
      %v4172 = vmax.f32 %v3866, 0.0
      %v4173 = vmax.f32 %v3868, 0.0
      %v4174 = vmax.f32 %v3870, 0.0
      %v4175 = vmax.f32 %v3872, 0.0
      %v4176 = vmax.f32 %v3876, 0.0
      %v4177 = vmax.f32 %v3878, 0.0
      %v4178 = vmax.f32 %v3880, 0.0
      %v4179 = vmax.f32 %v3882, 0.0
      %v4180 = vmax.f32 %v3886, 0.0
      %v4181 = vmax.f32 %v3888, 0.0
      %v4182 = vmax.f32 %v3890, 0.0
      %v4183 = vmax.f32 %v3892, 0.0
      %v4184 = vmax.f32 %v3896, 0.0
      %v4185 = vmax.f32 %v3898, 0.0
      %v4186 = vmax.f32 %v3900, 0.0
      %v4187 = vmax.f32 %v3902, 0.0
      %v4188 = vmax.f32 %v3906, 0.0
      %v4189 = vmax.f32 %v3908, 0.0
      %v4190 = vmax.f32 %v3910, 0.0
      %v4191 = vmax.f32 %v3912, 0.0
      %v4192 = vmax.f32 %v3916, 0.0
      %v4193 = vmax.f32 %v3918, 0.0
      %v4194 = vmax.f32 %v3920, 0.0
      %v4195 = vmax.f32 %v3922, 0.0
      %v4196 = vmax.f32 %v3926, 0.0
      %v4197 = vmax.f32 %v3928, 0.0
      %v4198 = vmax.f32 %v3930, 0.0
      %v4199 = vmax.f32 %v3932, 0.0
      %v4200 = vmax.f32 %v3936, 0.0
      %v4201 = vmax.f32 %v3938, 0.0
      %v4202 = vmax.f32 %v3940, 0.0
      %v4203 = vmax.f32 %v3942, 0.0
      %v4204 = vmax.f32 %v3946, 0.0
      %v4205 = vmax.f32 %v3948, 0.0
      %v4206 = vmax.f32 %v3950, 0.0
      %v4207 = vmax.f32 %v3952, 0.0
      %v4208 = vmax.f32 %v3956, 0.0
      %v4209 = vmax.f32 %v3958, 0.0
      %v4210 = vmax.f32 %v3960, 0.0
      %v4211 = vmax.f32 %v3962, 0.0
      %v4212 = vmax.f32 %v3966, 0.0
      %v4213 = vmax.f32 %v3968, 0.0
      %v4214 = vmax.f32 %v3970, 0.0
      %v4215 = vmax.f32 %v3972, 0.0
      %v4216 = vmax.f32 %v3976, 0.0
      %v4217 = vmax.f32 %v3978, 0.0
      %v4218 = vmax.f32 %v3980, 0.0
      %v4219 = vmax.f32 %v3982, 0.0
      %v4220 = vmax.f32 %v3986, 0.0
      %v4221 = vmax.f32 %v3988, 0.0
      %v4222 = vmax.f32 %v3990, 0.0
      %v4223 = vmax.f32 %v3992, 0.0
      %v4224 = vmax.f32 %v3996, 0.0
      %v4225 = vmax.f32 %v3998, 0.0
      %v4226 = vmax.f32 %v4000, 0.0
      %v4227 = vmax.f32 %v4002, 0.0
      %v4228 = vmax.f32 %v4006, 0.0
      %v4229 = vmax.f32 %v4008, 0.0
      %v4230 = vmax.f32 %v4010, 0.0
      %v4231 = vmax.f32 %v4012, 0.0
      %v4232 = vmax.f32 %v4016, 0.0
      %v4233 = vmax.f32 %v4018, 0.0
      %v4234 = vmax.f32 %v4020, 0.0
      %v4235 = vmax.f32 %v4022, 0.0
      %v4236 = vmax.f32 %v4026, 0.0
      %v4237 = vmax.f32 %v4028, 0.0
      %v4238 = vmax.f32 %v4030, 0.0
      %v4239 = vmax.f32 %v4032, 0.0
      %v4240 = vmax.f32 %v4036, 0.0
      %v4241 = vmax.f32 %v4038, 0.0
      %v4242 = vmax.f32 %v4040, 0.0
      %v4243 = vmax.f32 %v4042, 0.0
      %v4244 = vmax.f32 %v4046, 0.0
      %v4245 = vmax.f32 %v4048, 0.0
      %v4246 = vmax.f32 %v4050, 0.0
      %v4247 = vmax.f32 %v4052, 0.0
      %v4248 = vmax.f32 %v4056, 0.0
      %v4249 = vmax.f32 %v4058, 0.0
      %v4250 = vmax.f32 %v4060, 0.0
      %v4251 = vmax.f32 %v4062, 0.0
      %v4252 = vmax.f32 %v4066, 0.0
      %v4253 = vmax.f32 %v4068, 0.0
      %v4254 = vmax.f32 %v4070, 0.0
      %v4255 = vmax.f32 %v4072, 0.0
      %v4256 = vmax.f32 %v4076, 0.0
      %v4257 = vmax.f32 %v4078, 0.0
      %v4258 = vmax.f32 %v4080, 0.0
      %v4259 = vmax.f32 %v4082, 0.0
      %v4260 = vmax.f32 %v4086, 0.0
      %v4261 = vmax.f32 %v4088, 0.0
      %v4262 = vmax.f32 %v4090, 0.0
      %v4263 = vmax.f32 %v4092, 0.0
      %v4264 = vmax.f32 %v4096, 0.0
      %v4265 = vmax.f32 %v4098, 0.0
      %v4266 = vmax.f32 %v4100, 0.0
      %v4267 = vmax.f32 %v4102, 0.0
      %v4268 = vmax.f32 %v4106, 0.0
      %v4269 = vmax.f32 %v4108, 0.0
      %v4270 = vmax.f32 %v4110, 0.0
      %v4271 = vmax.f32 %v4112, 0.0
      %v4272 = vmax.f32 %v4116, 0.0
      %v4273 = vmax.f32 %v4118, 0.0
      %v4274 = vmax.f32 %v4120, 0.0
      %v4275 = vmax.f32 %v4122, 0.0
      %v4276 = vmax.f32 %v4126, 0.0
      %v4277 = vmax.f32 %v4128, 0.0
      %v4278 = vmax.f32 %v4130, 0.0
      %v4279 = vmax.f32 %v4132, 0.0
      %v4280 = vmax.f32 %v4136, 0.0
      %v4281 = vmax.f32 %v4138, 0.0
      %v4282 = vmax.f32 %v4140, 0.0
      %v4283 = vmax.f32 %v4142, 0.0
      %v4284 = vmax.f32 %v4146, 0.0
      %v4285 = vmax.f32 %v4148, 0.0
      %v4286 = vmax.f32 %v4150, 0.0
      %v4287 = vmax.f32 %v4152, 0.0
      %v4288 = vmax.f32 %v4156, 0.0
      %v4289 = vmax.f32 %v4158, 0.0
      %v4290 = vmax.f32 %v4160, 0.0
      %v4291 = vmax.f32 %v4162, 0.0
      %v4292 = vpack.c.bf16 %v4166, %v4164
      %v4293 = vpack.c.bf16 %v4167, %v4165
      %v4294 = vpack.c.bf16 %v4170, %v4168
      %v4295 = vpack.c.bf16 %v4171, %v4169
      %v4296 = vpack.c.bf16 %v4174, %v4172
      %v4297 = vpack.c.bf16 %v4175, %v4173
      %v4298 = vpack.c.bf16 %v4178, %v4176
      %v4299 = vpack.c.bf16 %v4179, %v4177
      %v4300 = vpack.c.bf16 %v4182, %v4180
      %v4301 = vpack.c.bf16 %v4183, %v4181
      %v4302 = vpack.c.bf16 %v4186, %v4184
      %v4303 = vpack.c.bf16 %v4187, %v4185
      %v4304 = vpack.c.bf16 %v4190, %v4188
      %v4305 = vpack.c.bf16 %v4191, %v4189
      %v4306 = vpack.c.bf16 %v4194, %v4192
      %v4307 = vpack.c.bf16 %v4195, %v4193
      %v4308 = vpack.c.bf16 %v4198, %v4196
      %v4309 = vpack.c.bf16 %v4199, %v4197
      %v4310 = vpack.c.bf16 %v4202, %v4200
      %v4311 = vpack.c.bf16 %v4203, %v4201
      %v4312 = vpack.c.bf16 %v4206, %v4204
      %v4313 = vpack.c.bf16 %v4207, %v4205
      %v4314 = vpack.c.bf16 %v4210, %v4208
      %v4315 = vpack.c.bf16 %v4211, %v4209
      %v4316 = vpack.c.bf16 %v4214, %v4212
      %v4317 = vpack.c.bf16 %v4215, %v4213
      %v4318 = vpack.c.bf16 %v4218, %v4216
      %v4319 = vpack.c.bf16 %v4219, %v4217
      %v4320 = vpack.c.bf16 %v4222, %v4220
      %v4321 = vpack.c.bf16 %v4223, %v4221
      %v4322 = vpack.c.bf16 %v4226, %v4224
      %v4323 = vpack.c.bf16 %v4227, %v4225
      %v4324 = vpack.c.bf16 %v4230, %v4228
      %v4325 = vpack.c.bf16 %v4231, %v4229
      %v4326 = vpack.c.bf16 %v4234, %v4232
      %v4327 = vpack.c.bf16 %v4235, %v4233
      %v4328 = vpack.c.bf16 %v4238, %v4236
      %v4329 = vpack.c.bf16 %v4239, %v4237
      %v4330 = vpack.c.bf16 %v4242, %v4240
      %v4331 = vpack.c.bf16 %v4243, %v4241
      %v4332 = vpack.c.bf16 %v4246, %v4244
      %v4333 = vpack.c.bf16 %v4247, %v4245
      %v4334 = vpack.c.bf16 %v4250, %v4248
      %v4335 = vpack.c.bf16 %v4251, %v4249
      %v4336 = vpack.c.bf16 %v4254, %v4252
      %v4337 = vpack.c.bf16 %v4255, %v4253
      %v4338 = vpack.c.bf16 %v4258, %v4256
      %v4339 = vpack.c.bf16 %v4259, %v4257
      %v4340 = vpack.c.bf16 %v4262, %v4260
      %v4341 = vpack.c.bf16 %v4263, %v4261
      %v4342 = vpack.c.bf16 %v4266, %v4264
      %v4343 = vpack.c.bf16 %v4267, %v4265
      %v4344 = vpack.c.bf16 %v4270, %v4268
      %v4345 = vpack.c.bf16 %v4271, %v4269
      %v4346 = vpack.c.bf16 %v4274, %v4272
      %v4347 = vpack.c.bf16 %v4275, %v4273
      %v4348 = vpack.c.bf16 %v4278, %v4276
      %v4349 = vpack.c.bf16 %v4279, %v4277
      %v4350 = vpack.c.bf16 %v4282, %v4280
      %v4351 = vpack.c.bf16 %v4283, %v4281
      %v4352 = vpack.c.bf16 %v4286, %v4284
      %v4353 = vpack.c.bf16 %v4287, %v4285
      %v4354 = vpack.c.bf16 %v4290, %v4288
      %v4355 = vpack.c.bf16 %v4291, %v4289
      %v4356 = vld [vmem:[%s9] sm:$0xff]
      %v4357 = vld [vmem:[%s9 + $0x8] sm:$0xff]
      %v4358 = vld [vmem:[%s9 + $0x10] sm:$0xff]
      %v4359 = vld [vmem:[%s9 + $0x18] sm:$0xff]
      %v4360 = vld [vmem:[%s9 + $0x20] sm:$0xff]
      %v4361 = vld [vmem:[%s9 + $0x28] sm:$0xff]
      %v4362 = vld [vmem:[%s9 + $0x30] sm:$0xff]
      %v4363 = vld [vmem:[%s9 + $0x38] sm:$0xff]
      %v4364 = vld [vmem:[%s9 + $0x40] sm:$0xff]
      %v4365 = vld [vmem:[%s9 + $0x48] sm:$0xff]
      %v4366 = vld [vmem:[%s9 + $0x50] sm:$0xff]
      %v4367 = vld [vmem:[%s9 + $0x58] sm:$0xff]
      %v4368 = vld [vmem:[%s9 + $0x60] sm:$0xff]
      %v4369 = vld [vmem:[%s9 + $0x68] sm:$0xff]
      %v4370 = vld [vmem:[%s9 + $0x70] sm:$0xff]
      %v4371 = vld [vmem:[%s9 + $0x78] sm:$0xff]
      %v4372 = vld [vmem:[%s9 + $0x80] sm:$0xff]
      %v4373 = vld [vmem:[%s9 + $0x88] sm:$0xff]
      %v4374 = vld [vmem:[%s9 + $0x90] sm:$0xff]
      %v4375 = vld [vmem:[%s9 + $0x98] sm:$0xff]
      %v4376 = vld [vmem:[%s9 + $0xa0] sm:$0xff]
      %v4377 = vld [vmem:[%s9 + $0xa8] sm:$0xff]
      %v4378 = vld [vmem:[%s9 + $0xb0] sm:$0xff]
      %v4379 = vld [vmem:[%s9 + $0xb8] sm:$0xff]
      %v4380 = vld [vmem:[%s9 + $0xc0] sm:$0xff]
      %v4381 = vld [vmem:[%s9 + $0xc8] sm:$0xff]
      %v4382 = vld [vmem:[%s9 + $0xd0] sm:$0xff]
      %v4383 = vld [vmem:[%s9 + $0xd8] sm:$0xff]
      %v4384 = vld [vmem:[%s9 + $0xe0] sm:$0xff]
      %v4385 = vld [vmem:[%s9 + $0xe8] sm:$0xff]
      %v4386 = vld [vmem:[%s9 + $0xf0] sm:$0xff]
      %v4387 = vld [vmem:[%s9 + $0xf8] sm:$0xff]
      %v4388 = vld [vmem:[%s10] sm:$0x3]
      %v4390 = vlaneseq
      %v4391 = vshrl.u32 %v4390, 7
      %v4392 = vsub.s32 0, %v4391
      %v4393 = vrot.slane %v4388, %v4392
      %v4394 = vlaneseq
      %v4395 = vshrl.u32 %v4394, 7
      %v4396 = vsub.s32 1, %v4395
      %v4397 = vrot.slane %v4388, %v4396
      %v4432 = vunpack.c.l.b16 %v4356
      %v4433 = vunpack.c.h.b16 %v4356
      %v4434 = vunpack.c.l.b16 %v4357
      %v4435 = vunpack.c.h.b16 %v4357
      %v4436 = vunpack.c.l.b16 %v4358
      %v4437 = vunpack.c.h.b16 %v4358
      %v4438 = vunpack.c.l.b16 %v4359
      %v4439 = vunpack.c.h.b16 %v4359
      %v4440 = vunpack.c.l.b16 %v4360
      %v4441 = vunpack.c.h.b16 %v4360
      %v4442 = vunpack.c.l.b16 %v4361
      %v4443 = vunpack.c.h.b16 %v4361
      %v4444 = vunpack.c.l.b16 %v4362
      %v4445 = vunpack.c.h.b16 %v4362
      %v4446 = vunpack.c.l.b16 %v4363
      %v4447 = vunpack.c.h.b16 %v4363
      %v4448 = vunpack.c.l.b16 %v4364
      %v4449 = vunpack.c.h.b16 %v4364
      %v4450 = vunpack.c.l.b16 %v4365
      %v4451 = vunpack.c.h.b16 %v4365
      %v4452 = vunpack.c.l.b16 %v4366
      %v4453 = vunpack.c.h.b16 %v4366
      %v4454 = vunpack.c.l.b16 %v4367
      %v4455 = vunpack.c.h.b16 %v4367
      %v4456 = vunpack.c.l.b16 %v4368
      %v4457 = vunpack.c.h.b16 %v4368
      %v4458 = vunpack.c.l.b16 %v4369
      %v4459 = vunpack.c.h.b16 %v4369
      %v4460 = vunpack.c.l.b16 %v4370
      %v4461 = vunpack.c.h.b16 %v4370
      %v4462 = vunpack.c.l.b16 %v4371
      %v4463 = vunpack.c.h.b16 %v4371
      %v4464 = vunpack.c.l.b16 %v4372
      %v4465 = vunpack.c.h.b16 %v4372
      %v4466 = vunpack.c.l.b16 %v4373
      %v4467 = vunpack.c.h.b16 %v4373
      %v4468 = vunpack.c.l.b16 %v4374
      %v4469 = vunpack.c.h.b16 %v4374
      %v4470 = vunpack.c.l.b16 %v4375
      %v4471 = vunpack.c.h.b16 %v4375
      %v4472 = vunpack.c.l.b16 %v4376
      %v4473 = vunpack.c.h.b16 %v4376
      %v4474 = vunpack.c.l.b16 %v4377
      %v4475 = vunpack.c.h.b16 %v4377
      %v4476 = vunpack.c.l.b16 %v4378
      %v4477 = vunpack.c.h.b16 %v4378
      %v4478 = vunpack.c.l.b16 %v4379
      %v4479 = vunpack.c.h.b16 %v4379
      %v4480 = vunpack.c.l.b16 %v4380
      %v4481 = vunpack.c.h.b16 %v4380
      %v4482 = vunpack.c.l.b16 %v4381
      %v4483 = vunpack.c.h.b16 %v4381
      %v4484 = vunpack.c.l.b16 %v4382
      %v4485 = vunpack.c.h.b16 %v4382
      %v4486 = vunpack.c.l.b16 %v4383
      %v4487 = vunpack.c.h.b16 %v4383
      %v4488 = vunpack.c.l.b16 %v4384
      %v4489 = vunpack.c.h.b16 %v4384
      %v4490 = vunpack.c.l.b16 %v4385
      %v4491 = vunpack.c.h.b16 %v4385
      %v4492 = vunpack.c.l.b16 %v4386
      %v4493 = vunpack.c.h.b16 %v4386
      %v4494 = vunpack.c.l.b16 %v4387
      %v4495 = vunpack.c.h.b16 %v4387
      %v4496 = vpack.c.b16 %v4434, %v4432
      %v4497 = vpack.c.b16 %v4435, %v4433
      %v4498 = vpack.c.b16 %v4438, %v4436
      %v4499 = vpack.c.b16 %v4439, %v4437
      %v4500 = vpack.c.b16 %v4442, %v4440
      %v4501 = vpack.c.b16 %v4443, %v4441
      %v4502 = vpack.c.b16 %v4446, %v4444
      %v4503 = vpack.c.b16 %v4447, %v4445
      %v4504 = vpack.c.b16 %v4450, %v4448
      %v4505 = vpack.c.b16 %v4451, %v4449
      %v4506 = vpack.c.b16 %v4454, %v4452
      %v4507 = vpack.c.b16 %v4455, %v4453
      %v4508 = vpack.c.b16 %v4458, %v4456
      %v4509 = vpack.c.b16 %v4459, %v4457
      %v4510 = vpack.c.b16 %v4462, %v4460
      %v4511 = vpack.c.b16 %v4463, %v4461
      %v4512 = vpack.c.b16 %v4466, %v4464
      %v4513 = vpack.c.b16 %v4467, %v4465
      %v4514 = vpack.c.b16 %v4470, %v4468
      %v4515 = vpack.c.b16 %v4471, %v4469
      %v4516 = vpack.c.b16 %v4474, %v4472
      %v4517 = vpack.c.b16 %v4475, %v4473
      %v4518 = vpack.c.b16 %v4478, %v4476
      %v4519 = vpack.c.b16 %v4479, %v4477
      %v4520 = vpack.c.b16 %v4482, %v4480
      %v4521 = vpack.c.b16 %v4483, %v4481
      %v4522 = vpack.c.b16 %v4486, %v4484
      %v4523 = vpack.c.b16 %v4487, %v4485
      %v4524 = vpack.c.b16 %v4490, %v4488
      %v4525 = vpack.c.b16 %v4491, %v4489
      %v4526 = vpack.c.b16 %v4494, %v4492
      %v4527 = vpack.c.b16 %v4495, %v4493
      %4560 = vmatprep.subr.bf16.mxu0 %v4497
      %4561 = vmatpush1.bf16.msra.mxu0 %v4496
      %4562 = vmatprep.subr.bf16.mxu0 %v4499
      %4563 = vmatpush1.bf16.msra.mxu0 %v4498
      %4564 = vmatprep.subr.bf16.mxu0 %v4501
      %4565 = vmatpush1.bf16.msra.mxu0 %v4500
      %4566 = vmatprep.subr.bf16.mxu0 %v4503
      %4567 = vmatpush1.bf16.msra.mxu0 %v4502
      %4568 = vmatprep.subr.bf16.mxu0 %v4505
      %4569 = vmatpush1.bf16.msra.mxu0 %v4504
      %4570 = vmatprep.subr.bf16.mxu0 %v4507
      %4571 = vmatpush1.bf16.msra.mxu0 %v4506
      %4572 = vmatprep.subr.bf16.mxu0 %v4509
      %4573 = vmatpush1.bf16.msra.mxu0 %v4508
      %4574 = vmatprep.subr.bf16.mxu0 %v4511
      %4575 = vmatpush1.bf16.msra.mxu0 %v4510
      %4576 = vmatprep.subr.bf16.mxu0 %v4513
      %4577 = vmatpush1.bf16.msra.mxu0 %v4512
      %4578 = vmatprep.subr.bf16.mxu0 %v4515
      %4579 = vmatpush1.bf16.msra.mxu0 %v4514
      %4580 = vmatprep.subr.bf16.mxu0 %v4517
      %4581 = vmatpush1.bf16.msra.mxu0 %v4516
      %4582 = vmatprep.subr.bf16.mxu0 %v4519
      %4583 = vmatpush1.bf16.msra.mxu0 %v4518
      %4584 = vmatprep.subr.bf16.mxu0 %v4521
      %4585 = vmatpush1.bf16.msra.mxu0 %v4520
      %4586 = vmatprep.subr.bf16.mxu0 %v4523
      %4587 = vmatpush1.bf16.msra.mxu0 %v4522
      %4588 = vmatprep.subr.bf16.mxu0 %v4525
      %4589 = vmatpush1.bf16.msra.mxu0 %v4524
      %4590 = vmatprep.subr.bf16.mxu0 %v4527
      %4591 = vmatpush1.bf16.msra.mxu0 %v4526
      %4592 = vmatprep.mubr.bf16.mxu0 %v4293
      %4593 = vmatmul.mubr.bf16.gmra.mrb[0].mxu0 %v4292
      %v4594 = vpop.f32.mrb[0].mxu0
      %v4595 = vadd.f32 %v4393, %v4594
      %v4596 = vpop.f32.mrb[0].mxu0
      %v4597 = vadd.f32 %v4397, %v4596
      %v4598 = vpop.f32.mrb[0].mxu0
      %v4599 = vadd.f32 %v4393, %v4598
      %v4600 = vpop.f32.mrb[0].mxu0
      %v4601 = vadd.f32 %v4397, %v4600
      %4602 = vmatprep.mubr.bf16.mxu0 %v4295
      %4603 = vmatmul.mubr.bf16.gmra.mrb[0].mxu0 %v4294
      %v4604 = vpop.f32.mrb[0].mxu0
      %v4605 = vadd.f32 %v4393, %v4604
      %v4606 = vpop.f32.mrb[0].mxu0
      %v4607 = vadd.f32 %v4397, %v4606
      %v4608 = vpop.f32.mrb[0].mxu0
      %v4609 = vadd.f32 %v4393, %v4608
      %v4610 = vpop.f32.mrb[0].mxu0
      %v4611 = vadd.f32 %v4397, %v4610
      %4612 = vmatprep.mubr.bf16.mxu0 %v4297
      %4613 = vmatmul.mubr.bf16.gmra.mrb[0].mxu0 %v4296
      %v4614 = vpop.f32.mrb[0].mxu0
      %v4615 = vadd.f32 %v4393, %v4614
      %v4616 = vpop.f32.mrb[0].mxu0
      %v4617 = vadd.f32 %v4397, %v4616
      %v4618 = vpop.f32.mrb[0].mxu0
      %v4619 = vadd.f32 %v4393, %v4618
      %v4620 = vpop.f32.mrb[0].mxu0
      %v4621 = vadd.f32 %v4397, %v4620
      %4622 = vmatprep.mubr.bf16.mxu0 %v4299
      %4623 = vmatmul.mubr.bf16.gmra.mrb[0].mxu0 %v4298
      %v4624 = vpop.f32.mrb[0].mxu0
      %v4625 = vadd.f32 %v4393, %v4624
      %v4626 = vpop.f32.mrb[0].mxu0
      %v4627 = vadd.f32 %v4397, %v4626
      %v4628 = vpop.f32.mrb[0].mxu0
      %v4629 = vadd.f32 %v4393, %v4628
      %v4630 = vpop.f32.mrb[0].mxu0
      %v4631 = vadd.f32 %v4397, %v4630
      %4632 = vmatprep.mubr.bf16.mxu0 %v4301
      %4633 = vmatmul.mubr.bf16.gmra.mrb[0].mxu0 %v4300
      %v4634 = vpop.f32.mrb[0].mxu0
      %v4635 = vadd.f32 %v4393, %v4634
      %v4636 = vpop.f32.mrb[0].mxu0
      %v4637 = vadd.f32 %v4397, %v4636
      %v4638 = vpop.f32.mrb[0].mxu0
      %v4639 = vadd.f32 %v4393, %v4638
      %v4640 = vpop.f32.mrb[0].mxu0
      %v4641 = vadd.f32 %v4397, %v4640
      %4642 = vmatprep.mubr.bf16.mxu0 %v4303
      %4643 = vmatmul.mubr.bf16.gmra.mrb[0].mxu0 %v4302
      %v4644 = vpop.f32.mrb[0].mxu0
      %v4645 = vadd.f32 %v4393, %v4644
      %v4646 = vpop.f32.mrb[0].mxu0
      %v4647 = vadd.f32 %v4397, %v4646
      %v4648 = vpop.f32.mrb[0].mxu0
      %v4649 = vadd.f32 %v4393, %v4648
      %v4650 = vpop.f32.mrb[0].mxu0
      %v4651 = vadd.f32 %v4397, %v4650
      %4652 = vmatprep.mubr.bf16.mxu0 %v4305
      %4653 = vmatmul.mubr.bf16.gmra.mrb[0].mxu0 %v4304
      %v4654 = vpop.f32.mrb[0].mxu0
      %v4655 = vadd.f32 %v4393, %v4654
      %v4656 = vpop.f32.mrb[0].mxu0
      %v4657 = vadd.f32 %v4397, %v4656
      %v4658 = vpop.f32.mrb[0].mxu0
      %v4659 = vadd.f32 %v4393, %v4658
      %v4660 = vpop.f32.mrb[0].mxu0
      %v4661 = vadd.f32 %v4397, %v4660
      %4662 = vmatprep.mubr.bf16.mxu0 %v4307
      %4663 = vmatmul.mubr.bf16.gmra.mrb[0].mxu0 %v4306
      %v4664 = vpop.f32.mrb[0].mxu0
      %v4665 = vadd.f32 %v4393, %v4664
      %v4666 = vpop.f32.mrb[0].mxu0
      %v4667 = vadd.f32 %v4397, %v4666
      %v4668 = vpop.f32.mrb[0].mxu0
      %v4669 = vadd.f32 %v4393, %v4668
      %v4670 = vpop.f32.mrb[0].mxu0
      %v4671 = vadd.f32 %v4397, %v4670
      %4672 = vmatprep.mubr.bf16.mxu0 %v4309
      %4673 = vmatmul.mubr.bf16.gmra.mrb[0].mxu0 %v4308
      %v4674 = vpop.f32.mrb[0].mxu0
      %v4675 = vadd.f32 %v4393, %v4674
      %v4676 = vpop.f32.mrb[0].mxu0
      %v4677 = vadd.f32 %v4397, %v4676
      %v4678 = vpop.f32.mrb[0].mxu0
      %v4679 = vadd.f32 %v4393, %v4678
      %v4680 = vpop.f32.mrb[0].mxu0
      %v4681 = vadd.f32 %v4397, %v4680
      %4682 = vmatprep.mubr.bf16.mxu0 %v4311
      %4683 = vmatmul.mubr.bf16.gmra.mrb[0].mxu0 %v4310
      %v4684 = vpop.f32.mrb[0].mxu0
      %v4685 = vadd.f32 %v4393, %v4684
      %v4686 = vpop.f32.mrb[0].mxu0
      %v4687 = vadd.f32 %v4397, %v4686
      %v4688 = vpop.f32.mrb[0].mxu0
      %v4689 = vadd.f32 %v4393, %v4688
      %v4690 = vpop.f32.mrb[0].mxu0
      %v4691 = vadd.f32 %v4397, %v4690
      %4692 = vmatprep.mubr.bf16.mxu0 %v4313
      %4693 = vmatmul.mubr.bf16.gmra.mrb[0].mxu0 %v4312
      %v4694 = vpop.f32.mrb[0].mxu0
      %v4695 = vadd.f32 %v4393, %v4694
      %v4696 = vpop.f32.mrb[0].mxu0
      %v4697 = vadd.f32 %v4397, %v4696
      %v4698 = vpop.f32.mrb[0].mxu0
      %v4699 = vadd.f32 %v4393, %v4698
      %v4700 = vpop.f32.mrb[0].mxu0
      %v4701 = vadd.f32 %v4397, %v4700
      %4702 = vmatprep.mubr.bf16.mxu0 %v4315
      %4703 = vmatmul.mubr.bf16.gmra.mrb[0].mxu0 %v4314
      %v4704 = vpop.f32.mrb[0].mxu0
      %v4705 = vadd.f32 %v4393, %v4704
      %v4706 = vpop.f32.mrb[0].mxu0
      %v4707 = vadd.f32 %v4397, %v4706
      %v4708 = vpop.f32.mrb[0].mxu0
      %v4709 = vadd.f32 %v4393, %v4708
      %v4710 = vpop.f32.mrb[0].mxu0
      %v4711 = vadd.f32 %v4397, %v4710
      %4712 = vmatprep.mubr.bf16.mxu0 %v4317
      %4713 = vmatmul.mubr.bf16.gmra.mrb[0].mxu0 %v4316
      %v4714 = vpop.f32.mrb[0].mxu0
      %v4715 = vadd.f32 %v4393, %v4714
      %v4716 = vpop.f32.mrb[0].mxu0
      %v4717 = vadd.f32 %v4397, %v4716
      %v4718 = vpop.f32.mrb[0].mxu0
      %v4719 = vadd.f32 %v4393, %v4718
      %v4720 = vpop.f32.mrb[0].mxu0
      %v4721 = vadd.f32 %v4397, %v4720
      %4722 = vmatprep.mubr.bf16.mxu0 %v4319
      %4723 = vmatmul.mubr.bf16.gmra.mrb[0].mxu0 %v4318
      %v4724 = vpop.f32.mrb[0].mxu0
      %v4725 = vadd.f32 %v4393, %v4724
      %v4726 = vpop.f32.mrb[0].mxu0
      %v4727 = vadd.f32 %v4397, %v4726
      %v4728 = vpop.f32.mrb[0].mxu0
      %v4729 = vadd.f32 %v4393, %v4728
      %v4730 = vpop.f32.mrb[0].mxu0
      %v4731 = vadd.f32 %v4397, %v4730
      %4732 = vmatprep.mubr.bf16.mxu0 %v4321
      %4733 = vmatmul.mubr.bf16.gmra.mrb[0].mxu0 %v4320
      %v4734 = vpop.f32.mrb[0].mxu0
      %v4735 = vadd.f32 %v4393, %v4734
      %v4736 = vpop.f32.mrb[0].mxu0
      %v4737 = vadd.f32 %v4397, %v4736
      %v4738 = vpop.f32.mrb[0].mxu0
      %v4739 = vadd.f32 %v4393, %v4738
      %v4740 = vpop.f32.mrb[0].mxu0
      %v4741 = vadd.f32 %v4397, %v4740
      %4742 = vmatprep.mubr.bf16.mxu0 %v4323
      %4743 = vmatmul.mubr.bf16.gmra.mrb[0].mxu0 %v4322
      %v4744 = vpop.f32.mrb[0].mxu0
      %v4745 = vadd.f32 %v4393, %v4744
      %v4746 = vpop.f32.mrb[0].mxu0
      %v4747 = vadd.f32 %v4397, %v4746
      %v4748 = vpop.f32.mrb[0].mxu0
      %v4749 = vadd.f32 %v4393, %v4748
      %v4750 = vpop.f32.mrb[0].mxu0
      %v4751 = vadd.f32 %v4397, %v4750
      %4752 = vmatprep.mubr.bf16.mxu0 %v4325
      %4753 = vmatmul.mubr.bf16.gmra.mrb[0].mxu0 %v4324
      %v4754 = vpop.f32.mrb[0].mxu0
      %v4755 = vadd.f32 %v4393, %v4754
      %v4756 = vpop.f32.mrb[0].mxu0
      %v4757 = vadd.f32 %v4397, %v4756
      %v4758 = vpop.f32.mrb[0].mxu0
      %v4759 = vadd.f32 %v4393, %v4758
      %v4760 = vpop.f32.mrb[0].mxu0
      %v4761 = vadd.f32 %v4397, %v4760
      %4762 = vmatprep.mubr.bf16.mxu0 %v4327
      %4763 = vmatmul.mubr.bf16.gmra.mrb[0].mxu0 %v4326
      %v4764 = vpop.f32.mrb[0].mxu0
      %v4765 = vadd.f32 %v4393, %v4764
      %v4766 = vpop.f32.mrb[0].mxu0
      %v4767 = vadd.f32 %v4397, %v4766
      %v4768 = vpop.f32.mrb[0].mxu0
      %v4769 = vadd.f32 %v4393, %v4768
      %v4770 = vpop.f32.mrb[0].mxu0
      %v4771 = vadd.f32 %v4397, %v4770
      %4772 = vmatprep.mubr.bf16.mxu0 %v4329
      %4773 = vmatmul.mubr.bf16.gmra.mrb[0].mxu0 %v4328
      %v4774 = vpop.f32.mrb[0].mxu0
      %v4775 = vadd.f32 %v4393, %v4774
      %v4776 = vpop.f32.mrb[0].mxu0
      %v4777 = vadd.f32 %v4397, %v4776
      %v4778 = vpop.f32.mrb[0].mxu0
      %v4779 = vadd.f32 %v4393, %v4778
      %v4780 = vpop.f32.mrb[0].mxu0
      %v4781 = vadd.f32 %v4397, %v4780
      %4782 = vmatprep.mubr.bf16.mxu0 %v4331
      %4783 = vmatmul.mubr.bf16.gmra.mrb[0].mxu0 %v4330
      %v4784 = vpop.f32.mrb[0].mxu0
      %v4785 = vadd.f32 %v4393, %v4784
      %v4786 = vpop.f32.mrb[0].mxu0
      %v4787 = vadd.f32 %v4397, %v4786
      %v4788 = vpop.f32.mrb[0].mxu0
      %v4789 = vadd.f32 %v4393, %v4788
      %v4790 = vpop.f32.mrb[0].mxu0
      %v4791 = vadd.f32 %v4397, %v4790
      %4792 = vmatprep.mubr.bf16.mxu0 %v4333
      %4793 = vmatmul.mubr.bf16.gmra.mrb[0].mxu0 %v4332
      %v4794 = vpop.f32.mrb[0].mxu0
      %v4795 = vadd.f32 %v4393, %v4794
      %v4796 = vpop.f32.mrb[0].mxu0
      %v4797 = vadd.f32 %v4397, %v4796
      %v4798 = vpop.f32.mrb[0].mxu0
      %v4799 = vadd.f32 %v4393, %v4798
      %v4800 = vpop.f32.mrb[0].mxu0
      %v4801 = vadd.f32 %v4397, %v4800
      %4802 = vmatprep.mubr.bf16.mxu0 %v4335
      %4803 = vmatmul.mubr.bf16.gmra.mrb[0].mxu0 %v4334
      %v4804 = vpop.f32.mrb[0].mxu0
      %v4805 = vadd.f32 %v4393, %v4804
      %v4806 = vpop.f32.mrb[0].mxu0
      %v4807 = vadd.f32 %v4397, %v4806
      %v4808 = vpop.f32.mrb[0].mxu0
      %v4809 = vadd.f32 %v4393, %v4808
      %v4810 = vpop.f32.mrb[0].mxu0
      %v4811 = vadd.f32 %v4397, %v4810
      %4812 = vmatprep.mubr.bf16.mxu0 %v4337
      %4813 = vmatmul.mubr.bf16.gmra.mrb[0].mxu0 %v4336
      %v4814 = vpop.f32.mrb[0].mxu0
      %v4815 = vadd.f32 %v4393, %v4814
      %v4816 = vpop.f32.mrb[0].mxu0
      %v4817 = vadd.f32 %v4397, %v4816
      %v4818 = vpop.f32.mrb[0].mxu0
      %v4819 = vadd.f32 %v4393, %v4818
      %v4820 = vpop.f32.mrb[0].mxu0
      %v4821 = vadd.f32 %v4397, %v4820
      %4822 = vmatprep.mubr.bf16.mxu0 %v4339
      %4823 = vmatmul.mubr.bf16.gmra.mrb[0].mxu0 %v4338
      %v4824 = vpop.f32.mrb[0].mxu0
      %v4825 = vadd.f32 %v4393, %v4824
      %v4826 = vpop.f32.mrb[0].mxu0
      %v4827 = vadd.f32 %v4397, %v4826
      %v4828 = vpop.f32.mrb[0].mxu0
      %v4829 = vadd.f32 %v4393, %v4828
      %v4830 = vpop.f32.mrb[0].mxu0
      %v4831 = vadd.f32 %v4397, %v4830
      %4832 = vmatprep.mubr.bf16.mxu0 %v4341
      %4833 = vmatmul.mubr.bf16.gmra.mrb[0].mxu0 %v4340
      %v4834 = vpop.f32.mrb[0].mxu0
      %v4835 = vadd.f32 %v4393, %v4834
      %v4836 = vpop.f32.mrb[0].mxu0
      %v4837 = vadd.f32 %v4397, %v4836
      %v4838 = vpop.f32.mrb[0].mxu0
      %v4839 = vadd.f32 %v4393, %v4838
      %v4840 = vpop.f32.mrb[0].mxu0
      %v4841 = vadd.f32 %v4397, %v4840
      %4842 = vmatprep.mubr.bf16.mxu0 %v4343
      %4843 = vmatmul.mubr.bf16.gmra.mrb[0].mxu0 %v4342
      %v4844 = vpop.f32.mrb[0].mxu0
      %v4845 = vadd.f32 %v4393, %v4844
      %v4846 = vpop.f32.mrb[0].mxu0
      %v4847 = vadd.f32 %v4397, %v4846
      %v4848 = vpop.f32.mrb[0].mxu0
      %v4849 = vadd.f32 %v4393, %v4848
      %v4850 = vpop.f32.mrb[0].mxu0
      %v4851 = vadd.f32 %v4397, %v4850
      %4852 = vmatprep.mubr.bf16.mxu0 %v4345
      %4853 = vmatmul.mubr.bf16.gmra.mrb[0].mxu0 %v4344
      %v4854 = vpop.f32.mrb[0].mxu0
      %v4855 = vadd.f32 %v4393, %v4854
      %v4856 = vpop.f32.mrb[0].mxu0
      %v4857 = vadd.f32 %v4397, %v4856
      %v4858 = vpop.f32.mrb[0].mxu0
      %v4859 = vadd.f32 %v4393, %v4858
      %v4860 = vpop.f32.mrb[0].mxu0
      %v4861 = vadd.f32 %v4397, %v4860
      %4862 = vmatprep.mubr.bf16.mxu0 %v4347
      %4863 = vmatmul.mubr.bf16.gmra.mrb[0].mxu0 %v4346
      %v4864 = vpop.f32.mrb[0].mxu0
      %v4865 = vadd.f32 %v4393, %v4864
      %v4866 = vpop.f32.mrb[0].mxu0
      %v4867 = vadd.f32 %v4397, %v4866
      %v4868 = vpop.f32.mrb[0].mxu0
      %v4869 = vadd.f32 %v4393, %v4868
      %v4870 = vpop.f32.mrb[0].mxu0
      %v4871 = vadd.f32 %v4397, %v4870
      %4872 = vmatprep.mubr.bf16.mxu0 %v4349
      %4873 = vmatmul.mubr.bf16.gmra.mrb[0].mxu0 %v4348
      %v4874 = vpop.f32.mrb[0].mxu0
      %v4875 = vadd.f32 %v4393, %v4874
      %v4876 = vpop.f32.mrb[0].mxu0
      %v4877 = vadd.f32 %v4397, %v4876
      %v4878 = vpop.f32.mrb[0].mxu0
      %v4879 = vadd.f32 %v4393, %v4878
      %v4880 = vpop.f32.mrb[0].mxu0
      %v4881 = vadd.f32 %v4397, %v4880
      %4882 = vmatprep.mubr.bf16.mxu0 %v4351
      %4883 = vmatmul.mubr.bf16.gmra.mrb[0].mxu0 %v4350
      %v4884 = vpop.f32.mrb[0].mxu0
      %v4885 = vadd.f32 %v4393, %v4884
      %v4886 = vpop.f32.mrb[0].mxu0
      %v4887 = vadd.f32 %v4397, %v4886
      %v4888 = vpop.f32.mrb[0].mxu0
      %v4889 = vadd.f32 %v4393, %v4888
      %v4890 = vpop.f32.mrb[0].mxu0
      %v4891 = vadd.f32 %v4397, %v4890
      %4892 = vmatprep.mubr.bf16.mxu0 %v4353
      %4893 = vmatmul.mubr.bf16.gmra.mrb[0].mxu0 %v4352
      %v4894 = vpop.f32.mrb[0].mxu0
      %v4895 = vadd.f32 %v4393, %v4894
      %v4896 = vpop.f32.mrb[0].mxu0
      %v4897 = vadd.f32 %v4397, %v4896
      %v4898 = vpop.f32.mrb[0].mxu0
      %v4899 = vadd.f32 %v4393, %v4898
      %v4900 = vpop.f32.mrb[0].mxu0
      %v4901 = vadd.f32 %v4397, %v4900
      %4902 = vmatprep.mubr.bf16.mxu0 %v4355
      %4903 = vmatmul.mubr.bf16.gmra.mrb[0].mxu0 %v4354
      %v4904 = vpop.f32.mrb[0].mxu0
      %v4905 = vadd.f32 %v4393, %v4904
      %v4906 = vpop.f32.mrb[0].mxu0
      %v4907 = vadd.f32 %v4397, %v4906
      %v4908 = vpop.f32.mrb[0].mxu0
      %v4909 = vadd.f32 %v4393, %v4908
      %v4910 = vpop.f32.mrb[0].mxu0
      %v4911 = vadd.f32 %v4397, %v4910
      %4912 = vdwg.mxu0
      %v4913 = vmax.f32 %v4595, 0.0
      %v4914 = vmax.f32 %v4597, 0.0
      %v4915 = vmax.f32 %v4599, 0.0
      %v4916 = vmax.f32 %v4601, 0.0
      %v4917 = vmax.f32 %v4605, 0.0
      %v4918 = vmax.f32 %v4607, 0.0
      %v4919 = vmax.f32 %v4609, 0.0
      %v4920 = vmax.f32 %v4611, 0.0
      %v4921 = vmax.f32 %v4615, 0.0
      %v4922 = vmax.f32 %v4617, 0.0
      %v4923 = vmax.f32 %v4619, 0.0
      %v4924 = vmax.f32 %v4621, 0.0
      %v4925 = vmax.f32 %v4625, 0.0
      %v4926 = vmax.f32 %v4627, 0.0
      %v4927 = vmax.f32 %v4629, 0.0
      %v4928 = vmax.f32 %v4631, 0.0
      %v4929 = vmax.f32 %v4635, 0.0
      %v4930 = vmax.f32 %v4637, 0.0
      %v4931 = vmax.f32 %v4639, 0.0
      %v4932 = vmax.f32 %v4641, 0.0
      %v4933 = vmax.f32 %v4645, 0.0
      %v4934 = vmax.f32 %v4647, 0.0
      %v4935 = vmax.f32 %v4649, 0.0
      %v4936 = vmax.f32 %v4651, 0.0
      %v4937 = vmax.f32 %v4655, 0.0
      %v4938 = vmax.f32 %v4657, 0.0
      %v4939 = vmax.f32 %v4659, 0.0
      %v4940 = vmax.f32 %v4661, 0.0
      %v4941 = vmax.f32 %v4665, 0.0
      %v4942 = vmax.f32 %v4667, 0.0
      %v4943 = vmax.f32 %v4669, 0.0
      %v4944 = vmax.f32 %v4671, 0.0
      %v4945 = vmax.f32 %v4675, 0.0
      %v4946 = vmax.f32 %v4677, 0.0
      %v4947 = vmax.f32 %v4679, 0.0
      %v4948 = vmax.f32 %v4681, 0.0
      %v4949 = vmax.f32 %v4685, 0.0
      %v4950 = vmax.f32 %v4687, 0.0
      %v4951 = vmax.f32 %v4689, 0.0
      %v4952 = vmax.f32 %v4691, 0.0
      %v4953 = vmax.f32 %v4695, 0.0
      %v4954 = vmax.f32 %v4697, 0.0
      %v4955 = vmax.f32 %v4699, 0.0
      %v4956 = vmax.f32 %v4701, 0.0
      %v4957 = vmax.f32 %v4705, 0.0
      %v4958 = vmax.f32 %v4707, 0.0
      %v4959 = vmax.f32 %v4709, 0.0
      %v4960 = vmax.f32 %v4711, 0.0
      %v4961 = vmax.f32 %v4715, 0.0
      %v4962 = vmax.f32 %v4717, 0.0
      %v4963 = vmax.f32 %v4719, 0.0
      %v4964 = vmax.f32 %v4721, 0.0
      %v4965 = vmax.f32 %v4725, 0.0
      %v4966 = vmax.f32 %v4727, 0.0
      %v4967 = vmax.f32 %v4729, 0.0
      %v4968 = vmax.f32 %v4731, 0.0
      %v4969 = vmax.f32 %v4735, 0.0
      %v4970 = vmax.f32 %v4737, 0.0
      %v4971 = vmax.f32 %v4739, 0.0
      %v4972 = vmax.f32 %v4741, 0.0
      %v4973 = vmax.f32 %v4745, 0.0
      %v4974 = vmax.f32 %v4747, 0.0
      %v4975 = vmax.f32 %v4749, 0.0
      %v4976 = vmax.f32 %v4751, 0.0
      %v4977 = vmax.f32 %v4755, 0.0
      %v4978 = vmax.f32 %v4757, 0.0
      %v4979 = vmax.f32 %v4759, 0.0
      %v4980 = vmax.f32 %v4761, 0.0
      %v4981 = vmax.f32 %v4765, 0.0
      %v4982 = vmax.f32 %v4767, 0.0
      %v4983 = vmax.f32 %v4769, 0.0
      %v4984 = vmax.f32 %v4771, 0.0
      %v4985 = vmax.f32 %v4775, 0.0
      %v4986 = vmax.f32 %v4777, 0.0
      %v4987 = vmax.f32 %v4779, 0.0
      %v4988 = vmax.f32 %v4781, 0.0
      %v4989 = vmax.f32 %v4785, 0.0
      %v4990 = vmax.f32 %v4787, 0.0
      %v4991 = vmax.f32 %v4789, 0.0
      %v4992 = vmax.f32 %v4791, 0.0
      %v4993 = vmax.f32 %v4795, 0.0
      %v4994 = vmax.f32 %v4797, 0.0
      %v4995 = vmax.f32 %v4799, 0.0
      %v4996 = vmax.f32 %v4801, 0.0
      %v4997 = vmax.f32 %v4805, 0.0
      %v4998 = vmax.f32 %v4807, 0.0
      %v4999 = vmax.f32 %v4809, 0.0
      %v5000 = vmax.f32 %v4811, 0.0
      %v5001 = vmax.f32 %v4815, 0.0
      %v5002 = vmax.f32 %v4817, 0.0
      %v5003 = vmax.f32 %v4819, 0.0
      %v5004 = vmax.f32 %v4821, 0.0
      %v5005 = vmax.f32 %v4825, 0.0
      %v5006 = vmax.f32 %v4827, 0.0
      %v5007 = vmax.f32 %v4829, 0.0
      %v5008 = vmax.f32 %v4831, 0.0
      %v5009 = vmax.f32 %v4835, 0.0
      %v5010 = vmax.f32 %v4837, 0.0
      %v5011 = vmax.f32 %v4839, 0.0
      %v5012 = vmax.f32 %v4841, 0.0
      %v5013 = vmax.f32 %v4845, 0.0
      %v5014 = vmax.f32 %v4847, 0.0
      %v5015 = vmax.f32 %v4849, 0.0
      %v5016 = vmax.f32 %v4851, 0.0
      %v5017 = vmax.f32 %v4855, 0.0
      %v5018 = vmax.f32 %v4857, 0.0
      %v5019 = vmax.f32 %v4859, 0.0
      %v5020 = vmax.f32 %v4861, 0.0
      %v5021 = vmax.f32 %v4865, 0.0
      %v5022 = vmax.f32 %v4867, 0.0
      %v5023 = vmax.f32 %v4869, 0.0
      %v5024 = vmax.f32 %v4871, 0.0
      %v5025 = vmax.f32 %v4875, 0.0
      %v5026 = vmax.f32 %v4877, 0.0
      %v5027 = vmax.f32 %v4879, 0.0
      %v5028 = vmax.f32 %v4881, 0.0
      %v5029 = vmax.f32 %v4885, 0.0
      %v5030 = vmax.f32 %v4887, 0.0
      %v5031 = vmax.f32 %v4889, 0.0
      %v5032 = vmax.f32 %v4891, 0.0
      %v5033 = vmax.f32 %v4895, 0.0
      %v5034 = vmax.f32 %v4897, 0.0
      %v5035 = vmax.f32 %v4899, 0.0
      %v5036 = vmax.f32 %v4901, 0.0
      %v5037 = vmax.f32 %v4905, 0.0
      %v5038 = vmax.f32 %v4907, 0.0
      %v5039 = vmax.f32 %v4909, 0.0
      %v5040 = vmax.f32 %v4911, 0.0
      %v5041 = vpack.c.bf16 %v4915, %v4913
      %v5042 = vpack.c.bf16 %v4916, %v4914
      %v5043 = vpack.c.bf16 %v4919, %v4917
      %v5044 = vpack.c.bf16 %v4920, %v4918
      %v5045 = vpack.c.bf16 %v4923, %v4921
      %v5046 = vpack.c.bf16 %v4924, %v4922
      %v5047 = vpack.c.bf16 %v4927, %v4925
      %v5048 = vpack.c.bf16 %v4928, %v4926
      %v5049 = vpack.c.bf16 %v4931, %v4929
      %v5050 = vpack.c.bf16 %v4932, %v4930
      %v5051 = vpack.c.bf16 %v4935, %v4933
      %v5052 = vpack.c.bf16 %v4936, %v4934
      %v5053 = vpack.c.bf16 %v4939, %v4937
      %v5054 = vpack.c.bf16 %v4940, %v4938
      %v5055 = vpack.c.bf16 %v4943, %v4941
      %v5056 = vpack.c.bf16 %v4944, %v4942
      %v5057 = vpack.c.bf16 %v4947, %v4945
      %v5058 = vpack.c.bf16 %v4948, %v4946
      %v5059 = vpack.c.bf16 %v4951, %v4949
      %v5060 = vpack.c.bf16 %v4952, %v4950
      %v5061 = vpack.c.bf16 %v4955, %v4953
      %v5062 = vpack.c.bf16 %v4956, %v4954
      %v5063 = vpack.c.bf16 %v4959, %v4957
      %v5064 = vpack.c.bf16 %v4960, %v4958
      %v5065 = vpack.c.bf16 %v4963, %v4961
      %v5066 = vpack.c.bf16 %v4964, %v4962
      %v5067 = vpack.c.bf16 %v4967, %v4965
      %v5068 = vpack.c.bf16 %v4968, %v4966
      %v5069 = vpack.c.bf16 %v4971, %v4969
      %v5070 = vpack.c.bf16 %v4972, %v4970
      %v5071 = vpack.c.bf16 %v4975, %v4973
      %v5072 = vpack.c.bf16 %v4976, %v4974
      %v5073 = vpack.c.bf16 %v4979, %v4977
      %v5074 = vpack.c.bf16 %v4980, %v4978
      %v5075 = vpack.c.bf16 %v4983, %v4981
      %v5076 = vpack.c.bf16 %v4984, %v4982
      %v5077 = vpack.c.bf16 %v4987, %v4985
      %v5078 = vpack.c.bf16 %v4988, %v4986
      %v5079 = vpack.c.bf16 %v4991, %v4989
      %v5080 = vpack.c.bf16 %v4992, %v4990
      %v5081 = vpack.c.bf16 %v4995, %v4993
      %v5082 = vpack.c.bf16 %v4996, %v4994
      %v5083 = vpack.c.bf16 %v4999, %v4997
      %v5084 = vpack.c.bf16 %v5000, %v4998
      %v5085 = vpack.c.bf16 %v5003, %v5001
      %v5086 = vpack.c.bf16 %v5004, %v5002
      %v5087 = vpack.c.bf16 %v5007, %v5005
      %v5088 = vpack.c.bf16 %v5008, %v5006
      %v5089 = vpack.c.bf16 %v5011, %v5009
      %v5090 = vpack.c.bf16 %v5012, %v5010
      %v5091 = vpack.c.bf16 %v5015, %v5013
      %v5092 = vpack.c.bf16 %v5016, %v5014
      %v5093 = vpack.c.bf16 %v5019, %v5017
      %v5094 = vpack.c.bf16 %v5020, %v5018
      %v5095 = vpack.c.bf16 %v5023, %v5021
      %v5096 = vpack.c.bf16 %v5024, %v5022
      %v5097 = vpack.c.bf16 %v5027, %v5025
      %v5098 = vpack.c.bf16 %v5028, %v5026
      %v5099 = vpack.c.bf16 %v5031, %v5029
      %v5100 = vpack.c.bf16 %v5032, %v5030
      %v5101 = vpack.c.bf16 %v5035, %v5033
      %v5102 = vpack.c.bf16 %v5036, %v5034
      %v5103 = vpack.c.bf16 %v5039, %v5037
      %v5104 = vpack.c.bf16 %v5040, %v5038
      %v5105 = vld [vmem:[%s11] sm:$0xff]
      %v5106 = vld [vmem:[%s11 + $0x8] sm:$0xff]
      %v5107 = vld [vmem:[%s11 + $0x10] sm:$0xff]
      %v5108 = vld [vmem:[%s11 + $0x18] sm:$0xff]
      %v5109 = vld [vmem:[%s11 + $0x20] sm:$0xff]
      %v5110 = vld [vmem:[%s11 + $0x28] sm:$0xff]
      %v5111 = vld [vmem:[%s11 + $0x30] sm:$0xff]
      %v5112 = vld [vmem:[%s11 + $0x38] sm:$0xff]
      %v5113 = vld [vmem:[%s11 + $0x40] sm:$0xff]
      %v5114 = vld [vmem:[%s11 + $0x48] sm:$0xff]
      %v5115 = vld [vmem:[%s11 + $0x50] sm:$0xff]
      %v5116 = vld [vmem:[%s11 + $0x58] sm:$0xff]
      %v5117 = vld [vmem:[%s11 + $0x60] sm:$0xff]
      %v5118 = vld [vmem:[%s11 + $0x68] sm:$0xff]
      %v5119 = vld [vmem:[%s11 + $0x70] sm:$0xff]
      %v5120 = vld [vmem:[%s11 + $0x78] sm:$0xff]
      %v5121 = vld [vmem:[%s11 + $0x80] sm:$0xff]
      %v5122 = vld [vmem:[%s11 + $0x88] sm:$0xff]
      %v5123 = vld [vmem:[%s11 + $0x90] sm:$0xff]
      %v5124 = vld [vmem:[%s11 + $0x98] sm:$0xff]
      %v5125 = vld [vmem:[%s11 + $0xa0] sm:$0xff]
      %v5126 = vld [vmem:[%s11 + $0xa8] sm:$0xff]
      %v5127 = vld [vmem:[%s11 + $0xb0] sm:$0xff]
      %v5128 = vld [vmem:[%s11 + $0xb8] sm:$0xff]
      %v5129 = vld [vmem:[%s11 + $0xc0] sm:$0xff]
      %v5130 = vld [vmem:[%s11 + $0xc8] sm:$0xff]
      %v5131 = vld [vmem:[%s11 + $0xd0] sm:$0xff]
      %v5132 = vld [vmem:[%s11 + $0xd8] sm:$0xff]
      %v5133 = vld [vmem:[%s11 + $0xe0] sm:$0xff]
      %v5134 = vld [vmem:[%s11 + $0xe8] sm:$0xff]
      %v5135 = vld [vmem:[%s11 + $0xf0] sm:$0xff]
      %v5136 = vld [vmem:[%s11 + $0xf8] sm:$0xff]
      %v5137 = vld [vmem:[%s12] sm:$0x3]
      %v5139 = vlaneseq
      %v5140 = vshrl.u32 %v5139, 7
      %v5141 = vsub.s32 0, %v5140
      %v5142 = vrot.slane %v5137, %v5141
      %v5143 = vlaneseq
      %v5144 = vshrl.u32 %v5143, 7
      %v5145 = vsub.s32 1, %v5144
      %v5146 = vrot.slane %v5137, %v5145
      %v5181 = vunpack.c.l.b16 %v5105
      %v5182 = vunpack.c.h.b16 %v5105
      %v5183 = vunpack.c.l.b16 %v5106
      %v5184 = vunpack.c.h.b16 %v5106
      %v5185 = vunpack.c.l.b16 %v5107
      %v5186 = vunpack.c.h.b16 %v5107
      %v5187 = vunpack.c.l.b16 %v5108
      %v5188 = vunpack.c.h.b16 %v5108
      %v5189 = vunpack.c.l.b16 %v5109
      %v5190 = vunpack.c.h.b16 %v5109
      %v5191 = vunpack.c.l.b16 %v5110
      %v5192 = vunpack.c.h.b16 %v5110
      %v5193 = vunpack.c.l.b16 %v5111
      %v5194 = vunpack.c.h.b16 %v5111
      %v5195 = vunpack.c.l.b16 %v5112
      %v5196 = vunpack.c.h.b16 %v5112
      %v5197 = vunpack.c.l.b16 %v5113
      %v5198 = vunpack.c.h.b16 %v5113
      %v5199 = vunpack.c.l.b16 %v5114
      %v5200 = vunpack.c.h.b16 %v5114
      %v5201 = vunpack.c.l.b16 %v5115
      %v5202 = vunpack.c.h.b16 %v5115
      %v5203 = vunpack.c.l.b16 %v5116
      %v5204 = vunpack.c.h.b16 %v5116
      %v5205 = vunpack.c.l.b16 %v5117
      %v5206 = vunpack.c.h.b16 %v5117
      %v5207 = vunpack.c.l.b16 %v5118
      %v5208 = vunpack.c.h.b16 %v5118
      %v5209 = vunpack.c.l.b16 %v5119
      %v5210 = vunpack.c.h.b16 %v5119
      %v5211 = vunpack.c.l.b16 %v5120
      %v5212 = vunpack.c.h.b16 %v5120
      %v5213 = vunpack.c.l.b16 %v5121
      %v5214 = vunpack.c.h.b16 %v5121
      %v5215 = vunpack.c.l.b16 %v5122
      %v5216 = vunpack.c.h.b16 %v5122
      %v5217 = vunpack.c.l.b16 %v5123
      %v5218 = vunpack.c.h.b16 %v5123
      %v5219 = vunpack.c.l.b16 %v5124
      %v5220 = vunpack.c.h.b16 %v5124
      %v5221 = vunpack.c.l.b16 %v5125
      %v5222 = vunpack.c.h.b16 %v5125
      %v5223 = vunpack.c.l.b16 %v5126
      %v5224 = vunpack.c.h.b16 %v5126
      %v5225 = vunpack.c.l.b16 %v5127
      %v5226 = vunpack.c.h.b16 %v5127
      %v5227 = vunpack.c.l.b16 %v5128
      %v5228 = vunpack.c.h.b16 %v5128
      %v5229 = vunpack.c.l.b16 %v5129
      %v5230 = vunpack.c.h.b16 %v5129
      %v5231 = vunpack.c.l.b16 %v5130
      %v5232 = vunpack.c.h.b16 %v5130
      %v5233 = vunpack.c.l.b16 %v5131
      %v5234 = vunpack.c.h.b16 %v5131
      %v5235 = vunpack.c.l.b16 %v5132
      %v5236 = vunpack.c.h.b16 %v5132
      %v5237 = vunpack.c.l.b16 %v5133
      %v5238 = vunpack.c.h.b16 %v5133
      %v5239 = vunpack.c.l.b16 %v5134
      %v5240 = vunpack.c.h.b16 %v5134
      %v5241 = vunpack.c.l.b16 %v5135
      %v5242 = vunpack.c.h.b16 %v5135
      %v5243 = vunpack.c.l.b16 %v5136
      %v5244 = vunpack.c.h.b16 %v5136
      %v5245 = vpack.c.b16 %v5183, %v5181
      %v5246 = vpack.c.b16 %v5184, %v5182
      %v5247 = vpack.c.b16 %v5187, %v5185
      %v5248 = vpack.c.b16 %v5188, %v5186
      %v5249 = vpack.c.b16 %v5191, %v5189
      %v5250 = vpack.c.b16 %v5192, %v5190
      %v5251 = vpack.c.b16 %v5195, %v5193
      %v5252 = vpack.c.b16 %v5196, %v5194
      %v5253 = vpack.c.b16 %v5199, %v5197
      %v5254 = vpack.c.b16 %v5200, %v5198
      %v5255 = vpack.c.b16 %v5203, %v5201
      %v5256 = vpack.c.b16 %v5204, %v5202
      %v5257 = vpack.c.b16 %v5207, %v5205
      %v5258 = vpack.c.b16 %v5208, %v5206
      %v5259 = vpack.c.b16 %v5211, %v5209
      %v5260 = vpack.c.b16 %v5212, %v5210
      %v5261 = vpack.c.b16 %v5215, %v5213
      %v5262 = vpack.c.b16 %v5216, %v5214
      %v5263 = vpack.c.b16 %v5219, %v5217
      %v5264 = vpack.c.b16 %v5220, %v5218
      %v5265 = vpack.c.b16 %v5223, %v5221
      %v5266 = vpack.c.b16 %v5224, %v5222
      %v5267 = vpack.c.b16 %v5227, %v5225
      %v5268 = vpack.c.b16 %v5228, %v5226
      %v5269 = vpack.c.b16 %v5231, %v5229
      %v5270 = vpack.c.b16 %v5232, %v5230
      %v5271 = vpack.c.b16 %v5235, %v5233
      %v5272 = vpack.c.b16 %v5236, %v5234
      %v5273 = vpack.c.b16 %v5239, %v5237
      %v5274 = vpack.c.b16 %v5240, %v5238
      %v5275 = vpack.c.b16 %v5243, %v5241
      %v5276 = vpack.c.b16 %v5244, %v5242
      %5309 = vmatprep.subr.bf16.mxu0 %v5246
      %5310 = vmatpush1.bf16.msra.mxu0 %v5245
      %5311 = vmatprep.subr.bf16.mxu0 %v5248
      %5312 = vmatpush1.bf16.msra.mxu0 %v5247
      %5313 = vmatprep.subr.bf16.mxu0 %v5250
      %5314 = vmatpush1.bf16.msra.mxu0 %v5249
      %5315 = vmatprep.subr.bf16.mxu0 %v5252
      %5316 = vmatpush1.bf16.msra.mxu0 %v5251
      %5317 = vmatprep.subr.bf16.mxu0 %v5254
      %5318 = vmatpush1.bf16.msra.mxu0 %v5253
      %5319 = vmatprep.subr.bf16.mxu0 %v5256
      %5320 = vmatpush1.bf16.msra.mxu0 %v5255
      %5321 = vmatprep.subr.bf16.mxu0 %v5258
      %5322 = vmatpush1.bf16.msra.mxu0 %v5257
      %5323 = vmatprep.subr.bf16.mxu0 %v5260
      %5324 = vmatpush1.bf16.msra.mxu0 %v5259
      %5325 = vmatprep.subr.bf16.mxu0 %v5262
      %5326 = vmatpush1.bf16.msra.mxu0 %v5261
      %5327 = vmatprep.subr.bf16.mxu0 %v5264
      %5328 = vmatpush1.bf16.msra.mxu0 %v5263
      %5329 = vmatprep.subr.bf16.mxu0 %v5266
      %5330 = vmatpush1.bf16.msra.mxu0 %v5265
      %5331 = vmatprep.subr.bf16.mxu0 %v5268
      %5332 = vmatpush1.bf16.msra.mxu0 %v5267
      %5333 = vmatprep.subr.bf16.mxu0 %v5270
      %5334 = vmatpush1.bf16.msra.mxu0 %v5269
      %5335 = vmatprep.subr.bf16.mxu0 %v5272
      %5336 = vmatpush1.bf16.msra.mxu0 %v5271
      %5337 = vmatprep.subr.bf16.mxu0 %v5274
      %5338 = vmatpush1.bf16.msra.mxu0 %v5273
      %5339 = vmatprep.subr.bf16.mxu0 %v5276
      %5340 = vmatpush1.bf16.msra.mxu0 %v5275
      %5341 = vmatprep.mubr.bf16.mxu0 %v5042
      %5342 = vmatmul.mubr.bf16.gmra.mrb[0].mxu0 %v5041
      %v5343 = vpop.f32.mrb[0].mxu0
      %v5344 = vadd.f32 %v5142, %v5343
      %v5345 = vpop.f32.mrb[0].mxu0
      %v5346 = vadd.f32 %v5146, %v5345
      %v5347 = vpop.f32.mrb[0].mxu0
      %v5348 = vadd.f32 %v5142, %v5347
      %v5349 = vpop.f32.mrb[0].mxu0
      %v5350 = vadd.f32 %v5146, %v5349
      %5351 = vmatprep.mubr.bf16.mxu0 %v5044
      %5352 = vmatmul.mubr.bf16.gmra.mrb[0].mxu0 %v5043
      %v5353 = vpop.f32.mrb[0].mxu0
      %v5354 = vadd.f32 %v5142, %v5353
      %v5355 = vpop.f32.mrb[0].mxu0
      %v5356 = vadd.f32 %v5146, %v5355
      %v5357 = vpop.f32.mrb[0].mxu0
      %v5358 = vadd.f32 %v5142, %v5357
      %v5359 = vpop.f32.mrb[0].mxu0
      %v5360 = vadd.f32 %v5146, %v5359
      %5361 = vmatprep.mubr.bf16.mxu0 %v5046
      %5362 = vmatmul.mubr.bf16.gmra.mrb[0].mxu0 %v5045
      %v5363 = vpop.f32.mrb[0].mxu0
      %v5364 = vadd.f32 %v5142, %v5363
      %v5365 = vpop.f32.mrb[0].mxu0
      %v5366 = vadd.f32 %v5146, %v5365
      %v5367 = vpop.f32.mrb[0].mxu0
      %v5368 = vadd.f32 %v5142, %v5367
      %v5369 = vpop.f32.mrb[0].mxu0
      %v5370 = vadd.f32 %v5146, %v5369
      %5371 = vmatprep.mubr.bf16.mxu0 %v5048
      %5372 = vmatmul.mubr.bf16.gmra.mrb[0].mxu0 %v5047
      %v5373 = vpop.f32.mrb[0].mxu0
      %v5374 = vadd.f32 %v5142, %v5373
      %v5375 = vpop.f32.mrb[0].mxu0
      %v5376 = vadd.f32 %v5146, %v5375
      %v5377 = vpop.f32.mrb[0].mxu0
      %v5378 = vadd.f32 %v5142, %v5377
      %v5379 = vpop.f32.mrb[0].mxu0
      %v5380 = vadd.f32 %v5146, %v5379
      %5381 = vmatprep.mubr.bf16.mxu0 %v5050
      %5382 = vmatmul.mubr.bf16.gmra.mrb[0].mxu0 %v5049
      %v5383 = vpop.f32.mrb[0].mxu0
      %v5384 = vadd.f32 %v5142, %v5383
      %v5385 = vpop.f32.mrb[0].mxu0
      %v5386 = vadd.f32 %v5146, %v5385
      %v5387 = vpop.f32.mrb[0].mxu0
      %v5388 = vadd.f32 %v5142, %v5387
      %v5389 = vpop.f32.mrb[0].mxu0
      %v5390 = vadd.f32 %v5146, %v5389
      %5391 = vmatprep.mubr.bf16.mxu0 %v5052
      %5392 = vmatmul.mubr.bf16.gmra.mrb[0].mxu0 %v5051
      %v5393 = vpop.f32.mrb[0].mxu0
      %v5394 = vadd.f32 %v5142, %v5393
      %v5395 = vpop.f32.mrb[0].mxu0
      %v5396 = vadd.f32 %v5146, %v5395
      %v5397 = vpop.f32.mrb[0].mxu0
      %v5398 = vadd.f32 %v5142, %v5397
      %v5399 = vpop.f32.mrb[0].mxu0
      %v5400 = vadd.f32 %v5146, %v5399
      %5401 = vmatprep.mubr.bf16.mxu0 %v5054
      %5402 = vmatmul.mubr.bf16.gmra.mrb[0].mxu0 %v5053
      %v5403 = vpop.f32.mrb[0].mxu0
      %v5404 = vadd.f32 %v5142, %v5403
      %v5405 = vpop.f32.mrb[0].mxu0
      %v5406 = vadd.f32 %v5146, %v5405
      %v5407 = vpop.f32.mrb[0].mxu0
      %v5408 = vadd.f32 %v5142, %v5407
      %v5409 = vpop.f32.mrb[0].mxu0
      %v5410 = vadd.f32 %v5146, %v5409
      %5411 = vmatprep.mubr.bf16.mxu0 %v5056
      %5412 = vmatmul.mubr.bf16.gmra.mrb[0].mxu0 %v5055
      %v5413 = vpop.f32.mrb[0].mxu0
      %v5414 = vadd.f32 %v5142, %v5413
      %v5415 = vpop.f32.mrb[0].mxu0
      %v5416 = vadd.f32 %v5146, %v5415
      %v5417 = vpop.f32.mrb[0].mxu0
      %v5418 = vadd.f32 %v5142, %v5417
      %v5419 = vpop.f32.mrb[0].mxu0
      %v5420 = vadd.f32 %v5146, %v5419
      %5421 = vmatprep.mubr.bf16.mxu0 %v5058
      %5422 = vmatmul.mubr.bf16.gmra.mrb[0].mxu0 %v5057
      %v5423 = vpop.f32.mrb[0].mxu0
      %v5424 = vadd.f32 %v5142, %v5423
      %v5425 = vpop.f32.mrb[0].mxu0
      %v5426 = vadd.f32 %v5146, %v5425
      %v5427 = vpop.f32.mrb[0].mxu0
      %v5428 = vadd.f32 %v5142, %v5427
      %v5429 = vpop.f32.mrb[0].mxu0
      %v5430 = vadd.f32 %v5146, %v5429
      %5431 = vmatprep.mubr.bf16.mxu0 %v5060
      %5432 = vmatmul.mubr.bf16.gmra.mrb[0].mxu0 %v5059
      %v5433 = vpop.f32.mrb[0].mxu0
      %v5434 = vadd.f32 %v5142, %v5433
      %v5435 = vpop.f32.mrb[0].mxu0
      %v5436 = vadd.f32 %v5146, %v5435
      %v5437 = vpop.f32.mrb[0].mxu0
      %v5438 = vadd.f32 %v5142, %v5437
      %v5439 = vpop.f32.mrb[0].mxu0
      %v5440 = vadd.f32 %v5146, %v5439
      %5441 = vmatprep.mubr.bf16.mxu0 %v5062
      %5442 = vmatmul.mubr.bf16.gmra.mrb[0].mxu0 %v5061
      %v5443 = vpop.f32.mrb[0].mxu0
      %v5444 = vadd.f32 %v5142, %v5443
      %v5445 = vpop.f32.mrb[0].mxu0
      %v5446 = vadd.f32 %v5146, %v5445
      %v5447 = vpop.f32.mrb[0].mxu0
      %v5448 = vadd.f32 %v5142, %v5447
      %v5449 = vpop.f32.mrb[0].mxu0
      %v5450 = vadd.f32 %v5146, %v5449
      %5451 = vmatprep.mubr.bf16.mxu0 %v5064
      %5452 = vmatmul.mubr.bf16.gmra.mrb[0].mxu0 %v5063
      %v5453 = vpop.f32.mrb[0].mxu0
      %v5454 = vadd.f32 %v5142, %v5453
      %v5455 = vpop.f32.mrb[0].mxu0
      %v5456 = vadd.f32 %v5146, %v5455
      %v5457 = vpop.f32.mrb[0].mxu0
      %v5458 = vadd.f32 %v5142, %v5457
      %v5459 = vpop.f32.mrb[0].mxu0
      %v5460 = vadd.f32 %v5146, %v5459
      %5461 = vmatprep.mubr.bf16.mxu0 %v5066
      %5462 = vmatmul.mubr.bf16.gmra.mrb[0].mxu0 %v5065
      %v5463 = vpop.f32.mrb[0].mxu0
      %v5464 = vadd.f32 %v5142, %v5463
      %v5465 = vpop.f32.mrb[0].mxu0
      %v5466 = vadd.f32 %v5146, %v5465
      %v5467 = vpop.f32.mrb[0].mxu0
      %v5468 = vadd.f32 %v5142, %v5467
      %v5469 = vpop.f32.mrb[0].mxu0
      %v5470 = vadd.f32 %v5146, %v5469
      %5471 = vmatprep.mubr.bf16.mxu0 %v5068
      %5472 = vmatmul.mubr.bf16.gmra.mrb[0].mxu0 %v5067
      %v5473 = vpop.f32.mrb[0].mxu0
      %v5474 = vadd.f32 %v5142, %v5473
      %v5475 = vpop.f32.mrb[0].mxu0
      %v5476 = vadd.f32 %v5146, %v5475
      %v5477 = vpop.f32.mrb[0].mxu0
      %v5478 = vadd.f32 %v5142, %v5477
      %v5479 = vpop.f32.mrb[0].mxu0
      %v5480 = vadd.f32 %v5146, %v5479
      %5481 = vmatprep.mubr.bf16.mxu0 %v5070
      %5482 = vmatmul.mubr.bf16.gmra.mrb[0].mxu0 %v5069
      %v5483 = vpop.f32.mrb[0].mxu0
      %v5484 = vadd.f32 %v5142, %v5483
      %v5485 = vpop.f32.mrb[0].mxu0
      %v5486 = vadd.f32 %v5146, %v5485
      %v5487 = vpop.f32.mrb[0].mxu0
      %v5488 = vadd.f32 %v5142, %v5487
      %v5489 = vpop.f32.mrb[0].mxu0
      %v5490 = vadd.f32 %v5146, %v5489
      %5491 = vmatprep.mubr.bf16.mxu0 %v5072
      %5492 = vmatmul.mubr.bf16.gmra.mrb[0].mxu0 %v5071
      %v5493 = vpop.f32.mrb[0].mxu0
      %v5494 = vadd.f32 %v5142, %v5493
      %v5495 = vpop.f32.mrb[0].mxu0
      %v5496 = vadd.f32 %v5146, %v5495
      %v5497 = vpop.f32.mrb[0].mxu0
      %v5498 = vadd.f32 %v5142, %v5497
      %v5499 = vpop.f32.mrb[0].mxu0
      %v5500 = vadd.f32 %v5146, %v5499
      %5501 = vmatprep.mubr.bf16.mxu0 %v5074
      %5502 = vmatmul.mubr.bf16.gmra.mrb[0].mxu0 %v5073
      %v5503 = vpop.f32.mrb[0].mxu0
      %v5504 = vadd.f32 %v5142, %v5503
      %v5505 = vpop.f32.mrb[0].mxu0
      %v5506 = vadd.f32 %v5146, %v5505
      %v5507 = vpop.f32.mrb[0].mxu0
      %v5508 = vadd.f32 %v5142, %v5507
      %v5509 = vpop.f32.mrb[0].mxu0
      %v5510 = vadd.f32 %v5146, %v5509
      %5511 = vmatprep.mubr.bf16.mxu0 %v5076
      %5512 = vmatmul.mubr.bf16.gmra.mrb[0].mxu0 %v5075
      %v5513 = vpop.f32.mrb[0].mxu0
      %v5514 = vadd.f32 %v5142, %v5513
      %v5515 = vpop.f32.mrb[0].mxu0
      %v5516 = vadd.f32 %v5146, %v5515
      %v5517 = vpop.f32.mrb[0].mxu0
      %v5518 = vadd.f32 %v5142, %v5517
      %v5519 = vpop.f32.mrb[0].mxu0
      %v5520 = vadd.f32 %v5146, %v5519
      %5521 = vmatprep.mubr.bf16.mxu0 %v5078
      %5522 = vmatmul.mubr.bf16.gmra.mrb[0].mxu0 %v5077
      %v5523 = vpop.f32.mrb[0].mxu0
      %v5524 = vadd.f32 %v5142, %v5523
      %v5525 = vpop.f32.mrb[0].mxu0
      %v5526 = vadd.f32 %v5146, %v5525
      %v5527 = vpop.f32.mrb[0].mxu0
      %v5528 = vadd.f32 %v5142, %v5527
      %v5529 = vpop.f32.mrb[0].mxu0
      %v5530 = vadd.f32 %v5146, %v5529
      %5531 = vmatprep.mubr.bf16.mxu0 %v5080
      %5532 = vmatmul.mubr.bf16.gmra.mrb[0].mxu0 %v5079
      %v5533 = vpop.f32.mrb[0].mxu0
      %v5534 = vadd.f32 %v5142, %v5533
      %v5535 = vpop.f32.mrb[0].mxu0
      %v5536 = vadd.f32 %v5146, %v5535
      %v5537 = vpop.f32.mrb[0].mxu0
      %v5538 = vadd.f32 %v5142, %v5537
      %v5539 = vpop.f32.mrb[0].mxu0
      %v5540 = vadd.f32 %v5146, %v5539
      %5541 = vmatprep.mubr.bf16.mxu0 %v5082
      %5542 = vmatmul.mubr.bf16.gmra.mrb[0].mxu0 %v5081
      %v5543 = vpop.f32.mrb[0].mxu0
      %v5544 = vadd.f32 %v5142, %v5543
      %v5545 = vpop.f32.mrb[0].mxu0
      %v5546 = vadd.f32 %v5146, %v5545
      %v5547 = vpop.f32.mrb[0].mxu0
      %v5548 = vadd.f32 %v5142, %v5547
      %v5549 = vpop.f32.mrb[0].mxu0
      %v5550 = vadd.f32 %v5146, %v5549
      %5551 = vmatprep.mubr.bf16.mxu0 %v5084
      %5552 = vmatmul.mubr.bf16.gmra.mrb[0].mxu0 %v5083
      %v5553 = vpop.f32.mrb[0].mxu0
      %v5554 = vadd.f32 %v5142, %v5553
      %v5555 = vpop.f32.mrb[0].mxu0
      %v5556 = vadd.f32 %v5146, %v5555
      %v5557 = vpop.f32.mrb[0].mxu0
      %v5558 = vadd.f32 %v5142, %v5557
      %v5559 = vpop.f32.mrb[0].mxu0
      %v5560 = vadd.f32 %v5146, %v5559
      %5561 = vmatprep.mubr.bf16.mxu0 %v5086
      %5562 = vmatmul.mubr.bf16.gmra.mrb[0].mxu0 %v5085
      %v5563 = vpop.f32.mrb[0].mxu0
      %v5564 = vadd.f32 %v5142, %v5563
      %v5565 = vpop.f32.mrb[0].mxu0
      %v5566 = vadd.f32 %v5146, %v5565
      %v5567 = vpop.f32.mrb[0].mxu0
      %v5568 = vadd.f32 %v5142, %v5567
      %v5569 = vpop.f32.mrb[0].mxu0
      %v5570 = vadd.f32 %v5146, %v5569
      %5571 = vmatprep.mubr.bf16.mxu0 %v5088
      %5572 = vmatmul.mubr.bf16.gmra.mrb[0].mxu0 %v5087
      %v5573 = vpop.f32.mrb[0].mxu0
      %v5574 = vadd.f32 %v5142, %v5573
      %v5575 = vpop.f32.mrb[0].mxu0
      %v5576 = vadd.f32 %v5146, %v5575
      %v5577 = vpop.f32.mrb[0].mxu0
      %v5578 = vadd.f32 %v5142, %v5577
      %v5579 = vpop.f32.mrb[0].mxu0
      %v5580 = vadd.f32 %v5146, %v5579
      %5581 = vmatprep.mubr.bf16.mxu0 %v5090
      %5582 = vmatmul.mubr.bf16.gmra.mrb[0].mxu0 %v5089
      %v5583 = vpop.f32.mrb[0].mxu0
      %v5584 = vadd.f32 %v5142, %v5583
      %v5585 = vpop.f32.mrb[0].mxu0
      %v5586 = vadd.f32 %v5146, %v5585
      %v5587 = vpop.f32.mrb[0].mxu0
      %v5588 = vadd.f32 %v5142, %v5587
      %v5589 = vpop.f32.mrb[0].mxu0
      %v5590 = vadd.f32 %v5146, %v5589
      %5591 = vmatprep.mubr.bf16.mxu0 %v5092
      %5592 = vmatmul.mubr.bf16.gmra.mrb[0].mxu0 %v5091
      %v5593 = vpop.f32.mrb[0].mxu0
      %v5594 = vadd.f32 %v5142, %v5593
      %v5595 = vpop.f32.mrb[0].mxu0
      %v5596 = vadd.f32 %v5146, %v5595
      %v5597 = vpop.f32.mrb[0].mxu0
      %v5598 = vadd.f32 %v5142, %v5597
      %v5599 = vpop.f32.mrb[0].mxu0
      %v5600 = vadd.f32 %v5146, %v5599
      %5601 = vmatprep.mubr.bf16.mxu0 %v5094
      %5602 = vmatmul.mubr.bf16.gmra.mrb[0].mxu0 %v5093
      %v5603 = vpop.f32.mrb[0].mxu0
      %v5604 = vadd.f32 %v5142, %v5603
      %v5605 = vpop.f32.mrb[0].mxu0
      %v5606 = vadd.f32 %v5146, %v5605
      %v5607 = vpop.f32.mrb[0].mxu0
      %v5608 = vadd.f32 %v5142, %v5607
      %v5609 = vpop.f32.mrb[0].mxu0
      %v5610 = vadd.f32 %v5146, %v5609
      %5611 = vmatprep.mubr.bf16.mxu0 %v5096
      %5612 = vmatmul.mubr.bf16.gmra.mrb[0].mxu0 %v5095
      %v5613 = vpop.f32.mrb[0].mxu0
      %v5614 = vadd.f32 %v5142, %v5613
      %v5615 = vpop.f32.mrb[0].mxu0
      %v5616 = vadd.f32 %v5146, %v5615
      %v5617 = vpop.f32.mrb[0].mxu0
      %v5618 = vadd.f32 %v5142, %v5617
      %v5619 = vpop.f32.mrb[0].mxu0
      %v5620 = vadd.f32 %v5146, %v5619
      %5621 = vmatprep.mubr.bf16.mxu0 %v5098
      %5622 = vmatmul.mubr.bf16.gmra.mrb[0].mxu0 %v5097
      %v5623 = vpop.f32.mrb[0].mxu0
      %v5624 = vadd.f32 %v5142, %v5623
      %v5625 = vpop.f32.mrb[0].mxu0
      %v5626 = vadd.f32 %v5146, %v5625
      %v5627 = vpop.f32.mrb[0].mxu0
      %v5628 = vadd.f32 %v5142, %v5627
      %v5629 = vpop.f32.mrb[0].mxu0
      %v5630 = vadd.f32 %v5146, %v5629
      %5631 = vmatprep.mubr.bf16.mxu0 %v5100
      %5632 = vmatmul.mubr.bf16.gmra.mrb[0].mxu0 %v5099
      %v5633 = vpop.f32.mrb[0].mxu0
      %v5634 = vadd.f32 %v5142, %v5633
      %v5635 = vpop.f32.mrb[0].mxu0
      %v5636 = vadd.f32 %v5146, %v5635
      %v5637 = vpop.f32.mrb[0].mxu0
      %v5638 = vadd.f32 %v5142, %v5637
      %v5639 = vpop.f32.mrb[0].mxu0
      %v5640 = vadd.f32 %v5146, %v5639
      %5641 = vmatprep.mubr.bf16.mxu0 %v5102
      %5642 = vmatmul.mubr.bf16.gmra.mrb[0].mxu0 %v5101
      %v5643 = vpop.f32.mrb[0].mxu0
      %v5644 = vadd.f32 %v5142, %v5643
      %v5645 = vpop.f32.mrb[0].mxu0
      %v5646 = vadd.f32 %v5146, %v5645
      %v5647 = vpop.f32.mrb[0].mxu0
      %v5648 = vadd.f32 %v5142, %v5647
      %v5649 = vpop.f32.mrb[0].mxu0
      %v5650 = vadd.f32 %v5146, %v5649
      %5651 = vmatprep.mubr.bf16.mxu0 %v5104
      %5652 = vmatmul.mubr.bf16.gmra.mrb[0].mxu0 %v5103
      %v5653 = vpop.f32.mrb[0].mxu0
      %v5654 = vadd.f32 %v5142, %v5653
      %v5655 = vpop.f32.mrb[0].mxu0
      %v5656 = vadd.f32 %v5146, %v5655
      %v5657 = vpop.f32.mrb[0].mxu0
      %v5658 = vadd.f32 %v5142, %v5657
      %v5659 = vpop.f32.mrb[0].mxu0
      %v5660 = vadd.f32 %v5146, %v5659
      %5661 = vdwg.mxu0
      %v5662 = vadd.f32 %v5344, %v1395
      %v5663 = vadd.f32 %v5346, %v1397
      %v5664 = vadd.f32 %v5348, %v1401
      %v5665 = vadd.f32 %v5350, %v1403
      %v5666 = vadd.f32 %v5354, %v1407
      %v5667 = vadd.f32 %v5356, %v1409
      %v5668 = vadd.f32 %v5358, %v1413
      %v5669 = vadd.f32 %v5360, %v1415
      %v5670 = vadd.f32 %v5364, %v1419
      %v5671 = vadd.f32 %v5366, %v1421
      %v5672 = vadd.f32 %v5368, %v1425
      %v5673 = vadd.f32 %v5370, %v1427
      %v5674 = vadd.f32 %v5374, %v1431
      %v5675 = vadd.f32 %v5376, %v1433
      %v5676 = vadd.f32 %v5378, %v1437
      %v5677 = vadd.f32 %v5380, %v1439
      %v5678 = vadd.f32 %v5384, %v1443
      %v5679 = vadd.f32 %v5386, %v1445
      %v5680 = vadd.f32 %v5388, %v1449
      %v5681 = vadd.f32 %v5390, %v1451
      %v5682 = vadd.f32 %v5394, %v1455
      %v5683 = vadd.f32 %v5396, %v1457
      %v5684 = vadd.f32 %v5398, %v1461
      %v5685 = vadd.f32 %v5400, %v1463
      %v5686 = vadd.f32 %v5404, %v1467
      %v5687 = vadd.f32 %v5406, %v1469
      %v5688 = vadd.f32 %v5408, %v1473
      %v5689 = vadd.f32 %v5410, %v1475
      %v5690 = vadd.f32 %v5414, %v1479
      %v5691 = vadd.f32 %v5416, %v1481
      %v5692 = vadd.f32 %v5418, %v1485
      %v5693 = vadd.f32 %v5420, %v1487
      %v5694 = vadd.f32 %v5424, %v1491
      %v5695 = vadd.f32 %v5426, %v1493
      %v5696 = vadd.f32 %v5428, %v1497
      %v5697 = vadd.f32 %v5430, %v1499
      %v5698 = vadd.f32 %v5434, %v1503
      %v5699 = vadd.f32 %v5436, %v1505
      %v5700 = vadd.f32 %v5438, %v1509
      %v5701 = vadd.f32 %v5440, %v1511
      %v5702 = vadd.f32 %v5444, %v1515
      %v5703 = vadd.f32 %v5446, %v1517
      %v5704 = vadd.f32 %v5448, %v1521
      %v5705 = vadd.f32 %v5450, %v1523
      %v5706 = vadd.f32 %v5454, %v1527
      %v5707 = vadd.f32 %v5456, %v1529
      %v5708 = vadd.f32 %v5458, %v1533
      %v5709 = vadd.f32 %v5460, %v1535
      %v5710 = vadd.f32 %v5464, %v1539
      %v5711 = vadd.f32 %v5466, %v1541
      %v5712 = vadd.f32 %v5468, %v1545
      %v5713 = vadd.f32 %v5470, %v1547
      %v5714 = vadd.f32 %v5474, %v1551
      %v5715 = vadd.f32 %v5476, %v1553
      %v5716 = vadd.f32 %v5478, %v1557
      %v5717 = vadd.f32 %v5480, %v1559
      %v5718 = vadd.f32 %v5484, %v1563
      %v5719 = vadd.f32 %v5486, %v1565
      %v5720 = vadd.f32 %v5488, %v1569
      %v5721 = vadd.f32 %v5490, %v1571
      %v5722 = vadd.f32 %v5494, %v1575
      %v5723 = vadd.f32 %v5496, %v1577
      %v5724 = vadd.f32 %v5498, %v1581
      %v5725 = vadd.f32 %v5500, %v1583
      %v5726 = vadd.f32 %v5504, %v1587
      %v5727 = vadd.f32 %v5506, %v1589
      %v5728 = vadd.f32 %v5508, %v1593
      %v5729 = vadd.f32 %v5510, %v1595
      %v5730 = vadd.f32 %v5514, %v1599
      %v5731 = vadd.f32 %v5516, %v1601
      %v5732 = vadd.f32 %v5518, %v1605
      %v5733 = vadd.f32 %v5520, %v1607
      %v5734 = vadd.f32 %v5524, %v1611
      %v5735 = vadd.f32 %v5526, %v1613
      %v5736 = vadd.f32 %v5528, %v1617
      %v5737 = vadd.f32 %v5530, %v1619
      %v5738 = vadd.f32 %v5534, %v1623
      %v5739 = vadd.f32 %v5536, %v1625
      %v5740 = vadd.f32 %v5538, %v1629
      %v5741 = vadd.f32 %v5540, %v1631
      %v5742 = vadd.f32 %v5544, %v1635
      %v5743 = vadd.f32 %v5546, %v1637
      %v5744 = vadd.f32 %v5548, %v1641
      %v5745 = vadd.f32 %v5550, %v1643
      %v5746 = vadd.f32 %v5554, %v1647
      %v5747 = vadd.f32 %v5556, %v1649
      %v5748 = vadd.f32 %v5558, %v1653
      %v5749 = vadd.f32 %v5560, %v1655
      %v5750 = vadd.f32 %v5564, %v1659
      %v5751 = vadd.f32 %v5566, %v1661
      %v5752 = vadd.f32 %v5568, %v1665
      %v5753 = vadd.f32 %v5570, %v1667
      %v5754 = vadd.f32 %v5574, %v1671
      %v5755 = vadd.f32 %v5576, %v1673
      %v5756 = vadd.f32 %v5578, %v1677
      %v5757 = vadd.f32 %v5580, %v1679
      %v5758 = vadd.f32 %v5584, %v1683
      %v5759 = vadd.f32 %v5586, %v1685
      %v5760 = vadd.f32 %v5588, %v1689
      %v5761 = vadd.f32 %v5590, %v1691
      %v5762 = vadd.f32 %v5594, %v1695
      %v5763 = vadd.f32 %v5596, %v1697
      %v5764 = vadd.f32 %v5598, %v1701
      %v5765 = vadd.f32 %v5600, %v1703
      %v5766 = vadd.f32 %v5604, %v1707
      %v5767 = vadd.f32 %v5606, %v1709
      %v5768 = vadd.f32 %v5608, %v1713
      %v5769 = vadd.f32 %v5610, %v1715
      %v5770 = vadd.f32 %v5614, %v1719
      %v5771 = vadd.f32 %v5616, %v1721
      %v5772 = vadd.f32 %v5618, %v1725
      %v5773 = vadd.f32 %v5620, %v1727
      %v5774 = vadd.f32 %v5624, %v1731
      %v5775 = vadd.f32 %v5626, %v1733
      %v5776 = vadd.f32 %v5628, %v1737
      %v5777 = vadd.f32 %v5630, %v1739
      %v5778 = vadd.f32 %v5634, %v1743
      %v5779 = vadd.f32 %v5636, %v1745
      %v5780 = vadd.f32 %v5638, %v1749
      %v5781 = vadd.f32 %v5640, %v1751
      %v5782 = vadd.f32 %v5644, %v1755
      %v5783 = vadd.f32 %v5646, %v1757
      %v5784 = vadd.f32 %v5648, %v1761
      %v5785 = vadd.f32 %v5650, %v1763
      %v5786 = vadd.f32 %v5654, %v1767
      %v5787 = vadd.f32 %v5656, %v1769
      %v5788 = vadd.f32 %v5658, %v1773
      %v5789 = vadd.f32 %v5660, %v1775
      %v5790 = vmax.f32 %v5662, 0.0
      %v5791 = vmax.f32 %v5663, 0.0
      %v5792 = vmax.f32 %v5664, 0.0
      %v5793 = vmax.f32 %v5665, 0.0
      %v5794 = vmax.f32 %v5666, 0.0
      %v5795 = vmax.f32 %v5667, 0.0
      %v5796 = vmax.f32 %v5668, 0.0
      %v5797 = vmax.f32 %v5669, 0.0
      %v5798 = vmax.f32 %v5670, 0.0
      %v5799 = vmax.f32 %v5671, 0.0
      %v5800 = vmax.f32 %v5672, 0.0
      %v5801 = vmax.f32 %v5673, 0.0
      %v5802 = vmax.f32 %v5674, 0.0
      %v5803 = vmax.f32 %v5675, 0.0
      %v5804 = vmax.f32 %v5676, 0.0
      %v5805 = vmax.f32 %v5677, 0.0
      %v5806 = vmax.f32 %v5678, 0.0
      %v5807 = vmax.f32 %v5679, 0.0
      %v5808 = vmax.f32 %v5680, 0.0
      %v5809 = vmax.f32 %v5681, 0.0
      %v5810 = vmax.f32 %v5682, 0.0
      %v5811 = vmax.f32 %v5683, 0.0
      %v5812 = vmax.f32 %v5684, 0.0
      %v5813 = vmax.f32 %v5685, 0.0
      %v5814 = vmax.f32 %v5686, 0.0
      %v5815 = vmax.f32 %v5687, 0.0
      %v5816 = vmax.f32 %v5688, 0.0
      %v5817 = vmax.f32 %v5689, 0.0
      %v5818 = vmax.f32 %v5690, 0.0
      %v5819 = vmax.f32 %v5691, 0.0
      %v5820 = vmax.f32 %v5692, 0.0
      %v5821 = vmax.f32 %v5693, 0.0
      %v5822 = vmax.f32 %v5694, 0.0
      %v5823 = vmax.f32 %v5695, 0.0
      %v5824 = vmax.f32 %v5696, 0.0
      %v5825 = vmax.f32 %v5697, 0.0
      %v5826 = vmax.f32 %v5698, 0.0
      %v5827 = vmax.f32 %v5699, 0.0
      %v5828 = vmax.f32 %v5700, 0.0
      %v5829 = vmax.f32 %v5701, 0.0
      %v5830 = vmax.f32 %v5702, 0.0
      %v5831 = vmax.f32 %v5703, 0.0
      %v5832 = vmax.f32 %v5704, 0.0
      %v5833 = vmax.f32 %v5705, 0.0
      %v5834 = vmax.f32 %v5706, 0.0
      %v5835 = vmax.f32 %v5707, 0.0
      %v5836 = vmax.f32 %v5708, 0.0
      %v5837 = vmax.f32 %v5709, 0.0
      %v5838 = vmax.f32 %v5710, 0.0
      %v5839 = vmax.f32 %v5711, 0.0
      %v5840 = vmax.f32 %v5712, 0.0
      %v5841 = vmax.f32 %v5713, 0.0
      %v5842 = vmax.f32 %v5714, 0.0
      %v5843 = vmax.f32 %v5715, 0.0
      %v5844 = vmax.f32 %v5716, 0.0
      %v5845 = vmax.f32 %v5717, 0.0
      %v5846 = vmax.f32 %v5718, 0.0
      %v5847 = vmax.f32 %v5719, 0.0
      %v5848 = vmax.f32 %v5720, 0.0
      %v5849 = vmax.f32 %v5721, 0.0
      %v5850 = vmax.f32 %v5722, 0.0
      %v5851 = vmax.f32 %v5723, 0.0
      %v5852 = vmax.f32 %v5724, 0.0
      %v5853 = vmax.f32 %v5725, 0.0
      %v5854 = vmax.f32 %v5726, 0.0
      %v5855 = vmax.f32 %v5727, 0.0
      %v5856 = vmax.f32 %v5728, 0.0
      %v5857 = vmax.f32 %v5729, 0.0
      %v5858 = vmax.f32 %v5730, 0.0
      %v5859 = vmax.f32 %v5731, 0.0
      %v5860 = vmax.f32 %v5732, 0.0
      %v5861 = vmax.f32 %v5733, 0.0
      %v5862 = vmax.f32 %v5734, 0.0
      %v5863 = vmax.f32 %v5735, 0.0
      %v5864 = vmax.f32 %v5736, 0.0
      %v5865 = vmax.f32 %v5737, 0.0
      %v5866 = vmax.f32 %v5738, 0.0
      %v5867 = vmax.f32 %v5739, 0.0
      %v5868 = vmax.f32 %v5740, 0.0
      %v5869 = vmax.f32 %v5741, 0.0
      %v5870 = vmax.f32 %v5742, 0.0
      %v5871 = vmax.f32 %v5743, 0.0
      %v5872 = vmax.f32 %v5744, 0.0
      %v5873 = vmax.f32 %v5745, 0.0
      %v5874 = vmax.f32 %v5746, 0.0
      %v5875 = vmax.f32 %v5747, 0.0
      %v5876 = vmax.f32 %v5748, 0.0
      %v5877 = vmax.f32 %v5749, 0.0
      %v5878 = vmax.f32 %v5750, 0.0
      %v5879 = vmax.f32 %v5751, 0.0
      %v5880 = vmax.f32 %v5752, 0.0
      %v5881 = vmax.f32 %v5753, 0.0
      %v5882 = vmax.f32 %v5754, 0.0
      %v5883 = vmax.f32 %v5755, 0.0
      %v5884 = vmax.f32 %v5756, 0.0
      %v5885 = vmax.f32 %v5757, 0.0
      %v5886 = vmax.f32 %v5758, 0.0
      %v5887 = vmax.f32 %v5759, 0.0
      %v5888 = vmax.f32 %v5760, 0.0
      %v5889 = vmax.f32 %v5761, 0.0
      %v5890 = vmax.f32 %v5762, 0.0
      %v5891 = vmax.f32 %v5763, 0.0
      %v5892 = vmax.f32 %v5764, 0.0
      %v5893 = vmax.f32 %v5765, 0.0
      %v5894 = vmax.f32 %v5766, 0.0
      %v5895 = vmax.f32 %v5767, 0.0
      %v5896 = vmax.f32 %v5768, 0.0
      %v5897 = vmax.f32 %v5769, 0.0
      %v5898 = vmax.f32 %v5770, 0.0
      %v5899 = vmax.f32 %v5771, 0.0
      %v5900 = vmax.f32 %v5772, 0.0
      %v5901 = vmax.f32 %v5773, 0.0
      %v5902 = vmax.f32 %v5774, 0.0
      %v5903 = vmax.f32 %v5775, 0.0
      %v5904 = vmax.f32 %v5776, 0.0
      %v5905 = vmax.f32 %v5777, 0.0
      %v5906 = vmax.f32 %v5778, 0.0
      %v5907 = vmax.f32 %v5779, 0.0
      %v5908 = vmax.f32 %v5780, 0.0
      %v5909 = vmax.f32 %v5781, 0.0
      %v5910 = vmax.f32 %v5782, 0.0
      %v5911 = vmax.f32 %v5783, 0.0
      %v5912 = vmax.f32 %v5784, 0.0
      %v5913 = vmax.f32 %v5785, 0.0
      %v5914 = vmax.f32 %v5786, 0.0
      %v5915 = vmax.f32 %v5787, 0.0
      %v5916 = vmax.f32 %v5788, 0.0
      %v5917 = vmax.f32 %v5789, 0.0
      %v5918 = vpack.c.bf16 %v5792, %v5790
      %v5919 = vpack.c.bf16 %v5793, %v5791
      %v5920 = vpack.c.bf16 %v5796, %v5794
      %v5921 = vpack.c.bf16 %v5797, %v5795
      %v5922 = vpack.c.bf16 %v5800, %v5798
      %v5923 = vpack.c.bf16 %v5801, %v5799
      %v5924 = vpack.c.bf16 %v5804, %v5802
      %v5925 = vpack.c.bf16 %v5805, %v5803
      %v5926 = vpack.c.bf16 %v5808, %v5806
      %v5927 = vpack.c.bf16 %v5809, %v5807
      %v5928 = vpack.c.bf16 %v5812, %v5810
      %v5929 = vpack.c.bf16 %v5813, %v5811
      %v5930 = vpack.c.bf16 %v5816, %v5814
      %v5931 = vpack.c.bf16 %v5817, %v5815
      %v5932 = vpack.c.bf16 %v5820, %v5818
      %v5933 = vpack.c.bf16 %v5821, %v5819
      %v5934 = vpack.c.bf16 %v5824, %v5822
      %v5935 = vpack.c.bf16 %v5825, %v5823
      %v5936 = vpack.c.bf16 %v5828, %v5826
      %v5937 = vpack.c.bf16 %v5829, %v5827
      %v5938 = vpack.c.bf16 %v5832, %v5830
      %v5939 = vpack.c.bf16 %v5833, %v5831
      %v5940 = vpack.c.bf16 %v5836, %v5834
      %v5941 = vpack.c.bf16 %v5837, %v5835
      %v5942 = vpack.c.bf16 %v5840, %v5838
      %v5943 = vpack.c.bf16 %v5841, %v5839
      %v5944 = vpack.c.bf16 %v5844, %v5842
      %v5945 = vpack.c.bf16 %v5845, %v5843
      %v5946 = vpack.c.bf16 %v5848, %v5846
      %v5947 = vpack.c.bf16 %v5849, %v5847
      %v5948 = vpack.c.bf16 %v5852, %v5850
      %v5949 = vpack.c.bf16 %v5853, %v5851
      %v5950 = vpack.c.bf16 %v5856, %v5854
      %v5951 = vpack.c.bf16 %v5857, %v5855
      %v5952 = vpack.c.bf16 %v5860, %v5858
      %v5953 = vpack.c.bf16 %v5861, %v5859
      %v5954 = vpack.c.bf16 %v5864, %v5862
      %v5955 = vpack.c.bf16 %v5865, %v5863
      %v5956 = vpack.c.bf16 %v5868, %v5866
      %v5957 = vpack.c.bf16 %v5869, %v5867
      %v5958 = vpack.c.bf16 %v5872, %v5870
      %v5959 = vpack.c.bf16 %v5873, %v5871
      %v5960 = vpack.c.bf16 %v5876, %v5874
      %v5961 = vpack.c.bf16 %v5877, %v5875
      %v5962 = vpack.c.bf16 %v5880, %v5878
      %v5963 = vpack.c.bf16 %v5881, %v5879
      %v5964 = vpack.c.bf16 %v5884, %v5882
      %v5965 = vpack.c.bf16 %v5885, %v5883
      %v5966 = vpack.c.bf16 %v5888, %v5886
      %v5967 = vpack.c.bf16 %v5889, %v5887
      %v5968 = vpack.c.bf16 %v5892, %v5890
      %v5969 = vpack.c.bf16 %v5893, %v5891
      %v5970 = vpack.c.bf16 %v5896, %v5894
      %v5971 = vpack.c.bf16 %v5897, %v5895
      %v5972 = vpack.c.bf16 %v5900, %v5898
      %v5973 = vpack.c.bf16 %v5901, %v5899
      %v5974 = vpack.c.bf16 %v5904, %v5902
      %v5975 = vpack.c.bf16 %v5905, %v5903
      %v5976 = vpack.c.bf16 %v5908, %v5906
      %v5977 = vpack.c.bf16 %v5909, %v5907
      %v5978 = vpack.c.bf16 %v5912, %v5910
      %v5979 = vpack.c.bf16 %v5913, %v5911
      %v5980 = vpack.c.bf16 %v5916, %v5914
      %v5981 = vpack.c.bf16 %v5917, %v5915
      %v5982 = vld [vmem:[%s13] sm:$0xff]
      %v5983 = vld [vmem:[%s13 + $0x8] sm:$0xff]
      %v5984 = vld [vmem:[%s13 + $0x10] sm:$0xff]
      %v5985 = vld [vmem:[%s13 + $0x18] sm:$0xff]
      %v5986 = vld [vmem:[%s13 + $0x20] sm:$0xff]
      %v5987 = vld [vmem:[%s13 + $0x28] sm:$0xff]
      %v5988 = vld [vmem:[%s13 + $0x30] sm:$0xff]
      %v5989 = vld [vmem:[%s13 + $0x38] sm:$0xff]
      %v5990 = vld [vmem:[%s13 + $0x40] sm:$0xff]
      %v5991 = vld [vmem:[%s13 + $0x48] sm:$0xff]
      %v5992 = vld [vmem:[%s13 + $0x50] sm:$0xff]
      %v5993 = vld [vmem:[%s13 + $0x58] sm:$0xff]
      %v5994 = vld [vmem:[%s13 + $0x60] sm:$0xff]
      %v5995 = vld [vmem:[%s13 + $0x68] sm:$0xff]
      %v5996 = vld [vmem:[%s13 + $0x70] sm:$0xff]
      %v5997 = vld [vmem:[%s13 + $0x78] sm:$0xff]
      %v5998 = vld [vmem:[%s13 + $0x80] sm:$0xff]
      %v5999 = vld [vmem:[%s13 + $0x88] sm:$0xff]
      %v6000 = vld [vmem:[%s13 + $0x90] sm:$0xff]
      %v6001 = vld [vmem:[%s13 + $0x98] sm:$0xff]
      %v6002 = vld [vmem:[%s13 + $0xa0] sm:$0xff]
      %v6003 = vld [vmem:[%s13 + $0xa8] sm:$0xff]
      %v6004 = vld [vmem:[%s13 + $0xb0] sm:$0xff]
      %v6005 = vld [vmem:[%s13 + $0xb8] sm:$0xff]
      %v6006 = vld [vmem:[%s13 + $0xc0] sm:$0xff]
      %v6007 = vld [vmem:[%s13 + $0xc8] sm:$0xff]
      %v6008 = vld [vmem:[%s13 + $0xd0] sm:$0xff]
      %v6009 = vld [vmem:[%s13 + $0xd8] sm:$0xff]
      %v6010 = vld [vmem:[%s13 + $0xe0] sm:$0xff]
      %v6011 = vld [vmem:[%s13 + $0xe8] sm:$0xff]
      %v6012 = vld [vmem:[%s13 + $0xf0] sm:$0xff]
      %v6013 = vld [vmem:[%s13 + $0xf8] sm:$0xff]
      %v6014 = vld [vmem:[%s14] sm:$0x3]
      %v6016 = vlaneseq
      %v6017 = vshrl.u32 %v6016, 7
      %v6018 = vsub.s32 0, %v6017
      %v6019 = vrot.slane %v6014, %v6018
      %v6020 = vlaneseq
      %v6021 = vshrl.u32 %v6020, 7
      %v6022 = vsub.s32 1, %v6021
      %v6023 = vrot.slane %v6014, %v6022
      %v6058 = vunpack.c.l.b16 %v5982
      %v6059 = vunpack.c.h.b16 %v5982
      %v6060 = vunpack.c.l.b16 %v5983
      %v6061 = vunpack.c.h.b16 %v5983
      %v6062 = vunpack.c.l.b16 %v5984
      %v6063 = vunpack.c.h.b16 %v5984
      %v6064 = vunpack.c.l.b16 %v5985
      %v6065 = vunpack.c.h.b16 %v5985
      %v6066 = vunpack.c.l.b16 %v5986
      %v6067 = vunpack.c.h.b16 %v5986
      %v6068 = vunpack.c.l.b16 %v5987
      %v6069 = vunpack.c.h.b16 %v5987
      %v6070 = vunpack.c.l.b16 %v5988
      %v6071 = vunpack.c.h.b16 %v5988
      %v6072 = vunpack.c.l.b16 %v5989
      %v6073 = vunpack.c.h.b16 %v5989
      %v6074 = vunpack.c.l.b16 %v5990
      %v6075 = vunpack.c.h.b16 %v5990
      %v6076 = vunpack.c.l.b16 %v5991
      %v6077 = vunpack.c.h.b16 %v5991
      %v6078 = vunpack.c.l.b16 %v5992
      %v6079 = vunpack.c.h.b16 %v5992
      %v6080 = vunpack.c.l.b16 %v5993
      %v6081 = vunpack.c.h.b16 %v5993
      %v6082 = vunpack.c.l.b16 %v5994
      %v6083 = vunpack.c.h.b16 %v5994
      %v6084 = vunpack.c.l.b16 %v5995
      %v6085 = vunpack.c.h.b16 %v5995
      %v6086 = vunpack.c.l.b16 %v5996
      %v6087 = vunpack.c.h.b16 %v5996
      %v6088 = vunpack.c.l.b16 %v5997
      %v6089 = vunpack.c.h.b16 %v5997
      %v6090 = vunpack.c.l.b16 %v5998
      %v6091 = vunpack.c.h.b16 %v5998
      %v6092 = vunpack.c.l.b16 %v5999
      %v6093 = vunpack.c.h.b16 %v5999
      %v6094 = vunpack.c.l.b16 %v6000
      %v6095 = vunpack.c.h.b16 %v6000
      %v6096 = vunpack.c.l.b16 %v6001
      %v6097 = vunpack.c.h.b16 %v6001
      %v6098 = vunpack.c.l.b16 %v6002
      %v6099 = vunpack.c.h.b16 %v6002
      %v6100 = vunpack.c.l.b16 %v6003
      %v6101 = vunpack.c.h.b16 %v6003
      %v6102 = vunpack.c.l.b16 %v6004
      %v6103 = vunpack.c.h.b16 %v6004
      %v6104 = vunpack.c.l.b16 %v6005
      %v6105 = vunpack.c.h.b16 %v6005
      %v6106 = vunpack.c.l.b16 %v6006
      %v6107 = vunpack.c.h.b16 %v6006
      %v6108 = vunpack.c.l.b16 %v6007
      %v6109 = vunpack.c.h.b16 %v6007
      %v6110 = vunpack.c.l.b16 %v6008
      %v6111 = vunpack.c.h.b16 %v6008
      %v6112 = vunpack.c.l.b16 %v6009
      %v6113 = vunpack.c.h.b16 %v6009
      %v6114 = vunpack.c.l.b16 %v6010
      %v6115 = vunpack.c.h.b16 %v6010
      %v6116 = vunpack.c.l.b16 %v6011
      %v6117 = vunpack.c.h.b16 %v6011
      %v6118 = vunpack.c.l.b16 %v6012
      %v6119 = vunpack.c.h.b16 %v6012
      %v6120 = vunpack.c.l.b16 %v6013
      %v6121 = vunpack.c.h.b16 %v6013
      %v6122 = vpack.c.b16 %v6060, %v6058
      %v6123 = vpack.c.b16 %v6061, %v6059
      %v6124 = vpack.c.b16 %v6064, %v6062
      %v6125 = vpack.c.b16 %v6065, %v6063
      %v6126 = vpack.c.b16 %v6068, %v6066
      %v6127 = vpack.c.b16 %v6069, %v6067
      %v6128 = vpack.c.b16 %v6072, %v6070
      %v6129 = vpack.c.b16 %v6073, %v6071
      %v6130 = vpack.c.b16 %v6076, %v6074
      %v6131 = vpack.c.b16 %v6077, %v6075
      %v6132 = vpack.c.b16 %v6080, %v6078
      %v6133 = vpack.c.b16 %v6081, %v6079
      %v6134 = vpack.c.b16 %v6084, %v6082
      %v6135 = vpack.c.b16 %v6085, %v6083
      %v6136 = vpack.c.b16 %v6088, %v6086
      %v6137 = vpack.c.b16 %v6089, %v6087
      %v6138 = vpack.c.b16 %v6092, %v6090
      %v6139 = vpack.c.b16 %v6093, %v6091
      %v6140 = vpack.c.b16 %v6096, %v6094
      %v6141 = vpack.c.b16 %v6097, %v6095
      %v6142 = vpack.c.b16 %v6100, %v6098
      %v6143 = vpack.c.b16 %v6101, %v6099
      %v6144 = vpack.c.b16 %v6104, %v6102
      %v6145 = vpack.c.b16 %v6105, %v6103
      %v6146 = vpack.c.b16 %v6108, %v6106
      %v6147 = vpack.c.b16 %v6109, %v6107
      %v6148 = vpack.c.b16 %v6112, %v6110
      %v6149 = vpack.c.b16 %v6113, %v6111
      %v6150 = vpack.c.b16 %v6116, %v6114
      %v6151 = vpack.c.b16 %v6117, %v6115
      %v6152 = vpack.c.b16 %v6120, %v6118
      %v6153 = vpack.c.b16 %v6121, %v6119
      %6186 = vmatprep.subr.bf16.mxu0 %v6123
      %6187 = vmatpush1.bf16.msra.mxu0 %v6122
      %6188 = vmatprep.subr.bf16.mxu0 %v6125
      %6189 = vmatpush1.bf16.msra.mxu0 %v6124
      %6190 = vmatprep.subr.bf16.mxu0 %v6127
      %6191 = vmatpush1.bf16.msra.mxu0 %v6126
      %6192 = vmatprep.subr.bf16.mxu0 %v6129
      %6193 = vmatpush1.bf16.msra.mxu0 %v6128
      %6194 = vmatprep.subr.bf16.mxu0 %v6131
      %6195 = vmatpush1.bf16.msra.mxu0 %v6130
      %6196 = vmatprep.subr.bf16.mxu0 %v6133
      %6197 = vmatpush1.bf16.msra.mxu0 %v6132
      %6198 = vmatprep.subr.bf16.mxu0 %v6135
      %6199 = vmatpush1.bf16.msra.mxu0 %v6134
      %6200 = vmatprep.subr.bf16.mxu0 %v6137
      %6201 = vmatpush1.bf16.msra.mxu0 %v6136
      %6202 = vmatprep.subr.bf16.mxu0 %v6139
      %6203 = vmatpush1.bf16.msra.mxu0 %v6138
      %6204 = vmatprep.subr.bf16.mxu0 %v6141
      %6205 = vmatpush1.bf16.msra.mxu0 %v6140
      %6206 = vmatprep.subr.bf16.mxu0 %v6143
      %6207 = vmatpush1.bf16.msra.mxu0 %v6142
      %6208 = vmatprep.subr.bf16.mxu0 %v6145
      %6209 = vmatpush1.bf16.msra.mxu0 %v6144
      %6210 = vmatprep.subr.bf16.mxu0 %v6147
      %6211 = vmatpush1.bf16.msra.mxu0 %v6146
      %6212 = vmatprep.subr.bf16.mxu0 %v6149
      %6213 = vmatpush1.bf16.msra.mxu0 %v6148
      %6214 = vmatprep.subr.bf16.mxu0 %v6151
      %6215 = vmatpush1.bf16.msra.mxu0 %v6150
      %6216 = vmatprep.subr.bf16.mxu0 %v6153
      %6217 = vmatpush1.bf16.msra.mxu0 %v6152
      %6218 = vmatprep.mubr.bf16.mxu0 %v5919
      %6219 = vmatmul.mubr.bf16.gmra.mrb[0].mxu0 %v5918
      %v6220 = vpop.f32.mrb[0].mxu0
      %v6221 = vadd.f32 %v6019, %v6220
      %v6222 = vpop.f32.mrb[0].mxu0
      %v6223 = vadd.f32 %v6023, %v6222
      %v6224 = vpop.f32.mrb[0].mxu0
      %v6225 = vadd.f32 %v6019, %v6224
      %v6226 = vpop.f32.mrb[0].mxu0
      %v6227 = vadd.f32 %v6023, %v6226
      %6228 = vmatprep.mubr.bf16.mxu0 %v5921
      %6229 = vmatmul.mubr.bf16.gmra.mrb[0].mxu0 %v5920
      %v6230 = vpop.f32.mrb[0].mxu0
      %v6231 = vadd.f32 %v6019, %v6230
      %v6232 = vpop.f32.mrb[0].mxu0
      %v6233 = vadd.f32 %v6023, %v6232
      %v6234 = vpop.f32.mrb[0].mxu0
      %v6235 = vadd.f32 %v6019, %v6234
      %v6236 = vpop.f32.mrb[0].mxu0
      %v6237 = vadd.f32 %v6023, %v6236
      %6238 = vmatprep.mubr.bf16.mxu0 %v5923
      %6239 = vmatmul.mubr.bf16.gmra.mrb[0].mxu0 %v5922
      %v6240 = vpop.f32.mrb[0].mxu0
      %v6241 = vadd.f32 %v6019, %v6240
      %v6242 = vpop.f32.mrb[0].mxu0
      %v6243 = vadd.f32 %v6023, %v6242
      %v6244 = vpop.f32.mrb[0].mxu0
      %v6245 = vadd.f32 %v6019, %v6244
      %v6246 = vpop.f32.mrb[0].mxu0
      %v6247 = vadd.f32 %v6023, %v6246
      %6248 = vmatprep.mubr.bf16.mxu0 %v5925
      %6249 = vmatmul.mubr.bf16.gmra.mrb[0].mxu0 %v5924
      %v6250 = vpop.f32.mrb[0].mxu0
      %v6251 = vadd.f32 %v6019, %v6250
      %v6252 = vpop.f32.mrb[0].mxu0
      %v6253 = vadd.f32 %v6023, %v6252
      %v6254 = vpop.f32.mrb[0].mxu0
      %v6255 = vadd.f32 %v6019, %v6254
      %v6256 = vpop.f32.mrb[0].mxu0
      %v6257 = vadd.f32 %v6023, %v6256
      %6258 = vmatprep.mubr.bf16.mxu0 %v5927
      %6259 = vmatmul.mubr.bf16.gmra.mrb[0].mxu0 %v5926
      %v6260 = vpop.f32.mrb[0].mxu0
      %v6261 = vadd.f32 %v6019, %v6260
      %v6262 = vpop.f32.mrb[0].mxu0
      %v6263 = vadd.f32 %v6023, %v6262
      %v6264 = vpop.f32.mrb[0].mxu0
      %v6265 = vadd.f32 %v6019, %v6264
      %v6266 = vpop.f32.mrb[0].mxu0
      %v6267 = vadd.f32 %v6023, %v6266
      %6268 = vmatprep.mubr.bf16.mxu0 %v5929
      %6269 = vmatmul.mubr.bf16.gmra.mrb[0].mxu0 %v5928
      %v6270 = vpop.f32.mrb[0].mxu0
      %v6271 = vadd.f32 %v6019, %v6270
      %v6272 = vpop.f32.mrb[0].mxu0
      %v6273 = vadd.f32 %v6023, %v6272
      %v6274 = vpop.f32.mrb[0].mxu0
      %v6275 = vadd.f32 %v6019, %v6274
      %v6276 = vpop.f32.mrb[0].mxu0
      %v6277 = vadd.f32 %v6023, %v6276
      %6278 = vmatprep.mubr.bf16.mxu0 %v5931
      %6279 = vmatmul.mubr.bf16.gmra.mrb[0].mxu0 %v5930
      %v6280 = vpop.f32.mrb[0].mxu0
      %v6281 = vadd.f32 %v6019, %v6280
      %v6282 = vpop.f32.mrb[0].mxu0
      %v6283 = vadd.f32 %v6023, %v6282
      %v6284 = vpop.f32.mrb[0].mxu0
      %v6285 = vadd.f32 %v6019, %v6284
      %v6286 = vpop.f32.mrb[0].mxu0
      %v6287 = vadd.f32 %v6023, %v6286
      %6288 = vmatprep.mubr.bf16.mxu0 %v5933
      %6289 = vmatmul.mubr.bf16.gmra.mrb[0].mxu0 %v5932
      %v6290 = vpop.f32.mrb[0].mxu0
      %v6291 = vadd.f32 %v6019, %v6290
      %v6292 = vpop.f32.mrb[0].mxu0
      %v6293 = vadd.f32 %v6023, %v6292
      %v6294 = vpop.f32.mrb[0].mxu0
      %v6295 = vadd.f32 %v6019, %v6294
      %v6296 = vpop.f32.mrb[0].mxu0
      %v6297 = vadd.f32 %v6023, %v6296
      %6298 = vmatprep.mubr.bf16.mxu0 %v5935
      %6299 = vmatmul.mubr.bf16.gmra.mrb[0].mxu0 %v5934
      %v6300 = vpop.f32.mrb[0].mxu0
      %v6301 = vadd.f32 %v6019, %v6300
      %v6302 = vpop.f32.mrb[0].mxu0
      %v6303 = vadd.f32 %v6023, %v6302
      %v6304 = vpop.f32.mrb[0].mxu0
      %v6305 = vadd.f32 %v6019, %v6304
      %v6306 = vpop.f32.mrb[0].mxu0
      %v6307 = vadd.f32 %v6023, %v6306
      %6308 = vmatprep.mubr.bf16.mxu0 %v5937
      %6309 = vmatmul.mubr.bf16.gmra.mrb[0].mxu0 %v5936
      %v6310 = vpop.f32.mrb[0].mxu0
      %v6311 = vadd.f32 %v6019, %v6310
      %v6312 = vpop.f32.mrb[0].mxu0
      %v6313 = vadd.f32 %v6023, %v6312
      %v6314 = vpop.f32.mrb[0].mxu0
      %v6315 = vadd.f32 %v6019, %v6314
      %v6316 = vpop.f32.mrb[0].mxu0
      %v6317 = vadd.f32 %v6023, %v6316
      %6318 = vmatprep.mubr.bf16.mxu0 %v5939
      %6319 = vmatmul.mubr.bf16.gmra.mrb[0].mxu0 %v5938
      %v6320 = vpop.f32.mrb[0].mxu0
      %v6321 = vadd.f32 %v6019, %v6320
      %v6322 = vpop.f32.mrb[0].mxu0
      %v6323 = vadd.f32 %v6023, %v6322
      %v6324 = vpop.f32.mrb[0].mxu0
      %v6325 = vadd.f32 %v6019, %v6324
      %v6326 = vpop.f32.mrb[0].mxu0
      %v6327 = vadd.f32 %v6023, %v6326
      %6328 = vmatprep.mubr.bf16.mxu0 %v5941
      %6329 = vmatmul.mubr.bf16.gmra.mrb[0].mxu0 %v5940
      %v6330 = vpop.f32.mrb[0].mxu0
      %v6331 = vadd.f32 %v6019, %v6330
      %v6332 = vpop.f32.mrb[0].mxu0
      %v6333 = vadd.f32 %v6023, %v6332
      %v6334 = vpop.f32.mrb[0].mxu0
      %v6335 = vadd.f32 %v6019, %v6334
      %v6336 = vpop.f32.mrb[0].mxu0
      %v6337 = vadd.f32 %v6023, %v6336
      %6338 = vmatprep.mubr.bf16.mxu0 %v5943
      %6339 = vmatmul.mubr.bf16.gmra.mrb[0].mxu0 %v5942
      %v6340 = vpop.f32.mrb[0].mxu0
      %v6341 = vadd.f32 %v6019, %v6340
      %v6342 = vpop.f32.mrb[0].mxu0
      %v6343 = vadd.f32 %v6023, %v6342
      %v6344 = vpop.f32.mrb[0].mxu0
      %v6345 = vadd.f32 %v6019, %v6344
      %v6346 = vpop.f32.mrb[0].mxu0
      %v6347 = vadd.f32 %v6023, %v6346
      %6348 = vmatprep.mubr.bf16.mxu0 %v5945
      %6349 = vmatmul.mubr.bf16.gmra.mrb[0].mxu0 %v5944
      %v6350 = vpop.f32.mrb[0].mxu0
      %v6351 = vadd.f32 %v6019, %v6350
      %v6352 = vpop.f32.mrb[0].mxu0
      %v6353 = vadd.f32 %v6023, %v6352
      %v6354 = vpop.f32.mrb[0].mxu0
      %v6355 = vadd.f32 %v6019, %v6354
      %v6356 = vpop.f32.mrb[0].mxu0
      %v6357 = vadd.f32 %v6023, %v6356
      %6358 = vmatprep.mubr.bf16.mxu0 %v5947
      %6359 = vmatmul.mubr.bf16.gmra.mrb[0].mxu0 %v5946
      %v6360 = vpop.f32.mrb[0].mxu0
      %v6361 = vadd.f32 %v6019, %v6360
      %v6362 = vpop.f32.mrb[0].mxu0
      %v6363 = vadd.f32 %v6023, %v6362
      %v6364 = vpop.f32.mrb[0].mxu0
      %v6365 = vadd.f32 %v6019, %v6364
      %v6366 = vpop.f32.mrb[0].mxu0
      %v6367 = vadd.f32 %v6023, %v6366
      %6368 = vmatprep.mubr.bf16.mxu0 %v5949
      %6369 = vmatmul.mubr.bf16.gmra.mrb[0].mxu0 %v5948
      %v6370 = vpop.f32.mrb[0].mxu0
      %v6371 = vadd.f32 %v6019, %v6370
      %v6372 = vpop.f32.mrb[0].mxu0
      %v6373 = vadd.f32 %v6023, %v6372
      %v6374 = vpop.f32.mrb[0].mxu0
      %v6375 = vadd.f32 %v6019, %v6374
      %v6376 = vpop.f32.mrb[0].mxu0
      %v6377 = vadd.f32 %v6023, %v6376
      %6378 = vmatprep.mubr.bf16.mxu0 %v5951
      %6379 = vmatmul.mubr.bf16.gmra.mrb[0].mxu0 %v5950
      %v6380 = vpop.f32.mrb[0].mxu0
      %v6381 = vadd.f32 %v6019, %v6380
      %v6382 = vpop.f32.mrb[0].mxu0
      %v6383 = vadd.f32 %v6023, %v6382
      %v6384 = vpop.f32.mrb[0].mxu0
      %v6385 = vadd.f32 %v6019, %v6384
      %v6386 = vpop.f32.mrb[0].mxu0
      %v6387 = vadd.f32 %v6023, %v6386
      %6388 = vmatprep.mubr.bf16.mxu0 %v5953
      %6389 = vmatmul.mubr.bf16.gmra.mrb[0].mxu0 %v5952
      %v6390 = vpop.f32.mrb[0].mxu0
      %v6391 = vadd.f32 %v6019, %v6390
      %v6392 = vpop.f32.mrb[0].mxu0
      %v6393 = vadd.f32 %v6023, %v6392
      %v6394 = vpop.f32.mrb[0].mxu0
      %v6395 = vadd.f32 %v6019, %v6394
      %v6396 = vpop.f32.mrb[0].mxu0
      %v6397 = vadd.f32 %v6023, %v6396
      %6398 = vmatprep.mubr.bf16.mxu0 %v5955
      %6399 = vmatmul.mubr.bf16.gmra.mrb[0].mxu0 %v5954
      %v6400 = vpop.f32.mrb[0].mxu0
      %v6401 = vadd.f32 %v6019, %v6400
      %v6402 = vpop.f32.mrb[0].mxu0
      %v6403 = vadd.f32 %v6023, %v6402
      %v6404 = vpop.f32.mrb[0].mxu0
      %v6405 = vadd.f32 %v6019, %v6404
      %v6406 = vpop.f32.mrb[0].mxu0
      %v6407 = vadd.f32 %v6023, %v6406
      %6408 = vmatprep.mubr.bf16.mxu0 %v5957
      %6409 = vmatmul.mubr.bf16.gmra.mrb[0].mxu0 %v5956
      %v6410 = vpop.f32.mrb[0].mxu0
      %v6411 = vadd.f32 %v6019, %v6410
      %v6412 = vpop.f32.mrb[0].mxu0
      %v6413 = vadd.f32 %v6023, %v6412
      %v6414 = vpop.f32.mrb[0].mxu0
      %v6415 = vadd.f32 %v6019, %v6414
      %v6416 = vpop.f32.mrb[0].mxu0
      %v6417 = vadd.f32 %v6023, %v6416
      %6418 = vmatprep.mubr.bf16.mxu0 %v5959
      %6419 = vmatmul.mubr.bf16.gmra.mrb[0].mxu0 %v5958
      %v6420 = vpop.f32.mrb[0].mxu0
      %v6421 = vadd.f32 %v6019, %v6420
      %v6422 = vpop.f32.mrb[0].mxu0
      %v6423 = vadd.f32 %v6023, %v6422
      %v6424 = vpop.f32.mrb[0].mxu0
      %v6425 = vadd.f32 %v6019, %v6424
      %v6426 = vpop.f32.mrb[0].mxu0
      %v6427 = vadd.f32 %v6023, %v6426
      %6428 = vmatprep.mubr.bf16.mxu0 %v5961
      %6429 = vmatmul.mubr.bf16.gmra.mrb[0].mxu0 %v5960
      %v6430 = vpop.f32.mrb[0].mxu0
      %v6431 = vadd.f32 %v6019, %v6430
      %v6432 = vpop.f32.mrb[0].mxu0
      %v6433 = vadd.f32 %v6023, %v6432
      %v6434 = vpop.f32.mrb[0].mxu0
      %v6435 = vadd.f32 %v6019, %v6434
      %v6436 = vpop.f32.mrb[0].mxu0
      %v6437 = vadd.f32 %v6023, %v6436
      %6438 = vmatprep.mubr.bf16.mxu0 %v5963
      %6439 = vmatmul.mubr.bf16.gmra.mrb[0].mxu0 %v5962
      %v6440 = vpop.f32.mrb[0].mxu0
      %v6441 = vadd.f32 %v6019, %v6440
      %v6442 = vpop.f32.mrb[0].mxu0
      %v6443 = vadd.f32 %v6023, %v6442
      %v6444 = vpop.f32.mrb[0].mxu0
      %v6445 = vadd.f32 %v6019, %v6444
      %v6446 = vpop.f32.mrb[0].mxu0
      %v6447 = vadd.f32 %v6023, %v6446
      %6448 = vmatprep.mubr.bf16.mxu0 %v5965
      %6449 = vmatmul.mubr.bf16.gmra.mrb[0].mxu0 %v5964
      %v6450 = vpop.f32.mrb[0].mxu0
      %v6451 = vadd.f32 %v6019, %v6450
      %v6452 = vpop.f32.mrb[0].mxu0
      %v6453 = vadd.f32 %v6023, %v6452
      %v6454 = vpop.f32.mrb[0].mxu0
      %v6455 = vadd.f32 %v6019, %v6454
      %v6456 = vpop.f32.mrb[0].mxu0
      %v6457 = vadd.f32 %v6023, %v6456
      %6458 = vmatprep.mubr.bf16.mxu0 %v5967
      %6459 = vmatmul.mubr.bf16.gmra.mrb[0].mxu0 %v5966
      %v6460 = vpop.f32.mrb[0].mxu0
      %v6461 = vadd.f32 %v6019, %v6460
      %v6462 = vpop.f32.mrb[0].mxu0
      %v6463 = vadd.f32 %v6023, %v6462
      %v6464 = vpop.f32.mrb[0].mxu0
      %v6465 = vadd.f32 %v6019, %v6464
      %v6466 = vpop.f32.mrb[0].mxu0
      %v6467 = vadd.f32 %v6023, %v6466
      %6468 = vmatprep.mubr.bf16.mxu0 %v5969
      %6469 = vmatmul.mubr.bf16.gmra.mrb[0].mxu0 %v5968
      %v6470 = vpop.f32.mrb[0].mxu0
      %v6471 = vadd.f32 %v6019, %v6470
      %v6472 = vpop.f32.mrb[0].mxu0
      %v6473 = vadd.f32 %v6023, %v6472
      %v6474 = vpop.f32.mrb[0].mxu0
      %v6475 = vadd.f32 %v6019, %v6474
      %v6476 = vpop.f32.mrb[0].mxu0
      %v6477 = vadd.f32 %v6023, %v6476
      %6478 = vmatprep.mubr.bf16.mxu0 %v5971
      %6479 = vmatmul.mubr.bf16.gmra.mrb[0].mxu0 %v5970
      %v6480 = vpop.f32.mrb[0].mxu0
      %v6481 = vadd.f32 %v6019, %v6480
      %v6482 = vpop.f32.mrb[0].mxu0
      %v6483 = vadd.f32 %v6023, %v6482
      %v6484 = vpop.f32.mrb[0].mxu0
      %v6485 = vadd.f32 %v6019, %v6484
      %v6486 = vpop.f32.mrb[0].mxu0
      %v6487 = vadd.f32 %v6023, %v6486
      %6488 = vmatprep.mubr.bf16.mxu0 %v5973
      %6489 = vmatmul.mubr.bf16.gmra.mrb[0].mxu0 %v5972
      %v6490 = vpop.f32.mrb[0].mxu0
      %v6491 = vadd.f32 %v6019, %v6490
      %v6492 = vpop.f32.mrb[0].mxu0
      %v6493 = vadd.f32 %v6023, %v6492
      %v6494 = vpop.f32.mrb[0].mxu0
      %v6495 = vadd.f32 %v6019, %v6494
      %v6496 = vpop.f32.mrb[0].mxu0
      %v6497 = vadd.f32 %v6023, %v6496
      %6498 = vmatprep.mubr.bf16.mxu0 %v5975
      %6499 = vmatmul.mubr.bf16.gmra.mrb[0].mxu0 %v5974
      %v6500 = vpop.f32.mrb[0].mxu0
      %v6501 = vadd.f32 %v6019, %v6500
      %v6502 = vpop.f32.mrb[0].mxu0
      %v6503 = vadd.f32 %v6023, %v6502
      %v6504 = vpop.f32.mrb[0].mxu0
      %v6505 = vadd.f32 %v6019, %v6504
      %v6506 = vpop.f32.mrb[0].mxu0
      %v6507 = vadd.f32 %v6023, %v6506
      %6508 = vmatprep.mubr.bf16.mxu0 %v5977
      %6509 = vmatmul.mubr.bf16.gmra.mrb[0].mxu0 %v5976
      %v6510 = vpop.f32.mrb[0].mxu0
      %v6511 = vadd.f32 %v6019, %v6510
      %v6512 = vpop.f32.mrb[0].mxu0
      %v6513 = vadd.f32 %v6023, %v6512
      %v6514 = vpop.f32.mrb[0].mxu0
      %v6515 = vadd.f32 %v6019, %v6514
      %v6516 = vpop.f32.mrb[0].mxu0
      %v6517 = vadd.f32 %v6023, %v6516
      %6518 = vmatprep.mubr.bf16.mxu0 %v5979
      %6519 = vmatmul.mubr.bf16.gmra.mrb[0].mxu0 %v5978
      %v6520 = vpop.f32.mrb[0].mxu0
      %v6521 = vadd.f32 %v6019, %v6520
      %v6522 = vpop.f32.mrb[0].mxu0
      %v6523 = vadd.f32 %v6023, %v6522
      %v6524 = vpop.f32.mrb[0].mxu0
      %v6525 = vadd.f32 %v6019, %v6524
      %v6526 = vpop.f32.mrb[0].mxu0
      %v6527 = vadd.f32 %v6023, %v6526
      %6528 = vmatprep.mubr.bf16.mxu0 %v5981
      %6529 = vmatmul.mubr.bf16.gmra.mrb[0].mxu0 %v5980
      %v6530 = vpop.f32.mrb[0].mxu0
      %v6531 = vadd.f32 %v6019, %v6530
      %v6532 = vpop.f32.mrb[0].mxu0
      %v6533 = vadd.f32 %v6023, %v6532
      %v6534 = vpop.f32.mrb[0].mxu0
      %v6535 = vadd.f32 %v6019, %v6534
      %v6536 = vpop.f32.mrb[0].mxu0
      %v6537 = vadd.f32 %v6023, %v6536
      %6538 = vdwg.mxu0
      %v6539 = vmax.f32 %v6221, 0.0
      %v6540 = vmax.f32 %v6223, 0.0
      %v6541 = vmax.f32 %v6225, 0.0
      %v6542 = vmax.f32 %v6227, 0.0
      %v6543 = vmax.f32 %v6231, 0.0
      %v6544 = vmax.f32 %v6233, 0.0
      %v6545 = vmax.f32 %v6235, 0.0
      %v6546 = vmax.f32 %v6237, 0.0
      %v6547 = vmax.f32 %v6241, 0.0
      %v6548 = vmax.f32 %v6243, 0.0
      %v6549 = vmax.f32 %v6245, 0.0
      %v6550 = vmax.f32 %v6247, 0.0
      %v6551 = vmax.f32 %v6251, 0.0
      %v6552 = vmax.f32 %v6253, 0.0
      %v6553 = vmax.f32 %v6255, 0.0
      %v6554 = vmax.f32 %v6257, 0.0
      %v6555 = vmax.f32 %v6261, 0.0
      %v6556 = vmax.f32 %v6263, 0.0
      %v6557 = vmax.f32 %v6265, 0.0
      %v6558 = vmax.f32 %v6267, 0.0
      %v6559 = vmax.f32 %v6271, 0.0
      %v6560 = vmax.f32 %v6273, 0.0
      %v6561 = vmax.f32 %v6275, 0.0
      %v6562 = vmax.f32 %v6277, 0.0
      %v6563 = vmax.f32 %v6281, 0.0
      %v6564 = vmax.f32 %v6283, 0.0
      %v6565 = vmax.f32 %v6285, 0.0
      %v6566 = vmax.f32 %v6287, 0.0
      %v6567 = vmax.f32 %v6291, 0.0
      %v6568 = vmax.f32 %v6293, 0.0
      %v6569 = vmax.f32 %v6295, 0.0
      %v6570 = vmax.f32 %v6297, 0.0
      %v6571 = vmax.f32 %v6301, 0.0
      %v6572 = vmax.f32 %v6303, 0.0
      %v6573 = vmax.f32 %v6305, 0.0
      %v6574 = vmax.f32 %v6307, 0.0
      %v6575 = vmax.f32 %v6311, 0.0
      %v6576 = vmax.f32 %v6313, 0.0
      %v6577 = vmax.f32 %v6315, 0.0
      %v6578 = vmax.f32 %v6317, 0.0
      %v6579 = vmax.f32 %v6321, 0.0
      %v6580 = vmax.f32 %v6323, 0.0
      %v6581 = vmax.f32 %v6325, 0.0
      %v6582 = vmax.f32 %v6327, 0.0
      %v6583 = vmax.f32 %v6331, 0.0
      %v6584 = vmax.f32 %v6333, 0.0
      %v6585 = vmax.f32 %v6335, 0.0
      %v6586 = vmax.f32 %v6337, 0.0
      %v6587 = vmax.f32 %v6341, 0.0
      %v6588 = vmax.f32 %v6343, 0.0
      %v6589 = vmax.f32 %v6345, 0.0
      %v6590 = vmax.f32 %v6347, 0.0
      %v6591 = vmax.f32 %v6351, 0.0
      %v6592 = vmax.f32 %v6353, 0.0
      %v6593 = vmax.f32 %v6355, 0.0
      %v6594 = vmax.f32 %v6357, 0.0
      %v6595 = vmax.f32 %v6361, 0.0
      %v6596 = vmax.f32 %v6363, 0.0
      %v6597 = vmax.f32 %v6365, 0.0
      %v6598 = vmax.f32 %v6367, 0.0
      %v6599 = vmax.f32 %v6371, 0.0
      %v6600 = vmax.f32 %v6373, 0.0
      %v6601 = vmax.f32 %v6375, 0.0
      %v6602 = vmax.f32 %v6377, 0.0
      %v6603 = vmax.f32 %v6381, 0.0
      %v6604 = vmax.f32 %v6383, 0.0
      %v6605 = vmax.f32 %v6385, 0.0
      %v6606 = vmax.f32 %v6387, 0.0
      %v6607 = vmax.f32 %v6391, 0.0
      %v6608 = vmax.f32 %v6393, 0.0
      %v6609 = vmax.f32 %v6395, 0.0
      %v6610 = vmax.f32 %v6397, 0.0
      %v6611 = vmax.f32 %v6401, 0.0
      %v6612 = vmax.f32 %v6403, 0.0
      %v6613 = vmax.f32 %v6405, 0.0
      %v6614 = vmax.f32 %v6407, 0.0
      %v6615 = vmax.f32 %v6411, 0.0
      %v6616 = vmax.f32 %v6413, 0.0
      %v6617 = vmax.f32 %v6415, 0.0
      %v6618 = vmax.f32 %v6417, 0.0
      %v6619 = vmax.f32 %v6421, 0.0
      %v6620 = vmax.f32 %v6423, 0.0
      %v6621 = vmax.f32 %v6425, 0.0
      %v6622 = vmax.f32 %v6427, 0.0
      %v6623 = vmax.f32 %v6431, 0.0
      %v6624 = vmax.f32 %v6433, 0.0
      %v6625 = vmax.f32 %v6435, 0.0
      %v6626 = vmax.f32 %v6437, 0.0
      %v6627 = vmax.f32 %v6441, 0.0
      %v6628 = vmax.f32 %v6443, 0.0
      %v6629 = vmax.f32 %v6445, 0.0
      %v6630 = vmax.f32 %v6447, 0.0
      %v6631 = vmax.f32 %v6451, 0.0
      %v6632 = vmax.f32 %v6453, 0.0
      %v6633 = vmax.f32 %v6455, 0.0
      %v6634 = vmax.f32 %v6457, 0.0
      %v6635 = vmax.f32 %v6461, 0.0
      %v6636 = vmax.f32 %v6463, 0.0
      %v6637 = vmax.f32 %v6465, 0.0
      %v6638 = vmax.f32 %v6467, 0.0
      %v6639 = vmax.f32 %v6471, 0.0
      %v6640 = vmax.f32 %v6473, 0.0
      %v6641 = vmax.f32 %v6475, 0.0
      %v6642 = vmax.f32 %v6477, 0.0
      %v6643 = vmax.f32 %v6481, 0.0
      %v6644 = vmax.f32 %v6483, 0.0
      %v6645 = vmax.f32 %v6485, 0.0
      %v6646 = vmax.f32 %v6487, 0.0
      %v6647 = vmax.f32 %v6491, 0.0
      %v6648 = vmax.f32 %v6493, 0.0
      %v6649 = vmax.f32 %v6495, 0.0
      %v6650 = vmax.f32 %v6497, 0.0
      %v6651 = vmax.f32 %v6501, 0.0
      %v6652 = vmax.f32 %v6503, 0.0
      %v6653 = vmax.f32 %v6505, 0.0
      %v6654 = vmax.f32 %v6507, 0.0
      %v6655 = vmax.f32 %v6511, 0.0
      %v6656 = vmax.f32 %v6513, 0.0
      %v6657 = vmax.f32 %v6515, 0.0
      %v6658 = vmax.f32 %v6517, 0.0
      %v6659 = vmax.f32 %v6521, 0.0
      %v6660 = vmax.f32 %v6523, 0.0
      %v6661 = vmax.f32 %v6525, 0.0
      %v6662 = vmax.f32 %v6527, 0.0
      %v6663 = vmax.f32 %v6531, 0.0
      %v6664 = vmax.f32 %v6533, 0.0
      %v6665 = vmax.f32 %v6535, 0.0
      %v6666 = vmax.f32 %v6537, 0.0
      %v6667 = vpack.c.bf16 %v6541, %v6539
      %v6668 = vpack.c.bf16 %v6542, %v6540
      %v6669 = vpack.c.bf16 %v6545, %v6543
      %v6670 = vpack.c.bf16 %v6546, %v6544
      %v6671 = vpack.c.bf16 %v6549, %v6547
      %v6672 = vpack.c.bf16 %v6550, %v6548
      %v6673 = vpack.c.bf16 %v6553, %v6551
      %v6674 = vpack.c.bf16 %v6554, %v6552
      %v6675 = vpack.c.bf16 %v6557, %v6555
      %v6676 = vpack.c.bf16 %v6558, %v6556
      %v6677 = vpack.c.bf16 %v6561, %v6559
      %v6678 = vpack.c.bf16 %v6562, %v6560
      %v6679 = vpack.c.bf16 %v6565, %v6563
      %v6680 = vpack.c.bf16 %v6566, %v6564
      %v6681 = vpack.c.bf16 %v6569, %v6567
      %v6682 = vpack.c.bf16 %v6570, %v6568
      %v6683 = vpack.c.bf16 %v6573, %v6571
      %v6684 = vpack.c.bf16 %v6574, %v6572
      %v6685 = vpack.c.bf16 %v6577, %v6575
      %v6686 = vpack.c.bf16 %v6578, %v6576
      %v6687 = vpack.c.bf16 %v6581, %v6579
      %v6688 = vpack.c.bf16 %v6582, %v6580
      %v6689 = vpack.c.bf16 %v6585, %v6583
      %v6690 = vpack.c.bf16 %v6586, %v6584
      %v6691 = vpack.c.bf16 %v6589, %v6587
      %v6692 = vpack.c.bf16 %v6590, %v6588
      %v6693 = vpack.c.bf16 %v6593, %v6591
      %v6694 = vpack.c.bf16 %v6594, %v6592
      %v6695 = vpack.c.bf16 %v6597, %v6595
      %v6696 = vpack.c.bf16 %v6598, %v6596
      %v6697 = vpack.c.bf16 %v6601, %v6599
      %v6698 = vpack.c.bf16 %v6602, %v6600
      %v6699 = vpack.c.bf16 %v6605, %v6603
      %v6700 = vpack.c.bf16 %v6606, %v6604
      %v6701 = vpack.c.bf16 %v6609, %v6607
      %v6702 = vpack.c.bf16 %v6610, %v6608
      %v6703 = vpack.c.bf16 %v6613, %v6611
      %v6704 = vpack.c.bf16 %v6614, %v6612
      %v6705 = vpack.c.bf16 %v6617, %v6615
      %v6706 = vpack.c.bf16 %v6618, %v6616
      %v6707 = vpack.c.bf16 %v6621, %v6619
      %v6708 = vpack.c.bf16 %v6622, %v6620
      %v6709 = vpack.c.bf16 %v6625, %v6623
      %v6710 = vpack.c.bf16 %v6626, %v6624
      %v6711 = vpack.c.bf16 %v6629, %v6627
      %v6712 = vpack.c.bf16 %v6630, %v6628
      %v6713 = vpack.c.bf16 %v6633, %v6631
      %v6714 = vpack.c.bf16 %v6634, %v6632
      %v6715 = vpack.c.bf16 %v6637, %v6635
      %v6716 = vpack.c.bf16 %v6638, %v6636
      %v6717 = vpack.c.bf16 %v6641, %v6639
      %v6718 = vpack.c.bf16 %v6642, %v6640
      %v6719 = vpack.c.bf16 %v6645, %v6643
      %v6720 = vpack.c.bf16 %v6646, %v6644
      %v6721 = vpack.c.bf16 %v6649, %v6647
      %v6722 = vpack.c.bf16 %v6650, %v6648
      %v6723 = vpack.c.bf16 %v6653, %v6651
      %v6724 = vpack.c.bf16 %v6654, %v6652
      %v6725 = vpack.c.bf16 %v6657, %v6655
      %v6726 = vpack.c.bf16 %v6658, %v6656
      %v6727 = vpack.c.bf16 %v6661, %v6659
      %v6728 = vpack.c.bf16 %v6662, %v6660
      %v6729 = vpack.c.bf16 %v6665, %v6663
      %v6730 = vpack.c.bf16 %v6666, %v6664
      %v6731 = vld [vmem:[%s15] sm:$0xff]
      %v6732 = vld [vmem:[%s15 + $0x8] sm:$0xff]
      %v6733 = vld [vmem:[%s15 + $0x10] sm:$0xff]
      %v6734 = vld [vmem:[%s15 + $0x18] sm:$0xff]
      %v6735 = vld [vmem:[%s15 + $0x20] sm:$0xff]
      %v6736 = vld [vmem:[%s15 + $0x28] sm:$0xff]
      %v6737 = vld [vmem:[%s15 + $0x30] sm:$0xff]
      %v6738 = vld [vmem:[%s15 + $0x38] sm:$0xff]
      %v6739 = vld [vmem:[%s15 + $0x40] sm:$0xff]
      %v6740 = vld [vmem:[%s15 + $0x48] sm:$0xff]
      %v6741 = vld [vmem:[%s15 + $0x50] sm:$0xff]
      %v6742 = vld [vmem:[%s15 + $0x58] sm:$0xff]
      %v6743 = vld [vmem:[%s15 + $0x60] sm:$0xff]
      %v6744 = vld [vmem:[%s15 + $0x68] sm:$0xff]
      %v6745 = vld [vmem:[%s15 + $0x70] sm:$0xff]
      %v6746 = vld [vmem:[%s15 + $0x78] sm:$0xff]
      %v6747 = vld [vmem:[%s15 + $0x80] sm:$0xff]
      %v6748 = vld [vmem:[%s15 + $0x88] sm:$0xff]
      %v6749 = vld [vmem:[%s15 + $0x90] sm:$0xff]
      %v6750 = vld [vmem:[%s15 + $0x98] sm:$0xff]
      %v6751 = vld [vmem:[%s15 + $0xa0] sm:$0xff]
      %v6752 = vld [vmem:[%s15 + $0xa8] sm:$0xff]
      %v6753 = vld [vmem:[%s15 + $0xb0] sm:$0xff]
      %v6754 = vld [vmem:[%s15 + $0xb8] sm:$0xff]
      %v6755 = vld [vmem:[%s15 + $0xc0] sm:$0xff]
      %v6756 = vld [vmem:[%s15 + $0xc8] sm:$0xff]
      %v6757 = vld [vmem:[%s15 + $0xd0] sm:$0xff]
      %v6758 = vld [vmem:[%s15 + $0xd8] sm:$0xff]
      %v6759 = vld [vmem:[%s15 + $0xe0] sm:$0xff]
      %v6760 = vld [vmem:[%s15 + $0xe8] sm:$0xff]
      %v6761 = vld [vmem:[%s15 + $0xf0] sm:$0xff]
      %v6762 = vld [vmem:[%s15 + $0xf8] sm:$0xff]
      %v6763 = vld [vmem:[%s16] sm:$0x3]
      %v6765 = vlaneseq
      %v6766 = vshrl.u32 %v6765, 7
      %v6767 = vsub.s32 0, %v6766
      %v6768 = vrot.slane %v6763, %v6767
      %v6769 = vlaneseq
      %v6770 = vshrl.u32 %v6769, 7
      %v6771 = vsub.s32 1, %v6770
      %v6772 = vrot.slane %v6763, %v6771
      %v6807 = vunpack.c.l.b16 %v6731
      %v6808 = vunpack.c.h.b16 %v6731
      %v6809 = vunpack.c.l.b16 %v6732
      %v6810 = vunpack.c.h.b16 %v6732
      %v6811 = vunpack.c.l.b16 %v6733
      %v6812 = vunpack.c.h.b16 %v6733
      %v6813 = vunpack.c.l.b16 %v6734
      %v6814 = vunpack.c.h.b16 %v6734
      %v6815 = vunpack.c.l.b16 %v6735
      %v6816 = vunpack.c.h.b16 %v6735
      %v6817 = vunpack.c.l.b16 %v6736
      %v6818 = vunpack.c.h.b16 %v6736
      %v6819 = vunpack.c.l.b16 %v6737
      %v6820 = vunpack.c.h.b16 %v6737
      %v6821 = vunpack.c.l.b16 %v6738
      %v6822 = vunpack.c.h.b16 %v6738
      %v6823 = vunpack.c.l.b16 %v6739
      %v6824 = vunpack.c.h.b16 %v6739
      %v6825 = vunpack.c.l.b16 %v6740
      %v6826 = vunpack.c.h.b16 %v6740
      %v6827 = vunpack.c.l.b16 %v6741
      %v6828 = vunpack.c.h.b16 %v6741
      %v6829 = vunpack.c.l.b16 %v6742
      %v6830 = vunpack.c.h.b16 %v6742
      %v6831 = vunpack.c.l.b16 %v6743
      %v6832 = vunpack.c.h.b16 %v6743
      %v6833 = vunpack.c.l.b16 %v6744
      %v6834 = vunpack.c.h.b16 %v6744
      %v6835 = vunpack.c.l.b16 %v6745
      %v6836 = vunpack.c.h.b16 %v6745
      %v6837 = vunpack.c.l.b16 %v6746
      %v6838 = vunpack.c.h.b16 %v6746
      %v6839 = vunpack.c.l.b16 %v6747
      %v6840 = vunpack.c.h.b16 %v6747
      %v6841 = vunpack.c.l.b16 %v6748
      %v6842 = vunpack.c.h.b16 %v6748
      %v6843 = vunpack.c.l.b16 %v6749
      %v6844 = vunpack.c.h.b16 %v6749
      %v6845 = vunpack.c.l.b16 %v6750
      %v6846 = vunpack.c.h.b16 %v6750
      %v6847 = vunpack.c.l.b16 %v6751
      %v6848 = vunpack.c.h.b16 %v6751
      %v6849 = vunpack.c.l.b16 %v6752
      %v6850 = vunpack.c.h.b16 %v6752
      %v6851 = vunpack.c.l.b16 %v6753
      %v6852 = vunpack.c.h.b16 %v6753
      %v6853 = vunpack.c.l.b16 %v6754
      %v6854 = vunpack.c.h.b16 %v6754
      %v6855 = vunpack.c.l.b16 %v6755
      %v6856 = vunpack.c.h.b16 %v6755
      %v6857 = vunpack.c.l.b16 %v6756
      %v6858 = vunpack.c.h.b16 %v6756
      %v6859 = vunpack.c.l.b16 %v6757
      %v6860 = vunpack.c.h.b16 %v6757
      %v6861 = vunpack.c.l.b16 %v6758
      %v6862 = vunpack.c.h.b16 %v6758
      %v6863 = vunpack.c.l.b16 %v6759
      %v6864 = vunpack.c.h.b16 %v6759
      %v6865 = vunpack.c.l.b16 %v6760
      %v6866 = vunpack.c.h.b16 %v6760
      %v6867 = vunpack.c.l.b16 %v6761
      %v6868 = vunpack.c.h.b16 %v6761
      %v6869 = vunpack.c.l.b16 %v6762
      %v6870 = vunpack.c.h.b16 %v6762
      %v6871 = vpack.c.b16 %v6809, %v6807
      %v6872 = vpack.c.b16 %v6810, %v6808
      %v6873 = vpack.c.b16 %v6813, %v6811
      %v6874 = vpack.c.b16 %v6814, %v6812
      %v6875 = vpack.c.b16 %v6817, %v6815
      %v6876 = vpack.c.b16 %v6818, %v6816
      %v6877 = vpack.c.b16 %v6821, %v6819
      %v6878 = vpack.c.b16 %v6822, %v6820
      %v6879 = vpack.c.b16 %v6825, %v6823
      %v6880 = vpack.c.b16 %v6826, %v6824
      %v6881 = vpack.c.b16 %v6829, %v6827
      %v6882 = vpack.c.b16 %v6830, %v6828
      %v6883 = vpack.c.b16 %v6833, %v6831
      %v6884 = vpack.c.b16 %v6834, %v6832
      %v6885 = vpack.c.b16 %v6837, %v6835
      %v6886 = vpack.c.b16 %v6838, %v6836
      %v6887 = vpack.c.b16 %v6841, %v6839
      %v6888 = vpack.c.b16 %v6842, %v6840
      %v6889 = vpack.c.b16 %v6845, %v6843
      %v6890 = vpack.c.b16 %v6846, %v6844
      %v6891 = vpack.c.b16 %v6849, %v6847
      %v6892 = vpack.c.b16 %v6850, %v6848
      %v6893 = vpack.c.b16 %v6853, %v6851
      %v6894 = vpack.c.b16 %v6854, %v6852
      %v6895 = vpack.c.b16 %v6857, %v6855
      %v6896 = vpack.c.b16 %v6858, %v6856
      %v6897 = vpack.c.b16 %v6861, %v6859
      %v6898 = vpack.c.b16 %v6862, %v6860
      %v6899 = vpack.c.b16 %v6865, %v6863
      %v6900 = vpack.c.b16 %v6866, %v6864
      %v6901 = vpack.c.b16 %v6869, %v6867
      %v6902 = vpack.c.b16 %v6870, %v6868
      %6935 = vmatprep.subr.bf16.mxu0 %v6872
      %6936 = vmatpush1.bf16.msra.mxu0 %v6871
      %6937 = vmatprep.subr.bf16.mxu0 %v6874
      %6938 = vmatpush1.bf16.msra.mxu0 %v6873
      %6939 = vmatprep.subr.bf16.mxu0 %v6876
      %6940 = vmatpush1.bf16.msra.mxu0 %v6875
      %6941 = vmatprep.subr.bf16.mxu0 %v6878
      %6942 = vmatpush1.bf16.msra.mxu0 %v6877
      %6943 = vmatprep.subr.bf16.mxu0 %v6880
      %6944 = vmatpush1.bf16.msra.mxu0 %v6879
      %6945 = vmatprep.subr.bf16.mxu0 %v6882
      %6946 = vmatpush1.bf16.msra.mxu0 %v6881
      %6947 = vmatprep.subr.bf16.mxu0 %v6884
      %6948 = vmatpush1.bf16.msra.mxu0 %v6883
      %6949 = vmatprep.subr.bf16.mxu0 %v6886
      %6950 = vmatpush1.bf16.msra.mxu0 %v6885
      %6951 = vmatprep.subr.bf16.mxu0 %v6888
      %6952 = vmatpush1.bf16.msra.mxu0 %v6887
      %6953 = vmatprep.subr.bf16.mxu0 %v6890
      %6954 = vmatpush1.bf16.msra.mxu0 %v6889
      %6955 = vmatprep.subr.bf16.mxu0 %v6892
      %6956 = vmatpush1.bf16.msra.mxu0 %v6891
      %6957 = vmatprep.subr.bf16.mxu0 %v6894
      %6958 = vmatpush1.bf16.msra.mxu0 %v6893
      %6959 = vmatprep.subr.bf16.mxu0 %v6896
      %6960 = vmatpush1.bf16.msra.mxu0 %v6895
      %6961 = vmatprep.subr.bf16.mxu0 %v6898
      %6962 = vmatpush1.bf16.msra.mxu0 %v6897
      %6963 = vmatprep.subr.bf16.mxu0 %v6900
      %6964 = vmatpush1.bf16.msra.mxu0 %v6899
      %6965 = vmatprep.subr.bf16.mxu0 %v6902
      %6966 = vmatpush1.bf16.msra.mxu0 %v6901
      %6967 = vmatprep.mubr.bf16.mxu0 %v6668
      %6968 = vmatmul.mubr.bf16.gmra.mrb[0].mxu0 %v6667
      %v6969 = vpop.f32.mrb[0].mxu0
      %v6970 = vadd.f32 %v6768, %v6969
      %v6971 = vpop.f32.mrb[0].mxu0
      %v6972 = vadd.f32 %v6772, %v6971
      %v6973 = vpop.f32.mrb[0].mxu0
      %v6974 = vadd.f32 %v6768, %v6973
      %v6975 = vpop.f32.mrb[0].mxu0
      %v6976 = vadd.f32 %v6772, %v6975
      %6977 = vmatprep.mubr.bf16.mxu0 %v6670
      %6978 = vmatmul.mubr.bf16.gmra.mrb[0].mxu0 %v6669
      %v6979 = vpop.f32.mrb[0].mxu0
      %v6980 = vadd.f32 %v6768, %v6979
      %v6981 = vpop.f32.mrb[0].mxu0
      %v6982 = vadd.f32 %v6772, %v6981
      %v6983 = vpop.f32.mrb[0].mxu0
      %v6984 = vadd.f32 %v6768, %v6983
      %v6985 = vpop.f32.mrb[0].mxu0
      %v6986 = vadd.f32 %v6772, %v6985
      %6987 = vmatprep.mubr.bf16.mxu0 %v6672
      %6988 = vmatmul.mubr.bf16.gmra.mrb[0].mxu0 %v6671
      %v6989 = vpop.f32.mrb[0].mxu0
      %v6990 = vadd.f32 %v6768, %v6989
      %v6991 = vpop.f32.mrb[0].mxu0
      %v6992 = vadd.f32 %v6772, %v6991
      %v6993 = vpop.f32.mrb[0].mxu0
      %v6994 = vadd.f32 %v6768, %v6993
      %v6995 = vpop.f32.mrb[0].mxu0
      %v6996 = vadd.f32 %v6772, %v6995
      %6997 = vmatprep.mubr.bf16.mxu0 %v6674
      %6998 = vmatmul.mubr.bf16.gmra.mrb[0].mxu0 %v6673
      %v6999 = vpop.f32.mrb[0].mxu0
      %v7000 = vadd.f32 %v6768, %v6999
      %v7001 = vpop.f32.mrb[0].mxu0
      %v7002 = vadd.f32 %v6772, %v7001
      %v7003 = vpop.f32.mrb[0].mxu0
      %v7004 = vadd.f32 %v6768, %v7003
      %v7005 = vpop.f32.mrb[0].mxu0
      %v7006 = vadd.f32 %v6772, %v7005
      %7007 = vmatprep.mubr.bf16.mxu0 %v6676
      %7008 = vmatmul.mubr.bf16.gmra.mrb[0].mxu0 %v6675
      %v7009 = vpop.f32.mrb[0].mxu0
      %v7010 = vadd.f32 %v6768, %v7009
      %v7011 = vpop.f32.mrb[0].mxu0
      %v7012 = vadd.f32 %v6772, %v7011
      %v7013 = vpop.f32.mrb[0].mxu0
      %v7014 = vadd.f32 %v6768, %v7013
      %v7015 = vpop.f32.mrb[0].mxu0
      %v7016 = vadd.f32 %v6772, %v7015
      %7017 = vmatprep.mubr.bf16.mxu0 %v6678
      %7018 = vmatmul.mubr.bf16.gmra.mrb[0].mxu0 %v6677
      %v7019 = vpop.f32.mrb[0].mxu0
      %v7020 = vadd.f32 %v6768, %v7019
      %v7021 = vpop.f32.mrb[0].mxu0
      %v7022 = vadd.f32 %v6772, %v7021
      %v7023 = vpop.f32.mrb[0].mxu0
      %v7024 = vadd.f32 %v6768, %v7023
      %v7025 = vpop.f32.mrb[0].mxu0
      %v7026 = vadd.f32 %v6772, %v7025
      %7027 = vmatprep.mubr.bf16.mxu0 %v6680
      %7028 = vmatmul.mubr.bf16.gmra.mrb[0].mxu0 %v6679
      %v7029 = vpop.f32.mrb[0].mxu0
      %v7030 = vadd.f32 %v6768, %v7029
      %v7031 = vpop.f32.mrb[0].mxu0
      %v7032 = vadd.f32 %v6772, %v7031
      %v7033 = vpop.f32.mrb[0].mxu0
      %v7034 = vadd.f32 %v6768, %v7033
      %v7035 = vpop.f32.mrb[0].mxu0
      %v7036 = vadd.f32 %v6772, %v7035
      %7037 = vmatprep.mubr.bf16.mxu0 %v6682
      %7038 = vmatmul.mubr.bf16.gmra.mrb[0].mxu0 %v6681
      %v7039 = vpop.f32.mrb[0].mxu0
      %v7040 = vadd.f32 %v6768, %v7039
      %v7041 = vpop.f32.mrb[0].mxu0
      %v7042 = vadd.f32 %v6772, %v7041
      %v7043 = vpop.f32.mrb[0].mxu0
      %v7044 = vadd.f32 %v6768, %v7043
      %v7045 = vpop.f32.mrb[0].mxu0
      %v7046 = vadd.f32 %v6772, %v7045
      %7047 = vmatprep.mubr.bf16.mxu0 %v6684
      %7048 = vmatmul.mubr.bf16.gmra.mrb[0].mxu0 %v6683
      %v7049 = vpop.f32.mrb[0].mxu0
      %v7050 = vadd.f32 %v6768, %v7049
      %v7051 = vpop.f32.mrb[0].mxu0
      %v7052 = vadd.f32 %v6772, %v7051
      %v7053 = vpop.f32.mrb[0].mxu0
      %v7054 = vadd.f32 %v6768, %v7053
      %v7055 = vpop.f32.mrb[0].mxu0
      %v7056 = vadd.f32 %v6772, %v7055
      %7057 = vmatprep.mubr.bf16.mxu0 %v6686
      %7058 = vmatmul.mubr.bf16.gmra.mrb[0].mxu0 %v6685
      %v7059 = vpop.f32.mrb[0].mxu0
      %v7060 = vadd.f32 %v6768, %v7059
      %v7061 = vpop.f32.mrb[0].mxu0
      %v7062 = vadd.f32 %v6772, %v7061
      %v7063 = vpop.f32.mrb[0].mxu0
      %v7064 = vadd.f32 %v6768, %v7063
      %v7065 = vpop.f32.mrb[0].mxu0
      %v7066 = vadd.f32 %v6772, %v7065
      %7067 = vmatprep.mubr.bf16.mxu0 %v6688
      %7068 = vmatmul.mubr.bf16.gmra.mrb[0].mxu0 %v6687
      %v7069 = vpop.f32.mrb[0].mxu0
      %v7070 = vadd.f32 %v6768, %v7069
      %v7071 = vpop.f32.mrb[0].mxu0
      %v7072 = vadd.f32 %v6772, %v7071
      %v7073 = vpop.f32.mrb[0].mxu0
      %v7074 = vadd.f32 %v6768, %v7073
      %v7075 = vpop.f32.mrb[0].mxu0
      %v7076 = vadd.f32 %v6772, %v7075
      %7077 = vmatprep.mubr.bf16.mxu0 %v6690
      %7078 = vmatmul.mubr.bf16.gmra.mrb[0].mxu0 %v6689
      %v7079 = vpop.f32.mrb[0].mxu0
      %v7080 = vadd.f32 %v6768, %v7079
      %v7081 = vpop.f32.mrb[0].mxu0
      %v7082 = vadd.f32 %v6772, %v7081
      %v7083 = vpop.f32.mrb[0].mxu0
      %v7084 = vadd.f32 %v6768, %v7083
      %v7085 = vpop.f32.mrb[0].mxu0
      %v7086 = vadd.f32 %v6772, %v7085
      %7087 = vmatprep.mubr.bf16.mxu0 %v6692
      %7088 = vmatmul.mubr.bf16.gmra.mrb[0].mxu0 %v6691
      %v7089 = vpop.f32.mrb[0].mxu0
      %v7090 = vadd.f32 %v6768, %v7089
      %v7091 = vpop.f32.mrb[0].mxu0
      %v7092 = vadd.f32 %v6772, %v7091
      %v7093 = vpop.f32.mrb[0].mxu0
      %v7094 = vadd.f32 %v6768, %v7093
      %v7095 = vpop.f32.mrb[0].mxu0
      %v7096 = vadd.f32 %v6772, %v7095
      %7097 = vmatprep.mubr.bf16.mxu0 %v6694
      %7098 = vmatmul.mubr.bf16.gmra.mrb[0].mxu0 %v6693
      %v7099 = vpop.f32.mrb[0].mxu0
      %v7100 = vadd.f32 %v6768, %v7099
      %v7101 = vpop.f32.mrb[0].mxu0
      %v7102 = vadd.f32 %v6772, %v7101
      %v7103 = vpop.f32.mrb[0].mxu0
      %v7104 = vadd.f32 %v6768, %v7103
      %v7105 = vpop.f32.mrb[0].mxu0
      %v7106 = vadd.f32 %v6772, %v7105
      %7107 = vmatprep.mubr.bf16.mxu0 %v6696
      %7108 = vmatmul.mubr.bf16.gmra.mrb[0].mxu0 %v6695
      %v7109 = vpop.f32.mrb[0].mxu0
      %v7110 = vadd.f32 %v6768, %v7109
      %v7111 = vpop.f32.mrb[0].mxu0
      %v7112 = vadd.f32 %v6772, %v7111
      %v7113 = vpop.f32.mrb[0].mxu0
      %v7114 = vadd.f32 %v6768, %v7113
      %v7115 = vpop.f32.mrb[0].mxu0
      %v7116 = vadd.f32 %v6772, %v7115
      %7117 = vmatprep.mubr.bf16.mxu0 %v6698
      %7118 = vmatmul.mubr.bf16.gmra.mrb[0].mxu0 %v6697
      %v7119 = vpop.f32.mrb[0].mxu0
      %v7120 = vadd.f32 %v6768, %v7119
      %v7121 = vpop.f32.mrb[0].mxu0
      %v7122 = vadd.f32 %v6772, %v7121
      %v7123 = vpop.f32.mrb[0].mxu0
      %v7124 = vadd.f32 %v6768, %v7123
      %v7125 = vpop.f32.mrb[0].mxu0
      %v7126 = vadd.f32 %v6772, %v7125
      %7127 = vmatprep.mubr.bf16.mxu0 %v6700
      %7128 = vmatmul.mubr.bf16.gmra.mrb[0].mxu0 %v6699
      %v7129 = vpop.f32.mrb[0].mxu0
      %v7130 = vadd.f32 %v6768, %v7129
      %v7131 = vpop.f32.mrb[0].mxu0
      %v7132 = vadd.f32 %v6772, %v7131
      %v7133 = vpop.f32.mrb[0].mxu0
      %v7134 = vadd.f32 %v6768, %v7133
      %v7135 = vpop.f32.mrb[0].mxu0
      %v7136 = vadd.f32 %v6772, %v7135
      %7137 = vmatprep.mubr.bf16.mxu0 %v6702
      %7138 = vmatmul.mubr.bf16.gmra.mrb[0].mxu0 %v6701
      %v7139 = vpop.f32.mrb[0].mxu0
      %v7140 = vadd.f32 %v6768, %v7139
      %v7141 = vpop.f32.mrb[0].mxu0
      %v7142 = vadd.f32 %v6772, %v7141
      %v7143 = vpop.f32.mrb[0].mxu0
      %v7144 = vadd.f32 %v6768, %v7143
      %v7145 = vpop.f32.mrb[0].mxu0
      %v7146 = vadd.f32 %v6772, %v7145
      %7147 = vmatprep.mubr.bf16.mxu0 %v6704
      %7148 = vmatmul.mubr.bf16.gmra.mrb[0].mxu0 %v6703
      %v7149 = vpop.f32.mrb[0].mxu0
      %v7150 = vadd.f32 %v6768, %v7149
      %v7151 = vpop.f32.mrb[0].mxu0
      %v7152 = vadd.f32 %v6772, %v7151
      %v7153 = vpop.f32.mrb[0].mxu0
      %v7154 = vadd.f32 %v6768, %v7153
      %v7155 = vpop.f32.mrb[0].mxu0
      %v7156 = vadd.f32 %v6772, %v7155
      %7157 = vmatprep.mubr.bf16.mxu0 %v6706
      %7158 = vmatmul.mubr.bf16.gmra.mrb[0].mxu0 %v6705
      %v7159 = vpop.f32.mrb[0].mxu0
      %v7160 = vadd.f32 %v6768, %v7159
      %v7161 = vpop.f32.mrb[0].mxu0
      %v7162 = vadd.f32 %v6772, %v7161
      %v7163 = vpop.f32.mrb[0].mxu0
      %v7164 = vadd.f32 %v6768, %v7163
      %v7165 = vpop.f32.mrb[0].mxu0
      %v7166 = vadd.f32 %v6772, %v7165
      %7167 = vmatprep.mubr.bf16.mxu0 %v6708
      %7168 = vmatmul.mubr.bf16.gmra.mrb[0].mxu0 %v6707
      %v7169 = vpop.f32.mrb[0].mxu0
      %v7170 = vadd.f32 %v6768, %v7169
      %v7171 = vpop.f32.mrb[0].mxu0
      %v7172 = vadd.f32 %v6772, %v7171
      %v7173 = vpop.f32.mrb[0].mxu0
      %v7174 = vadd.f32 %v6768, %v7173
      %v7175 = vpop.f32.mrb[0].mxu0
      %v7176 = vadd.f32 %v6772, %v7175
      %7177 = vmatprep.mubr.bf16.mxu0 %v6710
      %7178 = vmatmul.mubr.bf16.gmra.mrb[0].mxu0 %v6709
      %v7179 = vpop.f32.mrb[0].mxu0
      %v7180 = vadd.f32 %v6768, %v7179
      %v7181 = vpop.f32.mrb[0].mxu0
      %v7182 = vadd.f32 %v6772, %v7181
      %v7183 = vpop.f32.mrb[0].mxu0
      %v7184 = vadd.f32 %v6768, %v7183
      %v7185 = vpop.f32.mrb[0].mxu0
      %v7186 = vadd.f32 %v6772, %v7185
      %7187 = vmatprep.mubr.bf16.mxu0 %v6712
      %7188 = vmatmul.mubr.bf16.gmra.mrb[0].mxu0 %v6711
      %v7189 = vpop.f32.mrb[0].mxu0
      %v7190 = vadd.f32 %v6768, %v7189
      %v7191 = vpop.f32.mrb[0].mxu0
      %v7192 = vadd.f32 %v6772, %v7191
      %v7193 = vpop.f32.mrb[0].mxu0
      %v7194 = vadd.f32 %v6768, %v7193
      %v7195 = vpop.f32.mrb[0].mxu0
      %v7196 = vadd.f32 %v6772, %v7195
      %7197 = vmatprep.mubr.bf16.mxu0 %v6714
      %7198 = vmatmul.mubr.bf16.gmra.mrb[0].mxu0 %v6713
      %v7199 = vpop.f32.mrb[0].mxu0
      %v7200 = vadd.f32 %v6768, %v7199
      %v7201 = vpop.f32.mrb[0].mxu0
      %v7202 = vadd.f32 %v6772, %v7201
      %v7203 = vpop.f32.mrb[0].mxu0
      %v7204 = vadd.f32 %v6768, %v7203
      %v7205 = vpop.f32.mrb[0].mxu0
      %v7206 = vadd.f32 %v6772, %v7205
      %7207 = vmatprep.mubr.bf16.mxu0 %v6716
      %7208 = vmatmul.mubr.bf16.gmra.mrb[0].mxu0 %v6715
      %v7209 = vpop.f32.mrb[0].mxu0
      %v7210 = vadd.f32 %v6768, %v7209
      %v7211 = vpop.f32.mrb[0].mxu0
      %v7212 = vadd.f32 %v6772, %v7211
      %v7213 = vpop.f32.mrb[0].mxu0
      %v7214 = vadd.f32 %v6768, %v7213
      %v7215 = vpop.f32.mrb[0].mxu0
      %v7216 = vadd.f32 %v6772, %v7215
      %7217 = vmatprep.mubr.bf16.mxu0 %v6718
      %7218 = vmatmul.mubr.bf16.gmra.mrb[0].mxu0 %v6717
      %v7219 = vpop.f32.mrb[0].mxu0
      %v7220 = vadd.f32 %v6768, %v7219
      %v7221 = vpop.f32.mrb[0].mxu0
      %v7222 = vadd.f32 %v6772, %v7221
      %v7223 = vpop.f32.mrb[0].mxu0
      %v7224 = vadd.f32 %v6768, %v7223
      %v7225 = vpop.f32.mrb[0].mxu0
      %v7226 = vadd.f32 %v6772, %v7225
      %7227 = vmatprep.mubr.bf16.mxu0 %v6720
      %7228 = vmatmul.mubr.bf16.gmra.mrb[0].mxu0 %v6719
      %v7229 = vpop.f32.mrb[0].mxu0
      %v7230 = vadd.f32 %v6768, %v7229
      %v7231 = vpop.f32.mrb[0].mxu0
      %v7232 = vadd.f32 %v6772, %v7231
      %v7233 = vpop.f32.mrb[0].mxu0
      %v7234 = vadd.f32 %v6768, %v7233
      %v7235 = vpop.f32.mrb[0].mxu0
      %v7236 = vadd.f32 %v6772, %v7235
      %7237 = vmatprep.mubr.bf16.mxu0 %v6722
      %7238 = vmatmul.mubr.bf16.gmra.mrb[0].mxu0 %v6721
      %v7239 = vpop.f32.mrb[0].mxu0
      %v7240 = vadd.f32 %v6768, %v7239
      %v7241 = vpop.f32.mrb[0].mxu0
      %v7242 = vadd.f32 %v6772, %v7241
      %v7243 = vpop.f32.mrb[0].mxu0
      %v7244 = vadd.f32 %v6768, %v7243
      %v7245 = vpop.f32.mrb[0].mxu0
      %v7246 = vadd.f32 %v6772, %v7245
      %7247 = vmatprep.mubr.bf16.mxu0 %v6724
      %7248 = vmatmul.mubr.bf16.gmra.mrb[0].mxu0 %v6723
      %v7249 = vpop.f32.mrb[0].mxu0
      %v7250 = vadd.f32 %v6768, %v7249
      %v7251 = vpop.f32.mrb[0].mxu0
      %v7252 = vadd.f32 %v6772, %v7251
      %v7253 = vpop.f32.mrb[0].mxu0
      %v7254 = vadd.f32 %v6768, %v7253
      %v7255 = vpop.f32.mrb[0].mxu0
      %v7256 = vadd.f32 %v6772, %v7255
      %7257 = vmatprep.mubr.bf16.mxu0 %v6726
      %7258 = vmatmul.mubr.bf16.gmra.mrb[0].mxu0 %v6725
      %v7259 = vpop.f32.mrb[0].mxu0
      %v7260 = vadd.f32 %v6768, %v7259
      %v7261 = vpop.f32.mrb[0].mxu0
      %v7262 = vadd.f32 %v6772, %v7261
      %v7263 = vpop.f32.mrb[0].mxu0
      %v7264 = vadd.f32 %v6768, %v7263
      %v7265 = vpop.f32.mrb[0].mxu0
      %v7266 = vadd.f32 %v6772, %v7265
      %7267 = vmatprep.mubr.bf16.mxu0 %v6728
      %7268 = vmatmul.mubr.bf16.gmra.mrb[0].mxu0 %v6727
      %v7269 = vpop.f32.mrb[0].mxu0
      %v7270 = vadd.f32 %v6768, %v7269
      %v7271 = vpop.f32.mrb[0].mxu0
      %v7272 = vadd.f32 %v6772, %v7271
      %v7273 = vpop.f32.mrb[0].mxu0
      %v7274 = vadd.f32 %v6768, %v7273
      %v7275 = vpop.f32.mrb[0].mxu0
      %v7276 = vadd.f32 %v6772, %v7275
      %7277 = vmatprep.mubr.bf16.mxu0 %v6730
      %7278 = vmatmul.mubr.bf16.gmra.mrb[0].mxu0 %v6729
      %v7279 = vpop.f32.mrb[0].mxu0
      %v7280 = vadd.f32 %v6768, %v7279
      %v7281 = vpop.f32.mrb[0].mxu0
      %v7282 = vadd.f32 %v6772, %v7281
      %v7283 = vpop.f32.mrb[0].mxu0
      %v7284 = vadd.f32 %v6768, %v7283
      %v7285 = vpop.f32.mrb[0].mxu0
      %v7286 = vadd.f32 %v6772, %v7285
      %7287 = vdwg.mxu0
      %v7288 = vmax.f32 %v6970, 0.0
      %v7289 = vmax.f32 %v6972, 0.0
      %v7290 = vmax.f32 %v6974, 0.0
      %v7291 = vmax.f32 %v6976, 0.0
      %v7292 = vmax.f32 %v6980, 0.0
      %v7293 = vmax.f32 %v6982, 0.0
      %v7294 = vmax.f32 %v6984, 0.0
      %v7295 = vmax.f32 %v6986, 0.0
      %v7296 = vmax.f32 %v6990, 0.0
      %v7297 = vmax.f32 %v6992, 0.0
      %v7298 = vmax.f32 %v6994, 0.0
      %v7299 = vmax.f32 %v6996, 0.0
      %v7300 = vmax.f32 %v7000, 0.0
      %v7301 = vmax.f32 %v7002, 0.0
      %v7302 = vmax.f32 %v7004, 0.0
      %v7303 = vmax.f32 %v7006, 0.0
      %v7304 = vmax.f32 %v7010, 0.0
      %v7305 = vmax.f32 %v7012, 0.0
      %v7306 = vmax.f32 %v7014, 0.0
      %v7307 = vmax.f32 %v7016, 0.0
      %v7308 = vmax.f32 %v7020, 0.0
      %v7309 = vmax.f32 %v7022, 0.0
      %v7310 = vmax.f32 %v7024, 0.0
      %v7311 = vmax.f32 %v7026, 0.0
      %v7312 = vmax.f32 %v7030, 0.0
      %v7313 = vmax.f32 %v7032, 0.0
      %v7314 = vmax.f32 %v7034, 0.0
      %v7315 = vmax.f32 %v7036, 0.0
      %v7316 = vmax.f32 %v7040, 0.0
      %v7317 = vmax.f32 %v7042, 0.0
      %v7318 = vmax.f32 %v7044, 0.0
      %v7319 = vmax.f32 %v7046, 0.0
      %v7320 = vmax.f32 %v7050, 0.0
      %v7321 = vmax.f32 %v7052, 0.0
      %v7322 = vmax.f32 %v7054, 0.0
      %v7323 = vmax.f32 %v7056, 0.0
      %v7324 = vmax.f32 %v7060, 0.0
      %v7325 = vmax.f32 %v7062, 0.0
      %v7326 = vmax.f32 %v7064, 0.0
      %v7327 = vmax.f32 %v7066, 0.0
      %v7328 = vmax.f32 %v7070, 0.0
      %v7329 = vmax.f32 %v7072, 0.0
      %v7330 = vmax.f32 %v7074, 0.0
      %v7331 = vmax.f32 %v7076, 0.0
      %v7332 = vmax.f32 %v7080, 0.0
      %v7333 = vmax.f32 %v7082, 0.0
      %v7334 = vmax.f32 %v7084, 0.0
      %v7335 = vmax.f32 %v7086, 0.0
      %v7336 = vmax.f32 %v7090, 0.0
      %v7337 = vmax.f32 %v7092, 0.0
      %v7338 = vmax.f32 %v7094, 0.0
      %v7339 = vmax.f32 %v7096, 0.0
      %v7340 = vmax.f32 %v7100, 0.0
      %v7341 = vmax.f32 %v7102, 0.0
      %v7342 = vmax.f32 %v7104, 0.0
      %v7343 = vmax.f32 %v7106, 0.0
      %v7344 = vmax.f32 %v7110, 0.0
      %v7345 = vmax.f32 %v7112, 0.0
      %v7346 = vmax.f32 %v7114, 0.0
      %v7347 = vmax.f32 %v7116, 0.0
      %v7348 = vmax.f32 %v7120, 0.0
      %v7349 = vmax.f32 %v7122, 0.0
      %v7350 = vmax.f32 %v7124, 0.0
      %v7351 = vmax.f32 %v7126, 0.0
      %v7352 = vmax.f32 %v7130, 0.0
      %v7353 = vmax.f32 %v7132, 0.0
      %v7354 = vmax.f32 %v7134, 0.0
      %v7355 = vmax.f32 %v7136, 0.0
      %v7356 = vmax.f32 %v7140, 0.0
      %v7357 = vmax.f32 %v7142, 0.0
      %v7358 = vmax.f32 %v7144, 0.0
      %v7359 = vmax.f32 %v7146, 0.0
      %v7360 = vmax.f32 %v7150, 0.0
      %v7361 = vmax.f32 %v7152, 0.0
      %v7362 = vmax.f32 %v7154, 0.0
      %v7363 = vmax.f32 %v7156, 0.0
      %v7364 = vmax.f32 %v7160, 0.0
      %v7365 = vmax.f32 %v7162, 0.0
      %v7366 = vmax.f32 %v7164, 0.0
      %v7367 = vmax.f32 %v7166, 0.0
      %v7368 = vmax.f32 %v7170, 0.0
      %v7369 = vmax.f32 %v7172, 0.0
      %v7370 = vmax.f32 %v7174, 0.0
      %v7371 = vmax.f32 %v7176, 0.0
      %v7372 = vmax.f32 %v7180, 0.0
      %v7373 = vmax.f32 %v7182, 0.0
      %v7374 = vmax.f32 %v7184, 0.0
      %v7375 = vmax.f32 %v7186, 0.0
      %v7376 = vmax.f32 %v7190, 0.0
      %v7377 = vmax.f32 %v7192, 0.0
      %v7378 = vmax.f32 %v7194, 0.0
      %v7379 = vmax.f32 %v7196, 0.0
      %v7380 = vmax.f32 %v7200, 0.0
      %v7381 = vmax.f32 %v7202, 0.0
      %v7382 = vmax.f32 %v7204, 0.0
      %v7383 = vmax.f32 %v7206, 0.0
      %v7384 = vmax.f32 %v7210, 0.0
      %v7385 = vmax.f32 %v7212, 0.0
      %v7386 = vmax.f32 %v7214, 0.0
      %v7387 = vmax.f32 %v7216, 0.0
      %v7388 = vmax.f32 %v7220, 0.0
      %v7389 = vmax.f32 %v7222, 0.0
      %v7390 = vmax.f32 %v7224, 0.0
      %v7391 = vmax.f32 %v7226, 0.0
      %v7392 = vmax.f32 %v7230, 0.0
      %v7393 = vmax.f32 %v7232, 0.0
      %v7394 = vmax.f32 %v7234, 0.0
      %v7395 = vmax.f32 %v7236, 0.0
      %v7396 = vmax.f32 %v7240, 0.0
      %v7397 = vmax.f32 %v7242, 0.0
      %v7398 = vmax.f32 %v7244, 0.0
      %v7399 = vmax.f32 %v7246, 0.0
      %v7400 = vmax.f32 %v7250, 0.0
      %v7401 = vmax.f32 %v7252, 0.0
      %v7402 = vmax.f32 %v7254, 0.0
      %v7403 = vmax.f32 %v7256, 0.0
      %v7404 = vmax.f32 %v7260, 0.0
      %v7405 = vmax.f32 %v7262, 0.0
      %v7406 = vmax.f32 %v7264, 0.0
      %v7407 = vmax.f32 %v7266, 0.0
      %v7408 = vmax.f32 %v7270, 0.0
      %v7409 = vmax.f32 %v7272, 0.0
      %v7410 = vmax.f32 %v7274, 0.0
      %v7411 = vmax.f32 %v7276, 0.0
      %v7412 = vmax.f32 %v7280, 0.0
      %v7413 = vmax.f32 %v7282, 0.0
      %v7414 = vmax.f32 %v7284, 0.0
      %v7415 = vmax.f32 %v7286, 0.0
      %v7416 = vpack.c.bf16 %v7290, %v7288
      %v7417 = vpack.c.bf16 %v7291, %v7289
      %v7418 = vpack.c.bf16 %v7294, %v7292
      %v7419 = vpack.c.bf16 %v7295, %v7293
      %v7420 = vpack.c.bf16 %v7298, %v7296
      %v7421 = vpack.c.bf16 %v7299, %v7297
      %v7422 = vpack.c.bf16 %v7302, %v7300
      %v7423 = vpack.c.bf16 %v7303, %v7301
      %v7424 = vpack.c.bf16 %v7306, %v7304
      %v7425 = vpack.c.bf16 %v7307, %v7305
      %v7426 = vpack.c.bf16 %v7310, %v7308
      %v7427 = vpack.c.bf16 %v7311, %v7309
      %v7428 = vpack.c.bf16 %v7314, %v7312
      %v7429 = vpack.c.bf16 %v7315, %v7313
      %v7430 = vpack.c.bf16 %v7318, %v7316
      %v7431 = vpack.c.bf16 %v7319, %v7317
      %v7432 = vpack.c.bf16 %v7322, %v7320
      %v7433 = vpack.c.bf16 %v7323, %v7321
      %v7434 = vpack.c.bf16 %v7326, %v7324
      %v7435 = vpack.c.bf16 %v7327, %v7325
      %v7436 = vpack.c.bf16 %v7330, %v7328
      %v7437 = vpack.c.bf16 %v7331, %v7329
      %v7438 = vpack.c.bf16 %v7334, %v7332
      %v7439 = vpack.c.bf16 %v7335, %v7333
      %v7440 = vpack.c.bf16 %v7338, %v7336
      %v7441 = vpack.c.bf16 %v7339, %v7337
      %v7442 = vpack.c.bf16 %v7342, %v7340
      %v7443 = vpack.c.bf16 %v7343, %v7341
      %v7444 = vpack.c.bf16 %v7346, %v7344
      %v7445 = vpack.c.bf16 %v7347, %v7345
      %v7446 = vpack.c.bf16 %v7350, %v7348
      %v7447 = vpack.c.bf16 %v7351, %v7349
      %v7448 = vpack.c.bf16 %v7354, %v7352
      %v7449 = vpack.c.bf16 %v7355, %v7353
      %v7450 = vpack.c.bf16 %v7358, %v7356
      %v7451 = vpack.c.bf16 %v7359, %v7357
      %v7452 = vpack.c.bf16 %v7362, %v7360
      %v7453 = vpack.c.bf16 %v7363, %v7361
      %v7454 = vpack.c.bf16 %v7366, %v7364
      %v7455 = vpack.c.bf16 %v7367, %v7365
      %v7456 = vpack.c.bf16 %v7370, %v7368
      %v7457 = vpack.c.bf16 %v7371, %v7369
      %v7458 = vpack.c.bf16 %v7374, %v7372
      %v7459 = vpack.c.bf16 %v7375, %v7373
      %v7460 = vpack.c.bf16 %v7378, %v7376
      %v7461 = vpack.c.bf16 %v7379, %v7377
      %v7462 = vpack.c.bf16 %v7382, %v7380
      %v7463 = vpack.c.bf16 %v7383, %v7381
      %v7464 = vpack.c.bf16 %v7386, %v7384
      %v7465 = vpack.c.bf16 %v7387, %v7385
      %v7466 = vpack.c.bf16 %v7390, %v7388
      %v7467 = vpack.c.bf16 %v7391, %v7389
      %v7468 = vpack.c.bf16 %v7394, %v7392
      %v7469 = vpack.c.bf16 %v7395, %v7393
      %v7470 = vpack.c.bf16 %v7398, %v7396
      %v7471 = vpack.c.bf16 %v7399, %v7397
      %v7472 = vpack.c.bf16 %v7402, %v7400
      %v7473 = vpack.c.bf16 %v7403, %v7401
      %v7474 = vpack.c.bf16 %v7406, %v7404
      %v7475 = vpack.c.bf16 %v7407, %v7405
      %v7476 = vpack.c.bf16 %v7410, %v7408
      %v7477 = vpack.c.bf16 %v7411, %v7409
      %v7478 = vpack.c.bf16 %v7414, %v7412
      %v7479 = vpack.c.bf16 %v7415, %v7413
      %v7480 = vld [vmem:[%s17] sm:$0xf]
      %v7481 = vld [vmem:[%s17 + $0x4] sm:$0xf]
      %v7482 = vld [vmem:[%s17 + $0x8] sm:$0xf]
      %v7483 = vld [vmem:[%s17 + $0xc] sm:$0xf]
      %v7484 = vld [vmem:[%s17 + $0x10] sm:$0xf]
      %v7485 = vld [vmem:[%s17 + $0x14] sm:$0xf]
      %v7486 = vld [vmem:[%s17 + $0x18] sm:$0xf]
      %v7487 = vld [vmem:[%s17 + $0x1c] sm:$0xf]
      %v7488 = vld [vmem:[%s17 + $0x20] sm:$0xf]
      %v7489 = vld [vmem:[%s17 + $0x24] sm:$0xf]
      %v7490 = vld [vmem:[%s17 + $0x28] sm:$0xf]
      %v7491 = vld [vmem:[%s17 + $0x2c] sm:$0xf]
      %v7492 = vld [vmem:[%s17 + $0x30] sm:$0xf]
      %v7493 = vld [vmem:[%s17 + $0x34] sm:$0xf]
      %v7494 = vld [vmem:[%s17 + $0x38] sm:$0xf]
      %v7495 = vld [vmem:[%s17 + $0x3c] sm:$0xf]
      %v7496 = vld [vmem:[%s17 + $0x40] sm:$0xf]
      %v7497 = vld [vmem:[%s17 + $0x44] sm:$0xf]
      %v7498 = vld [vmem:[%s17 + $0x48] sm:$0xf]
      %v7499 = vld [vmem:[%s17 + $0x4c] sm:$0xf]
      %v7500 = vld [vmem:[%s17 + $0x50] sm:$0xf]
      %v7501 = vld [vmem:[%s17 + $0x54] sm:$0xf]
      %v7502 = vld [vmem:[%s17 + $0x58] sm:$0xf]
      %v7503 = vld [vmem:[%s17 + $0x5c] sm:$0xf]
      %v7504 = vld [vmem:[%s17 + $0x60] sm:$0xf]
      %v7505 = vld [vmem:[%s17 + $0x64] sm:$0xf]
      %v7506 = vld [vmem:[%s17 + $0x68] sm:$0xf]
      %v7507 = vld [vmem:[%s17 + $0x6c] sm:$0xf]
      %v7508 = vld [vmem:[%s17 + $0x70] sm:$0xf]
      %v7509 = vld [vmem:[%s17 + $0x74] sm:$0xf]
      %v7510 = vld [vmem:[%s17 + $0x78] sm:$0xf]
      %v7511 = vld [vmem:[%s17 + $0x7c] sm:$0xf]
      %v7512 = vld [vmem:[%s18] sm:$0x1]
      %v7514 = vlaneseq
      %v7515 = vshrl.u32 %v7514, 7
      %v7516 = vsub.s32 0, %v7515
      %v7517 = vrot.slane %v7512, %v7516
      %v7551 = vunpack.c.l.b16 %v7480
      %v7552 = vunpack.c.l.b16 %v7481
      %v7553 = vunpack.c.l.b16 %v7482
      %v7554 = vunpack.c.l.b16 %v7483
      %v7555 = vunpack.c.l.b16 %v7484
      %v7556 = vunpack.c.l.b16 %v7485
      %v7557 = vunpack.c.l.b16 %v7486
      %v7558 = vunpack.c.l.b16 %v7487
      %v7559 = vunpack.c.l.b16 %v7488
      %v7560 = vunpack.c.l.b16 %v7489
      %v7561 = vunpack.c.l.b16 %v7490
      %v7562 = vunpack.c.l.b16 %v7491
      %v7563 = vunpack.c.l.b16 %v7492
      %v7564 = vunpack.c.l.b16 %v7493
      %v7565 = vunpack.c.l.b16 %v7494
      %v7566 = vunpack.c.l.b16 %v7495
      %v7567 = vunpack.c.l.b16 %v7496
      %v7568 = vunpack.c.l.b16 %v7497
      %v7569 = vunpack.c.l.b16 %v7498
      %v7570 = vunpack.c.l.b16 %v7499
      %v7571 = vunpack.c.l.b16 %v7500
      %v7572 = vunpack.c.l.b16 %v7501
      %v7573 = vunpack.c.l.b16 %v7502
      %v7574 = vunpack.c.l.b16 %v7503
      %v7575 = vunpack.c.l.b16 %v7504
      %v7576 = vunpack.c.l.b16 %v7505
      %v7577 = vunpack.c.l.b16 %v7506
      %v7578 = vunpack.c.l.b16 %v7507
      %v7579 = vunpack.c.l.b16 %v7508
      %v7580 = vunpack.c.l.b16 %v7509
      %v7581 = vunpack.c.l.b16 %v7510
      %v7582 = vunpack.c.l.b16 %v7511
      %v7583 = vpack.c.b16 %v7552, %v7551
      %v7584 = vpack.c.b16 %v7554, %v7553
      %v7585 = vpack.c.b16 %v7556, %v7555
      %v7586 = vpack.c.b16 %v7558, %v7557
      %v7587 = vpack.c.b16 %v7560, %v7559
      %v7588 = vpack.c.b16 %v7562, %v7561
      %v7589 = vpack.c.b16 %v7564, %v7563
      %v7590 = vpack.c.b16 %v7566, %v7565
      %v7591 = vpack.c.b16 %v7568, %v7567
      %v7592 = vpack.c.b16 %v7570, %v7569
      %v7593 = vpack.c.b16 %v7572, %v7571
      %v7594 = vpack.c.b16 %v7574, %v7573
      %v7595 = vpack.c.b16 %v7576, %v7575
      %v7596 = vpack.c.b16 %v7578, %v7577
      %v7597 = vpack.c.b16 %v7580, %v7579
      %v7598 = vpack.c.b16 %v7582, %v7581
      %7615 = vmatprep.subr.bf16.mxu0 0
      %7616 = vmatpush1.bf16.msra.mxu0 %v7583
      %7617 = vmatprep.subr.bf16.mxu0 0
      %7618 = vmatpush1.bf16.msra.mxu0 %v7584
      %7619 = vmatprep.subr.bf16.mxu0 0
      %7620 = vmatpush1.bf16.msra.mxu0 %v7585
      %7621 = vmatprep.subr.bf16.mxu0 0
      %7622 = vmatpush1.bf16.msra.mxu0 %v7586
      %7623 = vmatprep.subr.bf16.mxu0 0
      %7624 = vmatpush1.bf16.msra.mxu0 %v7587
      %7625 = vmatprep.subr.bf16.mxu0 0
      %7626 = vmatpush1.bf16.msra.mxu0 %v7588
      %7627 = vmatprep.subr.bf16.mxu0 0
      %7628 = vmatpush1.bf16.msra.mxu0 %v7589
      %7629 = vmatprep.subr.bf16.mxu0 0
      %7630 = vmatpush1.bf16.msra.mxu0 %v7590
      %7631 = vmatprep.subr.bf16.mxu0 0
      %7632 = vmatpush1.bf16.msra.mxu0 %v7591
      %7633 = vmatprep.subr.bf16.mxu0 0
      %7634 = vmatpush1.bf16.msra.mxu0 %v7592
      %7635 = vmatprep.subr.bf16.mxu0 0
      %7636 = vmatpush1.bf16.msra.mxu0 %v7593
      %7637 = vmatprep.subr.bf16.mxu0 0
      %7638 = vmatpush1.bf16.msra.mxu0 %v7594
      %7639 = vmatprep.subr.bf16.mxu0 0
      %7640 = vmatpush1.bf16.msra.mxu0 %v7595
      %7641 = vmatprep.subr.bf16.mxu0 0
      %7642 = vmatpush1.bf16.msra.mxu0 %v7596
      %7643 = vmatprep.subr.bf16.mxu0 0
      %7644 = vmatpush1.bf16.msra.mxu0 %v7597
      %7645 = vmatprep.subr.bf16.mxu0 0
      %7646 = vmatpush1.bf16.msra.mxu0 %v7598
      %7647 = vmatprep.mubr.bf16.mxu0 %v7417
      %7648 = vmatmul.mubr.bf16.gmra.mrb[0].mxu0 %v7416
      %v7649 = vpop.f32.mrb[0].mxu0
      %v7650 = vadd.f32 %v7517, %v7649
      %v7651 = vpop.f32.mrb[0].mxu0
      %v7652 = vpop.f32.mrb[0].mxu0
      %v7653 = vadd.f32 %v7517, %v7652
      %v7654 = vpop.f32.mrb[0].mxu0
      %7655 = vmatprep.mubr.bf16.mxu0 %v7419
      %7656 = vmatmul.mubr.bf16.gmra.mrb[0].mxu0 %v7418
      %v7657 = vpop.f32.mrb[0].mxu0
      %v7658 = vadd.f32 %v7517, %v7657
      %v7659 = vpop.f32.mrb[0].mxu0
      %v7660 = vpop.f32.mrb[0].mxu0
      %v7661 = vadd.f32 %v7517, %v7660
      %v7662 = vpop.f32.mrb[0].mxu0
      %7663 = vmatprep.mubr.bf16.mxu0 %v7421
      %7664 = vmatmul.mubr.bf16.gmra.mrb[0].mxu0 %v7420
      %v7665 = vpop.f32.mrb[0].mxu0
      %v7666 = vadd.f32 %v7517, %v7665
      %v7667 = vpop.f32.mrb[0].mxu0
      %v7668 = vpop.f32.mrb[0].mxu0
      %v7669 = vadd.f32 %v7517, %v7668
      %v7670 = vpop.f32.mrb[0].mxu0
      %7671 = vmatprep.mubr.bf16.mxu0 %v7423
      %7672 = vmatmul.mubr.bf16.gmra.mrb[0].mxu0 %v7422
      %v7673 = vpop.f32.mrb[0].mxu0
      %v7674 = vadd.f32 %v7517, %v7673
      %v7675 = vpop.f32.mrb[0].mxu0
      %v7676 = vpop.f32.mrb[0].mxu0
      %v7677 = vadd.f32 %v7517, %v7676
      %v7678 = vpop.f32.mrb[0].mxu0
      %7679 = vmatprep.mubr.bf16.mxu0 %v7425
      %7680 = vmatmul.mubr.bf16.gmra.mrb[0].mxu0 %v7424
      %v7681 = vpop.f32.mrb[0].mxu0
      %v7682 = vadd.f32 %v7517, %v7681
      %v7683 = vpop.f32.mrb[0].mxu0
      %v7684 = vpop.f32.mrb[0].mxu0
      %v7685 = vadd.f32 %v7517, %v7684
      %v7686 = vpop.f32.mrb[0].mxu0
      %7687 = vmatprep.mubr.bf16.mxu0 %v7427
      %7688 = vmatmul.mubr.bf16.gmra.mrb[0].mxu0 %v7426
      %v7689 = vpop.f32.mrb[0].mxu0
      %v7690 = vadd.f32 %v7517, %v7689
      %v7691 = vpop.f32.mrb[0].mxu0
      %v7692 = vpop.f32.mrb[0].mxu0
      %v7693 = vadd.f32 %v7517, %v7692
      %v7694 = vpop.f32.mrb[0].mxu0
      %7695 = vmatprep.mubr.bf16.mxu0 %v7429
      %7696 = vmatmul.mubr.bf16.gmra.mrb[0].mxu0 %v7428
      %v7697 = vpop.f32.mrb[0].mxu0
      %v7698 = vadd.f32 %v7517, %v7697
      %v7699 = vpop.f32.mrb[0].mxu0
      %v7700 = vpop.f32.mrb[0].mxu0
      %v7701 = vadd.f32 %v7517, %v7700
      %v7702 = vpop.f32.mrb[0].mxu0
      %7703 = vmatprep.mubr.bf16.mxu0 %v7431
      %7704 = vmatmul.mubr.bf16.gmra.mrb[0].mxu0 %v7430
      %v7705 = vpop.f32.mrb[0].mxu0
      %v7706 = vadd.f32 %v7517, %v7705
      %v7707 = vpop.f32.mrb[0].mxu0
      %v7708 = vpop.f32.mrb[0].mxu0
      %v7709 = vadd.f32 %v7517, %v7708
      %v7710 = vpop.f32.mrb[0].mxu0
      %7711 = vmatprep.mubr.bf16.mxu0 %v7433
      %7712 = vmatmul.mubr.bf16.gmra.mrb[0].mxu0 %v7432
      %v7713 = vpop.f32.mrb[0].mxu0
      %v7714 = vadd.f32 %v7517, %v7713
      %v7715 = vpop.f32.mrb[0].mxu0
      %v7716 = vpop.f32.mrb[0].mxu0
      %v7717 = vadd.f32 %v7517, %v7716
      %v7718 = vpop.f32.mrb[0].mxu0
      %7719 = vmatprep.mubr.bf16.mxu0 %v7435
      %7720 = vmatmul.mubr.bf16.gmra.mrb[0].mxu0 %v7434
      %v7721 = vpop.f32.mrb[0].mxu0
      %v7722 = vadd.f32 %v7517, %v7721
      %v7723 = vpop.f32.mrb[0].mxu0
      %v7724 = vpop.f32.mrb[0].mxu0
      %v7725 = vadd.f32 %v7517, %v7724
      %v7726 = vpop.f32.mrb[0].mxu0
      %7727 = vmatprep.mubr.bf16.mxu0 %v7437
      %7728 = vmatmul.mubr.bf16.gmra.mrb[0].mxu0 %v7436
      %v7729 = vpop.f32.mrb[0].mxu0
      %v7730 = vadd.f32 %v7517, %v7729
      %v7731 = vpop.f32.mrb[0].mxu0
      %v7732 = vpop.f32.mrb[0].mxu0
      %v7733 = vadd.f32 %v7517, %v7732
      %v7734 = vpop.f32.mrb[0].mxu0
      %7735 = vmatprep.mubr.bf16.mxu0 %v7439
      %7736 = vmatmul.mubr.bf16.gmra.mrb[0].mxu0 %v7438
      %v7737 = vpop.f32.mrb[0].mxu0
      %v7738 = vadd.f32 %v7517, %v7737
      %v7739 = vpop.f32.mrb[0].mxu0
      %v7740 = vpop.f32.mrb[0].mxu0
      %v7741 = vadd.f32 %v7517, %v7740
      %v7742 = vpop.f32.mrb[0].mxu0
      %7743 = vmatprep.mubr.bf16.mxu0 %v7441
      %7744 = vmatmul.mubr.bf16.gmra.mrb[0].mxu0 %v7440
      %v7745 = vpop.f32.mrb[0].mxu0
      %v7746 = vadd.f32 %v7517, %v7745
      %v7747 = vpop.f32.mrb[0].mxu0
      %v7748 = vpop.f32.mrb[0].mxu0
      %v7749 = vadd.f32 %v7517, %v7748
      %v7750 = vpop.f32.mrb[0].mxu0
      %7751 = vmatprep.mubr.bf16.mxu0 %v7443
      %7752 = vmatmul.mubr.bf16.gmra.mrb[0].mxu0 %v7442
      %v7753 = vpop.f32.mrb[0].mxu0
      %v7754 = vadd.f32 %v7517, %v7753
      %v7755 = vpop.f32.mrb[0].mxu0
      %v7756 = vpop.f32.mrb[0].mxu0
      %v7757 = vadd.f32 %v7517, %v7756
      %v7758 = vpop.f32.mrb[0].mxu0
      %7759 = vmatprep.mubr.bf16.mxu0 %v7445
      %7760 = vmatmul.mubr.bf16.gmra.mrb[0].mxu0 %v7444
      %v7761 = vpop.f32.mrb[0].mxu0
      %v7762 = vadd.f32 %v7517, %v7761
      %v7763 = vpop.f32.mrb[0].mxu0
      %v7764 = vpop.f32.mrb[0].mxu0
      %v7765 = vadd.f32 %v7517, %v7764
      %v7766 = vpop.f32.mrb[0].mxu0
      %7767 = vmatprep.mubr.bf16.mxu0 %v7447
      %7768 = vmatmul.mubr.bf16.gmra.mrb[0].mxu0 %v7446
      %v7769 = vpop.f32.mrb[0].mxu0
      %v7770 = vadd.f32 %v7517, %v7769
      %v7771 = vpop.f32.mrb[0].mxu0
      %v7772 = vpop.f32.mrb[0].mxu0
      %v7773 = vadd.f32 %v7517, %v7772
      %v7774 = vpop.f32.mrb[0].mxu0
      %7775 = vmatprep.mubr.bf16.mxu0 %v7449
      %7776 = vmatmul.mubr.bf16.gmra.mrb[0].mxu0 %v7448
      %v7777 = vpop.f32.mrb[0].mxu0
      %v7778 = vadd.f32 %v7517, %v7777
      %v7779 = vpop.f32.mrb[0].mxu0
      %v7780 = vpop.f32.mrb[0].mxu0
      %v7781 = vadd.f32 %v7517, %v7780
      %v7782 = vpop.f32.mrb[0].mxu0
      %7783 = vmatprep.mubr.bf16.mxu0 %v7451
      %7784 = vmatmul.mubr.bf16.gmra.mrb[0].mxu0 %v7450
      %v7785 = vpop.f32.mrb[0].mxu0
      %v7786 = vadd.f32 %v7517, %v7785
      %v7787 = vpop.f32.mrb[0].mxu0
      %v7788 = vpop.f32.mrb[0].mxu0
      %v7789 = vadd.f32 %v7517, %v7788
      %v7790 = vpop.f32.mrb[0].mxu0
      %7791 = vmatprep.mubr.bf16.mxu0 %v7453
      %7792 = vmatmul.mubr.bf16.gmra.mrb[0].mxu0 %v7452
      %v7793 = vpop.f32.mrb[0].mxu0
      %v7794 = vadd.f32 %v7517, %v7793
      %v7795 = vpop.f32.mrb[0].mxu0
      %v7796 = vpop.f32.mrb[0].mxu0
      %v7797 = vadd.f32 %v7517, %v7796
      %v7798 = vpop.f32.mrb[0].mxu0
      %7799 = vmatprep.mubr.bf16.mxu0 %v7455
      %7800 = vmatmul.mubr.bf16.gmra.mrb[0].mxu0 %v7454
      %v7801 = vpop.f32.mrb[0].mxu0
      %v7802 = vadd.f32 %v7517, %v7801
      %v7803 = vpop.f32.mrb[0].mxu0
      %v7804 = vpop.f32.mrb[0].mxu0
      %v7805 = vadd.f32 %v7517, %v7804
      %v7806 = vpop.f32.mrb[0].mxu0
      %7807 = vmatprep.mubr.bf16.mxu0 %v7457
      %7808 = vmatmul.mubr.bf16.gmra.mrb[0].mxu0 %v7456
      %v7809 = vpop.f32.mrb[0].mxu0
      %v7810 = vadd.f32 %v7517, %v7809
      %v7811 = vpop.f32.mrb[0].mxu0
      %v7812 = vpop.f32.mrb[0].mxu0
      %v7813 = vadd.f32 %v7517, %v7812
      %v7814 = vpop.f32.mrb[0].mxu0
      %7815 = vmatprep.mubr.bf16.mxu0 %v7459
      %7816 = vmatmul.mubr.bf16.gmra.mrb[0].mxu0 %v7458
      %v7817 = vpop.f32.mrb[0].mxu0
      %v7818 = vadd.f32 %v7517, %v7817
      %v7819 = vpop.f32.mrb[0].mxu0
      %v7820 = vpop.f32.mrb[0].mxu0
      %v7821 = vadd.f32 %v7517, %v7820
      %v7822 = vpop.f32.mrb[0].mxu0
      %7823 = vmatprep.mubr.bf16.mxu0 %v7461
      %7824 = vmatmul.mubr.bf16.gmra.mrb[0].mxu0 %v7460
      %v7825 = vpop.f32.mrb[0].mxu0
      %v7826 = vadd.f32 %v7517, %v7825
      %v7827 = vpop.f32.mrb[0].mxu0
      %v7828 = vpop.f32.mrb[0].mxu0
      %v7829 = vadd.f32 %v7517, %v7828
      %v7830 = vpop.f32.mrb[0].mxu0
      %7831 = vmatprep.mubr.bf16.mxu0 %v7463
      %7832 = vmatmul.mubr.bf16.gmra.mrb[0].mxu0 %v7462
      %v7833 = vpop.f32.mrb[0].mxu0
      %v7834 = vadd.f32 %v7517, %v7833
      %v7835 = vpop.f32.mrb[0].mxu0
      %v7836 = vpop.f32.mrb[0].mxu0
      %v7837 = vadd.f32 %v7517, %v7836
      %v7838 = vpop.f32.mrb[0].mxu0
      %7839 = vmatprep.mubr.bf16.mxu0 %v7465
      %7840 = vmatmul.mubr.bf16.gmra.mrb[0].mxu0 %v7464
      %v7841 = vpop.f32.mrb[0].mxu0
      %v7842 = vadd.f32 %v7517, %v7841
      %v7843 = vpop.f32.mrb[0].mxu0
      %v7844 = vpop.f32.mrb[0].mxu0
      %v7845 = vadd.f32 %v7517, %v7844
      %v7846 = vpop.f32.mrb[0].mxu0
      %7847 = vmatprep.mubr.bf16.mxu0 %v7467
      %7848 = vmatmul.mubr.bf16.gmra.mrb[0].mxu0 %v7466
      %v7849 = vpop.f32.mrb[0].mxu0
      %v7850 = vadd.f32 %v7517, %v7849
      %v7851 = vpop.f32.mrb[0].mxu0
      %v7852 = vpop.f32.mrb[0].mxu0
      %v7853 = vadd.f32 %v7517, %v7852
      %v7854 = vpop.f32.mrb[0].mxu0
      %7855 = vmatprep.mubr.bf16.mxu0 %v7469
      %7856 = vmatmul.mubr.bf16.gmra.mrb[0].mxu0 %v7468
      %v7857 = vpop.f32.mrb[0].mxu0
      %v7858 = vadd.f32 %v7517, %v7857
      %v7859 = vpop.f32.mrb[0].mxu0
      %v7860 = vpop.f32.mrb[0].mxu0
      %v7861 = vadd.f32 %v7517, %v7860
      %v7862 = vpop.f32.mrb[0].mxu0
      %7863 = vmatprep.mubr.bf16.mxu0 %v7471
      %7864 = vmatmul.mubr.bf16.gmra.mrb[0].mxu0 %v7470
      %v7865 = vpop.f32.mrb[0].mxu0
      %v7866 = vadd.f32 %v7517, %v7865
      %v7867 = vpop.f32.mrb[0].mxu0
      %v7868 = vpop.f32.mrb[0].mxu0
      %v7869 = vadd.f32 %v7517, %v7868
      %v7870 = vpop.f32.mrb[0].mxu0
      %7871 = vmatprep.mubr.bf16.mxu0 %v7473
      %7872 = vmatmul.mubr.bf16.gmra.mrb[0].mxu0 %v7472
      %v7873 = vpop.f32.mrb[0].mxu0
      %v7874 = vadd.f32 %v7517, %v7873
      %v7875 = vpop.f32.mrb[0].mxu0
      %v7876 = vpop.f32.mrb[0].mxu0
      %v7877 = vadd.f32 %v7517, %v7876
      %v7878 = vpop.f32.mrb[0].mxu0
      %7879 = vmatprep.mubr.bf16.mxu0 %v7475
      %7880 = vmatmul.mubr.bf16.gmra.mrb[0].mxu0 %v7474
      %v7881 = vpop.f32.mrb[0].mxu0
      %v7882 = vadd.f32 %v7517, %v7881
      %v7883 = vpop.f32.mrb[0].mxu0
      %v7884 = vpop.f32.mrb[0].mxu0
      %v7885 = vadd.f32 %v7517, %v7884
      %v7886 = vpop.f32.mrb[0].mxu0
      %7887 = vmatprep.mubr.bf16.mxu0 %v7477
      %7888 = vmatmul.mubr.bf16.gmra.mrb[0].mxu0 %v7476
      %v7889 = vpop.f32.mrb[0].mxu0
      %v7890 = vadd.f32 %v7517, %v7889
      %v7891 = vpop.f32.mrb[0].mxu0
      %v7892 = vpop.f32.mrb[0].mxu0
      %v7893 = vadd.f32 %v7517, %v7892
      %v7894 = vpop.f32.mrb[0].mxu0
      %7895 = vmatprep.mubr.bf16.mxu0 %v7479
      %7896 = vmatmul.mubr.bf16.gmra.mrb[0].mxu0 %v7478
      %v7897 = vpop.f32.mrb[0].mxu0
      %v7898 = vadd.f32 %v7517, %v7897
      %v7899 = vpop.f32.mrb[0].mxu0
      %v7900 = vpop.f32.mrb[0].mxu0
      %v7901 = vadd.f32 %v7517, %v7900
      %v7902 = vpop.f32.mrb[0].mxu0
      %7903 = vdwg.mxu0
      %vm7904 = vcmask 31744
      %7905 = vst.msk [vmem:[%s604] sm:$0xff] %vm7904, %v7650
      %7906 = vst.msk [vmem:[%s604 + $0x8] sm:$0xff] %vm7904, %v7653
      %7907 = vst.msk [vmem:[%s604 + $0x10] sm:$0xff] %vm7904, %v7658
      %7908 = vst.msk [vmem:[%s604 + $0x18] sm:$0xff] %vm7904, %v7661
      %7909 = vst.msk [vmem:[%s604 + $0x20] sm:$0xff] %vm7904, %v7666
      %7910 = vst.msk [vmem:[%s604 + $0x28] sm:$0xff] %vm7904, %v7669
      %7911 = vst.msk [vmem:[%s604 + $0x30] sm:$0xff] %vm7904, %v7674
      %7912 = vst.msk [vmem:[%s604 + $0x38] sm:$0xff] %vm7904, %v7677
      %7913 = vst.msk [vmem:[%s604 + $0x40] sm:$0xff] %vm7904, %v7682
      %7914 = vst.msk [vmem:[%s604 + $0x48] sm:$0xff] %vm7904, %v7685
      %7915 = vst.msk [vmem:[%s604 + $0x50] sm:$0xff] %vm7904, %v7690
      %7916 = vst.msk [vmem:[%s604 + $0x58] sm:$0xff] %vm7904, %v7693
      %7917 = vst.msk [vmem:[%s604 + $0x60] sm:$0xff] %vm7904, %v7698
      %7918 = vst.msk [vmem:[%s604 + $0x68] sm:$0xff] %vm7904, %v7701
      %7919 = vst.msk [vmem:[%s604 + $0x70] sm:$0xff] %vm7904, %v7706
      %7920 = vst.msk [vmem:[%s604 + $0x78] sm:$0xff] %vm7904, %v7709
      %7921 = vst.msk [vmem:[%s604 + $0x80] sm:$0xff] %vm7904, %v7714
      %7922 = vst.msk [vmem:[%s604 + $0x88] sm:$0xff] %vm7904, %v7717
      %7923 = vst.msk [vmem:[%s604 + $0x90] sm:$0xff] %vm7904, %v7722
      %7924 = vst.msk [vmem:[%s604 + $0x98] sm:$0xff] %vm7904, %v7725
      %7925 = vst.msk [vmem:[%s604 + $0xa0] sm:$0xff] %vm7904, %v7730
      %7926 = vst.msk [vmem:[%s604 + $0xa8] sm:$0xff] %vm7904, %v7733
      %7927 = vst.msk [vmem:[%s604 + $0xb0] sm:$0xff] %vm7904, %v7738
      %7928 = vst.msk [vmem:[%s604 + $0xb8] sm:$0xff] %vm7904, %v7741
      %7929 = vst.msk [vmem:[%s604 + $0xc0] sm:$0xff] %vm7904, %v7746
      %7930 = vst.msk [vmem:[%s604 + $0xc8] sm:$0xff] %vm7904, %v7749
      %7931 = vst.msk [vmem:[%s604 + $0xd0] sm:$0xff] %vm7904, %v7754
      %7932 = vst.msk [vmem:[%s604 + $0xd8] sm:$0xff] %vm7904, %v7757
      %7933 = vst.msk [vmem:[%s604 + $0xe0] sm:$0xff] %vm7904, %v7762
      %7934 = vst.msk [vmem:[%s604 + $0xe8] sm:$0xff] %vm7904, %v7765
      %7935 = vst.msk [vmem:[%s604 + $0xf0] sm:$0xff] %vm7904, %v7770
      %7936 = vst.msk [vmem:[%s604 + $0xf8] sm:$0xff] %vm7904, %v7773
      %7937 = vst.msk [vmem:[%s604 + $0x100] sm:$0xff] %vm7904, %v7778
      %7938 = vst.msk [vmem:[%s604 + $0x108] sm:$0xff] %vm7904, %v7781
      %7939 = vst.msk [vmem:[%s604 + $0x110] sm:$0xff] %vm7904, %v7786
      %7940 = vst.msk [vmem:[%s604 + $0x118] sm:$0xff] %vm7904, %v7789
      %7941 = vst.msk [vmem:[%s604 + $0x120] sm:$0xff] %vm7904, %v7794
      %7942 = vst.msk [vmem:[%s604 + $0x128] sm:$0xff] %vm7904, %v7797
      %7943 = vst.msk [vmem:[%s604 + $0x130] sm:$0xff] %vm7904, %v7802
      %7944 = vst.msk [vmem:[%s604 + $0x138] sm:$0xff] %vm7904, %v7805
      %7945 = vst.msk [vmem:[%s604 + $0x140] sm:$0xff] %vm7904, %v7810
      %7946 = vst.msk [vmem:[%s604 + $0x148] sm:$0xff] %vm7904, %v7813
      %7947 = vst.msk [vmem:[%s604 + $0x150] sm:$0xff] %vm7904, %v7818
      %7948 = vst.msk [vmem:[%s604 + $0x158] sm:$0xff] %vm7904, %v7821
      %7949 = vst.msk [vmem:[%s604 + $0x160] sm:$0xff] %vm7904, %v7826
      %7950 = vst.msk [vmem:[%s604 + $0x168] sm:$0xff] %vm7904, %v7829
      %7951 = vst.msk [vmem:[%s604 + $0x170] sm:$0xff] %vm7904, %v7834
      %7952 = vst.msk [vmem:[%s604 + $0x178] sm:$0xff] %vm7904, %v7837
      %7953 = vst.msk [vmem:[%s604 + $0x180] sm:$0xff] %vm7904, %v7842
      %7954 = vst.msk [vmem:[%s604 + $0x188] sm:$0xff] %vm7904, %v7845
      %7955 = vst.msk [vmem:[%s604 + $0x190] sm:$0xff] %vm7904, %v7850
      %7956 = vst.msk [vmem:[%s604 + $0x198] sm:$0xff] %vm7904, %v7853
      %7957 = vst.msk [vmem:[%s604 + $0x1a0] sm:$0xff] %vm7904, %v7858
      %7958 = vst.msk [vmem:[%s604 + $0x1a8] sm:$0xff] %vm7904, %v7861
      %7959 = vst.msk [vmem:[%s604 + $0x1b0] sm:$0xff] %vm7904, %v7866
      %7960 = vst.msk [vmem:[%s604 + $0x1b8] sm:$0xff] %vm7904, %v7869
      %7961 = vst.msk [vmem:[%s604 + $0x1c0] sm:$0xff] %vm7904, %v7874
      %7962 = vst.msk [vmem:[%s604 + $0x1c8] sm:$0xff] %vm7904, %v7877
      %7963 = vst.msk [vmem:[%s604 + $0x1d0] sm:$0xff] %vm7904, %v7882
      %7964 = vst.msk [vmem:[%s604 + $0x1d8] sm:$0xff] %vm7904, %v7885
      %7965 = vst.msk [vmem:[%s604 + $0x1e0] sm:$0xff] %vm7904, %v7890
      %7966 = vst.msk [vmem:[%s604 + $0x1e8] sm:$0xff] %vm7904, %v7893
      %7967 = vst.msk [vmem:[%s604 + $0x1f0] sm:$0xff] %vm7904, %v7898
      %7968 = vst.msk [vmem:[%s604 + $0x1f8] sm:$0xff] %vm7904, %v7901
      %s7969 = smul.u32 64, %s30
      %p7970 = scmp.lt.s32.totalorder %s7969, 255
      %s7971 = scalar_select %p7970, %s7969, 255
      %s7972 = smul.addr %s7971, 8
      %s7973 = scalar_lea.vmem %s19, %s7972
      // Predicated region
      $region97: #{tpu_custom_call.1} parent=95 // pred_check
        %p7974 = pneg %p452
      $region98: #{tpu_custom_call.1} parent=95 // pred_check_branch
        %7976 = sbr.rel (%p7974) target = $region100
      $region99: #{tpu_custom_call.1} parent=95 // pred_region
        %s7977 = smul.u32 64, %s30
      $region100: #{tpu_custom_call.1} parent=95 // pred_fallthru
        _
    $region96: #{tpu_custom_call.1} parent=5 // pred_fallthru
      _
    %p7978 = scmp.le.s32.totalorder 2, %s25
    // Predicated region
    $region101: #{tpu_custom_call.1} parent=5 // pred_check
      %p7979 = pneg %p7978
    $region102: #{tpu_custom_call.1} parent=5 // pred_check_branch
      %7981 = sbr.rel (%p7979) target = $region104
    $region103: #{tpu_custom_call.1} parent=5 // pred_region
      %s7982 = ssub.s32 %s25, 2
      // Predicated region
      $region105: #{tpu_custom_call.1} parent=103 // pred_check
        %p7983 = pneg %p458
      $region106: #{tpu_custom_call.1} parent=103 // pred_check_branch
        %7985 = sbr.rel (%p7983) target = $region108
      $region107: #{tpu_custom_call.1} parent=103 // pred_region
        %s7986 = smul.u32 64, %s31
        %p7987 = scmp.lt.s32.totalorder %s7986, 255
        %s7988 = scalar_select %p7987, %s7986, 255
        %s7989 = smul.addr %s7988, 8
        %s7990 = scalar_lea.vmem %s19, %s7989
      $region108: #{tpu_custom_call.1} parent=103 // pred_fallthru
        _
    $region104: #{tpu_custom_call.1} parent=5 // pred_fallthru
      _
  $region6: #{tpu_custom_call.1} parent=0 // loop_footer
    %s29 = sadd.s32 1, %s25
  $region7: #{tpu_custom_call.1} parent=0 // loop_footer_branch
    %24 = sbr.rel target = $region3
  $region8: #{tpu_custom_call.1} parent=0 // loop_exit
    _

</llo_original>
